<compile_context>
chip_gen: v6e
topology: v6e:2x2x1
jax: 0.10.0
libtpu: 0.0.40
codegen_flags: <defaults>
</compile_context>

<pallas_src>
import math

import jax
import jax.numpy as jnp
from jax import lax
from jax.experimental import pallas as pl
from jax.experimental.pallas import tpu as pltpu


_TILE_R = 256                      # row tile for the 1x1-conv matmuls
_VMEM_LIMIT = 32 * 1024 * 1024     # safe on v5e / v6e / v7x scoped VMEM


# ----------------------------- Pallas kernels ------------------------------ #

def _matmul_bn_relu_kernel(x_ref, w_ref, s_ref, b_ref, o_ref):
    # 1x1 conv as matmul on a row tile: (TILE_R, Cin) @ (Cin, Cout),
    # bf16 MXU inputs, f32 accumulation, f32 BN affine + ReLU epilogue.
    y = jnp.dot(x_ref[...].astype(jnp.bfloat16), w_ref[...],
                preferred_element_type=jnp.float32)
    o_ref[...] = jnp.maximum(y * s_ref[...] + b_ref[...], 0.0)


def _matmul_bn_add_relu_kernel(x_ref, w_ref, s_ref, b_ref, res_ref, o_ref):
    # conv3 + bn3 + residual add + ReLU, fused (residual stays in f32).
    y = jnp.dot(x_ref[...].astype(jnp.bfloat16), w_ref[...],
                preferred_element_type=jnp.float32)
    o_ref[...] = jnp.maximum(y * s_ref[...] + b_ref[...] + res_ref[...], 0.0)


def _res2net_branches_kernel(x_ref, wc_ref, sc_ref, bc_ref, o_ref,
                             xpad_ref, patch_ref):
    # Fused Res2Net branch chain for one image.
    #   x_ref  : (H, W, width*scale)  f32  -- conv1 output for this image
    #   wc_ref : (nums, 9*width, width) bf16 -- im2col-reshaped 3x3 weights
    #   sc_ref, bc_ref : (nums, 1, width) f32 -- folded BN scale / bias
    #   o_ref  : (H, W, width*scale)  f32  -- concatenated branch outputs
    # Scratch:
    #   xpad_ref  : (H+2, W+2, width) f32  -- zero-padded conv input
    #   patch_ref : (H*W, 9*width)    f32  -- im2col patch buffer
    H, W, C = x_ref.shape
    nums, _, width = wc_ref.shape
    scale = C // width

    # Zero the padded scratch once; only the interior is rewritten afterwards,
    # so the border stays zero for every branch ("SAME" zero padding).
    xpad_ref[...] = jnp.zeros_like(xpad_ref)

    spx = x_ref[...]                                   # (H, W, width*scale) f32
    sp = spx[:, :, 0:width]                            # spx[0]
    for i in range(nums):
        if i > 0:                                      # sp = sp + spx[i]
            sp = sp + spx[:, :, i * width:(i + 1) * width]
        xpad_ref[1:H + 1, 1:W + 1, :] = sp             # interior write only
        xw = xpad_ref[...]                             # (H+2, W+2, width)
        # im2col: 9 shifted views -> one (H*W, 9*width) block.
        # TODO(synk): the shifted slice+reshape copies could be replaced with
        #             pltpu.roll-based shifts at larger H/W.
        for kh in range(3):
            for kw in range(3):
                t = kh * 3 + kw
                patch_ref[:, t * width:(t + 1) * width] = (
                    xw[kh:kh + H, kw:kw + W, :].reshape(H * W, width))
        # Single MXU matmul with K = 9*width (instead of nine K=width dots).
        y = jnp.dot(patch_ref[...].astype(jnp.bfloat16), wc_ref[i],
                    preferred_element_type=jnp.float32)
        y = jnp.maximum(y * sc_ref[i] + bc_ref[i], 0.0)
        sp = y.reshape(H, W, width)
        o_ref[:, :, i * width:(i + 1) * width] = sp

    # 'normal' stype: last channel group passes through unchanged.
    if scale != 1:
        o_ref[:, :, nums * width:] = spx[:, :, nums * width:]


# ------------------------------ kernel wrappers ----------------------------- #

def _pointwise_call(kernel, x2d, w, scale, bias, res2d=None, tile=_TILE_R):
    """Row-tiled pointwise (1x1-conv) matmul with fused BN/ReLU epilogue."""
    R, Cin = x2d.shape
    Cout = w.shape[1]
    Rp = ((R + tile - 1) // tile) * tile
    pad = Rp - R
    if pad:
        x2d = jnp.pad(x2d, ((0, pad), (0, 0)))
        if res2d is not None:
            res2d = jnp.pad(res2d, ((0, pad), (0, 0)))

    in_specs = [pl.BlockSpec((tile, Cin), lambda i: (i, 0)),
                pl.BlockSpec((Cin, Cout), lambda i: (0, 0)),
                pl.BlockSpec((1, Cout), lambda i: (0, 0)),
                pl.BlockSpec((1, Cout), lambda i: (0, 0))]
    args = [x2d, w, scale, bias]
    if res2d is not None:
        in_specs.append(pl.BlockSpec((tile, Cout), lambda i: (i, 0)))
        args.append(res2d)

    out = pl.pallas_call(
        kernel,
        out_shape=jax.ShapeDtypeStruct((Rp, Cout), jnp.float32),
        grid=(Rp // tile,),
        in_specs=in_specs,
        out_specs=pl.BlockSpec((tile, Cout), lambda i: (i, 0)),
        compiler_params=pltpu.CompilerParams(
            dimension_semantics=("parallel",),
            vmem_limit_bytes=_VMEM_LIMIT),
    )(*args)
    return out[:R] if pad else out


def pointwise_conv_bn_relu(x2d, w, scale, bias):
    return _pointwise_call(_matmul_bn_relu_kernel, x2d, w, scale, bias)


def pointwise_conv_bn_add_relu(x2d, w, scale, bias, res2d):
    return _pointwise_call(_matmul_bn_add_relu_kernel, x2d, w, scale, bias,
                           res2d=res2d)


def res2net_branches(out1_nhwc, wc, sc, bc):
    """Fused branch chain; one grid step per image, everything VMEM-resident."""
    N, H, W, C = out1_nhwc.shape
    nums, _, width = wc.shape
    return pl.pallas_call(
        _res2net_branches_kernel,
        out_shape=jax.ShapeDtypeStruct((N, H, W, C), jnp.float32),
        grid=(N,),
        in_specs=[
            pl.BlockSpec((None, H, W, C), lambda n: (n, 0, 0, 0)),
            pl.BlockSpec((nums, 9 * width, width), lambda n: (0, 0, 0)),
            pl.BlockSpec((nums, 1, width), lambda n: (0, 0, 0)),
            pl.BlockSpec((nums, 1, width), lambda n: (0, 0, 0)),
        ],
        out_specs=pl.BlockSpec((None, H, W, C), lambda n: (n, 0, 0, 0)),
        scratch_shapes=[pltpu.VMEM((H + 2, W + 2, width), jnp.float32),
                        pltpu.VMEM((H * W, 9 * width), jnp.float32)],
        compiler_params=pltpu.CompilerParams(
            dimension_semantics=("parallel",),
            vmem_limit_bytes=_VMEM_LIMIT),
    )(out1_nhwc, wc, sc, bc)


# ----------------------------- parameter setup ------------------------------ #

def _bn_fold(gamma, beta, mean, var, eps=1e-5):
    s = gamma / jnp.sqrt(var + eps)
    b = beta - mean * s
    return (s.reshape(1, -1).astype(jnp.float32),
            b.reshape(1, -1).astype(jnp.float32))


def init_params(key, inplanes, planes, baseWidth=26, scale=4):
    expansion = 4
    width = int(math.floor(planes * (baseWidth / 64.0)))
    nums = 1 if scale == 1 else scale - 1
    ks = jax.random.split(key, 4 + 2 * nums)

    def bn_params(k, c):
        k1, k2, k3, k4 = jax.random.split(k, 4)
        gamma = 1.0 + 0.1 * jax.random.normal(k1, (c,), jnp.float32)
        beta = 0.1 * jax.random.normal(k2, (c,), jnp.float32)
        mean = 0.1 * jax.random.normal(k3, (c,), jnp.float32)
        var = jax.random.uniform(k4, (c,), jnp.float32, 0.5, 1.5)
        return _bn_fold(gamma, beta, mean, var)

    # conv1: PyTorch (width*scale, inplanes, 1, 1) -> matmul (inplanes, width*scale)
    w1 = 0.1 * jax.random.normal(ks[0], (inplanes, width * scale), jnp.float32)
    s1, b1 = bn_params(ks[1], width * scale)

    wc_hwio, sc_list, bc_list = [], [], []
    for i in range(nums):
        # PyTorch (width, width, 3, 3) -> HWIO (3, 3, width, width)
        wc_hwio.append(0.1 * jax.random.normal(
            ks[2 + 2 * i], (3, 3, width, width), jnp.float32))
        s, b = bn_params(ks[3 + 2 * i], width)
        sc_list.append(s)
        bc_list.append(b)
    wc_hwio = jnp.stack(wc_hwio)                           # (nums, 3, 3, w, w)
    wc_im2col = wc_hwio.reshape(nums, 9 * width, width)    # (kh, kw, cin) rows
    sc = jnp.stack(sc_list)                                # (nums, 1, width)
    bc = jnp.stack(bc_list)

    # conv3: PyTorch (planes*4, width*scale, 1, 1) -> (width*scale, planes*4)
    w3 = 0.1 * jax.random.normal(ks[2 + 2 * nums],
                                 (width * scale, planes * expansion),
                                 jnp.float32)
    s3, b3 = bn_params(ks[3 + 2 * nums], planes * expansion)

    return dict(w1=w1, s1=s1, b1=b1,
                wc=wc_im2col, wc_hwio=wc_hwio, sc=sc, bc=bc,
                w3=w3, s3=s3, b3=b3)


# ------------------------------ forward passes ------------------------------ #

def bottle2neck_forward(x_nchw, params):
    """Bottle2neck forward (stype='normal', stride=1, downsample=None)."""
    N, C, H, W = x_nchw.shape
    wc = params["wc"]                       # (nums, 9*width, width)
    nums, _, width = wc.shape
    scale = params["w1"].shape[1] // width

    if params["w3"].shape[1] != C:
        raise ValueError("identity residual requires inplanes == planes*expansion"
                         " (downsample path not implemented)")

    x = jnp.transpose(x_nchw, (0, 2, 3, 1))                 # NCHW -> NHWC
    x2d = x.reshape(N * H * W, C)

    # conv1 (1x1) + bn1 + relu, row-tiled.
    out1 = pointwise_conv_bn_relu(x2d, params["w1"].astype(jnp.bfloat16),
                                  params["s1"], params["b1"])
    out1 = out1.reshape(N, H, W, width * scale)

    # Fused branch chain: split -> nums x (3x3 conv + bn + relu) -> concat,
    # all inside one kernel per image (VMEM resident).
    cat = res2net_branches(out1, wc.astype(jnp.bfloat16),
                           params["sc"], params["bc"])

    # conv3 (1x1) + bn3 + residual add + relu, fused, row-tiled.
    out3 = pointwise_conv_bn_add_relu(cat.reshape(N * H * W, width * scale),
                                      params["w3"].astype(jnp.bfloat16),
                                      params["s3"], params["b3"], x2d)
    out3 = out3.reshape(N, H, W, -1)
    return jnp.transpose(out3, (0, 3, 1, 2))                # NHWC -> NCHW


def ref_forward(x_nchw, params):
    """Pure-JAX reference mirroring the kernels' bf16-matmul / f32-accumulate
    numerics (lax conv / einsum)."""
    wc_hwio = params["wc_hwio"]
    nums = wc_hwio.shape[0]
    width = wc_hwio.shape[3]
    scale = params["w1"].shape[1] // width

    x = jnp.transpose(x_nchw, (0, 2, 3, 1))

    def pw(z, w):
        return jnp.einsum("nhwc,cd->nhwd", z.astype(jnp.bfloat16),
                          w.astype(jnp.bfloat16),
                          preferred_element_type=jnp.float32)

    def bn(z, s, b):
        return z * s.reshape(1, 1, 1, -1) + b.reshape(1, 1, 1, -1)

    out = jnp.maximum(bn(pw(x, params["w1"]), params["s1"], params["b1"]), 0.0)
    spx = [out[..., i * width:(i + 1) * width] for i in range(scale)]
    outs = []
    sp = None
    for i in range(nums):
        sp_in = spx[i] if i == 0 else sp + spx[i]
        c = lax.conv_general_dilated(
            sp_in.astype(jnp.bfloat16), wc_hwio[i].astype(jnp.bfloat16),
            (1, 1), "SAME", dimension_numbers=("NHWC", "HWIO", "NHWC"),
            preferred_element_type=jnp.float32)
        sp = jnp.maximum(bn(c, params["sc"][i], params["bc"][i]), 0.0)
        outs.append(sp)
    if scale != 1:
        outs.append(spx[nums])
    cat = jnp.concatenate(outs, -1)
    o = bn(pw(cat, params["w3"]), params["s3"], params["b3"]) + x
    o = jnp.maximum(o, 0.0)
    return jnp.transpose(o, (0, 3, 1, 2))


# ----------------------------------- main ----------------------------------- #

if __name__ == "__main__":
    key = jax.random.PRNGKey(0)
    kx, kp = jax.random.split(key)

    # planes * expansion == inplanes -> identity residual (downsample=None)
    inplanes, planes = 64, 16
    N, H, W = 2, 16, 16

    x = jax.random.normal(kx, (N, inplanes, H, W), jnp.float32)
    params = init_params(kp, inplanes, planes, baseWidth=26, scale=4)

    fwd = jax.jit(bottle2neck_forward)
    out = jax.block_until_ready(fwd(x, params))

    assert out.shape == (N, planes * 4, H, W), out.shape

    ref = jax.block_until_ready(ref_forward(x, params))
    err = float(jnp.max(jnp.abs(out - ref)))
    assert err < 2e-3, f"max abs err {err}"

    print("KERNEL_OK")
</pallas_src>

<mosaic_0001>
module attributes {stable_mosaic.version = 11 : i64} {
  func.func @_matmul_bn_relu_kernel(%arg0: i32, %arg1: memref<256x64xf32, #tpu.memory_space<vmem>>, %arg2: memref<64x24xbf16, #tpu.memory_space<vmem>>, %arg3: memref<1x24xf32, #tpu.memory_space<vmem>>, %arg4: memref<1x24xf32, #tpu.memory_space<vmem>>, %arg5: memref<256x24xf32, #tpu.memory_space<vmem>>) attributes {dimension_semantics = [#tpu.dimension_semantics<parallel>], iteration_bounds = array<i64: 2>, scalar_prefetch = 0 : i64, scratch_operands = 0 : i64, tpu.core_type = #tpu.core_type<tc>, window_params = [{transform_indices = @transform_0, window_bounds = array<i64: 256, 64>}, {pipeline_mode = #tpu.pipeline_mode<synchronous>, transform_indices = @transform_1, window_bounds = array<i64: 64, 24>}, {pipeline_mode = #tpu.pipeline_mode<synchronous>, transform_indices = @transform_2, window_bounds = array<i64: 1, 24>}, {pipeline_mode = #tpu.pipeline_mode<synchronous>, transform_indices = @transform_3, window_bounds = array<i64: 1, 24>}, {transform_indices = @transform_4, window_bounds = array<i64: 256, 24>}]} {
    %c0 = arith.constant 0 : index
    %c0_0 = arith.constant 0 : index
    %0 = vector.load %arg1[%c0, %c0_0] : memref<256x64xf32, #tpu.memory_space<vmem>>, vector<256x64xf32>
    %1 = arith.truncf %0 : vector<256x64xf32> to vector<256x64xbf16>
    %c0_1 = arith.constant 0 : index
    %c0_2 = arith.constant 0 : index
    %2 = vector.load %arg2[%c0_1, %c0_2] : memref<64x24xbf16, #tpu.memory_space<vmem>>, vector<64x24xbf16>
    %cst = arith.constant dense<0.000000e+00> : vector<256x24xf32>
    %3 = tpu.matmul %1, %2, %cst {dimension_numbers = #tpu.dot_dimension_numbers<[1], [0], [0], [1], [0, 0, 1, 1], [], []>} : vector<256x64xbf16>, vector<64x24xbf16>, vector<256x24xf32> -> vector<256x24xf32>
    %c0_3 = arith.constant 0 : index
    %c0_4 = arith.constant 0 : index
    %4 = vector.load %arg3[%c0_3, %c0_4] : memref<1x24xf32, #tpu.memory_space<vmem>>, vector<1x24xf32>
    %5 = vector.broadcast %4 : vector<1x24xf32> to vector<256x24xf32>
    %6 = arith.mulf %3, %5 : vector<256x24xf32>
    %c0_5 = arith.constant 0 : index
    %c0_6 = arith.constant 0 : index
    %7 = vector.load %arg4[%c0_5, %c0_6] : memref<1x24xf32, #tpu.memory_space<vmem>>, vector<1x24xf32>
    %8 = vector.broadcast %7 : vector<1x24xf32> to vector<256x24xf32>
    %9 = arith.addf %6, %8 : vector<256x24xf32>
    %cst_7 = arith.constant 0.000000e+00 : f32
    %10 = vector.broadcast %cst_7 : f32 to vector<256x24xf32>
    %11 = arith.maximumf %9, %10 : vector<256x24xf32>
    %c0_8 = arith.constant 0 : index
    %c0_9 = arith.constant 0 : index
    %12 = vector.load %arg5[%c0_8, %c0_9] : memref<256x24xf32, #tpu.memory_space<vmem>>, vector<256x24xf32>
    tpu.vector_store %arg5[%c0_8, %c0_9], %11 {strides = array<i32>} : memref<256x24xf32, #tpu.memory_space<vmem>>, vector<256x24xf32>,
    return
  }
  func.func @transform_0(%arg0: i32) -> (i32, i32) {
    %c0_i32 = arith.constant 0 : i32
    %c0_i32_0 = arith.constant 0 : i32
    return %arg0, %c0_i32 : i32, i32
  }
  func.func @transform_1(%arg0: i32) -> (i32, i32) {
    %c0_i32 = arith.constant 0 : i32
    %c0_i32_0 = arith.constant 0 : i32
    %c0_i32_1 = arith.constant 0 : i32
    return %c0_i32, %c0_i32_0 : i32, i32
  }
  func.func @transform_2(%arg0: i32) -> (i32, i32) {
    %c0_i32 = arith.constant 0 : i32
    %c0_i32_0 = arith.constant 0 : i32
    %c0_i32_1 = arith.constant 0 : i32
    return %c0_i32, %c0_i32_0 : i32, i32
  }
  func.func @transform_3(%arg0: i32) -> (i32, i32) {
    %c0_i32 = arith.constant 0 : i32
    %c0_i32_0 = arith.constant 0 : i32
    %c0_i32_1 = arith.constant 0 : i32
    return %c0_i32, %c0_i32_0 : i32, i32
  }
  func.func @transform_4(%arg0: i32) -> (i32, i32) {
    %c0_i32 = arith.constant 0 : i32
    %c0_i32_0 = arith.constant 0 : i32
    return %arg0, %c0_i32 : i32, i32
  }
}

module attributes {stable_mosaic.version = 11 : i64} {
  func.func @_res2net_branches_kernel(%arg0: i32, %arg1: memref<1x16x16x24xf32, #tpu.memory_space<vmem>>, %arg2: memref<3x54x6xbf16, #tpu.memory_space<vmem>>, %arg3: memref<3x1x6xf32, #tpu.memory_space<vmem>>, %arg4: memref<3x1x6xf32, #tpu.memory_space<vmem>>, %arg5: memref<1x16x16x24xf32, #tpu.memory_space<vmem>>, %arg6: memref<18x18x6xf32, #tpu.memory_space<vmem>>, %arg7: memref<256x54xf32, #tpu.memory_space<vmem>>) attributes {dimension_semantics = [#tpu.dimension_semantics<parallel>], iteration_bounds = array<i64: 2>, scalar_prefetch = 0 : i64, scratch_operands = 2 : i64, tpu.core_type = #tpu.core_type<tc>, window_params = [{transform_indices = @transform_0, window_bounds = array<i64: 1, 16, 16, 24>}, {pipeline_mode = #tpu.pipeline_mode<synchronous>, transform_indices = @transform_1, window_bounds = array<i64: 3, 54, 6>}, {pipeline_mode = #tpu.pipeline_mode<synchronous>, transform_indices = @transform_2, window_bounds = array<i64: 3, 1, 6>}, {pipeline_mode = #tpu.pipeline_mode<synchronous>, transform_indices = @transform_3, window_bounds = array<i64: 3, 1, 6>}, {transform_indices = @transform_4, window_bounds = array<i64: 1, 16, 16, 24>}]} {
    %cst = arith.constant 0.000000e+00 : f32
    %0 = vector.broadcast %cst : f32 to vector<18x18x6xf32>
    %c0 = arith.constant 0 : index
    %c0_0 = arith.constant 0 : index
    %c0_1 = arith.constant 0 : index
    %1 = vector.load %arg6[%c0, %c0_0, %c0_1] : memref<18x18x6xf32, #tpu.memory_space<vmem>>, vector<18x18x6xf32>
    tpu.vector_store %arg6[%c0, %c0_0, %c0_1], %0 {strides = array<i32>} : memref<18x18x6xf32, #tpu.memory_space<vmem>>, vector<18x18x6xf32>,
    %c0_2 = arith.constant 0 : index
    %c0_3 = arith.constant 0 : index
    %c0_4 = arith.constant 0 : index
    %c0_5 = arith.constant 0 : index
    %2 = vector.load %arg1[%c0_2, %c0_3, %c0_4, %c0_5] : memref<1x16x16x24xf32, #tpu.memory_space<vmem>>, vector<1x16x16x24xf32>
    %3 = vector.shape_cast %2 : vector<1x16x16x24xf32> to vector<16x16x24xf32>
    %4 = vector.extract_strided_slice %3 {offsets = [0, 0, 0], sizes = [16, 16, 6], strides = [1, 1, 1]} : vector<16x16x24xf32> to vector<16x16x6xf32>
    %c1 = arith.constant 1 : index
    %c1_6 = arith.constant 1 : index
    %c0_7 = arith.constant 0 : index
    %5 = vector.load %arg6[%c1, %c1_6, %c0_7] : memref<18x18x6xf32, #tpu.memory_space<vmem>>, vector<16x16x6xf32>
    tpu.vector_store %arg6[%c1, %c1_6, %c0_7], %4 {strides = array<i32>} : memref<18x18x6xf32, #tpu.memory_space<vmem>>, vector<16x16x6xf32>,
    %c0_8 = arith.constant 0 : index
    %c0_9 = arith.constant 0 : index
    %c0_10 = arith.constant 0 : index
    %6 = vector.load %arg6[%c0_8, %c0_9, %c0_10] : memref<18x18x6xf32, #tpu.memory_space<vmem>>, vector<18x18x6xf32>
    %7 = vector.extract_strided_slice %6 {offsets = [0, 0, 0], sizes = [16, 16, 6], strides = [1, 1, 1]} : vector<18x18x6xf32> to vector<16x16x6xf32>
    %8 = vector.shape_cast %7 : vector<16x16x6xf32> to vector<256x6xf32>
    %c0_11 = arith.constant 0 : index
    %c0_12 = arith.constant 0 : index
    %9 = vector.load %arg7[%c0_11, %c0_12] : memref<256x54xf32, #tpu.memory_space<vmem>>, vector<256x6xf32>
    tpu.vector_store %arg7[%c0_11, %c0_12], %8 {strides = array<i32>} : memref<256x54xf32, #tpu.memory_space<vmem>>, vector<256x6xf32>,
    %10 = vector.extract_strided_slice %6 {offsets = [0, 1, 0], sizes = [16, 16, 6], strides = [1, 1, 1]} : vector<18x18x6xf32> to vector<16x16x6xf32>
    %11 = vector.shape_cast %10 : vector<16x16x6xf32> to vector<256x6xf32>
    %c0_13 = arith.constant 0 : index
    %c6 = arith.constant 6 : index
    %12 = vector.load %arg7[%c0_13, %c6] : memref<256x54xf32, #tpu.memory_space<vmem>>, vector<256x6xf32>
    tpu.vector_store %arg7[%c0_13, %c6], %11 {strides = array<i32>} : memref<256x54xf32, #tpu.memory_space<vmem>>, vector<256x6xf32>,
    %13 = vector.extract_strided_slice %6 {offsets = [0, 2, 0], sizes = [16, 16, 6], strides = [1, 1, 1]} : vector<18x18x6xf32> to vector<16x16x6xf32>
    %14 = vector.shape_cast %13 : vector<16x16x6xf32> to vector<256x6xf32>
    %c0_14 = arith.constant 0 : index
    %c12 = arith.constant 12 : index
    %15 = vector.load %arg7[%c0_14, %c12] : memref<256x54xf32, #tpu.memory_space<vmem>>, vector<256x6xf32>
    tpu.vector_store %arg7[%c0_14, %c12], %14 {strides = array<i32>} : memref<256x54xf32, #tpu.memory_space<vmem>>, vector<256x6xf32>,
    %16 = vector.extract_strided_slice %6 {offsets = [1, 0, 0], sizes = [16, 16, 6], strides = [1, 1, 1]} : vector<18x18x6xf32> to vector<16x16x6xf32>
    %17 = vector.shape_cast %16 : vector<16x16x6xf32> to vector<256x6xf32>
    %c0_15 = arith.constant 0 : index
    %c18 = arith.constant 18 : index
    %18 = vector.load %arg7[%c0_15, %c18] : memref<256x54xf32, #tpu.memory_space<vmem>>, vector<256x6xf32>
    tpu.vector_store %arg7[%c0_15, %c18], %17 {strides = array<i32>} : memref<256x54xf32, #tpu.memory_space<vmem>>, vector<256x6xf32>,
    %19 = vector.extract_strided_slice %6 {offsets = [1, 1, 0], sizes = [16, 16, 6], strides = [1, 1, 1]} : vector<18x18x6xf32> to vector<16x16x6xf32>
    %20 = vector.shape_cast %19 : vector<16x16x6xf32> to vector<256x6xf32>
    %c0_16 = arith.constant 0 : index
    %c24 = arith.constant 24 : index
    %21 = vector.load %arg7[%c0_16, %c24] : memref<256x54xf32, #tpu.memory_space<vmem>>, vector<256x6xf32>
    tpu.vector_store %arg7[%c0_16, %c24], %20 {strides = array<i32>} : memref<256x54xf32, #tpu.memory_space<vmem>>, vector<256x6xf32>,
    %22 = vector.extract_strided_slice %6 {offsets = [1, 2, 0], sizes = [16, 16, 6], strides = [1, 1, 1]} : vector<18x18x6xf32> to vector<16x16x6xf32>
    %23 = vector.shape_cast %22 : vector<16x16x6xf32> to vector<256x6xf32>
    %c0_17 = arith.constant 0 : index
    %c30 = arith.constant 30 : index
    %24 = vector.load %arg7[%c0_17, %c30] : memref<256x54xf32, #tpu.memory_space<vmem>>, vector<256x6xf32>
    tpu.vector_store %arg7[%c0_17, %c30], %23 {strides = array<i32>} : memref<256x54xf32, #tpu.memory_space<vmem>>, vector<256x6xf32>,
    %25 = vector.extract_strided_slice %6 {offsets = [2, 0, 0], sizes = [16, 16, 6], strides = [1, 1, 1]} : vector<18x18x6xf32> to vector<16x16x6xf32>
    %26 = vector.shape_cast %25 : vector<16x16x6xf32> to vector<256x6xf32>
    %c0_18 = arith.constant 0 : index
    %c36 = arith.constant 36 : index
    %27 = vector.load %arg7[%c0_18, %c36] : memref<256x54xf32, #tpu.memory_space<vmem>>, vector<256x6xf32>
    tpu.vector_store %arg7[%c0_18, %c36], %26 {strides = array<i32>} : memref<256x54xf32, #tpu.memory_space<vmem>>, vector<256x6xf32>,
    %28 = vector.extract_strided_slice %6 {offsets = [2, 1, 0], sizes = [16, 16, 6], strides = [1, 1, 1]} : vector<18x18x6xf32> to vector<16x16x6xf32>
    %29 = vector.shape_cast %28 : vector<16x16x6xf32> to vector<256x6xf32>
    %c0_19 = arith.constant 0 : index
    %c42 = arith.constant 42 : index
    %30 = vector.load %arg7[%c0_19, %c42] : memref<256x54xf32, #tpu.memory_space<vmem>>, vector<256x6xf32>
    tpu.vector_store %arg7[%c0_19, %c42], %29 {strides = array<i32>} : memref<256x54xf32, #tpu.memory_space<vmem>>, vector<256x6xf32>,
    %31 = vector.extract_strided_slice %6 {offsets = [2, 2, 0], sizes = [16, 16, 6], strides = [1, 1, 1]} : vector<18x18x6xf32> to vector<16x16x6xf32>
    %32 = vector.shape_cast %31 : vector<16x16x6xf32> to vector<256x6xf32>
    %c0_20 = arith.constant 0 : index
    %c48 = arith.constant 48 : index
    %33 = vector.load %arg7[%c0_20, %c48] : memref<256x54xf32, #tpu.memory_space<vmem>>, vector<256x6xf32>
    tpu.vector_store %arg7[%c0_20, %c48], %32 {strides = array<i32>} : memref<256x54xf32, #tpu.memory_space<vmem>>, vector<256x6xf32>,
    %c0_21 = arith.constant 0 : index
    %c0_22 = arith.constant 0 : index
    %34 = vector.load %arg7[%c0_21, %c0_22] : memref<256x54xf32, #tpu.memory_space<vmem>>, vector<256x54xf32>
    %35 = arith.truncf %34 : vector<256x54xf32> to vector<256x54xbf16>
    %c0_23 = arith.constant 0 : index
    %c0_24 = arith.constant 0 : index
    %c0_25 = arith.constant 0 : index
    %36 = vector.load %arg2[%c0_23, %c0_24, %c0_25] : memref<3x54x6xbf16, #tpu.memory_space<vmem>>, vector<1x54x6xbf16>
    %37 = vector.shape_cast %36 : vector<1x54x6xbf16> to vector<54x6xbf16>
    %cst_26 = arith.constant dense<0.000000e+00> : vector<256x6xf32>
    %38 = tpu.matmul %35, %37, %cst_26 {dimension_numbers = #tpu.dot_dimension_numbers<[1], [0], [0], [1], [0, 0, 1, 1], [], []>} : vector<256x54xbf16>, vector<54x6xbf16>, vector<256x6xf32> -> vector<256x6xf32>
    %c0_27 = arith.constant 0 : index
    %c0_28 = arith.constant 0 : index
    %c0_29 = arith.constant 0 : index
    %39 = vector.load %arg3[%c0_27, %c0_28, %c0_29] : memref<3x1x6xf32, #tpu.memory_space<vmem>>, vector<1x1x6xf32>
    %40 = vector.shape_cast %39 : vector<1x1x6xf32> to vector<1x6xf32>
    %41 = vector.broadcast %40 : vector<1x6xf32> to vector<256x6xf32>
    %42 = arith.mulf %38, %41 : vector<256x6xf32>
    %c0_30 = arith.constant 0 : index
    %c0_31 = arith.constant 0 : index
    %c0_32 = arith.constant 0 : index
    %43 = vector.load %arg4[%c0_30, %c0_31, %c0_32] : memref<3x1x6xf32, #tpu.memory_space<vmem>>, vector<1x1x6xf32>
    %44 = vector.shape_cast %43 : vector<1x1x6xf32> to vector<1x6xf32>
    %45 = vector.broadcast %44 : vector<1x6xf32> to vector<256x6xf32>
    %46 = arith.addf %42, %45 : vector<256x6xf32>
    %cst_33 = arith.constant 0.000000e+00 : f32
    %47 = vector.broadcast %cst_33 : f32 to vector<256x6xf32>
    %48 = arith.maximumf %46, %47 : vector<256x6xf32>
    %49 = vector.shape_cast %48 : vector<256x6xf32> to vector<16x16x6xf32>
    %c0_34 = arith.constant 0 : index
    %c0_35 = arith.constant 0 : index
    %c0_36 = arith.constant 0 : index
    %c0_37 = arith.constant 0 : index
    %50 = vector.load %arg5[%c0_34, %c0_35, %c0_36, %c0_37] : memref<1x16x16x24xf32, #tpu.memory_space<vmem>>, vector<1x16x16x6xf32>
    %51 = vector.shape_cast %50 : vector<1x16x16x6xf32> to vector<16x16x6xf32>
    %52 = vector.shape_cast %49 : vector<16x16x6xf32> to vector<1x16x16x6xf32>
    tpu.vector_store %arg5[%c0_34, %c0_35, %c0_36, %c0_37], %52 {strides = array<i32>} : memref<1x16x16x24xf32, #tpu.memory_space<vmem>>, vector<1x16x16x6xf32>,
    %53 = vector.extract_strided_slice %3 {offsets = [0, 0, 6], sizes = [16, 16, 6], strides = [1, 1, 1]} : vector<16x16x24xf32> to vector<16x16x6xf32>
    %54 = arith.addf %49, %53 : vector<16x16x6xf32>
    %c1_38 = arith.constant 1 : index
    %c1_39 = arith.constant 1 : index
    %c0_40 = arith.constant 0 : index
    %55 = vector.load %arg6[%c1_38, %c1_39, %c0_40] : memref<18x18x6xf32, #tpu.memory_space<vmem>>, vector<16x16x6xf32>
    tpu.vector_store %arg6[%c1_38, %c1_39, %c0_40], %54 {strides = array<i32>} : memref<18x18x6xf32, #tpu.memory_space<vmem>>, vector<16x16x6xf32>,
    %c0_41 = arith.constant 0 : index
    %c0_42 = arith.constant 0 : index
    %c0_43 = arith.constant 0 : index
    %56 = vector.load %arg6[%c0_41, %c0_42, %c0_43] : memref<18x18x6xf32, #tpu.memory_space<vmem>>, vector<18x18x6xf32>
    %57 = vector.extract_strided_slice %56 {offsets = [0, 0, 0], sizes = [16, 16, 6], strides = [1, 1, 1]} : vector<18x18x6xf32> to vector<16x16x6xf32>
    %58 = vector.shape_cast %57 : vector<16x16x6xf32> to vector<256x6xf32>
    %c0_44 = arith.constant 0 : index
    %c0_45 = arith.constant 0 : index
    %59 = vector.load %arg7[%c0_44, %c0_45] : memref<256x54xf32, #tpu.memory_space<vmem>>, vector<256x6xf32>
    tpu.vector_store %arg7[%c0_44, %c0_45], %58 {strides = array<i32>} : memref<256x54xf32, #tpu.memory_space<vmem>>, vector<256x6xf32>,
    %60 = vector.extract_strided_slice %56 {offsets = [0, 1, 0], sizes = [16, 16, 6], strides = [1, 1, 1]} : vector<18x18x6xf32> to vector<16x16x6xf32>
    %61 = vector.shape_cast %60 : vector<16x16x6xf32> to vector<256x6xf32>
    %c0_46 = arith.constant 0 : index
    %c6_47 = arith.constant 6 : index
    %62 = vector.load %arg7[%c0_46, %c6_47] : memref<256x54xf32, #tpu.memory_space<vmem>>, vector<256x6xf32>
    tpu.vector_store %arg7[%c0_46, %c6_47], %61 {strides = array<i32>} : memref<256x54xf32, #tpu.memory_space<vmem>>, vector<256x6xf32>,
    %63 = vector.extract_strided_slice %56 {offsets = [0, 2, 0], sizes = [16, 16, 6], strides = [1, 1, 1]} : vector<18x18x6xf32> to vector<16x16x6xf32>
    %64 = vector.shape_cast %63 : vector<16x16x6xf32> to vector<256x6xf32>
    %c0_48 = arith.constant 0 : index
    %c12_49 = arith.constant 12 : index
    %65 = vector.load %arg7[%c0_48, %c12_49] : memref<256x54xf32, #tpu.memory_space<vmem>>, vector<256x6xf32>
    tpu.vector_store %arg7[%c0_48, %c12_49], %64 {strides = array<i32>} : memref<256x54xf32, #tpu.memory_space<vmem>>, vector<256x6xf32>,
    %66 = vector.extract_strided_slice %56 {offsets = [1, 0, 0], sizes = [16, 16, 6], strides = [1, 1, 1]} : vector<18x18x6xf32> to vector<16x16x6xf32>
    %67 = vector.shape_cast %66 : vector<16x16x6xf32> to vector<256x6xf32>
    %c0_50 = arith.constant 0 : index
    %c18_51 = arith.constant 18 : index
    %68 = vector.load %arg7[%c0_50, %c18_51] : memref<256x54xf32, #tpu.memory_space<vmem>>, vector<256x6xf32>
    tpu.vector_store %arg7[%c0_50, %c18_51], %67 {strides = array<i32>} : memref<256x54xf32, #tpu.memory_space<vmem>>, vector<256x6xf32>,
    %69 = vector.extract_strided_slice %56 {offsets = [1, 1, 0], sizes = [16, 16, 6], strides = [1, 1, 1]} : vector<18x18x6xf32> to vector<16x16x6xf32>
    %70 = vector.shape_cast %69 : vector<16x16x6xf32> to vector<256x6xf32>
    %c0_52 = arith.constant 0 : index
    %c24_53 = arith.constant 24 : index
    %71 = vector.load %arg7[%c0_52, %c24_53] : memref<256x54xf32, #tpu.memory_space<vmem>>, vector<256x6xf32>
    tpu.vector_store %arg7[%c0_52, %c24_53], %70 {strides = array<i32>} : memref<256x54xf32, #tpu.memory_space<vmem>>, vector<256x6xf32>,
    %72 = vector.extract_strided_slice %56 {offsets = [1, 2, 0], sizes = [16, 16, 6], strides = [1, 1, 1]} : vector<18x18x6xf32> to vector<16x16x6xf32>
    %73 = vector.shape_cast %72 : vector<16x16x6xf32> to vector<256x6xf32>
    %c0_54 = arith.constant 0 : index
    %c30_55 = arith.constant 30 : index
    %74 = vector.load %arg7[%c0_54, %c30_55] : memref<256x54xf32, #tpu.memory_space<vmem>>, vector<256x6xf32>
    tpu.vector_store %arg7[%c0_54, %c30_55], %73 {strides = array<i32>} : memref<256x54xf32, #tpu.memory_space<vmem>>, vector<256x6xf32>,
    %75 = vector.extract_strided_slice %56 {offsets = [2, 0, 0], sizes = [16, 16, 6], strides = [1, 1, 1]} : vector<18x18x6xf32> to vector<16x16x6xf32>
    %76 = vector.shape_cast %75 : vector<16x16x6xf32> to vector<256x6xf32>
    %c0_56 = arith.constant 0 : index
    %c36_57 = arith.constant 36 : index
    %77 = vector.load %arg7[%c0_56, %c36_57] : memref<256x54xf32, #tpu.memory_space<vmem>>, vector<256x6xf32>
    tpu.vector_store %arg7[%c0_56, %c36_57], %76 {strides = array<i32>} : memref<256x54xf32, #tpu.memory_space<vmem>>, vector<256x6xf32>,
    %78 = vector.extract_strided_slice %56 {offsets = [2, 1, 0], sizes = [16, 16, 6], strides = [1, 1, 1]} : vector<18x18x6xf32> to vector<16x16x6xf32>
    %79 = vector.shape_cast %78 : vector<16x16x6xf32> to vector<256x6xf32>
    %c0_58 = arith.constant 0 : index
    %c42_59 = arith.constant 42 : index
    %80 = vector.load %arg7[%c0_58, %c42_59] : memref<256x54xf32, #tpu.memory_space<vmem>>, vector<256x6xf32>
    tpu.vector_store %arg7[%c0_58, %c42_59], %79 {strides = array<i32>} : memref<256x54xf32, #tpu.memory_space<vmem>>, vector<256x6xf32>,
    %81 = vector.extract_strided_slice %56 {offsets = [2, 2, 0], sizes = [16, 16, 6], strides = [1, 1, 1]} : vector<18x18x6xf32> to vector<16x16x6xf32>
    %82 = vector.shape_cast %81 : vector<16x16x6xf32> to vector<256x6xf32>
    %c0_60 = arith.constant 0 : index
    %c48_61 = arith.constant 48 : index
    %83 = vector.load %arg7[%c0_60, %c48_61] : memref<256x54xf32, #tpu.memory_space<vmem>>, vector<256x6xf32>
    tpu.vector_store %arg7[%c0_60, %c48_61], %82 {strides = array<i32>} : memref<256x54xf32, #tpu.memory_space<vmem>>, vector<256x6xf32>,
    %c0_62 = arith.constant 0 : index
    %c0_63 = arith.constant 0 : index
    %84 = vector.load %arg7[%c0_62, %c0_63] : memref<256x54xf32, #tpu.memory_space<vmem>>, vector<256x54xf32>
    %85 = arith.truncf %84 : vector<256x54xf32> to vector<256x54xbf16>
    %c1_64 = arith.constant 1 : index
    %c0_65 = arith.constant 0 : index
    %c0_66 = arith.constant 0 : index
    %86 = vector.load %arg2[%c1_64, %c0_65, %c0_66] : memref<3x54x6xbf16, #tpu.memory_space<vmem>>, vector<1x54x6xbf16>
    %87 = vector.shape_cast %86 : vector<1x54x6xbf16> to vector<54x6xbf16>
    %cst_67 = arith.constant dense<0.000000e+00> : vector<256x6xf32>
    %88 = tpu.matmul %85, %87, %cst_67 {dimension_numbers = #tpu.dot_dimension_numbers<[1], [0], [0], [1], [0, 0, 1, 1], [], []>} : vector<256x54xbf16>, vector<54x6xbf16>, vector<256x6xf32> -> vector<256x6xf32>
    %c1_68 = arith.constant 1 : index
    %c0_69 = arith.constant 0 : index
    %c0_70 = arith.constant 0 : index
    %89 = vector.load %arg3[%c1_68, %c0_69, %c0_70] : memref<3x1x6xf32, #tpu.memory_space<vmem>>, vector<1x1x6xf32>
    %90 = vector.shape_cast %89 : vector<1x1x6xf32> to vector<1x6xf32>
    %91 = vector.broadcast %90 : vector<1x6xf32> to vector<256x6xf32>
    %92 = arith.mulf %88, %91 : vector<256x6xf32>
    %c1_71 = arith.constant 1 : index
    %c0_72 = arith.constant 0 : index
    %c0_73 = arith.constant 0 : index
    %93 = vector.load %arg4[%c1_71, %c0_72, %c0_73] : memref<3x1x6xf32, #tpu.memory_space<vmem>>, vector<1x1x6xf32>
    %94 = vector.shape_cast %93 : vector<1x1x6xf32> to vector<1x6xf32>
    %95 = vector.broadcast %94 : vector<1x6xf32> to vector<256x6xf32>
    %96 = arith.addf %92, %95 : vector<256x6xf32>
    %cst_74 = arith.constant 0.000000e+00 : f32
    %97 = vector.broadcast %cst_74 : f32 to vector<256x6xf32>
    %98 = arith.maximumf %96, %97 : vector<256x6xf32>
    %99 = vector.shape_cast %98 : vector<256x6xf32> to vector<16x16x6xf32>
    %c0_75 = arith.constant 0 : index
    %c0_76 = arith.constant 0 : index
    %c0_77 = arith.constant 0 : index
    %c6_78 = arith.constant 6 : index
    %100 = vector.load %arg5[%c0_75, %c0_76, %c0_77, %c6_78] : memref<1x16x16x24xf32, #tpu.memory_space<vmem>>, vector<1x16x16x6xf32>
    %101 = vector.shape_cast %100 : vector<1x16x16x6xf32> to vector<16x16x6xf32>
    %102 = vector.shape_cast %99 : vector<16x16x6xf32> to vector<1x16x16x6xf32>
    tpu.vector_store %arg5[%c0_75, %c0_76, %c0_77, %c6_78], %102 {strides = array<i32>} : memref<1x16x16x24xf32, #tpu.memory_space<vmem>>, vector<1x16x16x6xf32>,
    %103 = vector.extract_strided_slice %3 {offsets = [0, 0, 12], sizes = [16, 16, 6], strides = [1, 1, 1]} : vector<16x16x24xf32> to vector<16x16x6xf32>
    %104 = arith.addf %99, %103 : vector<16x16x6xf32>
    %c1_79 = arith.constant 1 : index
    %c1_80 = arith.constant 1 : index
    %c0_81 = arith.constant 0 : index
    %105 = vector.load %arg6[%c1_79, %c1_80, %c0_81] : memref<18x18x6xf32, #tpu.memory_space<vmem>>, vector<16x16x6xf32>
    tpu.vector_store %arg6[%c1_79, %c1_80, %c0_81], %104 {strides = array<i32>} : memref<18x18x6xf32, #tpu.memory_space<vmem>>, vector<16x16x6xf32>,
    %c0_82 = arith.constant 0 : index
    %c0_83 = arith.constant 0 : index
    %c0_84 = arith.constant 0 : index
    %106 = vector.load %arg6[%c0_82, %c0_83, %c0_84] : memref<18x18x6xf32, #tpu.memory_space<vmem>>, vector<18x18x6xf32>
    %107 = vector.extract_strided_slice %106 {offsets = [0, 0, 0], sizes = [16, 16, 6], strides = [1, 1, 1]} : vector<18x18x6xf32> to vector<16x16x6xf32>
    %108 = vector.shape_cast %107 : vector<16x16x6xf32> to vector<256x6xf32>
    %c0_85 = arith.constant 0 : index
    %c0_86 = arith.constant 0 : index
    %109 = vector.load %arg7[%c0_85, %c0_86] : memref<256x54xf32, #tpu.memory_space<vmem>>, vector<256x6xf32>
    tpu.vector_store %arg7[%c0_85, %c0_86], %108 {strides = array<i32>} : memref<256x54xf32, #tpu.memory_space<vmem>>, vector<256x6xf32>,
    %110 = vector.extract_strided_slice %106 {offsets = [0, 1, 0], sizes = [16, 16, 6], strides = [1, 1, 1]} : vector<18x18x6xf32> to vector<16x16x6xf32>
    %111 = vector.shape_cast %110 : vector<16x16x6xf32> to vector<256x6xf32>
    %c0_87 = arith.constant 0 : index
    %c6_88 = arith.constant 6 : index
    %112 = vector.load %arg7[%c0_87, %c6_88] : memref<256x54xf32, #tpu.memory_space<vmem>>, vector<256x6xf32>
    tpu.vector_store %arg7[%c0_87, %c6_88], %111 {strides = array<i32>} : memref<256x54xf32, #tpu.memory_space<vmem>>, vector<256x6xf32>,
    %113 = vector.extract_strided_slice %106 {offsets = [0, 2, 0], sizes = [16, 16, 6], strides = [1, 1, 1]} : vector<18x18x6xf32> to vector<16x16x6xf32>
    %114 = vector.shape_cast %113 : vector<16x16x6xf32> to vector<256x6xf32>
    %c0_89 = arith.constant 0 : index
    %c12_90 = arith.constant 12 : index
    %115 = vector.load %arg7[%c0_89, %c12_90] : memref<256x54xf32, #tpu.memory_space<vmem>>, vector<256x6xf32>
    tpu.vector_store %arg7[%c0_89, %c12_90], %114 {strides = array<i32>} : memref<256x54xf32, #tpu.memory_space<vmem>>, vector<256x6xf32>,
    %116 = vector.extract_strided_slice %106 {offsets = [1, 0, 0], sizes = [16, 16, 6], strides = [1, 1, 1]} : vector<18x18x6xf32> to vector<16x16x6xf32>
    %117 = vector.shape_cast %116 : vector<16x16x6xf32> to vector<256x6xf32>
    %c0_91 = arith.constant 0 : index
    %c18_92 = arith.constant 18 : index
    %118 = vector.load %arg7[%c0_91, %c18_92] : memref<256x54xf32, #tpu.memory_space<vmem>>, vector<256x6xf32>
    tpu.vector_store %arg7[%c0_91, %c18_92], %117 {strides = array<i32>} : memref<256x54xf32, #tpu.memory_space<vmem>>, vector<256x6xf32>,
    %119 = vector.extract_strided_slice %106 {offsets = [1, 1, 0], sizes = [16, 16, 6], strides = [1, 1, 1]} : vector<18x18x6xf32> to vector<16x16x6xf32>
    %120 = vector.shape_cast %119 : vector<16x16x6xf32> to vector<256x6xf32>
    %c0_93 = arith.constant 0 : index
    %c24_94 = arith.constant 24 : index
    %121 = vector.load %arg7[%c0_93, %c24_94] : memref<256x54xf32, #tpu.memory_space<vmem>>, vector<256x6xf32>
    tpu.vector_store %arg7[%c0_93, %c24_94], %120 {strides = array<i32>} : memref<256x54xf32, #tpu.memory_space<vmem>>, vector<256x6xf32>,
    %122 = vector.extract_strided_slice %106 {offsets = [1, 2, 0], sizes = [16, 16, 6], strides = [1, 1, 1]} : vector<18x18x6xf32> to vector<16x16x6xf32>
    %123 = vector.shape_cast %122 : vector<16x16x6xf32> to vector<256x6xf32>
    %c0_95 = arith.constant 0 : index
    %c30_96 = arith.constant 30 : index
    %124 = vector.load %arg7[%c0_95, %c30_96] : memref<256x54xf32, #tpu.memory_space<vmem>>, vector<256x6xf32>
    tpu.vector_store %arg7[%c0_95, %c30_96], %123 {strides = array<i32>} : memref<256x54xf32, #tpu.memory_space<vmem>>, vector<256x6xf32>,
    %125 = vector.extract_strided_slice %106 {offsets = [2, 0, 0], sizes = [16, 16, 6], strides = [1, 1, 1]} : vector<18x18x6xf32> to vector<16x16x6xf32>
    %126 = vector.shape_cast %125 : vector<16x16x6xf32> to vector<256x6xf32>
    %c0_97 = arith.constant 0 : index
    %c36_98 = arith.constant 36 : index
    %127 = vector.load %arg7[%c0_97, %c36_98] : memref<256x54xf32, #tpu.memory_space<vmem>>, vector<256x6xf32>
    tpu.vector_store %arg7[%c0_97, %c36_98], %126 {strides = array<i32>} : memref<256x54xf32, #tpu.memory_space<vmem>>, vector<256x6xf32>,
    %128 = vector.extract_strided_slice %106 {offsets = [2, 1, 0], sizes = [16, 16, 6], strides = [1, 1, 1]} : vector<18x18x6xf32> to vector<16x16x6xf32>
    %129 = vector.shape_cast %128 : vector<16x16x6xf32> to vector<256x6xf32>
    %c0_99 = arith.constant 0 : index
    %c42_100 = arith.constant 42 : index
    %130 = vector.load %arg7[%c0_99, %c42_100] : memref<256x54xf32, #tpu.memory_space<vmem>>, vector<256x6xf32>
    tpu.vector_store %arg7[%c0_99, %c42_100], %129 {strides = array<i32>} : memref<256x54xf32, #tpu.memory_space<vmem>>, vector<256x6xf32>,
    %131 = vector.extract_strided_slice %106 {offsets = [2, 2, 0], sizes = [16, 16, 6], strides = [1, 1, 1]} : vector<18x18x6xf32> to vector<16x16x6xf32>
    %132 = vector.shape_cast %131 : vector<16x16x6xf32> to vector<256x6xf32>
    %c0_101 = arith.constant 0 : index
    %c48_102 = arith.constant 48 : index
    %133 = vector.load %arg7[%c0_101, %c48_102] : memref<256x54xf32, #tpu.memory_space<vmem>>, vector<256x6xf32>
    tpu.vector_store %arg7[%c0_101, %c48_102], %132 {strides = array<i32>} : memref<256x54xf32, #tpu.memory_space<vmem>>, vector<256x6xf32>,
    %c0_103 = arith.constant 0 : index
    %c0_104 = arith.constant 0 : index
    %134 = vector.load %arg7[%c0_103, %c0_104] : memref<256x54xf32, #tpu.memory_space<vmem>>, vector<256x54xf32>
    %135 = arith.truncf %134 : vector<256x54xf32> to vector<256x54xbf16>
    %c2 = arith.constant 2 : index
    %c0_105 = arith.constant 0 : index
    %c0_106 = arith.constant 0 : index
    %136 = vector.load %arg2[%c2, %c0_105, %c0_106] : memref<3x54x6xbf16, #tpu.memory_space<vmem>>, vector<1x54x6xbf16>
    %137 = vector.shape_cast %136 : vector<1x54x6xbf16> to vector<54x6xbf16>
    %cst_107 = arith.constant dense<0.000000e+00> : vector<256x6xf32>
    %138 = tpu.matmul %135, %137, %cst_107 {dimension_numbers = #tpu.dot_dimension_numbers<[1], [0], [0], [1], [0, 0, 1, 1], [], []>} : vector<256x54xbf16>, vector<54x6xbf16>, vector<256x6xf32> -> vector<256x6xf32>
    %c2_108 = arith.constant 2 : index
    %c0_109 = arith.constant 0 : index
    %c0_110 = arith.constant 0 : index
    %139 = vector.load %arg3[%c2_108, %c0_109, %c0_110] : memref<3x1x6xf32, #tpu.memory_space<vmem>>, vector<1x1x6xf32>
    %140 = vector.shape_cast %139 : vector<1x1x6xf32> to vector<1x6xf32>
    %141 = vector.broadcast %140 : vector<1x6xf32> to vector<256x6xf32>
    %142 = arith.mulf %138, %141 : vector<256x6xf32>
    %c2_111 = arith.constant 2 : index
    %c0_112 = arith.constant 0 : index
    %c0_113 = arith.constant 0 : index
    %143 = vector.load %arg4[%c2_111, %c0_112, %c0_113] : memref<3x1x6xf32, #tpu.memory_space<vmem>>, vector<1x1x6xf32>
    %144 = vector.shape_cast %143 : vector<1x1x6xf32> to vector<1x6xf32>
    %145 = vector.broadcast %144 : vector<1x6xf32> to vector<256x6xf32>
    %146 = arith.addf %142, %145 : vector<256x6xf32>
    %cst_114 = arith.constant 0.000000e+00 : f32
    %147 = vector.broadcast %cst_114 : f32 to vector<256x6xf32>
    %148 = arith.maximumf %146, %147 : vector<256x6xf32>
    %149 = vector.shape_cast %148 : vector<256x6xf32> to vector<16x16x6xf32>
    %c0_115 = arith.constant 0 : index
    %c0_116 = arith.constant 0 : index
    %c0_117 = arith.constant 0 : index
    %c12_118 = arith.constant 12 : index
    %150 = vector.load %arg5[%c0_115, %c0_116, %c0_117, %c12_118] : memref<1x16x16x24xf32, #tpu.memory_space<vmem>>, vector<1x16x16x6xf32>
    %151 = vector.shape_cast %150 : vector<1x16x16x6xf32> to vector<16x16x6xf32>
    %152 = vector.shape_cast %149 : vector<16x16x6xf32> to vector<1x16x16x6xf32>
    tpu.vector_store %arg5[%c0_115, %c0_116, %c0_117, %c12_118], %152 {strides = array<i32>} : memref<1x16x16x24xf32, #tpu.memory_space<vmem>>, vector<1x16x16x6xf32>,
    %153 = vector.extract_strided_slice %3 {offsets = [0, 0, 18], sizes = [16, 16, 6], strides = [1, 1, 1]} : vector<16x16x24xf32> to vector<16x16x6xf32>
    %c0_119 = arith.constant 0 : index
    %c0_120 = arith.constant 0 : index
    %c0_121 = arith.constant 0 : index
    %c18_122 = arith.constant 18 : index
    %154 = vector.load %arg5[%c0_119, %c0_120, %c0_121, %c18_122] : memref<1x16x16x24xf32, #tpu.memory_space<vmem>>, vector<1x16x16x6xf32>
    %155 = vector.shape_cast %154 : vector<1x16x16x6xf32> to vector<16x16x6xf32>
    %156 = vector.shape_cast %153 : vector<16x16x6xf32> to vector<1x16x16x6xf32>
    tpu.vector_store %arg5[%c0_119, %c0_120, %c0_121, %c18_122], %156 {strides = array<i32>} : memref<1x16x16x24xf32, #tpu.memory_space<vmem>>, vector<1x16x16x6xf32>,
    return
  }
  func.func @transform_0(%arg0: i32) -> (i32, i32, i32, i32) {
    %c0_i32 = arith.constant 0 : i32
    %c0_i32_0 = arith.constant 0 : i32
    %c0_i32_1 = arith.constant 0 : i32
    %c0_i32_2 = arith.constant 0 : i32
    return %arg0, %c0_i32, %c0_i32_0, %c0_i32_1 : i32, i32, i32, i32
  }
  func.func @transform_1(%arg0: i32) -> (i32, i32, i32) {
    %c0_i32 = arith.constant 0 : i32
    %c0_i32_0 = arith.constant 0 : i32
    %c0_i32_1 = arith.constant 0 : i32
    %c0_i32_2 = arith.constant 0 : i32
    return %c0_i32, %c0_i32_0, %c0_i32_1 : i32, i32, i32
  }
  func.func @transform_2(%arg0: i32) -> (i32, i32, i32) {
    %c0_i32 = arith.constant 0 : i32
    %c0_i32_0 = arith.constant 0 : i32
    %c0_i32_1 = arith.constant 0 : i32
    %c0_i32_2 = arith.constant 0 : i32
    return %c0_i32, %c0_i32_0, %c0_i32_1 : i32, i32, i32
  }
  func.func @transform_3(%arg0: i32) -> (i32, i32, i32) {
    %c0_i32 = arith.constant 0 : i32
    %c0_i32_0 = arith.constant 0 : i32
    %c0_i32_1 = arith.constant 0 : i32
    %c0_i32_2 = arith.constant 0 : i32
    return %c0_i32, %c0_i32_0, %c0_i32_1 : i32, i32, i32
  }
  func.func @transform_4(%arg0: i32) -> (i32, i32, i32, i32) {
    %c0_i32 = arith.constant 0 : i32
    %c0_i32_0 = arith.constant 0 : i32
    %c0_i32_1 = arith.constant 0 : i32
    %c0_i32_2 = arith.constant 0 : i32
    return %arg0, %c0_i32, %c0_i32_0, %c0_i32_1 : i32, i32, i32, i32
  }
}

module attributes {stable_mosaic.version = 11 : i64} {
  func.func @_matmul_bn_add_relu_kernel(%arg0: i32, %arg1: memref<256x24xf32, #tpu.memory_space<vmem>>, %arg2: memref<24x64xbf16, #tpu.memory_space<vmem>>, %arg3: memref<1x64xf32, #tpu.memory_space<vmem>>, %arg4: memref<1x64xf32, #tpu.memory_space<vmem>>, %arg5: memref<256x64xf32, #tpu.memory_space<vmem>>, %arg6: memref<256x64xf32, #tpu.memory_space<vmem>>) attributes {dimension_semantics = [#tpu.dimension_semantics<parallel>], iteration_bounds = array<i64: 2>, scalar_prefetch = 0 : i64, scratch_operands = 0 : i64, tpu.core_type = #tpu.core_type<tc>, window_params = [{transform_indices = @transform_0, window_bounds = array<i64: 256, 24>}, {pipeline_mode = #tpu.pipeline_mode<synchronous>, transform_indices = @transform_1, window_bounds = array<i64: 24, 64>}, {pipeline_mode = #tpu.pipeline_mode<synchronous>, transform_indices = @transform_2, window_bounds = array<i64: 1, 64>}, {pipeline_mode = #tpu.pipeline_mode<synchronous>, transform_indices = @transform_3, window_bounds = array<i64: 1, 64>}, {transform_indices = @transform_4, window_bounds = array<i64: 256, 64>}, {transform_indices = @transform_5, window_bounds = array<i64: 256, 64>}]} {
    %c0 = arith.constant 0 : index
    %c0_0 = arith.constant 0 : index
    %0 = vector.load %arg1[%c0, %c0_0] : memref<256x24xf32, #tpu.memory_space<vmem>>, vector<256x24xf32>
    %1 = arith.truncf %0 : vector<256x24xf32> to vector<256x24xbf16>
    %c0_1 = arith.constant 0 : index
    %c0_2 = arith.constant 0 : index
    %2 = vector.load %arg2[%c0_1, %c0_2] : memref<24x64xbf16, #tpu.memory_space<vmem>>, vector<24x64xbf16>
    %cst = arith.constant dense<0.000000e+00> : vector<256x64xf32>
    %3 = tpu.matmul %1, %2, %cst {dimension_numbers = #tpu.dot_dimension_numbers<[1], [0], [0], [1], [0, 0, 1, 1], [], []>} : vector<256x24xbf16>, vector<24x64xbf16>, vector<256x64xf32> -> vector<256x64xf32>
    %c0_3 = arith.constant 0 : index
    %c0_4 = arith.constant 0 : index
    %4 = vector.load %arg3[%c0_3, %c0_4] : memref<1x64xf32, #tpu.memory_space<vmem>>, vector<1x64xf32>
    %5 = vector.broadcast %4 : vector<1x64xf32> to vector<256x64xf32>
    %6 = arith.mulf %3, %5 : vector<256x64xf32>
    %c0_5 = arith.constant 0 : index
    %c0_6 = arith.constant 0 : index
    %7 = vector.load %arg4[%c0_5, %c0_6] : memref<1x64xf32, #tpu.memory_space<vmem>>, vector<1x64xf32>
    %8 = vector.broadcast %7 : vector<1x64xf32> to vector<256x64xf32>
    %9 = arith.addf %6, %8 : vector<256x64xf32>
    %c0_7 = arith.constant 0 : index
    %c0_8 = arith.constant 0 : index
    %10 = vector.load %arg5[%c0_7, %c0_8] : memref<256x64xf32, #tpu.memory_space<vmem>>, vector<256x64xf32>
    %11 = arith.addf %9, %10 : vector<256x64xf32>
    %cst_9 = arith.constant 0.000000e+00 : f32
    %12 = vector.broadcast %cst_9 : f32 to vector<256x64xf32>
    %13 = arith.maximumf %11, %12 : vector<256x64xf32>
    %c0_10 = arith.constant 0 : index
    %c0_11 = arith.constant 0 : index
    %14 = vector.load %arg6[%c0_10, %c0_11] : memref<256x64xf32, #tpu.memory_space<vmem>>, vector<256x64xf32>
    tpu.vector_store %arg6[%c0_10, %c0_11], %13 {strides = array<i32>} : memref<256x64xf32, #tpu.memory_space<vmem>>, vector<256x64xf32>,
    return
  }
  func.func @transform_0(%arg0: i32) -> (i32, i32) {
    %c0_i32 = arith.constant 0 : i32
    %c0_i32_0 = arith.constant 0 : i32
    return %arg0, %c0_i32 : i32, i32
  }
  func.func @transform_1(%arg0: i32) -> (i32, i32) {
    %c0_i32 = arith.constant 0 : i32
    %c0_i32_0 = arith.constant 0 : i32
    %c0_i32_1 = arith.constant 0 : i32
    return %c0_i32, %c0_i32_0 : i32, i32
  }
  func.func @transform_2(%arg0: i32) -> (i32, i32) {
    %c0_i32 = arith.constant 0 : i32
    %c0_i32_0 = arith.constant 0 : i32
    %c0_i32_1 = arith.constant 0 : i32
    return %c0_i32, %c0_i32_0 : i32, i32
  }
  func.func @transform_3(%arg0: i32) -> (i32, i32) {
    %c0_i32 = arith.constant 0 : i32
    %c0_i32_0 = arith.constant 0 : i32
    %c0_i32_1 = arith.constant 0 : i32
    return %c0_i32, %c0_i32_0 : i32, i32
  }
  func.func @transform_4(%arg0: i32) -> (i32, i32) {
    %c0_i32 = arith.constant 0 : i32
    %c0_i32_0 = arith.constant 0 : i32
    return %arg0, %c0_i32 : i32, i32
  }
  func.func @transform_5(%arg0: i32) -> (i32, i32) {
    %c0_i32 = arith.constant 0 : i32
    %c0_i32_0 = arith.constant 0 : i32
    return %arg0, %c0_i32 : i32, i32
  }
}

</mosaic_0001>

<llo_original>
// kernel: bottle2neck_forward.3
$region0: #{bottle2neck_forward.3}
  #allocation0 [shape = 'u32[]', space=smem, size = 0x4, offset = 0x4, fixed_abs, tag = 'smem constant byte address 0x4 - core index']
  #allocation1 [shape = 'u32[144,128]{1,0:T(1,128)}', space=vmem, size = 0x12000, scoped, tag = 'internal scratch']
  %s0 = inlined_call_operand.hbm [shape: f32[512,64], index: 0, kind: input, shape index: {}]
  %s1 = inlined_call_operand.vmem [shape: bf16[64,24], index: 1, kind: input, shape index: {}]
  %s2 = inlined_call_operand.vmem [shape: f32[1,24], index: 2, kind: input, shape index: {}]
  %s3 = inlined_call_operand.vmem [shape: f32[1,24], index: 3, kind: input, shape index: {}]
  %s4 = inlined_call_operand.vmem [shape: f32[512,24], index: 4, kind: output, shape index: {}]
  %s5 = sld [smem:[#allocation0]]
  $region53: #{bottle2neck_forward.3} parent=0
    _
  %s7 = ssub.s32 1, %s5
  %s8 = scalar_select 0, %s7, %s5
  $region1: #{bottle2neck_forward.3} parent=0
    #allocation2 [shape = 'u8[262144]{0}', space=vmem, size = 0x40000, scoped, tag = 'input window, operand 0']
    #allocation3 [shape = 's32[2]{0}', space=sflag, size = 0x8, scoped, tag = 'scoped memory for bottle2neck_forward.3']
    %9 = vsyncpa [#allocation3], 0
    %s10 = scalar_lea.sflag [#allocation3], 1
    %11 = vsyncpa %s10, 0
    loop: start=0, step=1, limit=4
    $region2: #{bottle2neck_forward.3} parent=1 // loop_pre_header
      _
    $region3: #{bottle2neck_forward.3} parent=1 // loop_header
      %s13 = sphi 0, %s17
      %p14 = scmp.ge.s32.totalorder %s13, 4
      %s23 = sphi 0, %s25
      %s26 = sphi 0, %s23
      %s27 = sphi 0, %s26
      %s43 = sphi 0, %s27
      %s47 = sphi 0, %s47
      %s49 = sphi 0, %s47
      %s50 = sphi 0, %s49
      %s64 = sphi 0, %s50
      %s68 = sphi 0, %s68
      %s70 = sphi 0, %s68
      %s71 = sphi 0, %s70
      %s85 = sphi 0, %s71
      %s89 = sphi 0, %s89
      %s91 = sphi 0, %s89
      %s92 = sphi 0, %s91
      %s106 = sphi 0, %s92
      %s112 = sphi 0, %s114
      %s115 = sphi 0, %s112
      %s116 = sphi 0, %s115
      %s132 = sphi 0, %s116
    $region4: #{bottle2neck_forward.3} parent=1 // loop_header_branch
      %16 = sbr.rel (%p14) target = $region8
    $region5: #{bottle2neck_forward.3} parent=1 // loop_body
      %s18 = ssub.s32 %s13, 1
      %s19 = ssub.s32 %s13, 2
      %s20 = sadd.s32 %s13, 1
      %s21 = ssub.s32 %s13, %s20
      %p22 = scmp.eq.s32.totalorder %s21, 0
      %s24 = sadd.s32 %s23, 1
      %s25 = scalar_select %p22, %s23, %s24
      %p28 = pneg %p22
      %p29 = scmp.eq.s32.totalorder %s13, 1
      %p30 = por %p28, %p29
      %p31 = scmp.ne.s32.totalorder %s23, %s26
      %p32 = scmp.eq.s32.totalorder %s13, 0
      %p33 = por %p31, %p32
      %p34 = scmp.ne.s32.totalorder %s23, %s26
      %p35 = scmp.eq.s32.totalorder %s18, 1
      %p36 = por %p34, %p35
      %p37 = scmp.ne.s32.totalorder %s26, %s27
      %p38 = scmp.eq.s32.totalorder %s18, 0
      %p39 = por %p37, %p38
      %p40 = scmp.ne.s32.totalorder %s26, %s27
      %p41 = scmp.eq.s32.totalorder %s19, 1
      %p42 = por %p40, %p41
      %p44 = scmp.ne.s32.totalorder %s27, %s43
      %p45 = scmp.eq.s32.totalorder %s19, 0
      %p46 = por %p44, %p45
      %s48 = sadd.s32 %s47, 1
      %p51 = scmp.eq.s32.totalorder %s13, 1
      %p52 = scmp.ne.s32.totalorder %s47, %s49
      %p53 = scmp.eq.s32.totalorder %s13, 0
      %p54 = por %p52, %p53
      %p55 = scmp.ne.s32.totalorder %s47, %s49
      %p56 = scmp.eq.s32.totalorder %s18, 1
      %p57 = por %p55, %p56
      %p58 = scmp.ne.s32.totalorder %s49, %s50
      %p59 = scmp.eq.s32.totalorder %s18, 0
      %p60 = por %p58, %p59
      %p61 = scmp.ne.s32.totalorder %s49, %s50
      %p62 = scmp.eq.s32.totalorder %s19, 1
      %p63 = por %p61, %p62
      %p65 = scmp.ne.s32.totalorder %s50, %s64
      %p66 = scmp.eq.s32.totalorder %s19, 0
      %p67 = por %p65, %p66
      %s69 = sadd.s32 %s68, 1
      %p72 = scmp.eq.s32.totalorder %s13, 1
      %p73 = scmp.ne.s32.totalorder %s68, %s70
      %p74 = scmp.eq.s32.totalorder %s13, 0
      %p75 = por %p73, %p74
      %p76 = scmp.ne.s32.totalorder %s68, %s70
      %p77 = scmp.eq.s32.totalorder %s18, 1
      %p78 = por %p76, %p77
      %p79 = scmp.ne.s32.totalorder %s70, %s71
      %p80 = scmp.eq.s32.totalorder %s18, 0
      %p81 = por %p79, %p80
      %p82 = scmp.ne.s32.totalorder %s70, %s71
      %p83 = scmp.eq.s32.totalorder %s19, 1
      %p84 = por %p82, %p83
      %p86 = scmp.ne.s32.totalorder %s71, %s85
      %p87 = scmp.eq.s32.totalorder %s19, 0
      %p88 = por %p86, %p87
      %s90 = sadd.s32 %s89, 1
      %p93 = scmp.eq.s32.totalorder %s13, 1
      %p94 = scmp.ne.s32.totalorder %s89, %s91
      %p95 = scmp.eq.s32.totalorder %s13, 0
      %p96 = por %p94, %p95
      %p97 = scmp.ne.s32.totalorder %s89, %s91
      %p98 = scmp.eq.s32.totalorder %s18, 1
      %p99 = por %p97, %p98
      %p100 = scmp.ne.s32.totalorder %s91, %s92
      %p101 = scmp.eq.s32.totalorder %s18, 0
      %p102 = por %p100, %p101
      %p103 = scmp.ne.s32.totalorder %s91, %s92
      %p104 = scmp.eq.s32.totalorder %s19, 1
      %p105 = por %p103, %p104
      %p107 = scmp.ne.s32.totalorder %s92, %s106
      %p108 = scmp.eq.s32.totalorder %s19, 0
      %p109 = por %p107, %p108
      %s110 = ssub.s32 %s13, %s20
      %p111 = scmp.eq.s32.totalorder %s110, 0
      %s113 = sadd.s32 %s112, 1
      %s114 = scalar_select %p111, %s112, %s113
      %p117 = pneg %p111
      %p118 = scmp.eq.s32.totalorder %s13, 1
      %p119 = por %p117, %p118
      %p120 = scmp.ne.s32.totalorder %s112, %s115
      %p121 = scmp.eq.s32.totalorder %s13, 0
      %p122 = por %p120, %p121
      %p123 = scmp.ne.s32.totalorder %s112, %s115
      %p124 = scmp.eq.s32.totalorder %s18, 1
      %p125 = por %p123, %p124
      %p126 = scmp.ne.s32.totalorder %s115, %s116
      %p127 = scmp.eq.s32.totalorder %s18, 0
      %p128 = por %p126, %p127
      %p129 = scmp.ne.s32.totalorder %s115, %s116
      %p130 = scmp.eq.s32.totalorder %s19, 1
      %p131 = por %p129, %p130
      %p133 = scmp.ne.s32.totalorder %s116, %s132
      %p134 = scmp.eq.s32.totalorder %s19, 0
      %p135 = por %p133, %p134
      %p136 = scmp.le.s32.totalorder 1, %s13
      %p137 = scmp.lt.s32.totalorder %s13, 3
      %p138 = pnand %p136, %p137
      %p139 = pneg %p138
      // Predicated region
      $region9: #{bottle2neck_forward.3} parent=5 // pred_check
        _
      $region10: #{bottle2neck_forward.3} parent=5 // pred_check_branch
        %141 = sbr.rel (%p138) target = $region12
      $region11: #{bottle2neck_forward.3} parent=5 // pred_region
        %s142 = ssub.s32 %s13, 1
        // Predicated region
        $region13: #{bottle2neck_forward.3} parent=11 // pred_check
          %p143 = pneg %p60
        $region14: #{bottle2neck_forward.3} parent=11 // pred_check_branch
          %145 = sbr.rel (%p143) target = $region16
        $region15: #{bottle2neck_forward.3} parent=11 // pred_region
          _
        $region16: #{bottle2neck_forward.3} parent=11 // pred_fallthru
          _
        // Predicated region
        $region17: #{bottle2neck_forward.3} parent=11 // pred_check
          %p146 = pneg %p81
        $region18: #{bottle2neck_forward.3} parent=11 // pred_check_branch
          %148 = sbr.rel (%p146) target = $region20
        $region19: #{bottle2neck_forward.3} parent=11 // pred_region
          _
        $region20: #{bottle2neck_forward.3} parent=11 // pred_fallthru
          _
        // Predicated region
        $region21: #{bottle2neck_forward.3} parent=11 // pred_check
          %p149 = pneg %p102
        $region22: #{bottle2neck_forward.3} parent=11 // pred_check_branch
          %151 = sbr.rel (%p149) target = $region24
        $region23: #{bottle2neck_forward.3} parent=11 // pred_region
          _
        $region24: #{bottle2neck_forward.3} parent=11 // pred_fallthru
          _
      $region12: #{bottle2neck_forward.3} parent=5 // pred_fallthru
        _
      %p152 = scmp.lt.s32.totalorder %s13, 2
      // Predicated region
      $region25: #{bottle2neck_forward.3} parent=5 // pred_check
        %p153 = pneg %p152
      $region26: #{bottle2neck_forward.3} parent=5 // pred_check_branch
        %155 = sbr.rel (%p153) target = $region28
      $region27: #{bottle2neck_forward.3} parent=5 // pred_region
        // Predicated region
        $region29: #{bottle2neck_forward.3} parent=27 // pred_check
          %p156 = pneg %p33
        $region30: #{bottle2neck_forward.3} parent=27 // pred_check_branch
          %158 = sbr.rel (%p156) target = $region32
        $region31: #{bottle2neck_forward.3} parent=27 // pred_region
          %s159 = sand.u32 %s23, 1
          %s160 = scalar_lea.sflag [#allocation3], %s159
          %s161 = sand.u32 %s23, 1
          %s162 = smul.addr %s161, 256
          %s163 = scalar_lea.vmem [#allocation2], %s162
          %s164 = smul.u32 32, %s13
          %s166 = ssub.s32 4096, 4096
          %167 = vsyncadd %s160, %s166
          %s168 = smul.addr %s164, 128
          %s169 = scalar_lea.hbm %s0, %s168
          %s170 = sshll.u32 %s163, 4
          %s171 = int_to_ptr.vmem [resolvable:$true] %s170
          %176 = dma.hbm_to_vmem [thread:$0]  %s169, 4096, %s171, %s160, 128, 128, 8
        $region32: #{bottle2neck_forward.3} parent=27 // pred_fallthru
          _
      $region28: #{bottle2neck_forward.3} parent=5 // pred_fallthru
        _
      %p177 = scmp.le.s32.totalorder 1, %s13
      %p178 = scmp.lt.s32.totalorder %s13, 3
      %p179 = pnand %p177, %p178
      %p180 = pneg %p179
      // Predicated region
      $region33: #{bottle2neck_forward.3} parent=5 // pred_check
        _
      $region34: #{bottle2neck_forward.3} parent=5 // pred_check_branch
        %182 = sbr.rel (%p179) target = $region36
      $region35: #{bottle2neck_forward.3} parent=5 // pred_region
        %s183 = ssub.s32 %s13, 1
        %s184 = sand.u32 %s26, 1
        %s185 = scalar_lea.sflag [#allocation3], %s184
        %s186 = sand.u32 %s26, 1
        %s187 = smul.addr %s186, 256
        %s188 = scalar_lea.vmem [#allocation2], %s187
        // Predicated region
        $region37: #{bottle2neck_forward.3} parent=35 // pred_check
          %p189 = pneg %p39
        $region38: #{bottle2neck_forward.3} parent=35 // pred_check_branch
          %191 = sbr.rel (%p189) target = $region40
        $region39: #{bottle2neck_forward.3} parent=35 // pred_region
          %192 = dma.done %s185, 4096
        $region40: #{bottle2neck_forward.3} parent=35 // pred_fallthru
          _
        %s193 = sand.u32 %s26, 1
        %s194 = scalar_lea.sflag [#allocation3], %s193
        %s195 = sand.u32 %s26, 1
        %s196 = smul.addr %s195, 256
        %s197 = scalar_lea.vmem [#allocation2], %s196
        %p198 = pneg %p39
        %p199 = pneg %p36
        %p200 = pneg %p60
        %p201 = pneg %p57
        %p202 = pneg %p81
        %p203 = pneg %p78
        %p204 = pneg %p102
        %p205 = pneg %p99
        %p206 = pneg %p128
        %p207 = pneg %p125
        %s208 = smul.u32 32, %s18
        %p209 = scmp.lt.s32.totalorder %s208, 63
        %s210 = scalar_select %p209, %s208, 63
        %s211 = smul.addr %s210, 8
        %s212 = scalar_lea.vmem %s4, %s211
        %s213 = smul.u32 32, %s18
        %s214 = smul.u32 32, %s18
        %p215 = scmp.lt.s32.totalorder %s214, 63
        %s216 = scalar_select %p215, %s214, 63
        %s217 = smul.addr %s216, 8
        %s218 = scalar_lea.vmem %s4, %s217
        %s219 = smul.u32 32, %s18
        %v221 = vld [vmem:[%s188] sm:$0xff]
        %v222 = vld [vmem:[%s188 + $0x8] sm:$0xff]
        %v223 = vld [vmem:[%s188 + $0x10] sm:$0xff]
        %v224 = vld [vmem:[%s188 + $0x18] sm:$0xff]
        %v225 = vld [vmem:[%s188 + $0x20] sm:$0xff]
        %v226 = vld [vmem:[%s188 + $0x28] sm:$0xff]
        %v227 = vld [vmem:[%s188 + $0x30] sm:$0xff]
        %v228 = vld [vmem:[%s188 + $0x38] sm:$0xff]
        %v229 = vld [vmem:[%s188 + $0x40] sm:$0xff]
        %v230 = vld [vmem:[%s188 + $0x48] sm:$0xff]
        %v231 = vld [vmem:[%s188 + $0x50] sm:$0xff]
        %v232 = vld [vmem:[%s188 + $0x58] sm:$0xff]
        %v233 = vld [vmem:[%s188 + $0x60] sm:$0xff]
        %v234 = vld [vmem:[%s188 + $0x68] sm:$0xff]
        %v235 = vld [vmem:[%s188 + $0x70] sm:$0xff]
        %v236 = vld [vmem:[%s188 + $0x78] sm:$0xff]
        %v237 = vld [vmem:[%s188 + $0x80] sm:$0xff]
        %v238 = vld [vmem:[%s188 + $0x88] sm:$0xff]
        %v239 = vld [vmem:[%s188 + $0x90] sm:$0xff]
        %v240 = vld [vmem:[%s188 + $0x98] sm:$0xff]
        %v241 = vld [vmem:[%s188 + $0xa0] sm:$0xff]
        %v242 = vld [vmem:[%s188 + $0xa8] sm:$0xff]
        %v243 = vld [vmem:[%s188 + $0xb0] sm:$0xff]
        %v244 = vld [vmem:[%s188 + $0xb8] sm:$0xff]
        %v245 = vld [vmem:[%s188 + $0xc0] sm:$0xff]
        %v246 = vld [vmem:[%s188 + $0xc8] sm:$0xff]
        %v247 = vld [vmem:[%s188 + $0xd0] sm:$0xff]
        %v248 = vld [vmem:[%s188 + $0xd8] sm:$0xff]
        %v249 = vld [vmem:[%s188 + $0xe0] sm:$0xff]
        %v250 = vld [vmem:[%s188 + $0xe8] sm:$0xff]
        %v251 = vld [vmem:[%s188 + $0xf0] sm:$0xff]
        %v252 = vld [vmem:[%s188 + $0xf8] sm:$0xff]
        %v253 = vpack.c.bf16 %v222, %v221
        %v254 = vpack.c.bf16 %v224, %v223
        %v255 = vpack.c.bf16 %v226, %v225
        %v256 = vpack.c.bf16 %v228, %v227
        %v257 = vpack.c.bf16 %v230, %v229
        %v258 = vpack.c.bf16 %v232, %v231
        %v259 = vpack.c.bf16 %v234, %v233
        %v260 = vpack.c.bf16 %v236, %v235
        %v261 = vpack.c.bf16 %v238, %v237
        %v262 = vpack.c.bf16 %v240, %v239
        %v263 = vpack.c.bf16 %v242, %v241
        %v264 = vpack.c.bf16 %v244, %v243
        %v265 = vpack.c.bf16 %v246, %v245
        %v266 = vpack.c.bf16 %v248, %v247
        %v267 = vpack.c.bf16 %v250, %v249
        %v268 = vpack.c.bf16 %v252, %v251
        %v269 = vld [vmem:[%s1] sm:$0xf]
        %v270 = vld [vmem:[%s1 + $0x4] sm:$0xf]
        %v271 = vld [vmem:[%s1 + $0x8] sm:$0xf]
        %v272 = vld [vmem:[%s1 + $0xc] sm:$0xf]
        %v273 = vld [vmem:[%s1 + $0x10] sm:$0xf]
        %v274 = vld [vmem:[%s1 + $0x14] sm:$0xf]
        %v275 = vld [vmem:[%s1 + $0x18] sm:$0xf]
        %v276 = vld [vmem:[%s1 + $0x1c] sm:$0xf]
        %v285 = vunpack.c.l.b16 %v269
        %v286 = vunpack.c.l.b16 %v270
        %v287 = vunpack.c.l.b16 %v271
        %v288 = vunpack.c.l.b16 %v272
        %v289 = vunpack.c.l.b16 %v273
        %v290 = vunpack.c.l.b16 %v274
        %v291 = vunpack.c.l.b16 %v275
        %v292 = vunpack.c.l.b16 %v276
        %v293 = vpack.c.b16 %v286, %v285
        %v294 = vpack.c.b16 %v288, %v287
        %v295 = vpack.c.b16 %v290, %v289
        %v296 = vpack.c.b16 %v292, %v291
        %vm301 = vcmask 523264
        %v303 = vsel %vm301, %v253, 0
        %v306 = vsel %vm301, %v254, 0
        %v309 = vsel %vm301, %v255, 0
        %v312 = vsel %vm301, %v256, 0
        %v315 = vsel %vm301, %v257, 0
        %v318 = vsel %vm301, %v258, 0
        %v321 = vsel %vm301, %v259, 0
        %v324 = vsel %vm301, %v260, 0
        %v327 = vsel %vm301, %v261, 0
        %v330 = vsel %vm301, %v262, 0
        %v333 = vsel %vm301, %v263, 0
        %v336 = vsel %vm301, %v264, 0
        %v339 = vsel %vm301, %v265, 0
        %v342 = vsel %vm301, %v266, 0
        %v345 = vsel %vm301, %v267, 0
        %v348 = vsel %vm301, %v268, 0
        %350 = vmatprep.subr.bf16.mxu0 0
        %351 = vmatpush1.bf16.msra.mxu0 0
        %352 = vmatprep.subr.bf16.mxu0 0
        %353 = vmatpush1.bf16.msra.mxu0 0
        %354 = vmatprep.subr.bf16.mxu0 0
        %355 = vmatpush1.bf16.msra.mxu0 0
        %356 = vmatprep.subr.bf16.mxu0 0
        %357 = vmatpush1.bf16.msra.mxu0 0
        %358 = vmatprep.subr.bf16.mxu0 0
        %359 = vmatpush1.bf16.msra.mxu0 %v296
        %360 = vmatprep.subr.bf16.mxu0 0
        %361 = vmatpush1.bf16.msra.mxu0 %v295
        %362 = vmatprep.subr.bf16.mxu0 0
        %363 = vmatpush1.bf16.msra.mxu0 %v294
        %364 = vmatprep.subr.bf16.mxu0 0
        %365 = vmatpush1.bf16.msra.mxu0 %v293
        %366 = vmatprep.subr.bf16.mxu0 0
        %367 = vmatpush2.bf16.msra.mxu0 0
        %368 = vmatprep.subr.bf16.mxu0 0
        %369 = vmatpush2.bf16.msra.mxu0 0
        %370 = vmatprep.subr.bf16.mxu0 0
        %371 = vmatpush2.bf16.msra.mxu0 0
        %372 = vmatprep.subr.bf16.mxu0 0
        %373 = vmatpush2.bf16.msra.mxu0 0
        %374 = vmatprep.subr.bf16.mxu0 0
        %375 = vmatpush2.bf16.msra.mxu0 0
        %376 = vmatprep.subr.bf16.mxu0 0
        %377 = vmatpush2.bf16.msra.mxu0 0
        %378 = vmatprep.subr.bf16.mxu0 0
        %379 = vmatpush2.bf16.msra.mxu0 0
        %380 = vmatprep.subr.bf16.mxu0 0
        %381 = vmatpush2.bf16.msra.mxu0 0
        %382 = vmatprep.mubr.bf16.mxu0 0
        %383 = vmatmul.mubr.bf16.gmra.mxu0 %v303
        %v384 = vpop.f32.mrf.mxu0
        %v385 = vadd.f32 0.0, %v384
        %v386 = vpop.f32.mrf.mxu0
        %v387 = vpop.f32.mrf.mxu0
        %v388 = vadd.f32 0.0, %v387
        %v389 = vpop.f32.mrf.mxu0
        %390 = vmatprep.mubr.bf16.mxu0 0
        %391 = vmatmul.mubr.bf16.gmra.mxu0 %v306
        %v392 = vpop.f32.mrf.mxu0
        %v393 = vadd.f32 0.0, %v392
        %v394 = vpop.f32.mrf.mxu0
        %v395 = vpop.f32.mrf.mxu0
        %v396 = vadd.f32 0.0, %v395
        %v397 = vpop.f32.mrf.mxu0
        %398 = vmatprep.mubr.bf16.mxu0 0
        %399 = vmatmul.mubr.bf16.gmra.mxu0 %v309
        %v400 = vpop.f32.mrf.mxu0
        %v401 = vadd.f32 0.0, %v400
        %v402 = vpop.f32.mrf.mxu0
        %v403 = vpop.f32.mrf.mxu0
        %v404 = vadd.f32 0.0, %v403
        %v405 = vpop.f32.mrf.mxu0
        %406 = vmatprep.mubr.bf16.mxu0 0
        %407 = vmatmul.mubr.bf16.gmra.mxu0 %v312
        %v408 = vpop.f32.mrf.mxu0
        %v409 = vadd.f32 0.0, %v408
        %v410 = vpop.f32.mrf.mxu0
        %v411 = vpop.f32.mrf.mxu0
        %v412 = vadd.f32 0.0, %v411
        %v413 = vpop.f32.mrf.mxu0
        %414 = vmatprep.mubr.bf16.mxu0 0
        %415 = vmatmul.mubr.bf16.gmra.mxu0 %v315
        %v416 = vpop.f32.mrf.mxu0
        %v417 = vadd.f32 0.0, %v416
        %v418 = vpop.f32.mrf.mxu0
        %v419 = vpop.f32.mrf.mxu0
        %v420 = vadd.f32 0.0, %v419
        %v421 = vpop.f32.mrf.mxu0
        %422 = vmatprep.mubr.bf16.mxu0 0
        %423 = vmatmul.mubr.bf16.gmra.mxu0 %v318
        %v424 = vpop.f32.mrf.mxu0
        %v425 = vadd.f32 0.0, %v424
        %v426 = vpop.f32.mrf.mxu0
        %v427 = vpop.f32.mrf.mxu0
        %v428 = vadd.f32 0.0, %v427
        %v429 = vpop.f32.mrf.mxu0
        %430 = vmatprep.mubr.bf16.mxu0 0
        %431 = vmatmul.mubr.bf16.gmra.mxu0 %v321
        %v432 = vpop.f32.mrf.mxu0
        %v433 = vadd.f32 0.0, %v432
        %v434 = vpop.f32.mrf.mxu0
        %v435 = vpop.f32.mrf.mxu0
        %v436 = vadd.f32 0.0, %v435
        %v437 = vpop.f32.mrf.mxu0
        %438 = vmatprep.mubr.bf16.mxu0 0
        %439 = vmatmul.mubr.bf16.gmra.mxu0 %v324
        %v440 = vpop.f32.mrf.mxu0
        %v441 = vadd.f32 0.0, %v440
        %v442 = vpop.f32.mrf.mxu0
        %v443 = vpop.f32.mrf.mxu0
        %v444 = vadd.f32 0.0, %v443
        %v445 = vpop.f32.mrf.mxu0
        %446 = vmatprep.mubr.bf16.mxu0 0
        %447 = vmatmul.mubr.bf16.gmra.mxu0 %v327
        %v448 = vpop.f32.mrf.mxu0
        %v449 = vadd.f32 0.0, %v448
        %v450 = vpop.f32.mrf.mxu0
        %v451 = vpop.f32.mrf.mxu0
        %v452 = vadd.f32 0.0, %v451
        %v453 = vpop.f32.mrf.mxu0
        %454 = vmatprep.mubr.bf16.mxu0 0
        %455 = vmatmul.mubr.bf16.gmra.mxu0 %v330
        %v456 = vpop.f32.mrf.mxu0
        %v457 = vadd.f32 0.0, %v456
        %v458 = vpop.f32.mrf.mxu0
        %v459 = vpop.f32.mrf.mxu0
        %v460 = vadd.f32 0.0, %v459
        %v461 = vpop.f32.mrf.mxu0
        %462 = vmatprep.mubr.bf16.mxu0 0
        %463 = vmatmul.mubr.bf16.gmra.mxu0 %v333
        %v464 = vpop.f32.mrf.mxu0
        %v465 = vadd.f32 0.0, %v464
        %v466 = vpop.f32.mrf.mxu0
        %v467 = vpop.f32.mrf.mxu0
        %v468 = vadd.f32 0.0, %v467
        %v469 = vpop.f32.mrf.mxu0
        %470 = vmatprep.mubr.bf16.mxu0 0
        %471 = vmatmul.mubr.bf16.gmra.mxu0 %v336
        %v472 = vpop.f32.mrf.mxu0
        %v473 = vadd.f32 0.0, %v472
        %v474 = vpop.f32.mrf.mxu0
        %v475 = vpop.f32.mrf.mxu0
        %v476 = vadd.f32 0.0, %v475
        %v477 = vpop.f32.mrf.mxu0
        %478 = vmatprep.mubr.bf16.mxu0 0
        %479 = vmatmul.mubr.bf16.gmra.mxu0 %v339
        %v480 = vpop.f32.mrf.mxu0
        %v481 = vadd.f32 0.0, %v480
        %v482 = vpop.f32.mrf.mxu0
        %v483 = vpop.f32.mrf.mxu0
        %v484 = vadd.f32 0.0, %v483
        %v485 = vpop.f32.mrf.mxu0
        %486 = vmatprep.mubr.bf16.mxu0 0
        %487 = vmatmul.mubr.bf16.gmra.mxu0 %v342
        %v488 = vpop.f32.mrf.mxu0
        %v489 = vadd.f32 0.0, %v488
        %v490 = vpop.f32.mrf.mxu0
        %v491 = vpop.f32.mrf.mxu0
        %v492 = vadd.f32 0.0, %v491
        %v493 = vpop.f32.mrf.mxu0
        %494 = vmatprep.mubr.bf16.mxu0 0
        %495 = vmatmul.mubr.bf16.gmra.mxu0 %v345
        %v496 = vpop.f32.mrf.mxu0
        %v497 = vadd.f32 0.0, %v496
        %v498 = vpop.f32.mrf.mxu0
        %v499 = vpop.f32.mrf.mxu0
        %v500 = vadd.f32 0.0, %v499
        %v501 = vpop.f32.mrf.mxu0
        %502 = vmatprep.mubr.bf16.mxu0 0
        %503 = vmatmul.mubr.bf16.gmra.mxu0 %v348
        %v504 = vpop.f32.mrf.mxu0
        %v505 = vadd.f32 0.0, %v504
        %v506 = vpop.f32.mrf.mxu0
        %v507 = vpop.f32.mrf.mxu0
        %v508 = vadd.f32 0.0, %v507
        %v509 = vpop.f32.mrf.mxu0
        %510 = vdwg.mxu0
        %v511 = vld [vmem:[%s2] sm:$0x1]
        %v513 = vlaneseq
        %v514 = vshrl.u32 %v513, 7
        %v515 = vsub.s32 0, %v514
        %v516 = vrot.slane %v511, %v515
        %v518 = vmul.f32 %v385, %v516
        %v519 = vmul.f32 %v388, %v516
        %v520 = vmul.f32 %v393, %v516
        %v521 = vmul.f32 %v396, %v516
        %v522 = vmul.f32 %v401, %v516
        %v523 = vmul.f32 %v404, %v516
        %v524 = vmul.f32 %v409, %v516
        %v525 = vmul.f32 %v412, %v516
        %v526 = vmul.f32 %v417, %v516
        %v527 = vmul.f32 %v420, %v516
        %v528 = vmul.f32 %v425, %v516
        %v529 = vmul.f32 %v428, %v516
        %v530 = vmul.f32 %v433, %v516
        %v531 = vmul.f32 %v436, %v516
        %v532 = vmul.f32 %v441, %v516
        %v533 = vmul.f32 %v444, %v516
        %v534 = vmul.f32 %v449, %v516
        %v535 = vmul.f32 %v452, %v516
        %v536 = vmul.f32 %v457, %v516
        %v537 = vmul.f32 %v460, %v516
        %v538 = vmul.f32 %v465, %v516
        %v539 = vmul.f32 %v468, %v516
        %v540 = vmul.f32 %v473, %v516
        %v541 = vmul.f32 %v476, %v516
        %v542 = vmul.f32 %v481, %v516
        %v543 = vmul.f32 %v484, %v516
        %v544 = vmul.f32 %v489, %v516
        %v545 = vmul.f32 %v492, %v516
        %v546 = vmul.f32 %v497, %v516
        %v547 = vmul.f32 %v500, %v516
        %v548 = vmul.f32 %v505, %v516
        %v549 = vmul.f32 %v508, %v516
        %v550 = vld [vmem:[%s3] sm:$0x1]
        %v552 = vlaneseq
        %v553 = vshrl.u32 %v552, 7
        %v554 = vsub.s32 0, %v553
        %v555 = vrot.slane %v550, %v554
        %v557 = vadd.f32 %v518, %v555
        %v558 = vadd.f32 %v519, %v555
        %v559 = vadd.f32 %v520, %v555
        %v560 = vadd.f32 %v521, %v555
        %v561 = vadd.f32 %v522, %v555
        %v562 = vadd.f32 %v523, %v555
        %v563 = vadd.f32 %v524, %v555
        %v564 = vadd.f32 %v525, %v555
        %v565 = vadd.f32 %v526, %v555
        %v566 = vadd.f32 %v527, %v555
        %v567 = vadd.f32 %v528, %v555
        %v568 = vadd.f32 %v529, %v555
        %v569 = vadd.f32 %v530, %v555
        %v570 = vadd.f32 %v531, %v555
        %v571 = vadd.f32 %v532, %v555
        %v572 = vadd.f32 %v533, %v555
        %v573 = vadd.f32 %v534, %v555
        %v574 = vadd.f32 %v535, %v555
        %v575 = vadd.f32 %v536, %v555
        %v576 = vadd.f32 %v537, %v555
        %v577 = vadd.f32 %v538, %v555
        %v578 = vadd.f32 %v539, %v555
        %v579 = vadd.f32 %v540, %v555
        %v580 = vadd.f32 %v541, %v555
        %v581 = vadd.f32 %v542, %v555
        %v582 = vadd.f32 %v543, %v555
        %v583 = vadd.f32 %v544, %v555
        %v584 = vadd.f32 %v545, %v555
        %v585 = vadd.f32 %v546, %v555
        %v586 = vadd.f32 %v547, %v555
        %v587 = vadd.f32 %v548, %v555
        %v588 = vadd.f32 %v549, %v555
        %v589 = vmax.f32 %v557, 0.0
        %v590 = vmax.f32 %v558, 0.0
        %v591 = vmax.f32 %v559, 0.0
        %v592 = vmax.f32 %v560, 0.0
        %v593 = vmax.f32 %v561, 0.0
        %v594 = vmax.f32 %v562, 0.0
        %v595 = vmax.f32 %v563, 0.0
        %v596 = vmax.f32 %v564, 0.0
        %v597 = vmax.f32 %v565, 0.0
        %v598 = vmax.f32 %v566, 0.0
        %v599 = vmax.f32 %v567, 0.0
        %v600 = vmax.f32 %v568, 0.0
        %v601 = vmax.f32 %v569, 0.0
        %v602 = vmax.f32 %v570, 0.0
        %v603 = vmax.f32 %v571, 0.0
        %v604 = vmax.f32 %v572, 0.0
        %v605 = vmax.f32 %v573, 0.0
        %v606 = vmax.f32 %v574, 0.0
        %v607 = vmax.f32 %v575, 0.0
        %v608 = vmax.f32 %v576, 0.0
        %v609 = vmax.f32 %v577, 0.0
        %v610 = vmax.f32 %v578, 0.0
        %v611 = vmax.f32 %v579, 0.0
        %v612 = vmax.f32 %v580, 0.0
        %v613 = vmax.f32 %v581, 0.0
        %v614 = vmax.f32 %v582, 0.0
        %v615 = vmax.f32 %v583, 0.0
        %v616 = vmax.f32 %v584, 0.0
        %v617 = vmax.f32 %v585, 0.0
        %v618 = vmax.f32 %v586, 0.0
        %v619 = vmax.f32 %v587, 0.0
        %v620 = vmax.f32 %v588, 0.0
        %vm621 = vcmask 195584
        %622 = vst.msk [vmem:[%s218] sm:$0xff] %vm621, %v589
        %623 = vst.msk [vmem:[%s218 + $0x8] sm:$0xff] %vm621, %v590
        %624 = vst.msk [vmem:[%s218 + $0x10] sm:$0xff] %vm621, %v591
        %625 = vst.msk [vmem:[%s218 + $0x18] sm:$0xff] %vm621, %v592
        %626 = vst.msk [vmem:[%s218 + $0x20] sm:$0xff] %vm621, %v593
        %627 = vst.msk [vmem:[%s218 + $0x28] sm:$0xff] %vm621, %v594
        %628 = vst.msk [vmem:[%s218 + $0x30] sm:$0xff] %vm621, %v595
        %629 = vst.msk [vmem:[%s218 + $0x38] sm:$0xff] %vm621, %v596
        %630 = vst.msk [vmem:[%s218 + $0x40] sm:$0xff] %vm621, %v597
        %631 = vst.msk [vmem:[%s218 + $0x48] sm:$0xff] %vm621, %v598
        %632 = vst.msk [vmem:[%s218 + $0x50] sm:$0xff] %vm621, %v599
        %633 = vst.msk [vmem:[%s218 + $0x58] sm:$0xff] %vm621, %v600
        %634 = vst.msk [vmem:[%s218 + $0x60] sm:$0xff] %vm621, %v601
        %635 = vst.msk [vmem:[%s218 + $0x68] sm:$0xff] %vm621, %v602
        %636 = vst.msk [vmem:[%s218 + $0x70] sm:$0xff] %vm621, %v603
        %637 = vst.msk [vmem:[%s218 + $0x78] sm:$0xff] %vm621, %v604
        %638 = vst.msk [vmem:[%s218 + $0x80] sm:$0xff] %vm621, %v605
        %639 = vst.msk [vmem:[%s218 + $0x88] sm:$0xff] %vm621, %v606
        %640 = vst.msk [vmem:[%s218 + $0x90] sm:$0xff] %vm621, %v607
        %641 = vst.msk [vmem:[%s218 + $0x98] sm:$0xff] %vm621, %v608
        %642 = vst.msk [vmem:[%s218 + $0xa0] sm:$0xff] %vm621, %v609
        %643 = vst.msk [vmem:[%s218 + $0xa8] sm:$0xff] %vm621, %v610
        %644 = vst.msk [vmem:[%s218 + $0xb0] sm:$0xff] %vm621, %v611
        %645 = vst.msk [vmem:[%s218 + $0xb8] sm:$0xff] %vm621, %v612
        %646 = vst.msk [vmem:[%s218 + $0xc0] sm:$0xff] %vm621, %v613
        %647 = vst.msk [vmem:[%s218 + $0xc8] sm:$0xff] %vm621, %v614
        %648 = vst.msk [vmem:[%s218 + $0xd0] sm:$0xff] %vm621, %v615
        %649 = vst.msk [vmem:[%s218 + $0xd8] sm:$0xff] %vm621, %v616
        %650 = vst.msk [vmem:[%s218 + $0xe0] sm:$0xff] %vm621, %v617
        %651 = vst.msk [vmem:[%s218 + $0xe8] sm:$0xff] %vm621, %v618
        %652 = vst.msk [vmem:[%s218 + $0xf0] sm:$0xff] %vm621, %v619
        %653 = vst.msk [vmem:[%s218 + $0xf8] sm:$0xff] %vm621, %v620
        %s654 = smul.u32 32, %s18
        %p655 = scmp.lt.s32.totalorder %s654, 63
        %s656 = scalar_select %p655, %s654, 63
        %s657 = smul.addr %s656, 8
        %s658 = scalar_lea.vmem %s4, %s657
        // Predicated region
        $region41: #{bottle2neck_forward.3} parent=35 // pred_check
          %p659 = pneg %p125
        $region42: #{bottle2neck_forward.3} parent=35 // pred_check_branch
          %661 = sbr.rel (%p659) target = $region44
        $region43: #{bottle2neck_forward.3} parent=35 // pred_region
          %s662 = smul.u32 32, %s18
        $region44: #{bottle2neck_forward.3} parent=35 // pred_fallthru
          _
      $region36: #{bottle2neck_forward.3} parent=5 // pred_fallthru
        _
      %p663 = scmp.le.s32.totalorder 2, %s13
      // Predicated region
      $region45: #{bottle2neck_forward.3} parent=5 // pred_check
        %p664 = pneg %p663
      $region46: #{bottle2neck_forward.3} parent=5 // pred_check_branch
        %666 = sbr.rel (%p664) target = $region48
      $region47: #{bottle2neck_forward.3} parent=5 // pred_region
        %s667 = ssub.s32 %s13, 2
        // Predicated region
        $region49: #{bottle2neck_forward.3} parent=47 // pred_check
          %p668 = pneg %p131
        $region50: #{bottle2neck_forward.3} parent=47 // pred_check_branch
          %670 = sbr.rel (%p668) target = $region52
        $region51: #{bottle2neck_forward.3} parent=47 // pred_region
          %s671 = smul.u32 32, %s19
          %p672 = scmp.lt.s32.totalorder %s671, 63
          %s673 = scalar_select %p672, %s671, 63
          %s674 = smul.addr %s673, 8
          %s675 = scalar_lea.vmem %s4, %s674
        $region52: #{bottle2neck_forward.3} parent=47 // pred_fallthru
          _
      $region48: #{bottle2neck_forward.3} parent=5 // pred_fallthru
        _
    $region6: #{bottle2neck_forward.3} parent=1 // loop_footer
      %s17 = sadd.s32 1, %s13
    $region7: #{bottle2neck_forward.3} parent=1 // loop_footer_branch
      %12 = sbr.rel target = $region3
    $region8: #{bottle2neck_forward.3} parent=1 // loop_exit
      _
    %676 = vsyncpa [#allocation3], 1
    %s677 = scalar_lea.sflag [#allocation3], 1
    %678 = vsyncpa %s677, 1

// kernel: bottle2neck_forward.5
$region0: #{bottle2neck_forward.5}
  #allocation0 [shape = 'u32[]', space=smem, size = 0x4, offset = 0x4, fixed_abs, tag = 'smem constant byte address 0x4 - core index']
  #allocation1 [shape = 'u32[144,128]{1,0:T(1,128)}', space=vmem, size = 0x12000, scoped, tag = 'internal scratch']
  %s0 = inlined_call_operand.vmem [shape: f32[512,24], index: 0, kind: input, shape index: {}]
  %s1 = inlined_call_operand.vmem [shape: bf16[24,64], index: 1, kind: input, shape index: {}]
  %s2 = inlined_call_operand.vmem [shape: f32[1,64], index: 2, kind: input, shape index: {}]
  %s3 = inlined_call_operand.vmem [shape: f32[1,64], index: 3, kind: input, shape index: {}]
  %s4 = inlined_call_operand.vmem [shape: f32[512,64], index: 4, kind: input, shape index: {}]
  %s5 = inlined_call_operand.hbm [shape: f32[512,64], index: 5, kind: output, shape index: {}]
  %s6 = sld [smem:[#allocation0]]
  $region53: #{bottle2neck_forward.5} parent=0
    _
  %s8 = ssub.s32 1, %s6
  %s9 = scalar_select 0, %s8, %s6
  $region1: #{bottle2neck_forward.5} parent=0
    #allocation2 [shape = 'u8[262144]{0}', space=vmem, size = 0x40000, scoped, tag = 'output window, operand 0']
    #allocation3 [shape = 's32[2]{0}', space=sflag, size = 0x8, scoped, tag = 'scoped memory for bottle2neck_forward.5']
    %10 = vsyncpa [#allocation3], 0
    %s11 = scalar_lea.sflag [#allocation3], 1
    %12 = vsyncpa %s11, 0
    loop: start=0, step=1, limit=4
    $region2: #{bottle2neck_forward.5} parent=1 // loop_pre_header
      _
    $region3: #{bottle2neck_forward.5} parent=1 // loop_header
      %s14 = sphi 0, %s18
      %p15 = scmp.ge.s32.totalorder %s14, 4
      %s24 = sphi 0, %s26
      %s27 = sphi 0, %s24
      %s28 = sphi 0, %s27
      %s44 = sphi 0, %s28
      %s48 = sphi 0, %s48
      %s50 = sphi 0, %s48
      %s51 = sphi 0, %s50
      %s65 = sphi 0, %s51
      %s69 = sphi 0, %s69
      %s71 = sphi 0, %s69
      %s72 = sphi 0, %s71
      %s86 = sphi 0, %s72
      %s90 = sphi 0, %s90
      %s92 = sphi 0, %s90
      %s93 = sphi 0, %s92
      %s107 = sphi 0, %s93
      %s113 = sphi 0, %s115
      %s116 = sphi 0, %s113
      %s117 = sphi 0, %s116
      %s133 = sphi 0, %s117
      %s139 = sphi 0, %s141
      %s142 = sphi 0, %s139
      %s143 = sphi 0, %s142
      %s159 = sphi 0, %s143
    $region4: #{bottle2neck_forward.5} parent=1 // loop_header_branch
      %17 = sbr.rel (%p15) target = $region8
    $region5: #{bottle2neck_forward.5} parent=1 // loop_body
      %s19 = ssub.s32 %s14, 1
      %s20 = ssub.s32 %s14, 2
      %s21 = sadd.s32 %s14, 1
      %s22 = ssub.s32 %s14, %s21
      %p23 = scmp.eq.s32.totalorder %s22, 0
      %s25 = sadd.s32 %s24, 1
      %s26 = scalar_select %p23, %s24, %s25
      %p29 = pneg %p23
      %p30 = scmp.eq.s32.totalorder %s14, 1
      %p31 = por %p29, %p30
      %p32 = scmp.ne.s32.totalorder %s24, %s27
      %p33 = scmp.eq.s32.totalorder %s14, 0
      %p34 = por %p32, %p33
      %p35 = scmp.ne.s32.totalorder %s24, %s27
      %p36 = scmp.eq.s32.totalorder %s19, 1
      %p37 = por %p35, %p36
      %p38 = scmp.ne.s32.totalorder %s27, %s28
      %p39 = scmp.eq.s32.totalorder %s19, 0
      %p40 = por %p38, %p39
      %p41 = scmp.ne.s32.totalorder %s27, %s28
      %p42 = scmp.eq.s32.totalorder %s20, 1
      %p43 = por %p41, %p42
      %p45 = scmp.ne.s32.totalorder %s28, %s44
      %p46 = scmp.eq.s32.totalorder %s20, 0
      %p47 = por %p45, %p46
      %s49 = sadd.s32 %s48, 1
      %p52 = scmp.eq.s32.totalorder %s14, 1
      %p53 = scmp.ne.s32.totalorder %s48, %s50
      %p54 = scmp.eq.s32.totalorder %s14, 0
      %p55 = por %p53, %p54
      %p56 = scmp.ne.s32.totalorder %s48, %s50
      %p57 = scmp.eq.s32.totalorder %s19, 1
      %p58 = por %p56, %p57
      %p59 = scmp.ne.s32.totalorder %s50, %s51
      %p60 = scmp.eq.s32.totalorder %s19, 0
      %p61 = por %p59, %p60
      %p62 = scmp.ne.s32.totalorder %s50, %s51
      %p63 = scmp.eq.s32.totalorder %s20, 1
      %p64 = por %p62, %p63
      %p66 = scmp.ne.s32.totalorder %s51, %s65
      %p67 = scmp.eq.s32.totalorder %s20, 0
      %p68 = por %p66, %p67
      %s70 = sadd.s32 %s69, 1
      %p73 = scmp.eq.s32.totalorder %s14, 1
      %p74 = scmp.ne.s32.totalorder %s69, %s71
      %p75 = scmp.eq.s32.totalorder %s14, 0
      %p76 = por %p74, %p75
      %p77 = scmp.ne.s32.totalorder %s69, %s71
      %p78 = scmp.eq.s32.totalorder %s19, 1
      %p79 = por %p77, %p78
      %p80 = scmp.ne.s32.totalorder %s71, %s72
      %p81 = scmp.eq.s32.totalorder %s19, 0
      %p82 = por %p80, %p81
      %p83 = scmp.ne.s32.totalorder %s71, %s72
      %p84 = scmp.eq.s32.totalorder %s20, 1
      %p85 = por %p83, %p84
      %p87 = scmp.ne.s32.totalorder %s72, %s86
      %p88 = scmp.eq.s32.totalorder %s20, 0
      %p89 = por %p87, %p88
      %s91 = sadd.s32 %s90, 1
      %p94 = scmp.eq.s32.totalorder %s14, 1
      %p95 = scmp.ne.s32.totalorder %s90, %s92
      %p96 = scmp.eq.s32.totalorder %s14, 0
      %p97 = por %p95, %p96
      %p98 = scmp.ne.s32.totalorder %s90, %s92
      %p99 = scmp.eq.s32.totalorder %s19, 1
      %p100 = por %p98, %p99
      %p101 = scmp.ne.s32.totalorder %s92, %s93
      %p102 = scmp.eq.s32.totalorder %s19, 0
      %p103 = por %p101, %p102
      %p104 = scmp.ne.s32.totalorder %s92, %s93
      %p105 = scmp.eq.s32.totalorder %s20, 1
      %p106 = por %p104, %p105
      %p108 = scmp.ne.s32.totalorder %s93, %s107
      %p109 = scmp.eq.s32.totalorder %s20, 0
      %p110 = por %p108, %p109
      %s111 = ssub.s32 %s14, %s21
      %p112 = scmp.eq.s32.totalorder %s111, 0
      %s114 = sadd.s32 %s113, 1
      %s115 = scalar_select %p112, %s113, %s114
      %p118 = pneg %p112
      %p119 = scmp.eq.s32.totalorder %s14, 1
      %p120 = por %p118, %p119
      %p121 = scmp.ne.s32.totalorder %s113, %s116
      %p122 = scmp.eq.s32.totalorder %s14, 0
      %p123 = por %p121, %p122
      %p124 = scmp.ne.s32.totalorder %s113, %s116
      %p125 = scmp.eq.s32.totalorder %s19, 1
      %p126 = por %p124, %p125
      %p127 = scmp.ne.s32.totalorder %s116, %s117
      %p128 = scmp.eq.s32.totalorder %s19, 0
      %p129 = por %p127, %p128
      %p130 = scmp.ne.s32.totalorder %s116, %s117
      %p131 = scmp.eq.s32.totalorder %s20, 1
      %p132 = por %p130, %p131
      %p134 = scmp.ne.s32.totalorder %s117, %s133
      %p135 = scmp.eq.s32.totalorder %s20, 0
      %p136 = por %p134, %p135
      %s137 = ssub.s32 %s14, %s21
      %p138 = scmp.eq.s32.totalorder %s137, 0
      %s140 = sadd.s32 %s139, 1
      %s141 = scalar_select %p138, %s139, %s140
      %p144 = pneg %p138
      %p145 = scmp.eq.s32.totalorder %s14, 1
      %p146 = por %p144, %p145
      %p147 = scmp.ne.s32.totalorder %s139, %s142
      %p148 = scmp.eq.s32.totalorder %s14, 0
      %p149 = por %p147, %p148
      %p150 = scmp.ne.s32.totalorder %s139, %s142
      %p151 = scmp.eq.s32.totalorder %s19, 1
      %p152 = por %p150, %p151
      %p153 = scmp.ne.s32.totalorder %s142, %s143
      %p154 = scmp.eq.s32.totalorder %s19, 0
      %p155 = por %p153, %p154
      %p156 = scmp.ne.s32.totalorder %s142, %s143
      %p157 = scmp.eq.s32.totalorder %s20, 1
      %p158 = por %p156, %p157
      %p160 = scmp.ne.s32.totalorder %s143, %s159
      %p161 = scmp.eq.s32.totalorder %s20, 0
      %p162 = por %p160, %p161
      %p163 = scmp.le.s32.totalorder 1, %s14
      %p164 = scmp.lt.s32.totalorder %s14, 3
      %p165 = pnand %p163, %p164
      %p166 = pneg %p165
      // Predicated region
      $region9: #{bottle2neck_forward.5} parent=5 // pred_check
        _
      $region10: #{bottle2neck_forward.5} parent=5 // pred_check_branch
        %168 = sbr.rel (%p165) target = $region12
      $region11: #{bottle2neck_forward.5} parent=5 // pred_region
        %s169 = ssub.s32 %s14, 1
        // Predicated region
        $region13: #{bottle2neck_forward.5} parent=11 // pred_check
          %p170 = pneg %p61
        $region14: #{bottle2neck_forward.5} parent=11 // pred_check_branch
          %172 = sbr.rel (%p170) target = $region16
        $region15: #{bottle2neck_forward.5} parent=11 // pred_region
          _
        $region16: #{bottle2neck_forward.5} parent=11 // pred_fallthru
          _
        // Predicated region
        $region17: #{bottle2neck_forward.5} parent=11 // pred_check
          %p173 = pneg %p82
        $region18: #{bottle2neck_forward.5} parent=11 // pred_check_branch
          %175 = sbr.rel (%p173) target = $region20
        $region19: #{bottle2neck_forward.5} parent=11 // pred_region
          _
        $region20: #{bottle2neck_forward.5} parent=11 // pred_fallthru
          _
        // Predicated region
        $region21: #{bottle2neck_forward.5} parent=11 // pred_check
          %p176 = pneg %p103
        $region22: #{bottle2neck_forward.5} parent=11 // pred_check_branch
          %178 = sbr.rel (%p176) target = $region24
        $region23: #{bottle2neck_forward.5} parent=11 // pred_region
          _
        $region24: #{bottle2neck_forward.5} parent=11 // pred_fallthru
          _
      $region12: #{bottle2neck_forward.5} parent=5 // pred_fallthru
        _
      %p179 = scmp.lt.s32.totalorder %s14, 2
      // Predicated region
      $region25: #{bottle2neck_forward.5} parent=5 // pred_check
        %p180 = pneg %p179
      $region26: #{bottle2neck_forward.5} parent=5 // pred_check_branch
        %182 = sbr.rel (%p180) target = $region28
      $region27: #{bottle2neck_forward.5} parent=5 // pred_region
        // Predicated region
        $region29: #{bottle2neck_forward.5} parent=27 // pred_check
          %p183 = pneg %p34
        $region30: #{bottle2neck_forward.5} parent=27 // pred_check_branch
          %185 = sbr.rel (%p183) target = $region32
        $region31: #{bottle2neck_forward.5} parent=27 // pred_region
          %s186 = smul.u32 32, %s14
          %p187 = scmp.lt.s32.totalorder %s186, 63
          %s188 = scalar_select %p187, %s186, 63
          %s189 = smul.addr %s188, 8
          %s190 = scalar_lea.vmem %s0, %s189
          %s191 = smul.u32 32, %s14
        $region32: #{bottle2neck_forward.5} parent=27 // pred_fallthru
          _
        // Predicated region
        $region33: #{bottle2neck_forward.5} parent=27 // pred_check
          %p192 = pneg %p123
        $region34: #{bottle2neck_forward.5} parent=27 // pred_check_branch
          %194 = sbr.rel (%p192) target = $region36
        $region35: #{bottle2neck_forward.5} parent=27 // pred_region
          %s195 = smul.u32 32, %s14
          %p196 = scmp.lt.s32.totalorder %s195, 63
          %s197 = scalar_select %p196, %s195, 63
          %s198 = smul.addr %s197, 8
          %s199 = scalar_lea.vmem %s4, %s198
          %s200 = smul.u32 32, %s14
        $region36: #{bottle2neck_forward.5} parent=27 // pred_fallthru
          _
      $region28: #{bottle2neck_forward.5} parent=5 // pred_fallthru
        _
      %p201 = scmp.le.s32.totalorder 1, %s14
      %p202 = scmp.lt.s32.totalorder %s14, 3
      %p203 = pnand %p201, %p202
      %p204 = pneg %p203
      // Predicated region
      $region37: #{bottle2neck_forward.5} parent=5 // pred_check
        _
      $region38: #{bottle2neck_forward.5} parent=5 // pred_check_branch
        %206 = sbr.rel (%p203) target = $region40
      $region39: #{bottle2neck_forward.5} parent=5 // pred_region
        %s207 = ssub.s32 %s14, 1
        %s208 = smul.u32 32, %s19
        %p209 = scmp.lt.s32.totalorder %s208, 63
        %s210 = scalar_select %p209, %s208, 63
        %s211 = smul.addr %s210, 8
        %s212 = scalar_lea.vmem %s0, %s211
        %p213 = pneg %p40
        %p214 = pneg %p37
        %p215 = pneg %p61
        %p216 = pneg %p58
        %p217 = pneg %p82
        %p218 = pneg %p79
        %p219 = pneg %p103
        %p220 = pneg %p100
        %s221 = smul.u32 32, %s19
        %p222 = scmp.lt.s32.totalorder %s221, 63
        %s223 = scalar_select %p222, %s221, 63
        %s224 = smul.addr %s223, 8
        %s225 = scalar_lea.vmem %s4, %s224
        %p226 = pneg %p129
        %p227 = pneg %p126
        %p228 = pneg %p155
        %p229 = pneg %p152
        %s230 = sand.u32 %s142, 1
        %s231 = scalar_lea.sflag [#allocation3], %s230
        %s232 = sand.u32 %s142, 1
        %s233 = smul.addr %s232, 256
        %s234 = scalar_lea.vmem [#allocation2], %s233
        %s235 = smul.u32 32, %s19
        %p236 = scmp.lt.s32.totalorder %s235, 63
        %s237 = scalar_select %p236, %s235, 63
        %s238 = smul.addr %s237, 8
        %s239 = scalar_lea.vmem %s0, %s238
        %s240 = smul.u32 32, %s19
        %s241 = smul.u32 32, %s19
        %p242 = scmp.lt.s32.totalorder %s241, 63
        %s243 = scalar_select %p242, %s241, 63
        %s244 = smul.addr %s243, 8
        %s245 = scalar_lea.vmem %s4, %s244
        %s246 = smul.u32 32, %s19
        %s247 = smul.u32 32, %s19
        %v249 = vld [vmem:[%s239] sm:$0xff]
        %v250 = vld [vmem:[%s239 + $0x8] sm:$0xff]
        %v251 = vld [vmem:[%s239 + $0x10] sm:$0xff]
        %v252 = vld [vmem:[%s239 + $0x18] sm:$0xff]
        %v253 = vld [vmem:[%s239 + $0x20] sm:$0xff]
        %v254 = vld [vmem:[%s239 + $0x28] sm:$0xff]
        %v255 = vld [vmem:[%s239 + $0x30] sm:$0xff]
        %v256 = vld [vmem:[%s239 + $0x38] sm:$0xff]
        %v257 = vld [vmem:[%s239 + $0x40] sm:$0xff]
        %v258 = vld [vmem:[%s239 + $0x48] sm:$0xff]
        %v259 = vld [vmem:[%s239 + $0x50] sm:$0xff]
        %v260 = vld [vmem:[%s239 + $0x58] sm:$0xff]
        %v261 = vld [vmem:[%s239 + $0x60] sm:$0xff]
        %v262 = vld [vmem:[%s239 + $0x68] sm:$0xff]
        %v263 = vld [vmem:[%s239 + $0x70] sm:$0xff]
        %v264 = vld [vmem:[%s239 + $0x78] sm:$0xff]
        %v265 = vld [vmem:[%s239 + $0x80] sm:$0xff]
        %v266 = vld [vmem:[%s239 + $0x88] sm:$0xff]
        %v267 = vld [vmem:[%s239 + $0x90] sm:$0xff]
        %v268 = vld [vmem:[%s239 + $0x98] sm:$0xff]
        %v269 = vld [vmem:[%s239 + $0xa0] sm:$0xff]
        %v270 = vld [vmem:[%s239 + $0xa8] sm:$0xff]
        %v271 = vld [vmem:[%s239 + $0xb0] sm:$0xff]
        %v272 = vld [vmem:[%s239 + $0xb8] sm:$0xff]
        %v273 = vld [vmem:[%s239 + $0xc0] sm:$0xff]
        %v274 = vld [vmem:[%s239 + $0xc8] sm:$0xff]
        %v275 = vld [vmem:[%s239 + $0xd0] sm:$0xff]
        %v276 = vld [vmem:[%s239 + $0xd8] sm:$0xff]
        %v277 = vld [vmem:[%s239 + $0xe0] sm:$0xff]
        %v278 = vld [vmem:[%s239 + $0xe8] sm:$0xff]
        %v279 = vld [vmem:[%s239 + $0xf0] sm:$0xff]
        %v280 = vld [vmem:[%s239 + $0xf8] sm:$0xff]
        %v281 = vpack.c.bf16 %v250, %v249
        %v282 = vpack.c.bf16 %v252, %v251
        %v283 = vpack.c.bf16 %v254, %v253
        %v284 = vpack.c.bf16 %v256, %v255
        %v285 = vpack.c.bf16 %v258, %v257
        %v286 = vpack.c.bf16 %v260, %v259
        %v287 = vpack.c.bf16 %v262, %v261
        %v288 = vpack.c.bf16 %v264, %v263
        %v289 = vpack.c.bf16 %v266, %v265
        %v290 = vpack.c.bf16 %v268, %v267
        %v291 = vpack.c.bf16 %v270, %v269
        %v292 = vpack.c.bf16 %v272, %v271
        %v293 = vpack.c.bf16 %v274, %v273
        %v294 = vpack.c.bf16 %v276, %v275
        %v295 = vpack.c.bf16 %v278, %v277
        %v296 = vpack.c.bf16 %v280, %v279
        %v297 = vld [vmem:[%s1] sm:$0xf]
        %v298 = vld [vmem:[%s1 + $0x4] sm:$0xf]
        %v299 = vld [vmem:[%s1 + $0x8] sm:$0xf]
        %v303 = vunpack.c.l.b16 %v297
        %v304 = vunpack.c.l.b16 %v298
        %v305 = vunpack.c.l.b16 %v299
        %v306 = vpack.c.b16 %v304, %v303
        %v307 = vpack.c.b16 %v305, %v305
        %vm309 = vcmask 195584
        %v311 = vsel %vm309, %v281, 0
        %v314 = vsel %vm309, %v282, 0
        %v317 = vsel %vm309, %v283, 0
        %v320 = vsel %vm309, %v284, 0
        %v323 = vsel %vm309, %v285, 0
        %v326 = vsel %vm309, %v286, 0
        %v329 = vsel %vm309, %v287, 0
        %v332 = vsel %vm309, %v288, 0
        %v335 = vsel %vm309, %v289, 0
        %v338 = vsel %vm309, %v290, 0
        %v341 = vsel %vm309, %v291, 0
        %v344 = vsel %vm309, %v292, 0
        %v347 = vsel %vm309, %v293, 0
        %v350 = vsel %vm309, %v294, 0
        %v353 = vsel %vm309, %v295, 0
        %v356 = vsel %vm309, %v296, 0
        %vm358 = vcmask 1043456
        %v360 = vsel %vm358, %v307, 0
        %362 = vmatprep.subr.bf16.mxu0 0
        %363 = vmatpush1.bf16.msra.mxu0 0
        %364 = vmatprep.subr.bf16.mxu0 0
        %365 = vmatpush1.bf16.msra.mxu0 0
        %366 = vmatprep.subr.bf16.mxu0 0
        %367 = vmatpush1.bf16.msra.mxu0 0
        %368 = vmatprep.subr.bf16.mxu0 0
        %369 = vmatpush1.bf16.msra.mxu0 0
        %370 = vmatprep.subr.bf16.mxu0 0
        %371 = vmatpush1.bf16.msra.mxu0 0
        %372 = vmatprep.subr.bf16.mxu0 0
        %373 = vmatpush1.bf16.msra.mxu0 0
        %374 = vmatprep.subr.bf16.mxu0 0
        %375 = vmatpush1.bf16.msra.mxu0 %v360
        %376 = vmatprep.subr.bf16.mxu0 0
        %377 = vmatpush1.bf16.msra.mxu0 %v306
        %378 = vmatprep.subr.bf16.mxu0 0
        %379 = vmatpush2.bf16.msra.mxu0 0
        %380 = vmatprep.subr.bf16.mxu0 0
        %381 = vmatpush2.bf16.msra.mxu0 0
        %382 = vmatprep.subr.bf16.mxu0 0
        %383 = vmatpush2.bf16.msra.mxu0 0
        %384 = vmatprep.subr.bf16.mxu0 0
        %385 = vmatpush2.bf16.msra.mxu0 0
        %386 = vmatprep.subr.bf16.mxu0 0
        %387 = vmatpush2.bf16.msra.mxu0 0
        %388 = vmatprep.subr.bf16.mxu0 0
        %389 = vmatpush2.bf16.msra.mxu0 0
        %390 = vmatprep.subr.bf16.mxu0 0
        %391 = vmatpush2.bf16.msra.mxu0 0
        %392 = vmatprep.subr.bf16.mxu0 0
        %393 = vmatpush2.bf16.msra.mxu0 0
        %394 = vmatprep.mubr.bf16.mxu0 0
        %395 = vmatmul.mubr.bf16.gmra.mxu0 %v311
        %v396 = vpop.f32.mrf.mxu0
        %v397 = vadd.f32 0.0, %v396
        %v398 = vpop.f32.mrf.mxu0
        %v399 = vpop.f32.mrf.mxu0
        %v400 = vadd.f32 0.0, %v399
        %v401 = vpop.f32.mrf.mxu0
        %402 = vmatprep.mubr.bf16.mxu0 0
        %403 = vmatmul.mubr.bf16.gmra.mxu0 %v314
        %v404 = vpop.f32.mrf.mxu0
        %v405 = vadd.f32 0.0, %v404
        %v406 = vpop.f32.mrf.mxu0
        %v407 = vpop.f32.mrf.mxu0
        %v408 = vadd.f32 0.0, %v407
        %v409 = vpop.f32.mrf.mxu0
        %410 = vmatprep.mubr.bf16.mxu0 0
        %411 = vmatmul.mubr.bf16.gmra.mxu0 %v317
        %v412 = vpop.f32.mrf.mxu0
        %v413 = vadd.f32 0.0, %v412
        %v414 = vpop.f32.mrf.mxu0
        %v415 = vpop.f32.mrf.mxu0
        %v416 = vadd.f32 0.0, %v415
        %v417 = vpop.f32.mrf.mxu0
        %418 = vmatprep.mubr.bf16.mxu0 0
        %419 = vmatmul.mubr.bf16.gmra.mxu0 %v320
        %v420 = vpop.f32.mrf.mxu0
        %v421 = vadd.f32 0.0, %v420
        %v422 = vpop.f32.mrf.mxu0
        %v423 = vpop.f32.mrf.mxu0
        %v424 = vadd.f32 0.0, %v423
        %v425 = vpop.f32.mrf.mxu0
        %426 = vmatprep.mubr.bf16.mxu0 0
        %427 = vmatmul.mubr.bf16.gmra.mxu0 %v323
        %v428 = vpop.f32.mrf.mxu0
        %v429 = vadd.f32 0.0, %v428
        %v430 = vpop.f32.mrf.mxu0
        %v431 = vpop.f32.mrf.mxu0
        %v432 = vadd.f32 0.0, %v431
        %v433 = vpop.f32.mrf.mxu0
        %434 = vmatprep.mubr.bf16.mxu0 0
        %435 = vmatmul.mubr.bf16.gmra.mxu0 %v326
        %v436 = vpop.f32.mrf.mxu0
        %v437 = vadd.f32 0.0, %v436
        %v438 = vpop.f32.mrf.mxu0
        %v439 = vpop.f32.mrf.mxu0
        %v440 = vadd.f32 0.0, %v439
        %v441 = vpop.f32.mrf.mxu0
        %442 = vmatprep.mubr.bf16.mxu0 0
        %443 = vmatmul.mubr.bf16.gmra.mxu0 %v329
        %v444 = vpop.f32.mrf.mxu0
        %v445 = vadd.f32 0.0, %v444
        %v446 = vpop.f32.mrf.mxu0
        %v447 = vpop.f32.mrf.mxu0
        %v448 = vadd.f32 0.0, %v447
        %v449 = vpop.f32.mrf.mxu0
        %450 = vmatprep.mubr.bf16.mxu0 0
        %451 = vmatmul.mubr.bf16.gmra.mxu0 %v332
        %v452 = vpop.f32.mrf.mxu0
        %v453 = vadd.f32 0.0, %v452
        %v454 = vpop.f32.mrf.mxu0
        %v455 = vpop.f32.mrf.mxu0
        %v456 = vadd.f32 0.0, %v455
        %v457 = vpop.f32.mrf.mxu0
        %458 = vmatprep.mubr.bf16.mxu0 0
        %459 = vmatmul.mubr.bf16.gmra.mxu0 %v335
        %v460 = vpop.f32.mrf.mxu0
        %v461 = vadd.f32 0.0, %v460
        %v462 = vpop.f32.mrf.mxu0
        %v463 = vpop.f32.mrf.mxu0
        %v464 = vadd.f32 0.0, %v463
        %v465 = vpop.f32.mrf.mxu0
        %466 = vmatprep.mubr.bf16.mxu0 0
        %467 = vmatmul.mubr.bf16.gmra.mxu0 %v338
        %v468 = vpop.f32.mrf.mxu0
        %v469 = vadd.f32 0.0, %v468
        %v470 = vpop.f32.mrf.mxu0
        %v471 = vpop.f32.mrf.mxu0
        %v472 = vadd.f32 0.0, %v471
        %v473 = vpop.f32.mrf.mxu0
        %474 = vmatprep.mubr.bf16.mxu0 0
        %475 = vmatmul.mubr.bf16.gmra.mxu0 %v341
        %v476 = vpop.f32.mrf.mxu0
        %v477 = vadd.f32 0.0, %v476
        %v478 = vpop.f32.mrf.mxu0
        %v479 = vpop.f32.mrf.mxu0
        %v480 = vadd.f32 0.0, %v479
        %v481 = vpop.f32.mrf.mxu0
        %482 = vmatprep.mubr.bf16.mxu0 0
        %483 = vmatmul.mubr.bf16.gmra.mxu0 %v344
        %v484 = vpop.f32.mrf.mxu0
        %v485 = vadd.f32 0.0, %v484
        %v486 = vpop.f32.mrf.mxu0
        %v487 = vpop.f32.mrf.mxu0
        %v488 = vadd.f32 0.0, %v487
        %v489 = vpop.f32.mrf.mxu0
        %490 = vmatprep.mubr.bf16.mxu0 0
        %491 = vmatmul.mubr.bf16.gmra.mxu0 %v347
        %v492 = vpop.f32.mrf.mxu0
        %v493 = vadd.f32 0.0, %v492
        %v494 = vpop.f32.mrf.mxu0
        %v495 = vpop.f32.mrf.mxu0
        %v496 = vadd.f32 0.0, %v495
        %v497 = vpop.f32.mrf.mxu0
        %498 = vmatprep.mubr.bf16.mxu0 0
        %499 = vmatmul.mubr.bf16.gmra.mxu0 %v350
        %v500 = vpop.f32.mrf.mxu0
        %v501 = vadd.f32 0.0, %v500
        %v502 = vpop.f32.mrf.mxu0
        %v503 = vpop.f32.mrf.mxu0
        %v504 = vadd.f32 0.0, %v503
        %v505 = vpop.f32.mrf.mxu0
        %506 = vmatprep.mubr.bf16.mxu0 0
        %507 = vmatmul.mubr.bf16.gmra.mxu0 %v353
        %v508 = vpop.f32.mrf.mxu0
        %v509 = vadd.f32 0.0, %v508
        %v510 = vpop.f32.mrf.mxu0
        %v511 = vpop.f32.mrf.mxu0
        %v512 = vadd.f32 0.0, %v511
        %v513 = vpop.f32.mrf.mxu0
        %514 = vmatprep.mubr.bf16.mxu0 0
        %515 = vmatmul.mubr.bf16.gmra.mxu0 %v356
        %v516 = vpop.f32.mrf.mxu0
        %v517 = vadd.f32 0.0, %v516
        %v518 = vpop.f32.mrf.mxu0
        %v519 = vpop.f32.mrf.mxu0
        %v520 = vadd.f32 0.0, %v519
        %v521 = vpop.f32.mrf.mxu0
        %522 = vdwg.mxu0
        %v523 = vld [vmem:[%s2] sm:$0x1]
        %v525 = vlaneseq
        %v526 = vshrl.u32 %v525, 7
        %v527 = vsub.s32 0, %v526
        %v528 = vrot.slane %v523, %v527
        %v530 = vmul.f32 %v397, %v528
        %v531 = vmul.f32 %v400, %v528
        %v532 = vmul.f32 %v405, %v528
        %v533 = vmul.f32 %v408, %v528
        %v534 = vmul.f32 %v413, %v528
        %v535 = vmul.f32 %v416, %v528
        %v536 = vmul.f32 %v421, %v528
        %v537 = vmul.f32 %v424, %v528
        %v538 = vmul.f32 %v429, %v528
        %v539 = vmul.f32 %v432, %v528
        %v540 = vmul.f32 %v437, %v528
        %v541 = vmul.f32 %v440, %v528
        %v542 = vmul.f32 %v445, %v528
        %v543 = vmul.f32 %v448, %v528
        %v544 = vmul.f32 %v453, %v528
        %v545 = vmul.f32 %v456, %v528
        %v546 = vmul.f32 %v461, %v528
        %v547 = vmul.f32 %v464, %v528
        %v548 = vmul.f32 %v469, %v528
        %v549 = vmul.f32 %v472, %v528
        %v550 = vmul.f32 %v477, %v528
        %v551 = vmul.f32 %v480, %v528
        %v552 = vmul.f32 %v485, %v528
        %v553 = vmul.f32 %v488, %v528
        %v554 = vmul.f32 %v493, %v528
        %v555 = vmul.f32 %v496, %v528
        %v556 = vmul.f32 %v501, %v528
        %v557 = vmul.f32 %v504, %v528
        %v558 = vmul.f32 %v509, %v528
        %v559 = vmul.f32 %v512, %v528
        %v560 = vmul.f32 %v517, %v528
        %v561 = vmul.f32 %v520, %v528
        %v562 = vld [vmem:[%s3] sm:$0x1]
        %v564 = vlaneseq
        %v565 = vshrl.u32 %v564, 7
        %v566 = vsub.s32 0, %v565
        %v567 = vrot.slane %v562, %v566
        %v569 = vadd.f32 %v530, %v567
        %v570 = vadd.f32 %v531, %v567
        %v571 = vadd.f32 %v532, %v567
        %v572 = vadd.f32 %v533, %v567
        %v573 = vadd.f32 %v534, %v567
        %v574 = vadd.f32 %v535, %v567
        %v575 = vadd.f32 %v536, %v567
        %v576 = vadd.f32 %v537, %v567
        %v577 = vadd.f32 %v538, %v567
        %v578 = vadd.f32 %v539, %v567
        %v579 = vadd.f32 %v540, %v567
        %v580 = vadd.f32 %v541, %v567
        %v581 = vadd.f32 %v542, %v567
        %v582 = vadd.f32 %v543, %v567
        %v583 = vadd.f32 %v544, %v567
        %v584 = vadd.f32 %v545, %v567
        %v585 = vadd.f32 %v546, %v567
        %v586 = vadd.f32 %v547, %v567
        %v587 = vadd.f32 %v548, %v567
        %v588 = vadd.f32 %v549, %v567
        %v589 = vadd.f32 %v550, %v567
        %v590 = vadd.f32 %v551, %v567
        %v591 = vadd.f32 %v552, %v567
        %v592 = vadd.f32 %v553, %v567
        %v593 = vadd.f32 %v554, %v567
        %v594 = vadd.f32 %v555, %v567
        %v595 = vadd.f32 %v556, %v567
        %v596 = vadd.f32 %v557, %v567
        %v597 = vadd.f32 %v558, %v567
        %v598 = vadd.f32 %v559, %v567
        %v599 = vadd.f32 %v560, %v567
        %v600 = vadd.f32 %v561, %v567
        %v601 = vld [vmem:[%s245] sm:$0xff]
        %v602 = vld [vmem:[%s245 + $0x8] sm:$0xff]
        %v603 = vld [vmem:[%s245 + $0x10] sm:$0xff]
        %v604 = vld [vmem:[%s245 + $0x18] sm:$0xff]
        %v605 = vld [vmem:[%s245 + $0x20] sm:$0xff]
        %v606 = vld [vmem:[%s245 + $0x28] sm:$0xff]
        %v607 = vld [vmem:[%s245 + $0x30] sm:$0xff]
        %v608 = vld [vmem:[%s245 + $0x38] sm:$0xff]
        %v609 = vld [vmem:[%s245 + $0x40] sm:$0xff]
        %v610 = vld [vmem:[%s245 + $0x48] sm:$0xff]
        %v611 = vld [vmem:[%s245 + $0x50] sm:$0xff]
        %v612 = vld [vmem:[%s245 + $0x58] sm:$0xff]
        %v613 = vld [vmem:[%s245 + $0x60] sm:$0xff]
        %v614 = vld [vmem:[%s245 + $0x68] sm:$0xff]
        %v615 = vld [vmem:[%s245 + $0x70] sm:$0xff]
        %v616 = vld [vmem:[%s245 + $0x78] sm:$0xff]
        %v617 = vld [vmem:[%s245 + $0x80] sm:$0xff]
        %v618 = vld [vmem:[%s245 + $0x88] sm:$0xff]
        %v619 = vld [vmem:[%s245 + $0x90] sm:$0xff]
        %v620 = vld [vmem:[%s245 + $0x98] sm:$0xff]
        %v621 = vld [vmem:[%s245 + $0xa0] sm:$0xff]
        %v622 = vld [vmem:[%s245 + $0xa8] sm:$0xff]
        %v623 = vld [vmem:[%s245 + $0xb0] sm:$0xff]
        %v624 = vld [vmem:[%s245 + $0xb8] sm:$0xff]
        %v625 = vld [vmem:[%s245 + $0xc0] sm:$0xff]
        %v626 = vld [vmem:[%s245 + $0xc8] sm:$0xff]
        %v627 = vld [vmem:[%s245 + $0xd0] sm:$0xff]
        %v628 = vld [vmem:[%s245 + $0xd8] sm:$0xff]
        %v629 = vld [vmem:[%s245 + $0xe0] sm:$0xff]
        %v630 = vld [vmem:[%s245 + $0xe8] sm:$0xff]
        %v631 = vld [vmem:[%s245 + $0xf0] sm:$0xff]
        %v632 = vld [vmem:[%s245 + $0xf8] sm:$0xff]
        %v633 = vadd.f32 %v569, %v601
        %v634 = vadd.f32 %v570, %v602
        %v635 = vadd.f32 %v571, %v603
        %v636 = vadd.f32 %v572, %v604
        %v637 = vadd.f32 %v573, %v605
        %v638 = vadd.f32 %v574, %v606
        %v639 = vadd.f32 %v575, %v607
        %v640 = vadd.f32 %v576, %v608
        %v641 = vadd.f32 %v577, %v609
        %v642 = vadd.f32 %v578, %v610
        %v643 = vadd.f32 %v579, %v611
        %v644 = vadd.f32 %v580, %v612
        %v645 = vadd.f32 %v581, %v613
        %v646 = vadd.f32 %v582, %v614
        %v647 = vadd.f32 %v583, %v615
        %v648 = vadd.f32 %v584, %v616
        %v649 = vadd.f32 %v585, %v617
        %v650 = vadd.f32 %v586, %v618
        %v651 = vadd.f32 %v587, %v619
        %v652 = vadd.f32 %v588, %v620
        %v653 = vadd.f32 %v589, %v621
        %v654 = vadd.f32 %v590, %v622
        %v655 = vadd.f32 %v591, %v623
        %v656 = vadd.f32 %v592, %v624
        %v657 = vadd.f32 %v593, %v625
        %v658 = vadd.f32 %v594, %v626
        %v659 = vadd.f32 %v595, %v627
        %v660 = vadd.f32 %v596, %v628
        %v661 = vadd.f32 %v597, %v629
        %v662 = vadd.f32 %v598, %v630
        %v663 = vadd.f32 %v599, %v631
        %v664 = vadd.f32 %v600, %v632
        %v665 = vmax.f32 %v633, 0.0
        %v666 = vmax.f32 %v634, 0.0
        %v667 = vmax.f32 %v635, 0.0
        %v668 = vmax.f32 %v636, 0.0
        %v669 = vmax.f32 %v637, 0.0
        %v670 = vmax.f32 %v638, 0.0
        %v671 = vmax.f32 %v639, 0.0
        %v672 = vmax.f32 %v640, 0.0
        %v673 = vmax.f32 %v641, 0.0
        %v674 = vmax.f32 %v642, 0.0
        %v675 = vmax.f32 %v643, 0.0
        %v676 = vmax.f32 %v644, 0.0
        %v677 = vmax.f32 %v645, 0.0
        %v678 = vmax.f32 %v646, 0.0
        %v679 = vmax.f32 %v647, 0.0
        %v680 = vmax.f32 %v648, 0.0
        %v681 = vmax.f32 %v649, 0.0
        %v682 = vmax.f32 %v650, 0.0
        %v683 = vmax.f32 %v651, 0.0
        %v684 = vmax.f32 %v652, 0.0
        %v685 = vmax.f32 %v653, 0.0
        %v686 = vmax.f32 %v654, 0.0
        %v687 = vmax.f32 %v655, 0.0
        %v688 = vmax.f32 %v656, 0.0
        %v689 = vmax.f32 %v657, 0.0
        %v690 = vmax.f32 %v658, 0.0
        %v691 = vmax.f32 %v659, 0.0
        %v692 = vmax.f32 %v660, 0.0
        %v693 = vmax.f32 %v661, 0.0
        %v694 = vmax.f32 %v662, 0.0
        %v695 = vmax.f32 %v663, 0.0
        %v696 = vmax.f32 %v664, 0.0
        %vm697 = vcmask 523264
        %698 = vst.msk [vmem:[%s234] sm:$0xff] %vm697, %v665
        %699 = vst.msk [vmem:[%s234 + $0x8] sm:$0xff] %vm697, %v666
        %700 = vst.msk [vmem:[%s234 + $0x10] sm:$0xff] %vm697, %v667
        %701 = vst.msk [vmem:[%s234 + $0x18] sm:$0xff] %vm697, %v668
        %702 = vst.msk [vmem:[%s234 + $0x20] sm:$0xff] %vm697, %v669
        %703 = vst.msk [vmem:[%s234 + $0x28] sm:$0xff] %vm697, %v670
        %704 = vst.msk [vmem:[%s234 + $0x30] sm:$0xff] %vm697, %v671
        %705 = vst.msk [vmem:[%s234 + $0x38] sm:$0xff] %vm697, %v672
        %706 = vst.msk [vmem:[%s234 + $0x40] sm:$0xff] %vm697, %v673
        %707 = vst.msk [vmem:[%s234 + $0x48] sm:$0xff] %vm697, %v674
        %708 = vst.msk [vmem:[%s234 + $0x50] sm:$0xff] %vm697, %v675
        %709 = vst.msk [vmem:[%s234 + $0x58] sm:$0xff] %vm697, %v676
        %710 = vst.msk [vmem:[%s234 + $0x60] sm:$0xff] %vm697, %v677
        %711 = vst.msk [vmem:[%s234 + $0x68] sm:$0xff] %vm697, %v678
        %712 = vst.msk [vmem:[%s234 + $0x70] sm:$0xff] %vm697, %v679
        %713 = vst.msk [vmem:[%s234 + $0x78] sm:$0xff] %vm697, %v680
        %714 = vst.msk [vmem:[%s234 + $0x80] sm:$0xff] %vm697, %v681
        %715 = vst.msk [vmem:[%s234 + $0x88] sm:$0xff] %vm697, %v682
        %716 = vst.msk [vmem:[%s234 + $0x90] sm:$0xff] %vm697, %v683
        %717 = vst.msk [vmem:[%s234 + $0x98] sm:$0xff] %vm697, %v684
        %718 = vst.msk [vmem:[%s234 + $0xa0] sm:$0xff] %vm697, %v685
        %719 = vst.msk [vmem:[%s234 + $0xa8] sm:$0xff] %vm697, %v686
        %720 = vst.msk [vmem:[%s234 + $0xb0] sm:$0xff] %vm697, %v687
        %721 = vst.msk [vmem:[%s234 + $0xb8] sm:$0xff] %vm697, %v688
        %722 = vst.msk [vmem:[%s234 + $0xc0] sm:$0xff] %vm697, %v689
        %723 = vst.msk [vmem:[%s234 + $0xc8] sm:$0xff] %vm697, %v690
        %724 = vst.msk [vmem:[%s234 + $0xd0] sm:$0xff] %vm697, %v691
        %725 = vst.msk [vmem:[%s234 + $0xd8] sm:$0xff] %vm697, %v692
        %726 = vst.msk [vmem:[%s234 + $0xe0] sm:$0xff] %vm697, %v693
        %727 = vst.msk [vmem:[%s234 + $0xe8] sm:$0xff] %vm697, %v694
        %728 = vst.msk [vmem:[%s234 + $0xf0] sm:$0xff] %vm697, %v695
        %729 = vst.msk [vmem:[%s234 + $0xf8] sm:$0xff] %vm697, %v696
        %s730 = sand.u32 %s142, 1
        %s731 = scalar_lea.sflag [#allocation3], %s730
        %s732 = sand.u32 %s142, 1
        %s733 = smul.addr %s732, 256
        %s734 = scalar_lea.vmem [#allocation2], %s733
        // Predicated region
        $region41: #{bottle2neck_forward.5} parent=39 // pred_check
          %p735 = pneg %p152
        $region42: #{bottle2neck_forward.5} parent=39 // pred_check_branch
          %737 = sbr.rel (%p735) target = $region44
        $region43: #{bottle2neck_forward.5} parent=39 // pred_region
          %s738 = smul.u32 32, %s19
          %s740 = ssub.s32 4096, 4096
          %741 = vsyncadd %s731, %s740
          %s742 = smul.addr %s738, 128
          %s743 = scalar_lea.hbm %s5, %s742
          %s744 = sshll.u32 %s734, 4
          %s745 = int_to_ptr.vmem [resolvable:$true] %s744
          %750 = dma.vmem_to_hbm [thread:$0]  %s745, 4096, %s743, %s731, 128, 128, 8
        $region44: #{bottle2neck_forward.5} parent=39 // pred_fallthru
          _
      $region40: #{bottle2neck_forward.5} parent=5 // pred_fallthru
        _
      %p751 = scmp.le.s32.totalorder 2, %s14
      // Predicated region
      $region45: #{bottle2neck_forward.5} parent=5 // pred_check
        %p752 = pneg %p751
      $region46: #{bottle2neck_forward.5} parent=5 // pred_check_branch
        %754 = sbr.rel (%p752) target = $region48
      $region47: #{bottle2neck_forward.5} parent=5 // pred_region
        %s755 = ssub.s32 %s14, 2
        // Predicated region
        $region49: #{bottle2neck_forward.5} parent=47 // pred_check
          %p756 = pneg %p158
        $region50: #{bottle2neck_forward.5} parent=47 // pred_check_branch
          %758 = sbr.rel (%p756) target = $region52
        $region51: #{bottle2neck_forward.5} parent=47 // pred_region
          %s759 = sand.u32 %s143, 1
          %s760 = scalar_lea.sflag [#allocation3], %s759
          %s761 = sand.u32 %s143, 1
          %s762 = smul.addr %s761, 256
          %s763 = scalar_lea.vmem [#allocation2], %s762
          %764 = dma.done %s760, 4096
        $region52: #{bottle2neck_forward.5} parent=47 // pred_fallthru
          _
      $region48: #{bottle2neck_forward.5} parent=5 // pred_fallthru
        _
    $region6: #{bottle2neck_forward.5} parent=1 // loop_footer
      %s18 = sadd.s32 1, %s14
    $region7: #{bottle2neck_forward.5} parent=1 // loop_footer_branch
      %13 = sbr.rel target = $region3
    $region8: #{bottle2neck_forward.5} parent=1 // loop_exit
      _
    %765 = vsyncpa [#allocation3], 1
    %s766 = scalar_lea.sflag [#allocation3], 1
    %767 = vsyncpa %s766, 1

// kernel: bottle2neck_forward.4
$region0: #{bottle2neck_forward.4}
  #allocation0 [shape = 'u32[]', space=smem, size = 0x4, offset = 0x4, fixed_abs, tag = 'smem constant byte address 0x4 - core index']
  #allocation1 [shape = 'u32[144,128]{1,0:T(1,128)}', space=vmem, size = 0x12000, scoped, tag = 'internal scratch']
  #allocation2 [shape = 'f32[18,18,6]{2,1,0:T(8,128)}', space=vmem, size = 0x36000, scoped, tag = 'scratch operand']
  #allocation3 [shape = 'f32[256,54]{1,0:T(8,128)}', space=vmem, size = 0x20000, scoped, tag = 'scratch operand']
  %s0 = inlined_call_operand.vmem [shape: f32[2,16,16,24], index: 0, kind: input, shape index: {}]
  %s1 = inlined_call_operand.vmem [shape: bf16[3,54,6], index: 1, kind: input, shape index: {}]
  %s2 = inlined_call_operand.vmem [shape: f32[3,1,6], index: 2, kind: input, shape index: {}]
  %s3 = inlined_call_operand.vmem [shape: f32[3,1,6], index: 3, kind: input, shape index: {}]
  %s4 = inlined_call_operand.vmem [shape: f32[2,16,16,24], index: 4, kind: output, shape index: {}]
  %s5 = sld [smem:[#allocation0]]
  $region49: #{bottle2neck_forward.4} parent=0
    _
  %s7 = ssub.s32 1, %s5
  %s8 = scalar_select 0, %s7, %s5
  loop: start=0, step=1, limit=4
  $region2: #{bottle2neck_forward.4} parent=0 // loop_pre_header
    _
  $region3: #{bottle2neck_forward.4} parent=0 // loop_header
    %s10 = sphi 0, %s14
    %p11 = scmp.ge.s32.totalorder %s10, 4
    %s20 = sphi 0, %s22
    %s23 = sphi 0, %s20
    %s24 = sphi 0, %s23
    %s40 = sphi 0, %s24
    %s44 = sphi 0, %s44
    %s46 = sphi 0, %s44
    %s47 = sphi 0, %s46
    %s61 = sphi 0, %s47
    %s65 = sphi 0, %s65
    %s67 = sphi 0, %s65
    %s68 = sphi 0, %s67
    %s82 = sphi 0, %s68
    %s86 = sphi 0, %s86
    %s88 = sphi 0, %s86
    %s89 = sphi 0, %s88
    %s103 = sphi 0, %s89
    %s109 = sphi 0, %s111
    %s112 = sphi 0, %s109
    %s113 = sphi 0, %s112
    %s129 = sphi 0, %s113
  $region4: #{bottle2neck_forward.4} parent=0 // loop_header_branch
    %13 = sbr.rel (%p11) target = $region8
  $region5: #{bottle2neck_forward.4} parent=0 // loop_body
    %s15 = ssub.s32 %s10, 1
    %s16 = ssub.s32 %s10, 2
    %s17 = sadd.s32 %s10, 1
    %s18 = ssub.s32 %s10, %s17
    %p19 = scmp.eq.s32.totalorder %s18, 0
    %s21 = sadd.s32 %s20, 1
    %s22 = scalar_select %p19, %s20, %s21
    %p25 = pneg %p19
    %p26 = scmp.eq.s32.totalorder %s10, 1
    %p27 = por %p25, %p26
    %p28 = scmp.ne.s32.totalorder %s20, %s23
    %p29 = scmp.eq.s32.totalorder %s10, 0
    %p30 = por %p28, %p29
    %p31 = scmp.ne.s32.totalorder %s20, %s23
    %p32 = scmp.eq.s32.totalorder %s15, 1
    %p33 = por %p31, %p32
    %p34 = scmp.ne.s32.totalorder %s23, %s24
    %p35 = scmp.eq.s32.totalorder %s15, 0
    %p36 = por %p34, %p35
    %p37 = scmp.ne.s32.totalorder %s23, %s24
    %p38 = scmp.eq.s32.totalorder %s16, 1
    %p39 = por %p37, %p38
    %p41 = scmp.ne.s32.totalorder %s24, %s40
    %p42 = scmp.eq.s32.totalorder %s16, 0
    %p43 = por %p41, %p42
    %s45 = sadd.s32 %s44, 1
    %p48 = scmp.eq.s32.totalorder %s10, 1
    %p49 = scmp.ne.s32.totalorder %s44, %s46
    %p50 = scmp.eq.s32.totalorder %s10, 0
    %p51 = por %p49, %p50
    %p52 = scmp.ne.s32.totalorder %s44, %s46
    %p53 = scmp.eq.s32.totalorder %s15, 1
    %p54 = por %p52, %p53
    %p55 = scmp.ne.s32.totalorder %s46, %s47
    %p56 = scmp.eq.s32.totalorder %s15, 0
    %p57 = por %p55, %p56
    %p58 = scmp.ne.s32.totalorder %s46, %s47
    %p59 = scmp.eq.s32.totalorder %s16, 1
    %p60 = por %p58, %p59
    %p62 = scmp.ne.s32.totalorder %s47, %s61
    %p63 = scmp.eq.s32.totalorder %s16, 0
    %p64 = por %p62, %p63
    %s66 = sadd.s32 %s65, 1
    %p69 = scmp.eq.s32.totalorder %s10, 1
    %p70 = scmp.ne.s32.totalorder %s65, %s67
    %p71 = scmp.eq.s32.totalorder %s10, 0
    %p72 = por %p70, %p71
    %p73 = scmp.ne.s32.totalorder %s65, %s67
    %p74 = scmp.eq.s32.totalorder %s15, 1
    %p75 = por %p73, %p74
    %p76 = scmp.ne.s32.totalorder %s67, %s68
    %p77 = scmp.eq.s32.totalorder %s15, 0
    %p78 = por %p76, %p77
    %p79 = scmp.ne.s32.totalorder %s67, %s68
    %p80 = scmp.eq.s32.totalorder %s16, 1
    %p81 = por %p79, %p80
    %p83 = scmp.ne.s32.totalorder %s68, %s82
    %p84 = scmp.eq.s32.totalorder %s16, 0
    %p85 = por %p83, %p84
    %s87 = sadd.s32 %s86, 1
    %p90 = scmp.eq.s32.totalorder %s10, 1
    %p91 = scmp.ne.s32.totalorder %s86, %s88
    %p92 = scmp.eq.s32.totalorder %s10, 0
    %p93 = por %p91, %p92
    %p94 = scmp.ne.s32.totalorder %s86, %s88
    %p95 = scmp.eq.s32.totalorder %s15, 1
    %p96 = por %p94, %p95
    %p97 = scmp.ne.s32.totalorder %s88, %s89
    %p98 = scmp.eq.s32.totalorder %s15, 0
    %p99 = por %p97, %p98
    %p100 = scmp.ne.s32.totalorder %s88, %s89
    %p101 = scmp.eq.s32.totalorder %s16, 1
    %p102 = por %p100, %p101
    %p104 = scmp.ne.s32.totalorder %s89, %s103
    %p105 = scmp.eq.s32.totalorder %s16, 0
    %p106 = por %p104, %p105
    %s107 = ssub.s32 %s10, %s17
    %p108 = scmp.eq.s32.totalorder %s107, 0
    %s110 = sadd.s32 %s109, 1
    %s111 = scalar_select %p108, %s109, %s110
    %p114 = pneg %p108
    %p115 = scmp.eq.s32.totalorder %s10, 1
    %p116 = por %p114, %p115
    %p117 = scmp.ne.s32.totalorder %s109, %s112
    %p118 = scmp.eq.s32.totalorder %s10, 0
    %p119 = por %p117, %p118
    %p120 = scmp.ne.s32.totalorder %s109, %s112
    %p121 = scmp.eq.s32.totalorder %s15, 1
    %p122 = por %p120, %p121
    %p123 = scmp.ne.s32.totalorder %s112, %s113
    %p124 = scmp.eq.s32.totalorder %s15, 0
    %p125 = por %p123, %p124
    %p126 = scmp.ne.s32.totalorder %s112, %s113
    %p127 = scmp.eq.s32.totalorder %s16, 1
    %p128 = por %p126, %p127
    %p130 = scmp.ne.s32.totalorder %s113, %s129
    %p131 = scmp.eq.s32.totalorder %s16, 0
    %p132 = por %p130, %p131
    %p133 = scmp.le.s32.totalorder 1, %s10
    %p134 = scmp.lt.s32.totalorder %s10, 3
    %p135 = pnand %p133, %p134
    %p136 = pneg %p135
    // Predicated region
    $region9: #{bottle2neck_forward.4} parent=5 // pred_check
      _
    $region10: #{bottle2neck_forward.4} parent=5 // pred_check_branch
      %138 = sbr.rel (%p135) target = $region12
    $region11: #{bottle2neck_forward.4} parent=5 // pred_region
      %s139 = ssub.s32 %s10, 1
      // Predicated region
      $region13: #{bottle2neck_forward.4} parent=11 // pred_check
        %p140 = pneg %p57
      $region14: #{bottle2neck_forward.4} parent=11 // pred_check_branch
        %142 = sbr.rel (%p140) target = $region16
      $region15: #{bottle2neck_forward.4} parent=11 // pred_region
        _
      $region16: #{bottle2neck_forward.4} parent=11 // pred_fallthru
        _
      // Predicated region
      $region17: #{bottle2neck_forward.4} parent=11 // pred_check
        %p143 = pneg %p78
      $region18: #{bottle2neck_forward.4} parent=11 // pred_check_branch
        %145 = sbr.rel (%p143) target = $region20
      $region19: #{bottle2neck_forward.4} parent=11 // pred_region
        _
      $region20: #{bottle2neck_forward.4} parent=11 // pred_fallthru
        _
      // Predicated region
      $region21: #{bottle2neck_forward.4} parent=11 // pred_check
        %p146 = pneg %p99
      $region22: #{bottle2neck_forward.4} parent=11 // pred_check_branch
        %148 = sbr.rel (%p146) target = $region24
      $region23: #{bottle2neck_forward.4} parent=11 // pred_region
        _
      $region24: #{bottle2neck_forward.4} parent=11 // pred_fallthru
        _
    $region12: #{bottle2neck_forward.4} parent=5 // pred_fallthru
      _
    %p149 = scmp.lt.s32.totalorder %s10, 2
    // Predicated region
    $region25: #{bottle2neck_forward.4} parent=5 // pred_check
      %p150 = pneg %p149
    $region26: #{bottle2neck_forward.4} parent=5 // pred_check_branch
      %152 = sbr.rel (%p150) target = $region28
    $region27: #{bottle2neck_forward.4} parent=5 // pred_region
      // Predicated region
      $region29: #{bottle2neck_forward.4} parent=27 // pred_check
        %p153 = pneg %p30
      $region30: #{bottle2neck_forward.4} parent=27 // pred_check_branch
        %155 = sbr.rel (%p153) target = $region32
      $region31: #{bottle2neck_forward.4} parent=27 // pred_region
        %p156 = scmp.lt.s32.totalorder %s10, 1
        %s157 = scalar_select %p156, %s10, 1
        %s158 = smul.addr %s157, 32
        %s159 = smul.addr %s158, 8
        %s160 = scalar_lea.vmem %s0, %s159
      $region32: #{bottle2neck_forward.4} parent=27 // pred_fallthru
        _
    $region28: #{bottle2neck_forward.4} parent=5 // pred_fallthru
      _
    %p161 = scmp.le.s32.totalorder 1, %s10
    %p162 = scmp.lt.s32.totalorder %s10, 3
    %p163 = pnand %p161, %p162
    %p164 = pneg %p163
    // Predicated region
    $region33: #{bottle2neck_forward.4} parent=5 // pred_check
      _
    $region34: #{bottle2neck_forward.4} parent=5 // pred_check_branch
      %166 = sbr.rel (%p163) target = $region36
    $region35: #{bottle2neck_forward.4} parent=5 // pred_region
      %s167 = ssub.s32 %s10, 1
      %p168 = scmp.lt.s32.totalorder %s15, 1
      %s169 = scalar_select %p168, %s15, 1
      %s170 = smul.addr %s169, 32
      %s171 = smul.addr %s170, 8
      %s172 = scalar_lea.vmem %s0, %s171
      %p173 = pneg %p36
      %p174 = pneg %p33
      %p175 = pneg %p57
      %p176 = pneg %p54
      %p177 = pneg %p78
      %p178 = pneg %p75
      %p179 = pneg %p99
      %p180 = pneg %p96
      %p181 = pneg %p125
      %p182 = pneg %p122
      %p183 = scmp.lt.s32.totalorder %s15, 1
      %s184 = scalar_select %p183, %s15, 1
      %s185 = smul.addr %s184, 32
      %s186 = smul.addr %s185, 8
      %s187 = scalar_lea.vmem %s4, %s186
      %p188 = scmp.lt.s32.totalorder %s15, 1
      %s189 = scalar_select %p188, %s15, 1
      %s190 = smul.addr %s189, 32
      %s191 = smul.addr %s190, 8
      %s192 = scalar_lea.vmem %s0, %s191
      %p193 = scmp.lt.s32.totalorder %s15, 1
      %s194 = scalar_select %p193, %s15, 1
      %s195 = smul.addr %s194, 32
      %s196 = smul.addr %s195, 8
      %s197 = scalar_lea.vmem %s4, %s196
      %vm199 = vcmask 48128
      %200 = vst.msk [vmem:[#allocation2] sm:$0xff] %vm199, 0.0
      %201 = vst.msk [vmem:[#allocation2 + $0x8] sm:$0xff] %vm199, 0.0
      %vm202 = vcmask 41984
      %203 = vst.msk [vmem:[#allocation2 + $0x10] sm:$0x3] %vm202, 0.0
      %204 = vst.msk [vmem:[#allocation2 + $0x18] sm:$0xff] %vm199, 0.0
      %205 = vst.msk [vmem:[#allocation2 + $0x20] sm:$0xff] %vm199, 0.0
      %206 = vst.msk [vmem:[#allocation2 + $0x28] sm:$0x3] %vm202, 0.0
      %207 = vst.msk [vmem:[#allocation2 + $0x30] sm:$0xff] %vm199, 0.0
      %208 = vst.msk [vmem:[#allocation2 + $0x38] sm:$0xff] %vm199, 0.0
      %209 = vst.msk [vmem:[#allocation2 + $0x40] sm:$0x3] %vm202, 0.0
      %210 = vst.msk [vmem:[#allocation2 + $0x48] sm:$0xff] %vm199, 0.0
      %211 = vst.msk [vmem:[#allocation2 + $0x50] sm:$0xff] %vm199, 0.0
      %212 = vst.msk [vmem:[#allocation2 + $0x58] sm:$0x3] %vm202, 0.0
      %213 = vst.msk [vmem:[#allocation2 + $0x60] sm:$0xff] %vm199, 0.0
      %214 = vst.msk [vmem:[#allocation2 + $0x68] sm:$0xff] %vm199, 0.0
      %215 = vst.msk [vmem:[#allocation2 + $0x70] sm:$0x3] %vm202, 0.0
      %216 = vst.msk [vmem:[#allocation2 + $0x78] sm:$0xff] %vm199, 0.0
      %217 = vst.msk [vmem:[#allocation2 + $0x80] sm:$0xff] %vm199, 0.0
      %218 = vst.msk [vmem:[#allocation2 + $0x88] sm:$0x3] %vm202, 0.0
      %219 = vst.msk [vmem:[#allocation2 + $0x90] sm:$0xff] %vm199, 0.0
      %220 = vst.msk [vmem:[#allocation2 + $0x98] sm:$0xff] %vm199, 0.0
      %221 = vst.msk [vmem:[#allocation2 + $0xa0] sm:$0x3] %vm202, 0.0
      %222 = vst.msk [vmem:[#allocation2 + $0xa8] sm:$0xff] %vm199, 0.0
      %223 = vst.msk [vmem:[#allocation2 + $0xb0] sm:$0xff] %vm199, 0.0
      %224 = vst.msk [vmem:[#allocation2 + $0xb8] sm:$0x3] %vm202, 0.0
      %225 = vst.msk [vmem:[#allocation2 + $0xc0] sm:$0xff] %vm199, 0.0
      %226 = vst.msk [vmem:[#allocation2 + $0xc8] sm:$0xff] %vm199, 0.0
      %227 = vst.msk [vmem:[#allocation2 + $0xd0] sm:$0x3] %vm202, 0.0
      %228 = vst.msk [vmem:[#allocation2 + $0xd8] sm:$0xff] %vm199, 0.0
      %229 = vst.msk [vmem:[#allocation2 + $0xe0] sm:$0xff] %vm199, 0.0
      %230 = vst.msk [vmem:[#allocation2 + $0xe8] sm:$0x3] %vm202, 0.0
      %231 = vst.msk [vmem:[#allocation2 + $0xf0] sm:$0xff] %vm199, 0.0
      %232 = vst.msk [vmem:[#allocation2 + $0xf8] sm:$0xff] %vm199, 0.0
      %233 = vst.msk [vmem:[#allocation2 + $0x100] sm:$0x3] %vm202, 0.0
      %234 = vst.msk [vmem:[#allocation2 + $0x108] sm:$0xff] %vm199, 0.0
      %235 = vst.msk [vmem:[#allocation2 + $0x110] sm:$0xff] %vm199, 0.0
      %236 = vst.msk [vmem:[#allocation2 + $0x118] sm:$0x3] %vm202, 0.0
      %237 = vst.msk [vmem:[#allocation2 + $0x120] sm:$0xff] %vm199, 0.0
      %238 = vst.msk [vmem:[#allocation2 + $0x128] sm:$0xff] %vm199, 0.0
      %239 = vst.msk [vmem:[#allocation2 + $0x130] sm:$0x3] %vm202, 0.0
      %240 = vst.msk [vmem:[#allocation2 + $0x138] sm:$0xff] %vm199, 0.0
      %241 = vst.msk [vmem:[#allocation2 + $0x140] sm:$0xff] %vm199, 0.0
      %242 = vst.msk [vmem:[#allocation2 + $0x148] sm:$0x3] %vm202, 0.0
      %243 = vst.msk [vmem:[#allocation2 + $0x150] sm:$0xff] %vm199, 0.0
      %244 = vst.msk [vmem:[#allocation2 + $0x158] sm:$0xff] %vm199, 0.0
      %245 = vst.msk [vmem:[#allocation2 + $0x160] sm:$0x3] %vm202, 0.0
      %246 = vst.msk [vmem:[#allocation2 + $0x168] sm:$0xff] %vm199, 0.0
      %247 = vst.msk [vmem:[#allocation2 + $0x170] sm:$0xff] %vm199, 0.0
      %248 = vst.msk [vmem:[#allocation2 + $0x178] sm:$0x3] %vm202, 0.0
      %249 = vst.msk [vmem:[#allocation2 + $0x180] sm:$0xff] %vm199, 0.0
      %250 = vst.msk [vmem:[#allocation2 + $0x188] sm:$0xff] %vm199, 0.0
      %251 = vst.msk [vmem:[#allocation2 + $0x190] sm:$0x3] %vm202, 0.0
      %252 = vst.msk [vmem:[#allocation2 + $0x198] sm:$0xff] %vm199, 0.0
      %253 = vst.msk [vmem:[#allocation2 + $0x1a0] sm:$0xff] %vm199, 0.0
      %254 = vst.msk [vmem:[#allocation2 + $0x1a8] sm:$0x3] %vm202, 0.0
      %v255 = vld [vmem:[%s192] sm:$0xff]
      %v256 = vld [vmem:[%s192 + $0x8] sm:$0xff]
      %v257 = vld [vmem:[%s192 + $0x10] sm:$0xff]
      %v258 = vld [vmem:[%s192 + $0x18] sm:$0xff]
      %v259 = vld [vmem:[%s192 + $0x20] sm:$0xff]
      %v260 = vld [vmem:[%s192 + $0x28] sm:$0xff]
      %v261 = vld [vmem:[%s192 + $0x30] sm:$0xff]
      %v262 = vld [vmem:[%s192 + $0x38] sm:$0xff]
      %v263 = vld [vmem:[%s192 + $0x40] sm:$0xff]
      %v264 = vld [vmem:[%s192 + $0x48] sm:$0xff]
      %v265 = vld [vmem:[%s192 + $0x50] sm:$0xff]
      %v266 = vld [vmem:[%s192 + $0x58] sm:$0xff]
      %v267 = vld [vmem:[%s192 + $0x60] sm:$0xff]
      %v268 = vld [vmem:[%s192 + $0x68] sm:$0xff]
      %v269 = vld [vmem:[%s192 + $0x70] sm:$0xff]
      %v270 = vld [vmem:[%s192 + $0x78] sm:$0xff]
      %v271 = vld [vmem:[%s192 + $0x80] sm:$0xff]
      %v272 = vld [vmem:[%s192 + $0x88] sm:$0xff]
      %v273 = vld [vmem:[%s192 + $0x90] sm:$0xff]
      %v274 = vld [vmem:[%s192 + $0x98] sm:$0xff]
      %v275 = vld [vmem:[%s192 + $0xa0] sm:$0xff]
      %v276 = vld [vmem:[%s192 + $0xa8] sm:$0xff]
      %v277 = vld [vmem:[%s192 + $0xb0] sm:$0xff]
      %v278 = vld [vmem:[%s192 + $0xb8] sm:$0xff]
      %v279 = vld [vmem:[%s192 + $0xc0] sm:$0xff]
      %v280 = vld [vmem:[%s192 + $0xc8] sm:$0xff]
      %v281 = vld [vmem:[%s192 + $0xd0] sm:$0xff]
      %v282 = vld [vmem:[%s192 + $0xd8] sm:$0xff]
      %v283 = vld [vmem:[%s192 + $0xe0] sm:$0xff]
      %v284 = vld [vmem:[%s192 + $0xe8] sm:$0xff]
      %v285 = vld [vmem:[%s192 + $0xf0] sm:$0xff]
      %v286 = vld [vmem:[%s192 + $0xf8] sm:$0xff]
      %s287 = scalar_lea.vmem [#allocation2], 24
      %288 = vst.msk [vmem:[%s287 + $0x1] sm:$0xff] %vm199, %v255
      %289 = vst.msk [vmem:[%s287 + $0x9] sm:$0xff] %vm199, %v256
      %290 = vst.msk [vmem:[%s287 + $0x19] sm:$0xff] %vm199, %v257
      %291 = vst.msk [vmem:[%s287 + $0x21] sm:$0xff] %vm199, %v258
      %292 = vst.msk [vmem:[%s287 + $0x31] sm:$0xff] %vm199, %v259
      %293 = vst.msk [vmem:[%s287 + $0x39] sm:$0xff] %vm199, %v260
      %294 = vst.msk [vmem:[%s287 + $0x49] sm:$0xff] %vm199, %v261
      %295 = vst.msk [vmem:[%s287 + $0x51] sm:$0xff] %vm199, %v262
      %296 = vst.msk [vmem:[%s287 + $0x61] sm:$0xff] %vm199, %v263
      %297 = vst.msk [vmem:[%s287 + $0x69] sm:$0xff] %vm199, %v264
      %298 = vst.msk [vmem:[%s287 + $0x79] sm:$0xff] %vm199, %v265
      %299 = vst.msk [vmem:[%s287 + $0x81] sm:$0xff] %vm199, %v266
      %300 = vst.msk [vmem:[%s287 + $0x91] sm:$0xff] %vm199, %v267
      %301 = vst.msk [vmem:[%s287 + $0x99] sm:$0xff] %vm199, %v268
      %302 = vst.msk [vmem:[%s287 + $0xa9] sm:$0xff] %vm199, %v269
      %303 = vst.msk [vmem:[%s287 + $0xb1] sm:$0xff] %vm199, %v270
      %304 = vst.msk [vmem:[%s287 + $0xc1] sm:$0xff] %vm199, %v271
      %305 = vst.msk [vmem:[%s287 + $0xc9] sm:$0xff] %vm199, %v272
      %306 = vst.msk [vmem:[%s287 + $0xd9] sm:$0xff] %vm199, %v273
      %307 = vst.msk [vmem:[%s287 + $0xe1] sm:$0xff] %vm199, %v274
      %308 = vst.msk [vmem:[%s287 + $0xf1] sm:$0xff] %vm199, %v275
      %309 = vst.msk [vmem:[%s287 + $0xf9] sm:$0xff] %vm199, %v276
      %310 = vst.msk [vmem:[%s287 + $0x109] sm:$0xff] %vm199, %v277
      %311 = vst.msk [vmem:[%s287 + $0x111] sm:$0xff] %vm199, %v278
      %312 = vst.msk [vmem:[%s287 + $0x121] sm:$0xff] %vm199, %v279
      %313 = vst.msk [vmem:[%s287 + $0x129] sm:$0xff] %vm199, %v280
      %314 = vst.msk [vmem:[%s287 + $0x139] sm:$0xff] %vm199, %v281
      %315 = vst.msk [vmem:[%s287 + $0x141] sm:$0xff] %vm199, %v282
      %316 = vst.msk [vmem:[%s287 + $0x151] sm:$0xff] %vm199, %v283
      %317 = vst.msk [vmem:[%s287 + $0x159] sm:$0xff] %vm199, %v284
      %318 = vst.msk [vmem:[%s287 + $0x169] sm:$0xff] %vm199, %v285
      %319 = vst.msk [vmem:[%s287 + $0x171] sm:$0xff] %vm199, %v286
      %v320 = vld [vmem:[#allocation2] sm:$0xff]
      %v321 = vld [vmem:[#allocation2 + $0x8] sm:$0xff]
      %v322 = vld [vmem:[#allocation2 + $0x10] sm:$0x3]
      %v323 = vld [vmem:[#allocation2 + $0x18] sm:$0xff]
      %v324 = vld [vmem:[#allocation2 + $0x20] sm:$0xff]
      %v325 = vld [vmem:[#allocation2 + $0x28] sm:$0x3]
      %v326 = vld [vmem:[#allocation2 + $0x30] sm:$0xff]
      %v327 = vld [vmem:[#allocation2 + $0x38] sm:$0xff]
      %v328 = vld [vmem:[#allocation2 + $0x40] sm:$0x3]
      %v329 = vld [vmem:[#allocation2 + $0x48] sm:$0xff]
      %v330 = vld [vmem:[#allocation2 + $0x50] sm:$0xff]
      %v331 = vld [vmem:[#allocation2 + $0x58] sm:$0x3]
      %v332 = vld [vmem:[#allocation2 + $0x60] sm:$0xff]
      %v333 = vld [vmem:[#allocation2 + $0x68] sm:$0xff]
      %v334 = vld [vmem:[#allocation2 + $0x70] sm:$0x3]
      %v335 = vld [vmem:[#allocation2 + $0x78] sm:$0xff]
      %v336 = vld [vmem:[#allocation2 + $0x80] sm:$0xff]
      %v337 = vld [vmem:[#allocation2 + $0x88] sm:$0x3]
      %v338 = vld [vmem:[#allocation2 + $0x90] sm:$0xff]
      %v339 = vld [vmem:[#allocation2 + $0x98] sm:$0xff]
      %v340 = vld [vmem:[#allocation2 + $0xa0] sm:$0x3]
      %v341 = vld [vmem:[#allocation2 + $0xa8] sm:$0xff]
      %v342 = vld [vmem:[#allocation2 + $0xb0] sm:$0xff]
      %v343 = vld [vmem:[#allocation2 + $0xb8] sm:$0x3]
      %v344 = vld [vmem:[#allocation2 + $0xc0] sm:$0xff]
      %v345 = vld [vmem:[#allocation2 + $0xc8] sm:$0xff]
      %v346 = vld [vmem:[#allocation2 + $0xd0] sm:$0x3]
      %v347 = vld [vmem:[#allocation2 + $0xd8] sm:$0xff]
      %v348 = vld [vmem:[#allocation2 + $0xe0] sm:$0xff]
      %v349 = vld [vmem:[#allocation2 + $0xe8] sm:$0x3]
      %v350 = vld [vmem:[#allocation2 + $0xf0] sm:$0xff]
      %v351 = vld [vmem:[#allocation2 + $0xf8] sm:$0xff]
      %v352 = vld [vmem:[#allocation2 + $0x100] sm:$0x3]
      %v353 = vld [vmem:[#allocation2 + $0x108] sm:$0xff]
      %v354 = vld [vmem:[#allocation2 + $0x110] sm:$0xff]
      %v355 = vld [vmem:[#allocation2 + $0x118] sm:$0x3]
      %v356 = vld [vmem:[#allocation2 + $0x120] sm:$0xff]
      %v357 = vld [vmem:[#allocation2 + $0x128] sm:$0xff]
      %v358 = vld [vmem:[#allocation2 + $0x130] sm:$0x3]
      %v359 = vld [vmem:[#allocation2 + $0x138] sm:$0xff]
      %v360 = vld [vmem:[#allocation2 + $0x140] sm:$0xff]
      %v361 = vld [vmem:[#allocation2 + $0x148] sm:$0x3]
      %v362 = vld [vmem:[#allocation2 + $0x150] sm:$0xff]
      %v363 = vld [vmem:[#allocation2 + $0x158] sm:$0xff]
      %v364 = vld [vmem:[#allocation2 + $0x160] sm:$0x3]
      %v365 = vld [vmem:[#allocation2 + $0x168] sm:$0xff]
      %v366 = vld [vmem:[#allocation2 + $0x170] sm:$0xff]
      %v367 = vld [vmem:[#allocation2 + $0x178] sm:$0x3]
      %v368 = vld [vmem:[#allocation2 + $0x180] sm:$0xff]
      %v369 = vld [vmem:[#allocation2 + $0x188] sm:$0xff]
      %v370 = vld [vmem:[#allocation2 + $0x190] sm:$0x3]
      %v371 = vld [vmem:[#allocation2 + $0x198] sm:$0xff]
      %v372 = vld [vmem:[#allocation2 + $0x1a0] sm:$0xff]
      %v373 = vld [vmem:[#allocation2 + $0x1a8] sm:$0x3]
      %374 = vst.msk [vmem:[#allocation3] sm:$0xff] %vm199, %v320
      %375 = vst.msk [vmem:[#allocation3 + $0x8] sm:$0xff] %vm199, %v321
      %376 = vst.msk [vmem:[#allocation3 + $0x10] sm:$0xff] %vm199, %v323
      %377 = vst.msk [vmem:[#allocation3 + $0x18] sm:$0xff] %vm199, %v324
      %378 = vst.msk [vmem:[#allocation3 + $0x20] sm:$0xff] %vm199, %v326
      %379 = vst.msk [vmem:[#allocation3 + $0x28] sm:$0xff] %vm199, %v327
      %380 = vst.msk [vmem:[#allocation3 + $0x30] sm:$0xff] %vm199, %v329
      %381 = vst.msk [vmem:[#allocation3 + $0x38] sm:$0xff] %vm199, %v330
      %382 = vst.msk [vmem:[#allocation3 + $0x40] sm:$0xff] %vm199, %v332
      %383 = vst.msk [vmem:[#allocation3 + $0x48] sm:$0xff] %vm199, %v333
      %384 = vst.msk [vmem:[#allocation3 + $0x50] sm:$0xff] %vm199, %v335
      %385 = vst.msk [vmem:[#allocation3 + $0x58] sm:$0xff] %vm199, %v336
      %386 = vst.msk [vmem:[#allocation3 + $0x60] sm:$0xff] %vm199, %v338
      %387 = vst.msk [vmem:[#allocation3 + $0x68] sm:$0xff] %vm199, %v339
      %388 = vst.msk [vmem:[#allocation3 + $0x70] sm:$0xff] %vm199, %v341
      %389 = vst.msk [vmem:[#allocation3 + $0x78] sm:$0xff] %vm199, %v342
      %390 = vst.msk [vmem:[#allocation3 + $0x80] sm:$0xff] %vm199, %v344
      %391 = vst.msk [vmem:[#allocation3 + $0x88] sm:$0xff] %vm199, %v345
      %392 = vst.msk [vmem:[#allocation3 + $0x90] sm:$0xff] %vm199, %v347
      %393 = vst.msk [vmem:[#allocation3 + $0x98] sm:$0xff] %vm199, %v348
      %394 = vst.msk [vmem:[#allocation3 + $0xa0] sm:$0xff] %vm199, %v350
      %395 = vst.msk [vmem:[#allocation3 + $0xa8] sm:$0xff] %vm199, %v351
      %396 = vst.msk [vmem:[#allocation3 + $0xb0] sm:$0xff] %vm199, %v353
      %397 = vst.msk [vmem:[#allocation3 + $0xb8] sm:$0xff] %vm199, %v354
      %398 = vst.msk [vmem:[#allocation3 + $0xc0] sm:$0xff] %vm199, %v356
      %399 = vst.msk [vmem:[#allocation3 + $0xc8] sm:$0xff] %vm199, %v357
      %400 = vst.msk [vmem:[#allocation3 + $0xd0] sm:$0xff] %vm199, %v359
      %401 = vst.msk [vmem:[#allocation3 + $0xd8] sm:$0xff] %vm199, %v360
      %402 = vst.msk [vmem:[#allocation3 + $0xe0] sm:$0xff] %vm199, %v362
      %403 = vst.msk [vmem:[#allocation3 + $0xe8] sm:$0xff] %vm199, %v363
      %404 = vst.msk [vmem:[#allocation3 + $0xf0] sm:$0xff] %vm199, %v365
      %405 = vst.msk [vmem:[#allocation3 + $0xf8] sm:$0xff] %vm199, %v366
      %vm454 = vcmask 1046528
      %v455 = vrot.slane %v320, 1
      %v456 = vrot.slane %v321, 1
      %v457 = vsel %vm454, %v455, %v456
      %v458 = vrot.slane %v322, 1
      %v459 = vsel %vm454, %v456, %v458
      %v460 = vrot.slane %v323, 1
      %v461 = vrot.slane %v324, 1
      %v462 = vsel %vm454, %v460, %v461
      %v463 = vrot.slane %v325, 1
      %v464 = vsel %vm454, %v461, %v463
      %v465 = vrot.slane %v326, 1
      %v466 = vrot.slane %v327, 1
      %v467 = vsel %vm454, %v465, %v466
      %v468 = vrot.slane %v328, 1
      %v469 = vsel %vm454, %v466, %v468
      %v470 = vrot.slane %v329, 1
      %v471 = vrot.slane %v330, 1
      %v472 = vsel %vm454, %v470, %v471
      %v473 = vrot.slane %v331, 1
      %v474 = vsel %vm454, %v471, %v473
      %v475 = vrot.slane %v332, 1
      %v476 = vrot.slane %v333, 1
      %v477 = vsel %vm454, %v475, %v476
      %v478 = vrot.slane %v334, 1
      %v479 = vsel %vm454, %v476, %v478
      %v480 = vrot.slane %v335, 1
      %v481 = vrot.slane %v336, 1
      %v482 = vsel %vm454, %v480, %v481
      %v483 = vrot.slane %v337, 1
      %v484 = vsel %vm454, %v481, %v483
      %v485 = vrot.slane %v338, 1
      %v486 = vrot.slane %v339, 1
      %v487 = vsel %vm454, %v485, %v486
      %v488 = vrot.slane %v340, 1
      %v489 = vsel %vm454, %v486, %v488
      %v490 = vrot.slane %v341, 1
      %v491 = vrot.slane %v342, 1
      %v492 = vsel %vm454, %v490, %v491
      %v493 = vrot.slane %v343, 1
      %v494 = vsel %vm454, %v491, %v493
      %v495 = vrot.slane %v344, 1
      %v496 = vrot.slane %v345, 1
      %v497 = vsel %vm454, %v495, %v496
      %v498 = vrot.slane %v346, 1
      %v499 = vsel %vm454, %v496, %v498
      %v500 = vrot.slane %v347, 1
      %v501 = vrot.slane %v348, 1
      %v502 = vsel %vm454, %v500, %v501
      %v503 = vrot.slane %v349, 1
      %v504 = vsel %vm454, %v501, %v503
      %v505 = vrot.slane %v350, 1
      %v506 = vrot.slane %v351, 1
      %v507 = vsel %vm454, %v505, %v506
      %v508 = vrot.slane %v352, 1
      %v509 = vsel %vm454, %v506, %v508
      %v510 = vrot.slane %v353, 1
      %v511 = vrot.slane %v354, 1
      %v512 = vsel %vm454, %v510, %v511
      %v513 = vrot.slane %v355, 1
      %v514 = vsel %vm454, %v511, %v513
      %v515 = vrot.slane %v356, 1
      %v516 = vrot.slane %v357, 1
      %v517 = vsel %vm454, %v515, %v516
      %v518 = vrot.slane %v358, 1
      %v519 = vsel %vm454, %v516, %v518
      %v520 = vrot.slane %v359, 1
      %v521 = vrot.slane %v360, 1
      %v522 = vsel %vm454, %v520, %v521
      %v523 = vrot.slane %v361, 1
      %v524 = vsel %vm454, %v521, %v523
      %v525 = vrot.slane %v362, 1
      %v526 = vrot.slane %v363, 1
      %v527 = vsel %vm454, %v525, %v526
      %v528 = vrot.slane %v364, 1
      %v529 = vsel %vm454, %v526, %v528
      %v530 = vrot.slane %v365, 1
      %v531 = vrot.slane %v366, 1
      %v532 = vsel %vm454, %v530, %v531
      %v533 = vrot.slane %v367, 1
      %v534 = vsel %vm454, %v531, %v533
      %535 = vrot.lane.b32.xlu0 %v457, 6
      %v536 = vpop.permute.xlu0 %535
      %537 = vrot.lane.b32.xlu0 %v459, 6
      %v538 = vpop.permute.xlu0 %537
      %539 = vrot.lane.b32.xlu0 %v462, 6
      %v540 = vpop.permute.xlu0 %539
      %541 = vrot.lane.b32.xlu0 %v464, 6
      %v542 = vpop.permute.xlu0 %541
      %543 = vrot.lane.b32.xlu0 %v467, 6
      %v544 = vpop.permute.xlu0 %543
      %545 = vrot.lane.b32.xlu0 %v469, 6
      %v546 = vpop.permute.xlu0 %545
      %547 = vrot.lane.b32.xlu0 %v472, 6
      %v548 = vpop.permute.xlu0 %547
      %549 = vrot.lane.b32.xlu0 %v474, 6
      %v550 = vpop.permute.xlu0 %549
      %551 = vrot.lane.b32.xlu0 %v477, 6
      %v552 = vpop.permute.xlu0 %551
      %553 = vrot.lane.b32.xlu0 %v479, 6
      %v554 = vpop.permute.xlu0 %553
      %555 = vrot.lane.b32.xlu0 %v482, 6
      %v556 = vpop.permute.xlu0 %555
      %557 = vrot.lane.b32.xlu0 %v484, 6
      %v558 = vpop.permute.xlu0 %557
      %559 = vrot.lane.b32.xlu0 %v487, 6
      %v560 = vpop.permute.xlu0 %559
      %561 = vrot.lane.b32.xlu0 %v489, 6
      %v562 = vpop.permute.xlu0 %561
      %563 = vrot.lane.b32.xlu0 %v492, 6
      %v564 = vpop.permute.xlu0 %563
      %565 = vrot.lane.b32.xlu0 %v494, 6
      %v566 = vpop.permute.xlu0 %565
      %567 = vrot.lane.b32.xlu0 %v497, 6
      %v568 = vpop.permute.xlu0 %567
      %569 = vrot.lane.b32.xlu0 %v499, 6
      %v570 = vpop.permute.xlu0 %569
      %571 = vrot.lane.b32.xlu0 %v502, 6
      %v572 = vpop.permute.xlu0 %571
      %573 = vrot.lane.b32.xlu0 %v504, 6
      %v574 = vpop.permute.xlu0 %573
      %575 = vrot.lane.b32.xlu0 %v507, 6
      %v576 = vpop.permute.xlu0 %575
      %577 = vrot.lane.b32.xlu0 %v509, 6
      %v578 = vpop.permute.xlu0 %577
      %579 = vrot.lane.b32.xlu0 %v512, 6
      %v580 = vpop.permute.xlu0 %579
      %581 = vrot.lane.b32.xlu0 %v514, 6
      %v582 = vpop.permute.xlu0 %581
      %583 = vrot.lane.b32.xlu0 %v517, 6
      %v584 = vpop.permute.xlu0 %583
      %585 = vrot.lane.b32.xlu0 %v519, 6
      %v586 = vpop.permute.xlu0 %585
      %587 = vrot.lane.b32.xlu0 %v522, 6
      %v588 = vpop.permute.xlu0 %587
      %589 = vrot.lane.b32.xlu0 %v524, 6
      %v590 = vpop.permute.xlu0 %589
      %591 = vrot.lane.b32.xlu0 %v527, 6
      %v592 = vpop.permute.xlu0 %591
      %593 = vrot.lane.b32.xlu0 %v529, 6
      %v594 = vpop.permute.xlu0 %593
      %595 = vrot.lane.b32.xlu0 %v532, 6
      %v596 = vpop.permute.xlu0 %595
      %597 = vrot.lane.b32.xlu0 %v534, 6
      %v598 = vpop.permute.xlu0 %597
      %vm631 = vcmask 97328
      %632 = vst.msk [vmem:[#allocation3] sm:$0xff] %vm631, %v536
      %633 = vst.msk [vmem:[#allocation3 + $0x8] sm:$0xff] %vm631, %v538
      %634 = vst.msk [vmem:[#allocation3 + $0x10] sm:$0xff] %vm631, %v540
      %635 = vst.msk [vmem:[#allocation3 + $0x18] sm:$0xff] %vm631, %v542
      %636 = vst.msk [vmem:[#allocation3 + $0x20] sm:$0xff] %vm631, %v544
      %637 = vst.msk [vmem:[#allocation3 + $0x28] sm:$0xff] %vm631, %v546
      %638 = vst.msk [vmem:[#allocation3 + $0x30] sm:$0xff] %vm631, %v548
      %639 = vst.msk [vmem:[#allocation3 + $0x38] sm:$0xff] %vm631, %v550
      %640 = vst.msk [vmem:[#allocation3 + $0x40] sm:$0xff] %vm631, %v552
      %641 = vst.msk [vmem:[#allocation3 + $0x48] sm:$0xff] %vm631, %v554
      %642 = vst.msk [vmem:[#allocation3 + $0x50] sm:$0xff] %vm631, %v556
      %643 = vst.msk [vmem:[#allocation3 + $0x58] sm:$0xff] %vm631, %v558
      %644 = vst.msk [vmem:[#allocation3 + $0x60] sm:$0xff] %vm631, %v560
      %645 = vst.msk [vmem:[#allocation3 + $0x68] sm:$0xff] %vm631, %v562
      %646 = vst.msk [vmem:[#allocation3 + $0x70] sm:$0xff] %vm631, %v564
      %647 = vst.msk [vmem:[#allocation3 + $0x78] sm:$0xff] %vm631, %v566
      %648 = vst.msk [vmem:[#allocation3 + $0x80] sm:$0xff] %vm631, %v568
      %649 = vst.msk [vmem:[#allocation3 + $0x88] sm:$0xff] %vm631, %v570
      %650 = vst.msk [vmem:[#allocation3 + $0x90] sm:$0xff] %vm631, %v572
      %651 = vst.msk [vmem:[#allocation3 + $0x98] sm:$0xff] %vm631, %v574
      %652 = vst.msk [vmem:[#allocation3 + $0xa0] sm:$0xff] %vm631, %v576
      %653 = vst.msk [vmem:[#allocation3 + $0xa8] sm:$0xff] %vm631, %v578
      %654 = vst.msk [vmem:[#allocation3 + $0xb0] sm:$0xff] %vm631, %v580
      %655 = vst.msk [vmem:[#allocation3 + $0xb8] sm:$0xff] %vm631, %v582
      %656 = vst.msk [vmem:[#allocation3 + $0xc0] sm:$0xff] %vm631, %v584
      %657 = vst.msk [vmem:[#allocation3 + $0xc8] sm:$0xff] %vm631, %v586
      %658 = vst.msk [vmem:[#allocation3 + $0xd0] sm:$0xff] %vm631, %v588
      %659 = vst.msk [vmem:[#allocation3 + $0xd8] sm:$0xff] %vm631, %v590
      %660 = vst.msk [vmem:[#allocation3 + $0xe0] sm:$0xff] %vm631, %v592
      %661 = vst.msk [vmem:[#allocation3 + $0xe8] sm:$0xff] %vm631, %v594
      %662 = vst.msk [vmem:[#allocation3 + $0xf0] sm:$0xff] %vm631, %v596
      %663 = vst.msk [vmem:[#allocation3 + $0xf8] sm:$0xff] %vm631, %v598
      %vm664 = vcmask 1045504
      %v665 = vrot.slane %v320, 2
      %v666 = vrot.slane %v321, 2
      %v667 = vsel %vm664, %v665, %v666
      %v668 = vrot.slane %v322, 2
      %v669 = vsel %vm664, %v666, %v668
      %v670 = vrot.slane %v323, 2
      %v671 = vrot.slane %v324, 2
      %v672 = vsel %vm664, %v670, %v671
      %v673 = vrot.slane %v325, 2
      %v674 = vsel %vm664, %v671, %v673
      %v675 = vrot.slane %v326, 2
      %v676 = vrot.slane %v327, 2
      %v677 = vsel %vm664, %v675, %v676
      %v678 = vrot.slane %v328, 2
      %v679 = vsel %vm664, %v676, %v678
      %v680 = vrot.slane %v329, 2
      %v681 = vrot.slane %v330, 2
      %v682 = vsel %vm664, %v680, %v681
      %v683 = vrot.slane %v331, 2
      %v684 = vsel %vm664, %v681, %v683
      %v685 = vrot.slane %v332, 2
      %v686 = vrot.slane %v333, 2
      %v687 = vsel %vm664, %v685, %v686
      %v688 = vrot.slane %v334, 2
      %v689 = vsel %vm664, %v686, %v688
      %v690 = vrot.slane %v335, 2
      %v691 = vrot.slane %v336, 2
      %v692 = vsel %vm664, %v690, %v691
      %v693 = vrot.slane %v337, 2
      %v694 = vsel %vm664, %v691, %v693
      %v695 = vrot.slane %v338, 2
      %v696 = vrot.slane %v339, 2
      %v697 = vsel %vm664, %v695, %v696
      %v698 = vrot.slane %v340, 2
      %v699 = vsel %vm664, %v696, %v698
      %v700 = vrot.slane %v341, 2
      %v701 = vrot.slane %v342, 2
      %v702 = vsel %vm664, %v700, %v701
      %v703 = vrot.slane %v343, 2
      %v704 = vsel %vm664, %v701, %v703
      %v705 = vrot.slane %v344, 2
      %v706 = vrot.slane %v345, 2
      %v707 = vsel %vm664, %v705, %v706
      %v708 = vrot.slane %v346, 2
      %v709 = vsel %vm664, %v706, %v708
      %v710 = vrot.slane %v347, 2
      %v711 = vrot.slane %v348, 2
      %v712 = vsel %vm664, %v710, %v711
      %v713 = vrot.slane %v349, 2
      %v714 = vsel %vm664, %v711, %v713
      %v715 = vrot.slane %v350, 2
      %v716 = vrot.slane %v351, 2
      %v717 = vsel %vm664, %v715, %v716
      %v718 = vrot.slane %v352, 2
      %v719 = vsel %vm664, %v716, %v718
      %v720 = vrot.slane %v353, 2
      %v721 = vrot.slane %v354, 2
      %v722 = vsel %vm664, %v720, %v721
      %v723 = vrot.slane %v355, 2
      %v724 = vsel %vm664, %v721, %v723
      %v725 = vrot.slane %v356, 2
      %v726 = vrot.slane %v357, 2
      %v727 = vsel %vm664, %v725, %v726
      %v728 = vrot.slane %v358, 2
      %v729 = vsel %vm664, %v726, %v728
      %v730 = vrot.slane %v359, 2
      %v731 = vrot.slane %v360, 2
      %v732 = vsel %vm664, %v730, %v731
      %v733 = vrot.slane %v361, 2
      %v734 = vsel %vm664, %v731, %v733
      %v735 = vrot.slane %v362, 2
      %v736 = vrot.slane %v363, 2
      %v737 = vsel %vm664, %v735, %v736
      %v738 = vrot.slane %v364, 2
      %v739 = vsel %vm664, %v736, %v738
      %v740 = vrot.slane %v365, 2
      %v741 = vrot.slane %v366, 2
      %v742 = vsel %vm664, %v740, %v741
      %v743 = vrot.slane %v367, 2
      %v744 = vsel %vm664, %v741, %v743
      %745 = vrot.lane.b32.xlu0 %v667, 12
      %v746 = vpop.permute.xlu0 %745
      %747 = vrot.lane.b32.xlu0 %v669, 12
      %v748 = vpop.permute.xlu0 %747
      %749 = vrot.lane.b32.xlu0 %v672, 12
      %v750 = vpop.permute.xlu0 %749
      %751 = vrot.lane.b32.xlu0 %v674, 12
      %v752 = vpop.permute.xlu0 %751
      %753 = vrot.lane.b32.xlu0 %v677, 12
      %v754 = vpop.permute.xlu0 %753
      %755 = vrot.lane.b32.xlu0 %v679, 12
      %v756 = vpop.permute.xlu0 %755
      %757 = vrot.lane.b32.xlu0 %v682, 12
      %v758 = vpop.permute.xlu0 %757
      %759 = vrot.lane.b32.xlu0 %v684, 12
      %v760 = vpop.permute.xlu0 %759
      %761 = vrot.lane.b32.xlu0 %v687, 12
      %v762 = vpop.permute.xlu0 %761
      %763 = vrot.lane.b32.xlu0 %v689, 12
      %v764 = vpop.permute.xlu0 %763
      %765 = vrot.lane.b32.xlu0 %v692, 12
      %v766 = vpop.permute.xlu0 %765
      %767 = vrot.lane.b32.xlu0 %v694, 12
      %v768 = vpop.permute.xlu0 %767
      %769 = vrot.lane.b32.xlu0 %v697, 12
      %v770 = vpop.permute.xlu0 %769
      %771 = vrot.lane.b32.xlu0 %v699, 12
      %v772 = vpop.permute.xlu0 %771
      %773 = vrot.lane.b32.xlu0 %v702, 12
      %v774 = vpop.permute.xlu0 %773
      %775 = vrot.lane.b32.xlu0 %v704, 12
      %v776 = vpop.permute.xlu0 %775
      %777 = vrot.lane.b32.xlu0 %v707, 12
      %v778 = vpop.permute.xlu0 %777
      %779 = vrot.lane.b32.xlu0 %v709, 12
      %v780 = vpop.permute.xlu0 %779
      %781 = vrot.lane.b32.xlu0 %v712, 12
      %v782 = vpop.permute.xlu0 %781
      %783 = vrot.lane.b32.xlu0 %v714, 12
      %v784 = vpop.permute.xlu0 %783
      %785 = vrot.lane.b32.xlu0 %v717, 12
      %v786 = vpop.permute.xlu0 %785
      %787 = vrot.lane.b32.xlu0 %v719, 12
      %v788 = vpop.permute.xlu0 %787
      %789 = vrot.lane.b32.xlu0 %v722, 12
      %v790 = vpop.permute.xlu0 %789
      %791 = vrot.lane.b32.xlu0 %v724, 12
      %v792 = vpop.permute.xlu0 %791
      %793 = vrot.lane.b32.xlu0 %v727, 12
      %v794 = vpop.permute.xlu0 %793
      %795 = vrot.lane.b32.xlu0 %v729, 12
      %v796 = vpop.permute.xlu0 %795
      %797 = vrot.lane.b32.xlu0 %v732, 12
      %v798 = vpop.permute.xlu0 %797
      %799 = vrot.lane.b32.xlu0 %v734, 12
      %v800 = vpop.permute.xlu0 %799
      %801 = vrot.lane.b32.xlu0 %v737, 12
      %v802 = vpop.permute.xlu0 %801
      %803 = vrot.lane.b32.xlu0 %v739, 12
      %v804 = vpop.permute.xlu0 %803
      %805 = vrot.lane.b32.xlu0 %v742, 12
      %v806 = vpop.permute.xlu0 %805
      %807 = vrot.lane.b32.xlu0 %v744, 12
      %v808 = vpop.permute.xlu0 %807
      %vm841 = vcmask 146528
      %842 = vst.msk [vmem:[#allocation3] sm:$0xff] %vm841, %v746
      %843 = vst.msk [vmem:[#allocation3 + $0x8] sm:$0xff] %vm841, %v748
      %844 = vst.msk [vmem:[#allocation3 + $0x10] sm:$0xff] %vm841, %v750
      %845 = vst.msk [vmem:[#allocation3 + $0x18] sm:$0xff] %vm841, %v752
      %846 = vst.msk [vmem:[#allocation3 + $0x20] sm:$0xff] %vm841, %v754
      %847 = vst.msk [vmem:[#allocation3 + $0x28] sm:$0xff] %vm841, %v756
      %848 = vst.msk [vmem:[#allocation3 + $0x30] sm:$0xff] %vm841, %v758
      %849 = vst.msk [vmem:[#allocation3 + $0x38] sm:$0xff] %vm841, %v760
      %850 = vst.msk [vmem:[#allocation3 + $0x40] sm:$0xff] %vm841, %v762
      %851 = vst.msk [vmem:[#allocation3 + $0x48] sm:$0xff] %vm841, %v764
      %852 = vst.msk [vmem:[#allocation3 + $0x50] sm:$0xff] %vm841, %v766
      %853 = vst.msk [vmem:[#allocation3 + $0x58] sm:$0xff] %vm841, %v768
      %854 = vst.msk [vmem:[#allocation3 + $0x60] sm:$0xff] %vm841, %v770
      %855 = vst.msk [vmem:[#allocation3 + $0x68] sm:$0xff] %vm841, %v772
      %856 = vst.msk [vmem:[#allocation3 + $0x70] sm:$0xff] %vm841, %v774
      %857 = vst.msk [vmem:[#allocation3 + $0x78] sm:$0xff] %vm841, %v776
      %858 = vst.msk [vmem:[#allocation3 + $0x80] sm:$0xff] %vm841, %v778
      %859 = vst.msk [vmem:[#allocation3 + $0x88] sm:$0xff] %vm841, %v780
      %860 = vst.msk [vmem:[#allocation3 + $0x90] sm:$0xff] %vm841, %v782
      %861 = vst.msk [vmem:[#allocation3 + $0x98] sm:$0xff] %vm841, %v784
      %862 = vst.msk [vmem:[#allocation3 + $0xa0] sm:$0xff] %vm841, %v786
      %863 = vst.msk [vmem:[#allocation3 + $0xa8] sm:$0xff] %vm841, %v788
      %864 = vst.msk [vmem:[#allocation3 + $0xb0] sm:$0xff] %vm841, %v790
      %865 = vst.msk [vmem:[#allocation3 + $0xb8] sm:$0xff] %vm841, %v792
      %866 = vst.msk [vmem:[#allocation3 + $0xc0] sm:$0xff] %vm841, %v794
      %867 = vst.msk [vmem:[#allocation3 + $0xc8] sm:$0xff] %vm841, %v796
      %868 = vst.msk [vmem:[#allocation3 + $0xd0] sm:$0xff] %vm841, %v798
      %869 = vst.msk [vmem:[#allocation3 + $0xd8] sm:$0xff] %vm841, %v800
      %870 = vst.msk [vmem:[#allocation3 + $0xe0] sm:$0xff] %vm841, %v802
      %871 = vst.msk [vmem:[#allocation3 + $0xe8] sm:$0xff] %vm841, %v804
      %872 = vst.msk [vmem:[#allocation3 + $0xf0] sm:$0xff] %vm841, %v806
      %873 = vst.msk [vmem:[#allocation3 + $0xf8] sm:$0xff] %vm841, %v808
      %876 = vrot.lane.b32.xlu0 %v323, 18
      %v877 = vpop.permute.xlu0 %876
      %878 = vrot.lane.b32.xlu0 %v324, 18
      %v879 = vpop.permute.xlu0 %878
      %880 = vrot.lane.b32.xlu0 %v326, 18
      %v881 = vpop.permute.xlu0 %880
      %882 = vrot.lane.b32.xlu0 %v327, 18
      %v883 = vpop.permute.xlu0 %882
      %884 = vrot.lane.b32.xlu0 %v329, 18
      %v885 = vpop.permute.xlu0 %884
      %886 = vrot.lane.b32.xlu0 %v330, 18
      %v887 = vpop.permute.xlu0 %886
      %888 = vrot.lane.b32.xlu0 %v332, 18
      %v889 = vpop.permute.xlu0 %888
      %890 = vrot.lane.b32.xlu0 %v333, 18
      %v891 = vpop.permute.xlu0 %890
      %892 = vrot.lane.b32.xlu0 %v335, 18
      %v893 = vpop.permute.xlu0 %892
      %894 = vrot.lane.b32.xlu0 %v336, 18
      %v895 = vpop.permute.xlu0 %894
      %896 = vrot.lane.b32.xlu0 %v338, 18
      %v897 = vpop.permute.xlu0 %896
      %898 = vrot.lane.b32.xlu0 %v339, 18
      %v899 = vpop.permute.xlu0 %898
      %900 = vrot.lane.b32.xlu0 %v341, 18
      %v901 = vpop.permute.xlu0 %900
      %902 = vrot.lane.b32.xlu0 %v342, 18
      %v903 = vpop.permute.xlu0 %902
      %904 = vrot.lane.b32.xlu0 %v344, 18
      %v905 = vpop.permute.xlu0 %904
      %906 = vrot.lane.b32.xlu0 %v345, 18
      %v907 = vpop.permute.xlu0 %906
      %908 = vrot.lane.b32.xlu0 %v347, 18
      %v909 = vpop.permute.xlu0 %908
      %910 = vrot.lane.b32.xlu0 %v348, 18
      %v911 = vpop.permute.xlu0 %910
      %912 = vrot.lane.b32.xlu0 %v350, 18
      %v913 = vpop.permute.xlu0 %912
      %914 = vrot.lane.b32.xlu0 %v351, 18
      %v915 = vpop.permute.xlu0 %914
      %916 = vrot.lane.b32.xlu0 %v353, 18
      %v917 = vpop.permute.xlu0 %916
      %918 = vrot.lane.b32.xlu0 %v354, 18
      %v919 = vpop.permute.xlu0 %918
      %920 = vrot.lane.b32.xlu0 %v356, 18
      %v921 = vpop.permute.xlu0 %920
      %922 = vrot.lane.b32.xlu0 %v357, 18
      %v923 = vpop.permute.xlu0 %922
      %924 = vrot.lane.b32.xlu0 %v359, 18
      %v925 = vpop.permute.xlu0 %924
      %926 = vrot.lane.b32.xlu0 %v360, 18
      %v927 = vpop.permute.xlu0 %926
      %928 = vrot.lane.b32.xlu0 %v362, 18
      %v929 = vpop.permute.xlu0 %928
      %930 = vrot.lane.b32.xlu0 %v363, 18
      %v931 = vpop.permute.xlu0 %930
      %932 = vrot.lane.b32.xlu0 %v365, 18
      %v933 = vpop.permute.xlu0 %932
      %934 = vrot.lane.b32.xlu0 %v366, 18
      %v935 = vpop.permute.xlu0 %934
      %936 = vrot.lane.b32.xlu0 %v368, 18
      %v937 = vpop.permute.xlu0 %936
      %938 = vrot.lane.b32.xlu0 %v369, 18
      %v939 = vpop.permute.xlu0 %938
      %vm972 = vcmask 195728
      %973 = vst.msk [vmem:[#allocation3] sm:$0xff] %vm972, %v877
      %974 = vst.msk [vmem:[#allocation3 + $0x8] sm:$0xff] %vm972, %v879
      %975 = vst.msk [vmem:[#allocation3 + $0x10] sm:$0xff] %vm972, %v881
      %976 = vst.msk [vmem:[#allocation3 + $0x18] sm:$0xff] %vm972, %v883
      %977 = vst.msk [vmem:[#allocation3 + $0x20] sm:$0xff] %vm972, %v885
      %978 = vst.msk [vmem:[#allocation3 + $0x28] sm:$0xff] %vm972, %v887
      %979 = vst.msk [vmem:[#allocation3 + $0x30] sm:$0xff] %vm972, %v889
      %980 = vst.msk [vmem:[#allocation3 + $0x38] sm:$0xff] %vm972, %v891
      %981 = vst.msk [vmem:[#allocation3 + $0x40] sm:$0xff] %vm972, %v893
      %982 = vst.msk [vmem:[#allocation3 + $0x48] sm:$0xff] %vm972, %v895
      %983 = vst.msk [vmem:[#allocation3 + $0x50] sm:$0xff] %vm972, %v897
      %984 = vst.msk [vmem:[#allocation3 + $0x58] sm:$0xff] %vm972, %v899
      %985 = vst.msk [vmem:[#allocation3 + $0x60] sm:$0xff] %vm972, %v901
      %986 = vst.msk [vmem:[#allocation3 + $0x68] sm:$0xff] %vm972, %v903
      %987 = vst.msk [vmem:[#allocation3 + $0x70] sm:$0xff] %vm972, %v905
      %988 = vst.msk [vmem:[#allocation3 + $0x78] sm:$0xff] %vm972, %v907
      %989 = vst.msk [vmem:[#allocation3 + $0x80] sm:$0xff] %vm972, %v909
      %990 = vst.msk [vmem:[#allocation3 + $0x88] sm:$0xff] %vm972, %v911
      %991 = vst.msk [vmem:[#allocation3 + $0x90] sm:$0xff] %vm972, %v913
      %992 = vst.msk [vmem:[#allocation3 + $0x98] sm:$0xff] %vm972, %v915
      %993 = vst.msk [vmem:[#allocation3 + $0xa0] sm:$0xff] %vm972, %v917
      %994 = vst.msk [vmem:[#allocation3 + $0xa8] sm:$0xff] %vm972, %v919
      %995 = vst.msk [vmem:[#allocation3 + $0xb0] sm:$0xff] %vm972, %v921
      %996 = vst.msk [vmem:[#allocation3 + $0xb8] sm:$0xff] %vm972, %v923
      %997 = vst.msk [vmem:[#allocation3 + $0xc0] sm:$0xff] %vm972, %v925
      %998 = vst.msk [vmem:[#allocation3 + $0xc8] sm:$0xff] %vm972, %v927
      %999 = vst.msk [vmem:[#allocation3 + $0xd0] sm:$0xff] %vm972, %v929
      %1000 = vst.msk [vmem:[#allocation3 + $0xd8] sm:$0xff] %vm972, %v931
      %1001 = vst.msk [vmem:[#allocation3 + $0xe0] sm:$0xff] %vm972, %v933
      %1002 = vst.msk [vmem:[#allocation3 + $0xe8] sm:$0xff] %vm972, %v935
      %1003 = vst.msk [vmem:[#allocation3 + $0xf0] sm:$0xff] %vm972, %v937
      %1004 = vst.msk [vmem:[#allocation3 + $0xf8] sm:$0xff] %vm972, %v939
      %v1006 = vrot.slane %v368, 1
      %v1007 = vrot.slane %v369, 1
      %v1008 = vsel %vm454, %v1006, %v1007
      %v1009 = vrot.slane %v370, 1
      %v1010 = vsel %vm454, %v1007, %v1009
      %1011 = vrot.lane.b32.xlu0 %v462, 24
      %v1012 = vpop.permute.xlu0 %1011
      %1013 = vrot.lane.b32.xlu0 %v464, 24
      %v1014 = vpop.permute.xlu0 %1013
      %1015 = vrot.lane.b32.xlu0 %v467, 24
      %v1016 = vpop.permute.xlu0 %1015
      %1017 = vrot.lane.b32.xlu0 %v469, 24
      %v1018 = vpop.permute.xlu0 %1017
      %1019 = vrot.lane.b32.xlu0 %v472, 24
      %v1020 = vpop.permute.xlu0 %1019
      %1021 = vrot.lane.b32.xlu0 %v474, 24
      %v1022 = vpop.permute.xlu0 %1021
      %1023 = vrot.lane.b32.xlu0 %v477, 24
      %v1024 = vpop.permute.xlu0 %1023
      %1025 = vrot.lane.b32.xlu0 %v479, 24
      %v1026 = vpop.permute.xlu0 %1025
      %1027 = vrot.lane.b32.xlu0 %v482, 24
      %v1028 = vpop.permute.xlu0 %1027
      %1029 = vrot.lane.b32.xlu0 %v484, 24
      %v1030 = vpop.permute.xlu0 %1029
      %1031 = vrot.lane.b32.xlu0 %v487, 24
      %v1032 = vpop.permute.xlu0 %1031
      %1033 = vrot.lane.b32.xlu0 %v489, 24
      %v1034 = vpop.permute.xlu0 %1033
      %1035 = vrot.lane.b32.xlu0 %v492, 24
      %v1036 = vpop.permute.xlu0 %1035
      %1037 = vrot.lane.b32.xlu0 %v494, 24
      %v1038 = vpop.permute.xlu0 %1037
      %1039 = vrot.lane.b32.xlu0 %v497, 24
      %v1040 = vpop.permute.xlu0 %1039
      %1041 = vrot.lane.b32.xlu0 %v499, 24
      %v1042 = vpop.permute.xlu0 %1041
      %1043 = vrot.lane.b32.xlu0 %v502, 24
      %v1044 = vpop.permute.xlu0 %1043
      %1045 = vrot.lane.b32.xlu0 %v504, 24
      %v1046 = vpop.permute.xlu0 %1045
      %1047 = vrot.lane.b32.xlu0 %v507, 24
      %v1048 = vpop.permute.xlu0 %1047
      %1049 = vrot.lane.b32.xlu0 %v509, 24
      %v1050 = vpop.permute.xlu0 %1049
      %1051 = vrot.lane.b32.xlu0 %v512, 24
      %v1052 = vpop.permute.xlu0 %1051
      %1053 = vrot.lane.b32.xlu0 %v514, 24
      %v1054 = vpop.permute.xlu0 %1053
      %1055 = vrot.lane.b32.xlu0 %v517, 24
      %v1056 = vpop.permute.xlu0 %1055
      %1057 = vrot.lane.b32.xlu0 %v519, 24
      %v1058 = vpop.permute.xlu0 %1057
      %1059 = vrot.lane.b32.xlu0 %v522, 24
      %v1060 = vpop.permute.xlu0 %1059
      %1061 = vrot.lane.b32.xlu0 %v524, 24
      %v1062 = vpop.permute.xlu0 %1061
      %1063 = vrot.lane.b32.xlu0 %v527, 24
      %v1064 = vpop.permute.xlu0 %1063
      %1065 = vrot.lane.b32.xlu0 %v529, 24
      %v1066 = vpop.permute.xlu0 %1065
      %1067 = vrot.lane.b32.xlu0 %v532, 24
      %v1068 = vpop.permute.xlu0 %1067
      %1069 = vrot.lane.b32.xlu0 %v534, 24
      %v1070 = vpop.permute.xlu0 %1069
      %1071 = vrot.lane.b32.xlu0 %v1008, 24
      %v1072 = vpop.permute.xlu0 %1071
      %1073 = vrot.lane.b32.xlu0 %v1010, 24
      %v1074 = vpop.permute.xlu0 %1073
      %vm1107 = vcmask 244928
      %1108 = vst.msk [vmem:[#allocation3] sm:$0xff] %vm1107, %v1012
      %1109 = vst.msk [vmem:[#allocation3 + $0x8] sm:$0xff] %vm1107, %v1014
      %1110 = vst.msk [vmem:[#allocation3 + $0x10] sm:$0xff] %vm1107, %v1016
      %1111 = vst.msk [vmem:[#allocation3 + $0x18] sm:$0xff] %vm1107, %v1018
      %1112 = vst.msk [vmem:[#allocation3 + $0x20] sm:$0xff] %vm1107, %v1020
      %1113 = vst.msk [vmem:[#allocation3 + $0x28] sm:$0xff] %vm1107, %v1022
      %1114 = vst.msk [vmem:[#allocation3 + $0x30] sm:$0xff] %vm1107, %v1024
      %1115 = vst.msk [vmem:[#allocation3 + $0x38] sm:$0xff] %vm1107, %v1026
      %1116 = vst.msk [vmem:[#allocation3 + $0x40] sm:$0xff] %vm1107, %v1028
      %1117 = vst.msk [vmem:[#allocation3 + $0x48] sm:$0xff] %vm1107, %v1030
      %1118 = vst.msk [vmem:[#allocation3 + $0x50] sm:$0xff] %vm1107, %v1032
      %1119 = vst.msk [vmem:[#allocation3 + $0x58] sm:$0xff] %vm1107, %v1034
      %1120 = vst.msk [vmem:[#allocation3 + $0x60] sm:$0xff] %vm1107, %v1036
      %1121 = vst.msk [vmem:[#allocation3 + $0x68] sm:$0xff] %vm1107, %v1038
      %1122 = vst.msk [vmem:[#allocation3 + $0x70] sm:$0xff] %vm1107, %v1040
      %1123 = vst.msk [vmem:[#allocation3 + $0x78] sm:$0xff] %vm1107, %v1042
      %1124 = vst.msk [vmem:[#allocation3 + $0x80] sm:$0xff] %vm1107, %v1044
      %1125 = vst.msk [vmem:[#allocation3 + $0x88] sm:$0xff] %vm1107, %v1046
      %1126 = vst.msk [vmem:[#allocation3 + $0x90] sm:$0xff] %vm1107, %v1048
      %1127 = vst.msk [vmem:[#allocation3 + $0x98] sm:$0xff] %vm1107, %v1050
      %1128 = vst.msk [vmem:[#allocation3 + $0xa0] sm:$0xff] %vm1107, %v1052
      %1129 = vst.msk [vmem:[#allocation3 + $0xa8] sm:$0xff] %vm1107, %v1054
      %1130 = vst.msk [vmem:[#allocation3 + $0xb0] sm:$0xff] %vm1107, %v1056
      %1131 = vst.msk [vmem:[#allocation3 + $0xb8] sm:$0xff] %vm1107, %v1058
      %1132 = vst.msk [vmem:[#allocation3 + $0xc0] sm:$0xff] %vm1107, %v1060
      %1133 = vst.msk [vmem:[#allocation3 + $0xc8] sm:$0xff] %vm1107, %v1062
      %1134 = vst.msk [vmem:[#allocation3 + $0xd0] sm:$0xff] %vm1107, %v1064
      %1135 = vst.msk [vmem:[#allocation3 + $0xd8] sm:$0xff] %vm1107, %v1066
      %1136 = vst.msk [vmem:[#allocation3 + $0xe0] sm:$0xff] %vm1107, %v1068
      %1137 = vst.msk [vmem:[#allocation3 + $0xe8] sm:$0xff] %vm1107, %v1070
      %1138 = vst.msk [vmem:[#allocation3 + $0xf0] sm:$0xff] %vm1107, %v1072
      %1139 = vst.msk [vmem:[#allocation3 + $0xf8] sm:$0xff] %vm1107, %v1074
      %v1140 = vrot.slane %v368, 2
      %v1141 = vrot.slane %v369, 2
      %v1142 = vsel %vm664, %v1140, %v1141
      %v1143 = vrot.slane %v370, 2
      %v1144 = vsel %vm664, %v1141, %v1143
      %1145 = vrot.lane.b32.xlu0 %v672, 30
      %v1146 = vpop.permute.xlu0 %1145
      %1147 = vrot.lane.b32.xlu0 %v674, 30
      %v1148 = vpop.permute.xlu0 %1147
      %1149 = vrot.lane.b32.xlu0 %v677, 30
      %v1150 = vpop.permute.xlu0 %1149
      %1151 = vrot.lane.b32.xlu0 %v679, 30
      %v1152 = vpop.permute.xlu0 %1151
      %1153 = vrot.lane.b32.xlu0 %v682, 30
      %v1154 = vpop.permute.xlu0 %1153
      %1155 = vrot.lane.b32.xlu0 %v684, 30
      %v1156 = vpop.permute.xlu0 %1155
      %1157 = vrot.lane.b32.xlu0 %v687, 30
      %v1158 = vpop.permute.xlu0 %1157
      %1159 = vrot.lane.b32.xlu0 %v689, 30
      %v1160 = vpop.permute.xlu0 %1159
      %1161 = vrot.lane.b32.xlu0 %v692, 30
      %v1162 = vpop.permute.xlu0 %1161
      %1163 = vrot.lane.b32.xlu0 %v694, 30
      %v1164 = vpop.permute.xlu0 %1163
      %1165 = vrot.lane.b32.xlu0 %v697, 30
      %v1166 = vpop.permute.xlu0 %1165
      %1167 = vrot.lane.b32.xlu0 %v699, 30
      %v1168 = vpop.permute.xlu0 %1167
      %1169 = vrot.lane.b32.xlu0 %v702, 30
      %v1170 = vpop.permute.xlu0 %1169
      %1171 = vrot.lane.b32.xlu0 %v704, 30
      %v1172 = vpop.permute.xlu0 %1171
      %1173 = vrot.lane.b32.xlu0 %v707, 30
      %v1174 = vpop.permute.xlu0 %1173
      %1175 = vrot.lane.b32.xlu0 %v709, 30
      %v1176 = vpop.permute.xlu0 %1175
      %1177 = vrot.lane.b32.xlu0 %v712, 30
      %v1178 = vpop.permute.xlu0 %1177
      %1179 = vrot.lane.b32.xlu0 %v714, 30
      %v1180 = vpop.permute.xlu0 %1179
      %1181 = vrot.lane.b32.xlu0 %v717, 30
      %v1182 = vpop.permute.xlu0 %1181
      %1183 = vrot.lane.b32.xlu0 %v719, 30
      %v1184 = vpop.permute.xlu0 %1183
      %1185 = vrot.lane.b32.xlu0 %v722, 30
      %v1186 = vpop.permute.xlu0 %1185
      %1187 = vrot.lane.b32.xlu0 %v724, 30
      %v1188 = vpop.permute.xlu0 %1187
      %1189 = vrot.lane.b32.xlu0 %v727, 30
      %v1190 = vpop.permute.xlu0 %1189
      %1191 = vrot.lane.b32.xlu0 %v729, 30
      %v1192 = vpop.permute.xlu0 %1191
      %1193 = vrot.lane.b32.xlu0 %v732, 30
      %v1194 = vpop.permute.xlu0 %1193
      %1195 = vrot.lane.b32.xlu0 %v734, 30
      %v1196 = vpop.permute.xlu0 %1195
      %1197 = vrot.lane.b32.xlu0 %v737, 30
      %v1198 = vpop.permute.xlu0 %1197
      %1199 = vrot.lane.b32.xlu0 %v739, 30
      %v1200 = vpop.permute.xlu0 %1199
      %1201 = vrot.lane.b32.xlu0 %v742, 30
      %v1202 = vpop.permute.xlu0 %1201
      %1203 = vrot.lane.b32.xlu0 %v744, 30
      %v1204 = vpop.permute.xlu0 %1203
      %1205 = vrot.lane.b32.xlu0 %v1142, 30
      %v1206 = vpop.permute.xlu0 %1205
      %1207 = vrot.lane.b32.xlu0 %v1144, 30
      %v1208 = vpop.permute.xlu0 %1207
      %vm1241 = vcmask 294128
      %1242 = vst.msk [vmem:[#allocation3] sm:$0xff] %vm1241, %v1146
      %1243 = vst.msk [vmem:[#allocation3 + $0x8] sm:$0xff] %vm1241, %v1148
      %1244 = vst.msk [vmem:[#allocation3 + $0x10] sm:$0xff] %vm1241, %v1150
      %1245 = vst.msk [vmem:[#allocation3 + $0x18] sm:$0xff] %vm1241, %v1152
      %1246 = vst.msk [vmem:[#allocation3 + $0x20] sm:$0xff] %vm1241, %v1154
      %1247 = vst.msk [vmem:[#allocation3 + $0x28] sm:$0xff] %vm1241, %v1156
      %1248 = vst.msk [vmem:[#allocation3 + $0x30] sm:$0xff] %vm1241, %v1158
      %1249 = vst.msk [vmem:[#allocation3 + $0x38] sm:$0xff] %vm1241, %v1160
      %1250 = vst.msk [vmem:[#allocation3 + $0x40] sm:$0xff] %vm1241, %v1162
      %1251 = vst.msk [vmem:[#allocation3 + $0x48] sm:$0xff] %vm1241, %v1164
      %1252 = vst.msk [vmem:[#allocation3 + $0x50] sm:$0xff] %vm1241, %v1166
      %1253 = vst.msk [vmem:[#allocation3 + $0x58] sm:$0xff] %vm1241, %v1168
      %1254 = vst.msk [vmem:[#allocation3 + $0x60] sm:$0xff] %vm1241, %v1170
      %1255 = vst.msk [vmem:[#allocation3 + $0x68] sm:$0xff] %vm1241, %v1172
      %1256 = vst.msk [vmem:[#allocation3 + $0x70] sm:$0xff] %vm1241, %v1174
      %1257 = vst.msk [vmem:[#allocation3 + $0x78] sm:$0xff] %vm1241, %v1176
      %1258 = vst.msk [vmem:[#allocation3 + $0x80] sm:$0xff] %vm1241, %v1178
      %1259 = vst.msk [vmem:[#allocation3 + $0x88] sm:$0xff] %vm1241, %v1180
      %1260 = vst.msk [vmem:[#allocation3 + $0x90] sm:$0xff] %vm1241, %v1182
      %1261 = vst.msk [vmem:[#allocation3 + $0x98] sm:$0xff] %vm1241, %v1184
      %1262 = vst.msk [vmem:[#allocation3 + $0xa0] sm:$0xff] %vm1241, %v1186
      %1263 = vst.msk [vmem:[#allocation3 + $0xa8] sm:$0xff] %vm1241, %v1188
      %1264 = vst.msk [vmem:[#allocation3 + $0xb0] sm:$0xff] %vm1241, %v1190
      %1265 = vst.msk [vmem:[#allocation3 + $0xb8] sm:$0xff] %vm1241, %v1192
      %1266 = vst.msk [vmem:[#allocation3 + $0xc0] sm:$0xff] %vm1241, %v1194
      %1267 = vst.msk [vmem:[#allocation3 + $0xc8] sm:$0xff] %vm1241, %v1196
      %1268 = vst.msk [vmem:[#allocation3 + $0xd0] sm:$0xff] %vm1241, %v1198
      %1269 = vst.msk [vmem:[#allocation3 + $0xd8] sm:$0xff] %vm1241, %v1200
      %1270 = vst.msk [vmem:[#allocation3 + $0xe0] sm:$0xff] %vm1241, %v1202
      %1271 = vst.msk [vmem:[#allocation3 + $0xe8] sm:$0xff] %vm1241, %v1204
      %1272 = vst.msk [vmem:[#allocation3 + $0xf0] sm:$0xff] %vm1241, %v1206
      %1273 = vst.msk [vmem:[#allocation3 + $0xf8] sm:$0xff] %vm1241, %v1208
      %1276 = vrot.lane.b32.xlu0 %v326, 36
      %v1277 = vpop.permute.xlu0 %1276
      %1278 = vrot.lane.b32.xlu0 %v327, 36
      %v1279 = vpop.permute.xlu0 %1278
      %1280 = vrot.lane.b32.xlu0 %v329, 36
      %v1281 = vpop.permute.xlu0 %1280
      %1282 = vrot.lane.b32.xlu0 %v330, 36
      %v1283 = vpop.permute.xlu0 %1282
      %1284 = vrot.lane.b32.xlu0 %v332, 36
      %v1285 = vpop.permute.xlu0 %1284
      %1286 = vrot.lane.b32.xlu0 %v333, 36
      %v1287 = vpop.permute.xlu0 %1286
      %1288 = vrot.lane.b32.xlu0 %v335, 36
      %v1289 = vpop.permute.xlu0 %1288
      %1290 = vrot.lane.b32.xlu0 %v336, 36
      %v1291 = vpop.permute.xlu0 %1290
      %1292 = vrot.lane.b32.xlu0 %v338, 36
      %v1293 = vpop.permute.xlu0 %1292
      %1294 = vrot.lane.b32.xlu0 %v339, 36
      %v1295 = vpop.permute.xlu0 %1294
      %1296 = vrot.lane.b32.xlu0 %v341, 36
      %v1297 = vpop.permute.xlu0 %1296
      %1298 = vrot.lane.b32.xlu0 %v342, 36
      %v1299 = vpop.permute.xlu0 %1298
      %1300 = vrot.lane.b32.xlu0 %v344, 36
      %v1301 = vpop.permute.xlu0 %1300
      %1302 = vrot.lane.b32.xlu0 %v345, 36
      %v1303 = vpop.permute.xlu0 %1302
      %1304 = vrot.lane.b32.xlu0 %v347, 36
      %v1305 = vpop.permute.xlu0 %1304
      %1306 = vrot.lane.b32.xlu0 %v348, 36
      %v1307 = vpop.permute.xlu0 %1306
      %1308 = vrot.lane.b32.xlu0 %v350, 36
      %v1309 = vpop.permute.xlu0 %1308
      %1310 = vrot.lane.b32.xlu0 %v351, 36
      %v1311 = vpop.permute.xlu0 %1310
      %1312 = vrot.lane.b32.xlu0 %v353, 36
      %v1313 = vpop.permute.xlu0 %1312
      %1314 = vrot.lane.b32.xlu0 %v354, 36
      %v1315 = vpop.permute.xlu0 %1314
      %1316 = vrot.lane.b32.xlu0 %v356, 36
      %v1317 = vpop.permute.xlu0 %1316
      %1318 = vrot.lane.b32.xlu0 %v357, 36
      %v1319 = vpop.permute.xlu0 %1318
      %1320 = vrot.lane.b32.xlu0 %v359, 36
      %v1321 = vpop.permute.xlu0 %1320
      %1322 = vrot.lane.b32.xlu0 %v360, 36
      %v1323 = vpop.permute.xlu0 %1322
      %1324 = vrot.lane.b32.xlu0 %v362, 36
      %v1325 = vpop.permute.xlu0 %1324
      %1326 = vrot.lane.b32.xlu0 %v363, 36
      %v1327 = vpop.permute.xlu0 %1326
      %1328 = vrot.lane.b32.xlu0 %v365, 36
      %v1329 = vpop.permute.xlu0 %1328
      %1330 = vrot.lane.b32.xlu0 %v366, 36
      %v1331 = vpop.permute.xlu0 %1330
      %1332 = vrot.lane.b32.xlu0 %v368, 36
      %v1333 = vpop.permute.xlu0 %1332
      %1334 = vrot.lane.b32.xlu0 %v369, 36
      %v1335 = vpop.permute.xlu0 %1334
      %1336 = vrot.lane.b32.xlu0 %v371, 36
      %v1337 = vpop.permute.xlu0 %1336
      %1338 = vrot.lane.b32.xlu0 %v372, 36
      %v1339 = vpop.permute.xlu0 %1338
      %vm1372 = vcmask 343328
      %1373 = vst.msk [vmem:[#allocation3] sm:$0xff] %vm1372, %v1277
      %1374 = vst.msk [vmem:[#allocation3 + $0x8] sm:$0xff] %vm1372, %v1279
      %1375 = vst.msk [vmem:[#allocation3 + $0x10] sm:$0xff] %vm1372, %v1281
      %1376 = vst.msk [vmem:[#allocation3 + $0x18] sm:$0xff] %vm1372, %v1283
      %1377 = vst.msk [vmem:[#allocation3 + $0x20] sm:$0xff] %vm1372, %v1285
      %1378 = vst.msk [vmem:[#allocation3 + $0x28] sm:$0xff] %vm1372, %v1287
      %1379 = vst.msk [vmem:[#allocation3 + $0x30] sm:$0xff] %vm1372, %v1289
      %1380 = vst.msk [vmem:[#allocation3 + $0x38] sm:$0xff] %vm1372, %v1291
      %1381 = vst.msk [vmem:[#allocation3 + $0x40] sm:$0xff] %vm1372, %v1293
      %1382 = vst.msk [vmem:[#allocation3 + $0x48] sm:$0xff] %vm1372, %v1295
      %1383 = vst.msk [vmem:[#allocation3 + $0x50] sm:$0xff] %vm1372, %v1297
      %1384 = vst.msk [vmem:[#allocation3 + $0x58] sm:$0xff] %vm1372, %v1299
      %1385 = vst.msk [vmem:[#allocation3 + $0x60] sm:$0xff] %vm1372, %v1301
      %1386 = vst.msk [vmem:[#allocation3 + $0x68] sm:$0xff] %vm1372, %v1303
      %1387 = vst.msk [vmem:[#allocation3 + $0x70] sm:$0xff] %vm1372, %v1305
      %1388 = vst.msk [vmem:[#allocation3 + $0x78] sm:$0xff] %vm1372, %v1307
      %1389 = vst.msk [vmem:[#allocation3 + $0x80] sm:$0xff] %vm1372, %v1309
      %1390 = vst.msk [vmem:[#allocation3 + $0x88] sm:$0xff] %vm1372, %v1311
      %1391 = vst.msk [vmem:[#allocation3 + $0x90] sm:$0xff] %vm1372, %v1313
      %1392 = vst.msk [vmem:[#allocation3 + $0x98] sm:$0xff] %vm1372, %v1315
      %1393 = vst.msk [vmem:[#allocation3 + $0xa0] sm:$0xff] %vm1372, %v1317
      %1394 = vst.msk [vmem:[#allocation3 + $0xa8] sm:$0xff] %vm1372, %v1319
      %1395 = vst.msk [vmem:[#allocation3 + $0xb0] sm:$0xff] %vm1372, %v1321
      %1396 = vst.msk [vmem:[#allocation3 + $0xb8] sm:$0xff] %vm1372, %v1323
      %1397 = vst.msk [vmem:[#allocation3 + $0xc0] sm:$0xff] %vm1372, %v1325
      %1398 = vst.msk [vmem:[#allocation3 + $0xc8] sm:$0xff] %vm1372, %v1327
      %1399 = vst.msk [vmem:[#allocation3 + $0xd0] sm:$0xff] %vm1372, %v1329
      %1400 = vst.msk [vmem:[#allocation3 + $0xd8] sm:$0xff] %vm1372, %v1331
      %1401 = vst.msk [vmem:[#allocation3 + $0xe0] sm:$0xff] %vm1372, %v1333
      %1402 = vst.msk [vmem:[#allocation3 + $0xe8] sm:$0xff] %vm1372, %v1335
      %1403 = vst.msk [vmem:[#allocation3 + $0xf0] sm:$0xff] %vm1372, %v1337
      %1404 = vst.msk [vmem:[#allocation3 + $0xf8] sm:$0xff] %vm1372, %v1339
      %v1406 = vrot.slane %v371, 1
      %v1407 = vrot.slane %v372, 1
      %v1408 = vsel %vm454, %v1406, %v1407
      %v1409 = vrot.slane %v373, 1
      %v1410 = vsel %vm454, %v1407, %v1409
      %1411 = vrot.lane.b32.xlu0 %v467, 42
      %v1412 = vpop.permute.xlu0 %1411
      %1413 = vrot.lane.b32.xlu0 %v469, 42
      %v1414 = vpop.permute.xlu0 %1413
      %1415 = vrot.lane.b32.xlu0 %v472, 42
      %v1416 = vpop.permute.xlu0 %1415
      %1417 = vrot.lane.b32.xlu0 %v474, 42
      %v1418 = vpop.permute.xlu0 %1417
      %1419 = vrot.lane.b32.xlu0 %v477, 42
      %v1420 = vpop.permute.xlu0 %1419
      %1421 = vrot.lane.b32.xlu0 %v479, 42
      %v1422 = vpop.permute.xlu0 %1421
      %1423 = vrot.lane.b32.xlu0 %v482, 42
      %v1424 = vpop.permute.xlu0 %1423
      %1425 = vrot.lane.b32.xlu0 %v484, 42
      %v1426 = vpop.permute.xlu0 %1425
      %1427 = vrot.lane.b32.xlu0 %v487, 42
      %v1428 = vpop.permute.xlu0 %1427
      %1429 = vrot.lane.b32.xlu0 %v489, 42
      %v1430 = vpop.permute.xlu0 %1429
      %1431 = vrot.lane.b32.xlu0 %v492, 42
      %v1432 = vpop.permute.xlu0 %1431
      %1433 = vrot.lane.b32.xlu0 %v494, 42
      %v1434 = vpop.permute.xlu0 %1433
      %1435 = vrot.lane.b32.xlu0 %v497, 42
      %v1436 = vpop.permute.xlu0 %1435
      %1437 = vrot.lane.b32.xlu0 %v499, 42
      %v1438 = vpop.permute.xlu0 %1437
      %1439 = vrot.lane.b32.xlu0 %v502, 42
      %v1440 = vpop.permute.xlu0 %1439
      %1441 = vrot.lane.b32.xlu0 %v504, 42
      %v1442 = vpop.permute.xlu0 %1441
      %1443 = vrot.lane.b32.xlu0 %v507, 42
      %v1444 = vpop.permute.xlu0 %1443
      %1445 = vrot.lane.b32.xlu0 %v509, 42
      %v1446 = vpop.permute.xlu0 %1445
      %1447 = vrot.lane.b32.xlu0 %v512, 42
      %v1448 = vpop.permute.xlu0 %1447
      %1449 = vrot.lane.b32.xlu0 %v514, 42
      %v1450 = vpop.permute.xlu0 %1449
      %1451 = vrot.lane.b32.xlu0 %v517, 42
      %v1452 = vpop.permute.xlu0 %1451
      %1453 = vrot.lane.b32.xlu0 %v519, 42
      %v1454 = vpop.permute.xlu0 %1453
      %1455 = vrot.lane.b32.xlu0 %v522, 42
      %v1456 = vpop.permute.xlu0 %1455
      %1457 = vrot.lane.b32.xlu0 %v524, 42
      %v1458 = vpop.permute.xlu0 %1457
      %1459 = vrot.lane.b32.xlu0 %v527, 42
      %v1460 = vpop.permute.xlu0 %1459
      %1461 = vrot.lane.b32.xlu0 %v529, 42
      %v1462 = vpop.permute.xlu0 %1461
      %1463 = vrot.lane.b32.xlu0 %v532, 42
      %v1464 = vpop.permute.xlu0 %1463
      %1465 = vrot.lane.b32.xlu0 %v534, 42
      %v1466 = vpop.permute.xlu0 %1465
      %1467 = vrot.lane.b32.xlu0 %v1008, 42
      %v1468 = vpop.permute.xlu0 %1467
      %1469 = vrot.lane.b32.xlu0 %v1010, 42
      %v1470 = vpop.permute.xlu0 %1469
      %1471 = vrot.lane.b32.xlu0 %v1408, 42
      %v1472 = vpop.permute.xlu0 %1471
      %1473 = vrot.lane.b32.xlu0 %v1410, 42
      %v1474 = vpop.permute.xlu0 %1473
      %vm1507 = vcmask 392528
      %1508 = vst.msk [vmem:[#allocation3] sm:$0xff] %vm1507, %v1412
      %1509 = vst.msk [vmem:[#allocation3 + $0x8] sm:$0xff] %vm1507, %v1414
      %1510 = vst.msk [vmem:[#allocation3 + $0x10] sm:$0xff] %vm1507, %v1416
      %1511 = vst.msk [vmem:[#allocation3 + $0x18] sm:$0xff] %vm1507, %v1418
      %1512 = vst.msk [vmem:[#allocation3 + $0x20] sm:$0xff] %vm1507, %v1420
      %1513 = vst.msk [vmem:[#allocation3 + $0x28] sm:$0xff] %vm1507, %v1422
      %1514 = vst.msk [vmem:[#allocation3 + $0x30] sm:$0xff] %vm1507, %v1424
      %1515 = vst.msk [vmem:[#allocation3 + $0x38] sm:$0xff] %vm1507, %v1426
      %1516 = vst.msk [vmem:[#allocation3 + $0x40] sm:$0xff] %vm1507, %v1428
      %1517 = vst.msk [vmem:[#allocation3 + $0x48] sm:$0xff] %vm1507, %v1430
      %1518 = vst.msk [vmem:[#allocation3 + $0x50] sm:$0xff] %vm1507, %v1432
      %1519 = vst.msk [vmem:[#allocation3 + $0x58] sm:$0xff] %vm1507, %v1434
      %1520 = vst.msk [vmem:[#allocation3 + $0x60] sm:$0xff] %vm1507, %v1436
      %1521 = vst.msk [vmem:[#allocation3 + $0x68] sm:$0xff] %vm1507, %v1438
      %1522 = vst.msk [vmem:[#allocation3 + $0x70] sm:$0xff] %vm1507, %v1440
      %1523 = vst.msk [vmem:[#allocation3 + $0x78] sm:$0xff] %vm1507, %v1442
      %1524 = vst.msk [vmem:[#allocation3 + $0x80] sm:$0xff] %vm1507, %v1444
      %1525 = vst.msk [vmem:[#allocation3 + $0x88] sm:$0xff] %vm1507, %v1446
      %1526 = vst.msk [vmem:[#allocation3 + $0x90] sm:$0xff] %vm1507, %v1448
      %1527 = vst.msk [vmem:[#allocation3 + $0x98] sm:$0xff] %vm1507, %v1450
      %1528 = vst.msk [vmem:[#allocation3 + $0xa0] sm:$0xff] %vm1507, %v1452
      %1529 = vst.msk [vmem:[#allocation3 + $0xa8] sm:$0xff] %vm1507, %v1454
      %1530 = vst.msk [vmem:[#allocation3 + $0xb0] sm:$0xff] %vm1507, %v1456
      %1531 = vst.msk [vmem:[#allocation3 + $0xb8] sm:$0xff] %vm1507, %v1458
      %1532 = vst.msk [vmem:[#allocation3 + $0xc0] sm:$0xff] %vm1507, %v1460
      %1533 = vst.msk [vmem:[#allocation3 + $0xc8] sm:$0xff] %vm1507, %v1462
      %1534 = vst.msk [vmem:[#allocation3 + $0xd0] sm:$0xff] %vm1507, %v1464
      %1535 = vst.msk [vmem:[#allocation3 + $0xd8] sm:$0xff] %vm1507, %v1466
      %1536 = vst.msk [vmem:[#allocation3 + $0xe0] sm:$0xff] %vm1507, %v1468
      %1537 = vst.msk [vmem:[#allocation3 + $0xe8] sm:$0xff] %vm1507, %v1470
      %1538 = vst.msk [vmem:[#allocation3 + $0xf0] sm:$0xff] %vm1507, %v1472
      %1539 = vst.msk [vmem:[#allocation3 + $0xf8] sm:$0xff] %vm1507, %v1474
      %v1540 = vrot.slane %v371, 2
      %v1541 = vrot.slane %v372, 2
      %v1542 = vsel %vm664, %v1540, %v1541
      %v1543 = vrot.slane %v373, 2
      %v1544 = vsel %vm664, %v1541, %v1543
      %1545 = vrot.lane.b32.xlu0 %v677, 48
      %v1546 = vpop.permute.xlu0 %1545
      %1547 = vrot.lane.b32.xlu0 %v679, 48
      %v1548 = vpop.permute.xlu0 %1547
      %1549 = vrot.lane.b32.xlu0 %v682, 48
      %v1550 = vpop.permute.xlu0 %1549
      %1551 = vrot.lane.b32.xlu0 %v684, 48
      %v1552 = vpop.permute.xlu0 %1551
      %1553 = vrot.lane.b32.xlu0 %v687, 48
      %v1554 = vpop.permute.xlu0 %1553
      %1555 = vrot.lane.b32.xlu0 %v689, 48
      %v1556 = vpop.permute.xlu0 %1555
      %1557 = vrot.lane.b32.xlu0 %v692, 48
      %v1558 = vpop.permute.xlu0 %1557
      %1559 = vrot.lane.b32.xlu0 %v694, 48
      %v1560 = vpop.permute.xlu0 %1559
      %1561 = vrot.lane.b32.xlu0 %v697, 48
      %v1562 = vpop.permute.xlu0 %1561
      %1563 = vrot.lane.b32.xlu0 %v699, 48
      %v1564 = vpop.permute.xlu0 %1563
      %1565 = vrot.lane.b32.xlu0 %v702, 48
      %v1566 = vpop.permute.xlu0 %1565
      %1567 = vrot.lane.b32.xlu0 %v704, 48
      %v1568 = vpop.permute.xlu0 %1567
      %1569 = vrot.lane.b32.xlu0 %v707, 48
      %v1570 = vpop.permute.xlu0 %1569
      %1571 = vrot.lane.b32.xlu0 %v709, 48
      %v1572 = vpop.permute.xlu0 %1571
      %1573 = vrot.lane.b32.xlu0 %v712, 48
      %v1574 = vpop.permute.xlu0 %1573
      %1575 = vrot.lane.b32.xlu0 %v714, 48
      %v1576 = vpop.permute.xlu0 %1575
      %1577 = vrot.lane.b32.xlu0 %v717, 48
      %v1578 = vpop.permute.xlu0 %1577
      %1579 = vrot.lane.b32.xlu0 %v719, 48
      %v1580 = vpop.permute.xlu0 %1579
      %1581 = vrot.lane.b32.xlu0 %v722, 48
      %v1582 = vpop.permute.xlu0 %1581
      %1583 = vrot.lane.b32.xlu0 %v724, 48
      %v1584 = vpop.permute.xlu0 %1583
      %1585 = vrot.lane.b32.xlu0 %v727, 48
      %v1586 = vpop.permute.xlu0 %1585
      %1587 = vrot.lane.b32.xlu0 %v729, 48
      %v1588 = vpop.permute.xlu0 %1587
      %1589 = vrot.lane.b32.xlu0 %v732, 48
      %v1590 = vpop.permute.xlu0 %1589
      %1591 = vrot.lane.b32.xlu0 %v734, 48
      %v1592 = vpop.permute.xlu0 %1591
      %1593 = vrot.lane.b32.xlu0 %v737, 48
      %v1594 = vpop.permute.xlu0 %1593
      %1595 = vrot.lane.b32.xlu0 %v739, 48
      %v1596 = vpop.permute.xlu0 %1595
      %1597 = vrot.lane.b32.xlu0 %v742, 48
      %v1598 = vpop.permute.xlu0 %1597
      %1599 = vrot.lane.b32.xlu0 %v744, 48
      %v1600 = vpop.permute.xlu0 %1599
      %1601 = vrot.lane.b32.xlu0 %v1142, 48
      %v1602 = vpop.permute.xlu0 %1601
      %1603 = vrot.lane.b32.xlu0 %v1144, 48
      %v1604 = vpop.permute.xlu0 %1603
      %1605 = vrot.lane.b32.xlu0 %v1542, 48
      %v1606 = vpop.permute.xlu0 %1605
      %1607 = vrot.lane.b32.xlu0 %v1544, 48
      %v1608 = vpop.permute.xlu0 %1607
      %vm1641 = vcmask 441728
      %1642 = vst.msk [vmem:[#allocation3] sm:$0xff] %vm1641, %v1546
      %1643 = vst.msk [vmem:[#allocation3 + $0x8] sm:$0xff] %vm1641, %v1548
      %1644 = vst.msk [vmem:[#allocation3 + $0x10] sm:$0xff] %vm1641, %v1550
      %1645 = vst.msk [vmem:[#allocation3 + $0x18] sm:$0xff] %vm1641, %v1552
      %1646 = vst.msk [vmem:[#allocation3 + $0x20] sm:$0xff] %vm1641, %v1554
      %1647 = vst.msk [vmem:[#allocation3 + $0x28] sm:$0xff] %vm1641, %v1556
      %1648 = vst.msk [vmem:[#allocation3 + $0x30] sm:$0xff] %vm1641, %v1558
      %1649 = vst.msk [vmem:[#allocation3 + $0x38] sm:$0xff] %vm1641, %v1560
      %1650 = vst.msk [vmem:[#allocation3 + $0x40] sm:$0xff] %vm1641, %v1562
      %1651 = vst.msk [vmem:[#allocation3 + $0x48] sm:$0xff] %vm1641, %v1564
      %1652 = vst.msk [vmem:[#allocation3 + $0x50] sm:$0xff] %vm1641, %v1566
      %1653 = vst.msk [vmem:[#allocation3 + $0x58] sm:$0xff] %vm1641, %v1568
      %1654 = vst.msk [vmem:[#allocation3 + $0x60] sm:$0xff] %vm1641, %v1570
      %1655 = vst.msk [vmem:[#allocation3 + $0x68] sm:$0xff] %vm1641, %v1572
      %1656 = vst.msk [vmem:[#allocation3 + $0x70] sm:$0xff] %vm1641, %v1574
      %1657 = vst.msk [vmem:[#allocation3 + $0x78] sm:$0xff] %vm1641, %v1576
      %1658 = vst.msk [vmem:[#allocation3 + $0x80] sm:$0xff] %vm1641, %v1578
      %1659 = vst.msk [vmem:[#allocation3 + $0x88] sm:$0xff] %vm1641, %v1580
      %1660 = vst.msk [vmem:[#allocation3 + $0x90] sm:$0xff] %vm1641, %v1582
      %1661 = vst.msk [vmem:[#allocation3 + $0x98] sm:$0xff] %vm1641, %v1584
      %1662 = vst.msk [vmem:[#allocation3 + $0xa0] sm:$0xff] %vm1641, %v1586
      %1663 = vst.msk [vmem:[#allocation3 + $0xa8] sm:$0xff] %vm1641, %v1588
      %1664 = vst.msk [vmem:[#allocation3 + $0xb0] sm:$0xff] %vm1641, %v1590
      %1665 = vst.msk [vmem:[#allocation3 + $0xb8] sm:$0xff] %vm1641, %v1592
      %1666 = vst.msk [vmem:[#allocation3 + $0xc0] sm:$0xff] %vm1641, %v1594
      %1667 = vst.msk [vmem:[#allocation3 + $0xc8] sm:$0xff] %vm1641, %v1596
      %1668 = vst.msk [vmem:[#allocation3 + $0xd0] sm:$0xff] %vm1641, %v1598
      %1669 = vst.msk [vmem:[#allocation3 + $0xd8] sm:$0xff] %vm1641, %v1600
      %1670 = vst.msk [vmem:[#allocation3 + $0xe0] sm:$0xff] %vm1641, %v1602
      %1671 = vst.msk [vmem:[#allocation3 + $0xe8] sm:$0xff] %vm1641, %v1604
      %1672 = vst.msk [vmem:[#allocation3 + $0xf0] sm:$0xff] %vm1641, %v1606
      %1673 = vst.msk [vmem:[#allocation3 + $0xf8] sm:$0xff] %vm1641, %v1608
      %v1674 = vld [vmem:[#allocation3] sm:$0xff]
      %v1675 = vld [vmem:[#allocation3 + $0x8] sm:$0xff]
      %v1676 = vld [vmem:[#allocation3 + $0x10] sm:$0xff]
      %v1677 = vld [vmem:[#allocation3 + $0x18] sm:$0xff]
      %v1678 = vld [vmem:[#allocation3 + $0x20] sm:$0xff]
      %v1679 = vld [vmem:[#allocation3 + $0x28] sm:$0xff]
      %v1680 = vld [vmem:[#allocation3 + $0x30] sm:$0xff]
      %v1681 = vld [vmem:[#allocation3 + $0x38] sm:$0xff]
      %v1682 = vld [vmem:[#allocation3 + $0x40] sm:$0xff]
      %v1683 = vld [vmem:[#allocation3 + $0x48] sm:$0xff]
      %v1684 = vld [vmem:[#allocation3 + $0x50] sm:$0xff]
      %v1685 = vld [vmem:[#allocation3 + $0x58] sm:$0xff]
      %v1686 = vld [vmem:[#allocation3 + $0x60] sm:$0xff]
      %v1687 = vld [vmem:[#allocation3 + $0x68] sm:$0xff]
      %v1688 = vld [vmem:[#allocation3 + $0x70] sm:$0xff]
      %v1689 = vld [vmem:[#allocation3 + $0x78] sm:$0xff]
      %v1690 = vld [vmem:[#allocation3 + $0x80] sm:$0xff]
      %v1691 = vld [vmem:[#allocation3 + $0x88] sm:$0xff]
      %v1692 = vld [vmem:[#allocation3 + $0x90] sm:$0xff]
      %v1693 = vld [vmem:[#allocation3 + $0x98] sm:$0xff]
      %v1694 = vld [vmem:[#allocation3 + $0xa0] sm:$0xff]
      %v1695 = vld [vmem:[#allocation3 + $0xa8] sm:$0xff]
      %v1696 = vld [vmem:[#allocation3 + $0xb0] sm:$0xff]
      %v1697 = vld [vmem:[#allocation3 + $0xb8] sm:$0xff]
      %v1698 = vld [vmem:[#allocation3 + $0xc0] sm:$0xff]
      %v1699 = vld [vmem:[#allocation3 + $0xc8] sm:$0xff]
      %v1700 = vld [vmem:[#allocation3 + $0xd0] sm:$0xff]
      %v1701 = vld [vmem:[#allocation3 + $0xd8] sm:$0xff]
      %v1702 = vld [vmem:[#allocation3 + $0xe0] sm:$0xff]
      %v1703 = vld [vmem:[#allocation3 + $0xe8] sm:$0xff]
      %v1704 = vld [vmem:[#allocation3 + $0xf0] sm:$0xff]
      %v1705 = vld [vmem:[#allocation3 + $0xf8] sm:$0xff]
      %v1706 = vpack.c.bf16 %v1675, %v1674
      %v1707 = vpack.c.bf16 %v1677, %v1676
      %v1708 = vpack.c.bf16 %v1679, %v1678
      %v1709 = vpack.c.bf16 %v1681, %v1680
      %v1710 = vpack.c.bf16 %v1683, %v1682
      %v1711 = vpack.c.bf16 %v1685, %v1684
      %v1712 = vpack.c.bf16 %v1687, %v1686
      %v1713 = vpack.c.bf16 %v1689, %v1688
      %v1714 = vpack.c.bf16 %v1691, %v1690
      %v1715 = vpack.c.bf16 %v1693, %v1692
      %v1716 = vpack.c.bf16 %v1695, %v1694
      %v1717 = vpack.c.bf16 %v1697, %v1696
      %v1718 = vpack.c.bf16 %v1699, %v1698
      %v1719 = vpack.c.bf16 %v1701, %v1700
      %v1720 = vpack.c.bf16 %v1703, %v1702
      %v1721 = vpack.c.bf16 %v1705, %v1704
      %v1722 = vld [vmem:[%s1] sm:$0xf]
      %v1723 = vld [vmem:[%s1 + $0x4] sm:$0xf]
      %v1724 = vld [vmem:[%s1 + $0x8] sm:$0xf]
      %v1725 = vld [vmem:[%s1 + $0xc] sm:$0xf]
      %v1726 = vld [vmem:[%s1 + $0x10] sm:$0xf]
      %v1727 = vld [vmem:[%s1 + $0x14] sm:$0xf]
      %v1728 = vld [vmem:[%s1 + $0x18] sm:$0x7]
      %v1736 = vunpack.c.l.b16 %v1722
      %v1737 = vunpack.c.l.b16 %v1723
      %v1738 = vunpack.c.l.b16 %v1724
      %v1739 = vunpack.c.l.b16 %v1725
      %v1740 = vunpack.c.l.b16 %v1726
      %v1741 = vunpack.c.l.b16 %v1727
      %v1742 = vunpack.c.l.b16 %v1728
      %v1743 = vpack.c.b16 %v1737, %v1736
      %v1744 = vpack.c.b16 %v1739, %v1738
      %v1745 = vpack.c.b16 %v1741, %v1740
      %v1746 = vpack.c.b16 %v1742, %v1742
      %vm1750 = vcmask 441344
      %v1752 = vsel %vm1750, %v1706, 0
      %v1755 = vsel %vm1750, %v1707, 0
      %v1758 = vsel %vm1750, %v1708, 0
      %v1761 = vsel %vm1750, %v1709, 0
      %v1764 = vsel %vm1750, %v1710, 0
      %v1767 = vsel %vm1750, %v1711, 0
      %v1770 = vsel %vm1750, %v1712, 0
      %v1773 = vsel %vm1750, %v1713, 0
      %v1776 = vsel %vm1750, %v1714, 0
      %v1779 = vsel %vm1750, %v1715, 0
      %v1782 = vsel %vm1750, %v1716, 0
      %v1785 = vsel %vm1750, %v1717, 0
      %v1788 = vsel %vm1750, %v1718, 0
      %v1791 = vsel %vm1750, %v1719, 0
      %v1794 = vsel %vm1750, %v1720, 0
      %v1797 = vsel %vm1750, %v1721, 0
      %vm1799 = vcmask 1042432
      %v1801 = vsel %vm1799, %v1746, 0
      %1803 = vmatprep.subr.bf16.mxu0 0
      %1804 = vmatpush1.bf16.msra.mxu0 0
      %1805 = vmatprep.subr.bf16.mxu0 0
      %1806 = vmatpush1.bf16.msra.mxu0 0
      %1807 = vmatprep.subr.bf16.mxu0 0
      %1808 = vmatpush1.bf16.msra.mxu0 0
      %1809 = vmatprep.subr.bf16.mxu0 0
      %1810 = vmatpush1.bf16.msra.mxu0 0
      %1811 = vmatprep.subr.bf16.mxu0 0
      %1812 = vmatpush1.bf16.msra.mxu0 %v1801
      %1813 = vmatprep.subr.bf16.mxu0 0
      %1814 = vmatpush1.bf16.msra.mxu0 %v1745
      %1815 = vmatprep.subr.bf16.mxu0 0
      %1816 = vmatpush1.bf16.msra.mxu0 %v1744
      %1817 = vmatprep.subr.bf16.mxu0 0
      %1818 = vmatpush1.bf16.msra.mxu0 %v1743
      %1819 = vmatprep.subr.bf16.mxu0 0
      %1820 = vmatpush2.bf16.msra.mxu0 0
      %1821 = vmatprep.subr.bf16.mxu0 0
      %1822 = vmatpush2.bf16.msra.mxu0 0
      %1823 = vmatprep.subr.bf16.mxu0 0
      %1824 = vmatpush2.bf16.msra.mxu0 0
      %1825 = vmatprep.subr.bf16.mxu0 0
      %1826 = vmatpush2.bf16.msra.mxu0 0
      %1827 = vmatprep.subr.bf16.mxu0 0
      %1828 = vmatpush2.bf16.msra.mxu0 0
      %1829 = vmatprep.subr.bf16.mxu0 0
      %1830 = vmatpush2.bf16.msra.mxu0 0
      %1831 = vmatprep.subr.bf16.mxu0 0
      %1832 = vmatpush2.bf16.msra.mxu0 0
      %1833 = vmatprep.subr.bf16.mxu0 0
      %1834 = vmatpush2.bf16.msra.mxu0 0
      %1835 = vmatprep.mubr.bf16.mxu0 0
      %1836 = vmatmul.mubr.bf16.gmra.mxu0 %v1752
      %v1837 = vpop.f32.mrf.mxu0
      %v1838 = vadd.f32 0.0, %v1837
      %v1839 = vpop.f32.mrf.mxu0
      %v1840 = vpop.f32.mrf.mxu0
      %v1841 = vadd.f32 0.0, %v1840
      %v1842 = vpop.f32.mrf.mxu0
      %1843 = vmatprep.mubr.bf16.mxu0 0
      %1844 = vmatmul.mubr.bf16.gmra.mxu0 %v1755
      %v1845 = vpop.f32.mrf.mxu0
      %v1846 = vadd.f32 0.0, %v1845
      %v1847 = vpop.f32.mrf.mxu0
      %v1848 = vpop.f32.mrf.mxu0
      %v1849 = vadd.f32 0.0, %v1848
      %v1850 = vpop.f32.mrf.mxu0
      %1851 = vmatprep.mubr.bf16.mxu0 0
      %1852 = vmatmul.mubr.bf16.gmra.mxu0 %v1758
      %v1853 = vpop.f32.mrf.mxu0
      %v1854 = vadd.f32 0.0, %v1853
      %v1855 = vpop.f32.mrf.mxu0
      %v1856 = vpop.f32.mrf.mxu0
      %v1857 = vadd.f32 0.0, %v1856
      %v1858 = vpop.f32.mrf.mxu0
      %1859 = vmatprep.mubr.bf16.mxu0 0
      %1860 = vmatmul.mubr.bf16.gmra.mxu0 %v1761
      %v1861 = vpop.f32.mrf.mxu0
      %v1862 = vadd.f32 0.0, %v1861
      %v1863 = vpop.f32.mrf.mxu0
      %v1864 = vpop.f32.mrf.mxu0
      %v1865 = vadd.f32 0.0, %v1864
      %v1866 = vpop.f32.mrf.mxu0
      %1867 = vmatprep.mubr.bf16.mxu0 0
      %1868 = vmatmul.mubr.bf16.gmra.mxu0 %v1764
      %v1869 = vpop.f32.mrf.mxu0
      %v1870 = vadd.f32 0.0, %v1869
      %v1871 = vpop.f32.mrf.mxu0
      %v1872 = vpop.f32.mrf.mxu0
      %v1873 = vadd.f32 0.0, %v1872
      %v1874 = vpop.f32.mrf.mxu0
      %1875 = vmatprep.mubr.bf16.mxu0 0
      %1876 = vmatmul.mubr.bf16.gmra.mxu0 %v1767
      %v1877 = vpop.f32.mrf.mxu0
      %v1878 = vadd.f32 0.0, %v1877
      %v1879 = vpop.f32.mrf.mxu0
      %v1880 = vpop.f32.mrf.mxu0
      %v1881 = vadd.f32 0.0, %v1880
      %v1882 = vpop.f32.mrf.mxu0
      %1883 = vmatprep.mubr.bf16.mxu0 0
      %1884 = vmatmul.mubr.bf16.gmra.mxu0 %v1770
      %v1885 = vpop.f32.mrf.mxu0
      %v1886 = vadd.f32 0.0, %v1885
      %v1887 = vpop.f32.mrf.mxu0
      %v1888 = vpop.f32.mrf.mxu0
      %v1889 = vadd.f32 0.0, %v1888
      %v1890 = vpop.f32.mrf.mxu0
      %1891 = vmatprep.mubr.bf16.mxu0 0
      %1892 = vmatmul.mubr.bf16.gmra.mxu0 %v1773
      %v1893 = vpop.f32.mrf.mxu0
      %v1894 = vadd.f32 0.0, %v1893
      %v1895 = vpop.f32.mrf.mxu0
      %v1896 = vpop.f32.mrf.mxu0
      %v1897 = vadd.f32 0.0, %v1896
      %v1898 = vpop.f32.mrf.mxu0
      %1899 = vmatprep.mubr.bf16.mxu0 0
      %1900 = vmatmul.mubr.bf16.gmra.mxu0 %v1776
      %v1901 = vpop.f32.mrf.mxu0
      %v1902 = vadd.f32 0.0, %v1901
      %v1903 = vpop.f32.mrf.mxu0
      %v1904 = vpop.f32.mrf.mxu0
      %v1905 = vadd.f32 0.0, %v1904
      %v1906 = vpop.f32.mrf.mxu0
      %1907 = vmatprep.mubr.bf16.mxu0 0
      %1908 = vmatmul.mubr.bf16.gmra.mxu0 %v1779
      %v1909 = vpop.f32.mrf.mxu0
      %v1910 = vadd.f32 0.0, %v1909
      %v1911 = vpop.f32.mrf.mxu0
      %v1912 = vpop.f32.mrf.mxu0
      %v1913 = vadd.f32 0.0, %v1912
      %v1914 = vpop.f32.mrf.mxu0
      %1915 = vmatprep.mubr.bf16.mxu0 0
      %1916 = vmatmul.mubr.bf16.gmra.mxu0 %v1782
      %v1917 = vpop.f32.mrf.mxu0
      %v1918 = vadd.f32 0.0, %v1917
      %v1919 = vpop.f32.mrf.mxu0
      %v1920 = vpop.f32.mrf.mxu0
      %v1921 = vadd.f32 0.0, %v1920
      %v1922 = vpop.f32.mrf.mxu0
      %1923 = vmatprep.mubr.bf16.mxu0 0
      %1924 = vmatmul.mubr.bf16.gmra.mxu0 %v1785
      %v1925 = vpop.f32.mrf.mxu0
      %v1926 = vadd.f32 0.0, %v1925
      %v1927 = vpop.f32.mrf.mxu0
      %v1928 = vpop.f32.mrf.mxu0
      %v1929 = vadd.f32 0.0, %v1928
      %v1930 = vpop.f32.mrf.mxu0
      %1931 = vmatprep.mubr.bf16.mxu0 0
      %1932 = vmatmul.mubr.bf16.gmra.mxu0 %v1788
      %v1933 = vpop.f32.mrf.mxu0
      %v1934 = vadd.f32 0.0, %v1933
      %v1935 = vpop.f32.mrf.mxu0
      %v1936 = vpop.f32.mrf.mxu0
      %v1937 = vadd.f32 0.0, %v1936
      %v1938 = vpop.f32.mrf.mxu0
      %1939 = vmatprep.mubr.bf16.mxu0 0
      %1940 = vmatmul.mubr.bf16.gmra.mxu0 %v1791
      %v1941 = vpop.f32.mrf.mxu0
      %v1942 = vadd.f32 0.0, %v1941
      %v1943 = vpop.f32.mrf.mxu0
      %v1944 = vpop.f32.mrf.mxu0
      %v1945 = vadd.f32 0.0, %v1944
      %v1946 = vpop.f32.mrf.mxu0
      %1947 = vmatprep.mubr.bf16.mxu0 0
      %1948 = vmatmul.mubr.bf16.gmra.mxu0 %v1794
      %v1949 = vpop.f32.mrf.mxu0
      %v1950 = vadd.f32 0.0, %v1949
      %v1951 = vpop.f32.mrf.mxu0
      %v1952 = vpop.f32.mrf.mxu0
      %v1953 = vadd.f32 0.0, %v1952
      %v1954 = vpop.f32.mrf.mxu0
      %1955 = vmatprep.mubr.bf16.mxu0 0
      %1956 = vmatmul.mubr.bf16.gmra.mxu0 %v1797
      %v1957 = vpop.f32.mrf.mxu0
      %v1958 = vadd.f32 0.0, %v1957
      %v1959 = vpop.f32.mrf.mxu0
      %v1960 = vpop.f32.mrf.mxu0
      %v1961 = vadd.f32 0.0, %v1960
      %v1962 = vpop.f32.mrf.mxu0
      %1963 = vdwg.mxu0
      %v1964 = vld [vmem:[%s2] sm:$0x1]
      %v1966 = vlaneseq
      %v1967 = vshrl.u32 %v1966, 7
      %v1968 = vsub.s32 0, %v1967
      %v1969 = vrot.slane %v1964, %v1968
      %v1971 = vmul.f32 %v1838, %v1969
      %v1972 = vmul.f32 %v1841, %v1969
      %v1973 = vmul.f32 %v1846, %v1969
      %v1974 = vmul.f32 %v1849, %v1969
      %v1975 = vmul.f32 %v1854, %v1969
      %v1976 = vmul.f32 %v1857, %v1969
      %v1977 = vmul.f32 %v1862, %v1969
      %v1978 = vmul.f32 %v1865, %v1969
      %v1979 = vmul.f32 %v1870, %v1969
      %v1980 = vmul.f32 %v1873, %v1969
      %v1981 = vmul.f32 %v1878, %v1969
      %v1982 = vmul.f32 %v1881, %v1969
      %v1983 = vmul.f32 %v1886, %v1969
      %v1984 = vmul.f32 %v1889, %v1969
      %v1985 = vmul.f32 %v1894, %v1969
      %v1986 = vmul.f32 %v1897, %v1969
      %v1987 = vmul.f32 %v1902, %v1969
      %v1988 = vmul.f32 %v1905, %v1969
      %v1989 = vmul.f32 %v1910, %v1969
      %v1990 = vmul.f32 %v1913, %v1969
      %v1991 = vmul.f32 %v1918, %v1969
      %v1992 = vmul.f32 %v1921, %v1969
      %v1993 = vmul.f32 %v1926, %v1969
      %v1994 = vmul.f32 %v1929, %v1969
      %v1995 = vmul.f32 %v1934, %v1969
      %v1996 = vmul.f32 %v1937, %v1969
      %v1997 = vmul.f32 %v1942, %v1969
      %v1998 = vmul.f32 %v1945, %v1969
      %v1999 = vmul.f32 %v1950, %v1969
      %v2000 = vmul.f32 %v1953, %v1969
      %v2001 = vmul.f32 %v1958, %v1969
      %v2002 = vmul.f32 %v1961, %v1969
      %v2003 = vld [vmem:[%s3] sm:$0x1]
      %v2005 = vlaneseq
      %v2006 = vshrl.u32 %v2005, 7
      %v2007 = vsub.s32 0, %v2006
      %v2008 = vrot.slane %v2003, %v2007
      %v2010 = vadd.f32 %v1971, %v2008
      %v2011 = vadd.f32 %v1972, %v2008
      %v2012 = vadd.f32 %v1973, %v2008
      %v2013 = vadd.f32 %v1974, %v2008
      %v2014 = vadd.f32 %v1975, %v2008
      %v2015 = vadd.f32 %v1976, %v2008
      %v2016 = vadd.f32 %v1977, %v2008
      %v2017 = vadd.f32 %v1978, %v2008
      %v2018 = vadd.f32 %v1979, %v2008
      %v2019 = vadd.f32 %v1980, %v2008
      %v2020 = vadd.f32 %v1981, %v2008
      %v2021 = vadd.f32 %v1982, %v2008
      %v2022 = vadd.f32 %v1983, %v2008
      %v2023 = vadd.f32 %v1984, %v2008
      %v2024 = vadd.f32 %v1985, %v2008
      %v2025 = vadd.f32 %v1986, %v2008
      %v2026 = vadd.f32 %v1987, %v2008
      %v2027 = vadd.f32 %v1988, %v2008
      %v2028 = vadd.f32 %v1989, %v2008
      %v2029 = vadd.f32 %v1990, %v2008
      %v2030 = vadd.f32 %v1991, %v2008
      %v2031 = vadd.f32 %v1992, %v2008
      %v2032 = vadd.f32 %v1993, %v2008
      %v2033 = vadd.f32 %v1994, %v2008
      %v2034 = vadd.f32 %v1995, %v2008
      %v2035 = vadd.f32 %v1996, %v2008
      %v2036 = vadd.f32 %v1997, %v2008
      %v2037 = vadd.f32 %v1998, %v2008
      %v2038 = vadd.f32 %v1999, %v2008
      %v2039 = vadd.f32 %v2000, %v2008
      %v2040 = vadd.f32 %v2001, %v2008
      %v2041 = vadd.f32 %v2002, %v2008
      %v2042 = vmax.f32 %v2010, 0.0
      %v2043 = vmax.f32 %v2011, 0.0
      %v2044 = vmax.f32 %v2012, 0.0
      %v2045 = vmax.f32 %v2013, 0.0
      %v2046 = vmax.f32 %v2014, 0.0
      %v2047 = vmax.f32 %v2015, 0.0
      %v2048 = vmax.f32 %v2016, 0.0
      %v2049 = vmax.f32 %v2017, 0.0
      %v2050 = vmax.f32 %v2018, 0.0
      %v2051 = vmax.f32 %v2019, 0.0
      %v2052 = vmax.f32 %v2020, 0.0
      %v2053 = vmax.f32 %v2021, 0.0
      %v2054 = vmax.f32 %v2022, 0.0
      %v2055 = vmax.f32 %v2023, 0.0
      %v2056 = vmax.f32 %v2024, 0.0
      %v2057 = vmax.f32 %v2025, 0.0
      %v2058 = vmax.f32 %v2026, 0.0
      %v2059 = vmax.f32 %v2027, 0.0
      %v2060 = vmax.f32 %v2028, 0.0
      %v2061 = vmax.f32 %v2029, 0.0
      %v2062 = vmax.f32 %v2030, 0.0
      %v2063 = vmax.f32 %v2031, 0.0
      %v2064 = vmax.f32 %v2032, 0.0
      %v2065 = vmax.f32 %v2033, 0.0
      %v2066 = vmax.f32 %v2034, 0.0
      %v2067 = vmax.f32 %v2035, 0.0
      %v2068 = vmax.f32 %v2036, 0.0
      %v2069 = vmax.f32 %v2037, 0.0
      %v2070 = vmax.f32 %v2038, 0.0
      %v2071 = vmax.f32 %v2039, 0.0
      %v2072 = vmax.f32 %v2040, 0.0
      %v2073 = vmax.f32 %v2041, 0.0
      %2074 = vst.msk [vmem:[%s197] sm:$0xff] %vm199, %v2042
      %2075 = vst.msk [vmem:[%s197 + $0x8] sm:$0xff] %vm199, %v2043
      %2076 = vst.msk [vmem:[%s197 + $0x10] sm:$0xff] %vm199, %v2044
      %2077 = vst.msk [vmem:[%s197 + $0x18] sm:$0xff] %vm199, %v2045
      %2078 = vst.msk [vmem:[%s197 + $0x20] sm:$0xff] %vm199, %v2046
      %2079 = vst.msk [vmem:[%s197 + $0x28] sm:$0xff] %vm199, %v2047
      %2080 = vst.msk [vmem:[%s197 + $0x30] sm:$0xff] %vm199, %v2048
      %2081 = vst.msk [vmem:[%s197 + $0x38] sm:$0xff] %vm199, %v2049
      %2082 = vst.msk [vmem:[%s197 + $0x40] sm:$0xff] %vm199, %v2050
      %2083 = vst.msk [vmem:[%s197 + $0x48] sm:$0xff] %vm199, %v2051
      %2084 = vst.msk [vmem:[%s197 + $0x50] sm:$0xff] %vm199, %v2052
      %2085 = vst.msk [vmem:[%s197 + $0x58] sm:$0xff] %vm199, %v2053
      %2086 = vst.msk [vmem:[%s197 + $0x60] sm:$0xff] %vm199, %v2054
      %2087 = vst.msk [vmem:[%s197 + $0x68] sm:$0xff] %vm199, %v2055
      %2088 = vst.msk [vmem:[%s197 + $0x70] sm:$0xff] %vm199, %v2056
      %2089 = vst.msk [vmem:[%s197 + $0x78] sm:$0xff] %vm199, %v2057
      %2090 = vst.msk [vmem:[%s197 + $0x80] sm:$0xff] %vm199, %v2058
      %2091 = vst.msk [vmem:[%s197 + $0x88] sm:$0xff] %vm199, %v2059
      %2092 = vst.msk [vmem:[%s197 + $0x90] sm:$0xff] %vm199, %v2060
      %2093 = vst.msk [vmem:[%s197 + $0x98] sm:$0xff] %vm199, %v2061
      %2094 = vst.msk [vmem:[%s197 + $0xa0] sm:$0xff] %vm199, %v2062
      %2095 = vst.msk [vmem:[%s197 + $0xa8] sm:$0xff] %vm199, %v2063
      %2096 = vst.msk [vmem:[%s197 + $0xb0] sm:$0xff] %vm199, %v2064
      %2097 = vst.msk [vmem:[%s197 + $0xb8] sm:$0xff] %vm199, %v2065
      %2098 = vst.msk [vmem:[%s197 + $0xc0] sm:$0xff] %vm199, %v2066
      %2099 = vst.msk [vmem:[%s197 + $0xc8] sm:$0xff] %vm199, %v2067
      %2100 = vst.msk [vmem:[%s197 + $0xd0] sm:$0xff] %vm199, %v2068
      %2101 = vst.msk [vmem:[%s197 + $0xd8] sm:$0xff] %vm199, %v2069
      %2102 = vst.msk [vmem:[%s197 + $0xe0] sm:$0xff] %vm199, %v2070
      %2103 = vst.msk [vmem:[%s197 + $0xe8] sm:$0xff] %vm199, %v2071
      %2104 = vst.msk [vmem:[%s197 + $0xf0] sm:$0xff] %vm199, %v2072
      %2105 = vst.msk [vmem:[%s197 + $0xf8] sm:$0xff] %vm199, %v2073
      %2138 = vrot.lane.b32.xlu0 %v255, 122
      %v2139 = vpop.permute.xlu0 %2138
      %2140 = vrot.lane.b32.xlu0 %v256, 122
      %v2141 = vpop.permute.xlu0 %2140
      %2142 = vrot.lane.b32.xlu0 %v257, 122
      %v2143 = vpop.permute.xlu0 %2142
      %2144 = vrot.lane.b32.xlu0 %v258, 122
      %v2145 = vpop.permute.xlu0 %2144
      %2146 = vrot.lane.b32.xlu0 %v259, 122
      %v2147 = vpop.permute.xlu0 %2146
      %2148 = vrot.lane.b32.xlu0 %v260, 122
      %v2149 = vpop.permute.xlu0 %2148
      %2150 = vrot.lane.b32.xlu0 %v261, 122
      %v2151 = vpop.permute.xlu0 %2150
      %2152 = vrot.lane.b32.xlu0 %v262, 122
      %v2153 = vpop.permute.xlu0 %2152
      %2154 = vrot.lane.b32.xlu0 %v263, 122
      %v2155 = vpop.permute.xlu0 %2154
      %2156 = vrot.lane.b32.xlu0 %v264, 122
      %v2157 = vpop.permute.xlu0 %2156
      %2158 = vrot.lane.b32.xlu0 %v265, 122
      %v2159 = vpop.permute.xlu0 %2158
      %2160 = vrot.lane.b32.xlu0 %v266, 122
      %v2161 = vpop.permute.xlu0 %2160
      %2162 = vrot.lane.b32.xlu0 %v267, 122
      %v2163 = vpop.permute.xlu0 %2162
      %2164 = vrot.lane.b32.xlu0 %v268, 122
      %v2165 = vpop.permute.xlu0 %2164
      %2166 = vrot.lane.b32.xlu0 %v269, 122
      %v2167 = vpop.permute.xlu0 %2166
      %2168 = vrot.lane.b32.xlu0 %v270, 122
      %v2169 = vpop.permute.xlu0 %2168
      %2170 = vrot.lane.b32.xlu0 %v271, 122
      %v2171 = vpop.permute.xlu0 %2170
      %2172 = vrot.lane.b32.xlu0 %v272, 122
      %v2173 = vpop.permute.xlu0 %2172
      %2174 = vrot.lane.b32.xlu0 %v273, 122
      %v2175 = vpop.permute.xlu0 %2174
      %2176 = vrot.lane.b32.xlu0 %v274, 122
      %v2177 = vpop.permute.xlu0 %2176
      %2178 = vrot.lane.b32.xlu0 %v275, 122
      %v2179 = vpop.permute.xlu0 %2178
      %2180 = vrot.lane.b32.xlu0 %v276, 122
      %v2181 = vpop.permute.xlu0 %2180
      %2182 = vrot.lane.b32.xlu0 %v277, 122
      %v2183 = vpop.permute.xlu0 %2182
      %2184 = vrot.lane.b32.xlu0 %v278, 122
      %v2185 = vpop.permute.xlu0 %2184
      %2186 = vrot.lane.b32.xlu0 %v279, 122
      %v2187 = vpop.permute.xlu0 %2186
      %2188 = vrot.lane.b32.xlu0 %v280, 122
      %v2189 = vpop.permute.xlu0 %2188
      %2190 = vrot.lane.b32.xlu0 %v281, 122
      %v2191 = vpop.permute.xlu0 %2190
      %2192 = vrot.lane.b32.xlu0 %v282, 122
      %v2193 = vpop.permute.xlu0 %2192
      %2194 = vrot.lane.b32.xlu0 %v283, 122
      %v2195 = vpop.permute.xlu0 %2194
      %2196 = vrot.lane.b32.xlu0 %v284, 122
      %v2197 = vpop.permute.xlu0 %2196
      %2198 = vrot.lane.b32.xlu0 %v285, 122
      %v2199 = vpop.permute.xlu0 %2198
      %2200 = vrot.lane.b32.xlu0 %v286, 122
      %v2201 = vpop.permute.xlu0 %2200
      %v2234 = vadd.f32 %v2042, %v2139
      %v2235 = vadd.f32 %v2043, %v2141
      %v2236 = vadd.f32 %v2044, %v2143
      %v2237 = vadd.f32 %v2045, %v2145
      %v2238 = vadd.f32 %v2046, %v2147
      %v2239 = vadd.f32 %v2047, %v2149
      %v2240 = vadd.f32 %v2048, %v2151
      %v2241 = vadd.f32 %v2049, %v2153
      %v2242 = vadd.f32 %v2050, %v2155
      %v2243 = vadd.f32 %v2051, %v2157
      %v2244 = vadd.f32 %v2052, %v2159
      %v2245 = vadd.f32 %v2053, %v2161
      %v2246 = vadd.f32 %v2054, %v2163
      %v2247 = vadd.f32 %v2055, %v2165
      %v2248 = vadd.f32 %v2056, %v2167
      %v2249 = vadd.f32 %v2057, %v2169
      %v2250 = vadd.f32 %v2058, %v2171
      %v2251 = vadd.f32 %v2059, %v2173
      %v2252 = vadd.f32 %v2060, %v2175
      %v2253 = vadd.f32 %v2061, %v2177
      %v2254 = vadd.f32 %v2062, %v2179
      %v2255 = vadd.f32 %v2063, %v2181
      %v2256 = vadd.f32 %v2064, %v2183
      %v2257 = vadd.f32 %v2065, %v2185
      %v2258 = vadd.f32 %v2066, %v2187
      %v2259 = vadd.f32 %v2067, %v2189
      %v2260 = vadd.f32 %v2068, %v2191
      %v2261 = vadd.f32 %v2069, %v2193
      %v2262 = vadd.f32 %v2070, %v2195
      %v2263 = vadd.f32 %v2071, %v2197
      %v2264 = vadd.f32 %v2072, %v2199
      %v2265 = vadd.f32 %v2073, %v2201
      %2266 = vst.msk [vmem:[%s287 + $0x1] sm:$0xff] %vm199, %v2234
      %2267 = vst.msk [vmem:[%s287 + $0x9] sm:$0xff] %vm199, %v2235
      %2268 = vst.msk [vmem:[%s287 + $0x19] sm:$0xff] %vm199, %v2236
      %2269 = vst.msk [vmem:[%s287 + $0x21] sm:$0xff] %vm199, %v2237
      %2270 = vst.msk [vmem:[%s287 + $0x31] sm:$0xff] %vm199, %v2238
      %2271 = vst.msk [vmem:[%s287 + $0x39] sm:$0xff] %vm199, %v2239
      %2272 = vst.msk [vmem:[%s287 + $0x49] sm:$0xff] %vm199, %v2240
      %2273 = vst.msk [vmem:[%s287 + $0x51] sm:$0xff] %vm199, %v2241
      %2274 = vst.msk [vmem:[%s287 + $0x61] sm:$0xff] %vm199, %v2242
      %2275 = vst.msk [vmem:[%s287 + $0x69] sm:$0xff] %vm199, %v2243
      %2276 = vst.msk [vmem:[%s287 + $0x79] sm:$0xff] %vm199, %v2244
      %2277 = vst.msk [vmem:[%s287 + $0x81] sm:$0xff] %vm199, %v2245
      %2278 = vst.msk [vmem:[%s287 + $0x91] sm:$0xff] %vm199, %v2246
      %2279 = vst.msk [vmem:[%s287 + $0x99] sm:$0xff] %vm199, %v2247
      %2280 = vst.msk [vmem:[%s287 + $0xa9] sm:$0xff] %vm199, %v2248
      %2281 = vst.msk [vmem:[%s287 + $0xb1] sm:$0xff] %vm199, %v2249
      %2282 = vst.msk [vmem:[%s287 + $0xc1] sm:$0xff] %vm199, %v2250
      %2283 = vst.msk [vmem:[%s287 + $0xc9] sm:$0xff] %vm199, %v2251
      %2284 = vst.msk [vmem:[%s287 + $0xd9] sm:$0xff] %vm199, %v2252
      %2285 = vst.msk [vmem:[%s287 + $0xe1] sm:$0xff] %vm199, %v2253
      %2286 = vst.msk [vmem:[%s287 + $0xf1] sm:$0xff] %vm199, %v2254
      %2287 = vst.msk [vmem:[%s287 + $0xf9] sm:$0xff] %vm199, %v2255
      %2288 = vst.msk [vmem:[%s287 + $0x109] sm:$0xff] %vm199, %v2256
      %2289 = vst.msk [vmem:[%s287 + $0x111] sm:$0xff] %vm199, %v2257
      %2290 = vst.msk [vmem:[%s287 + $0x121] sm:$0xff] %vm199, %v2258
      %2291 = vst.msk [vmem:[%s287 + $0x129] sm:$0xff] %vm199, %v2259
      %2292 = vst.msk [vmem:[%s287 + $0x139] sm:$0xff] %vm199, %v2260
      %2293 = vst.msk [vmem:[%s287 + $0x141] sm:$0xff] %vm199, %v2261
      %2294 = vst.msk [vmem:[%s287 + $0x151] sm:$0xff] %vm199, %v2262
      %2295 = vst.msk [vmem:[%s287 + $0x159] sm:$0xff] %vm199, %v2263
      %2296 = vst.msk [vmem:[%s287 + $0x169] sm:$0xff] %vm199, %v2264
      %2297 = vst.msk [vmem:[%s287 + $0x171] sm:$0xff] %vm199, %v2265
      %v2298 = vld [vmem:[#allocation2] sm:$0xff]
      %v2299 = vld [vmem:[#allocation2 + $0x8] sm:$0xff]
      %v2300 = vld [vmem:[#allocation2 + $0x10] sm:$0x3]
      %v2301 = vld [vmem:[#allocation2 + $0x18] sm:$0xff]
      %v2302 = vld [vmem:[#allocation2 + $0x20] sm:$0xff]
      %v2303 = vld [vmem:[#allocation2 + $0x28] sm:$0x3]
      %v2304 = vld [vmem:[#allocation2 + $0x30] sm:$0xff]
      %v2305 = vld [vmem:[#allocation2 + $0x38] sm:$0xff]
      %v2306 = vld [vmem:[#allocation2 + $0x40] sm:$0x3]
      %v2307 = vld [vmem:[#allocation2 + $0x48] sm:$0xff]
      %v2308 = vld [vmem:[#allocation2 + $0x50] sm:$0xff]
      %v2309 = vld [vmem:[#allocation2 + $0x58] sm:$0x3]
      %v2310 = vld [vmem:[#allocation2 + $0x60] sm:$0xff]
      %v2311 = vld [vmem:[#allocation2 + $0x68] sm:$0xff]
      %v2312 = vld [vmem:[#allocation2 + $0x70] sm:$0x3]
      %v2313 = vld [vmem:[#allocation2 + $0x78] sm:$0xff]
      %v2314 = vld [vmem:[#allocation2 + $0x80] sm:$0xff]
      %v2315 = vld [vmem:[#allocation2 + $0x88] sm:$0x3]
      %v2316 = vld [vmem:[#allocation2 + $0x90] sm:$0xff]
      %v2317 = vld [vmem:[#allocation2 + $0x98] sm:$0xff]
      %v2318 = vld [vmem:[#allocation2 + $0xa0] sm:$0x3]
      %v2319 = vld [vmem:[#allocation2 + $0xa8] sm:$0xff]
      %v2320 = vld [vmem:[#allocation2 + $0xb0] sm:$0xff]
      %v2321 = vld [vmem:[#allocation2 + $0xb8] sm:$0x3]
      %v2322 = vld [vmem:[#allocation2 + $0xc0] sm:$0xff]
      %v2323 = vld [vmem:[#allocation2 + $0xc8] sm:$0xff]
      %v2324 = vld [vmem:[#allocation2 + $0xd0] sm:$0x3]
      %v2325 = vld [vmem:[#allocation2 + $0xd8] sm:$0xff]
      %v2326 = vld [vmem:[#allocation2 + $0xe0] sm:$0xff]
      %v2327 = vld [vmem:[#allocation2 + $0xe8] sm:$0x3]
      %v2328 = vld [vmem:[#allocation2 + $0xf0] sm:$0xff]
      %v2329 = vld [vmem:[#allocation2 + $0xf8] sm:$0xff]
      %v2330 = vld [vmem:[#allocation2 + $0x100] sm:$0x3]
      %v2331 = vld [vmem:[#allocation2 + $0x108] sm:$0xff]
      %v2332 = vld [vmem:[#allocation2 + $0x110] sm:$0xff]
      %v2333 = vld [vmem:[#allocation2 + $0x118] sm:$0x3]
      %v2334 = vld [vmem:[#allocation2 + $0x120] sm:$0xff]
      %v2335 = vld [vmem:[#allocation2 + $0x128] sm:$0xff]
      %v2336 = vld [vmem:[#allocation2 + $0x130] sm:$0x3]
      %v2337 = vld [vmem:[#allocation2 + $0x138] sm:$0xff]
      %v2338 = vld [vmem:[#allocation2 + $0x140] sm:$0xff]
      %v2339 = vld [vmem:[#allocation2 + $0x148] sm:$0x3]
      %v2340 = vld [vmem:[#allocation2 + $0x150] sm:$0xff]
      %v2341 = vld [vmem:[#allocation2 + $0x158] sm:$0xff]
      %v2342 = vld [vmem:[#allocation2 + $0x160] sm:$0x3]
      %v2343 = vld [vmem:[#allocation2 + $0x168] sm:$0xff]
      %v2344 = vld [vmem:[#allocation2 + $0x170] sm:$0xff]
      %v2345 = vld [vmem:[#allocation2 + $0x178] sm:$0x3]
      %v2346 = vld [vmem:[#allocation2 + $0x180] sm:$0xff]
      %v2347 = vld [vmem:[#allocation2 + $0x188] sm:$0xff]
      %v2348 = vld [vmem:[#allocation2 + $0x190] sm:$0x3]
      %v2349 = vld [vmem:[#allocation2 + $0x198] sm:$0xff]
      %v2350 = vld [vmem:[#allocation2 + $0x1a0] sm:$0xff]
      %v2351 = vld [vmem:[#allocation2 + $0x1a8] sm:$0x3]
      %2352 = vst.msk [vmem:[#allocation3] sm:$0xff] %vm199, %v2298
      %2353 = vst.msk [vmem:[#allocation3 + $0x8] sm:$0xff] %vm199, %v2299
      %2354 = vst.msk [vmem:[#allocation3 + $0x10] sm:$0xff] %vm199, %v2301
      %2355 = vst.msk [vmem:[#allocation3 + $0x18] sm:$0xff] %vm199, %v2302
      %2356 = vst.msk [vmem:[#allocation3 + $0x20] sm:$0xff] %vm199, %v2304
      %2357 = vst.msk [vmem:[#allocation3 + $0x28] sm:$0xff] %vm199, %v2305
      %2358 = vst.msk [vmem:[#allocation3 + $0x30] sm:$0xff] %vm199, %v2307
      %2359 = vst.msk [vmem:[#allocation3 + $0x38] sm:$0xff] %vm199, %v2308
      %2360 = vst.msk [vmem:[#allocation3 + $0x40] sm:$0xff] %vm199, %v2310
      %2361 = vst.msk [vmem:[#allocation3 + $0x48] sm:$0xff] %vm199, %v2311
      %2362 = vst.msk [vmem:[#allocation3 + $0x50] sm:$0xff] %vm199, %v2313
      %2363 = vst.msk [vmem:[#allocation3 + $0x58] sm:$0xff] %vm199, %v2314
      %2364 = vst.msk [vmem:[#allocation3 + $0x60] sm:$0xff] %vm199, %v2316
      %2365 = vst.msk [vmem:[#allocation3 + $0x68] sm:$0xff] %vm199, %v2317
      %2366 = vst.msk [vmem:[#allocation3 + $0x70] sm:$0xff] %vm199, %v2319
      %2367 = vst.msk [vmem:[#allocation3 + $0x78] sm:$0xff] %vm199, %v2320
      %2368 = vst.msk [vmem:[#allocation3 + $0x80] sm:$0xff] %vm199, %v2322
      %2369 = vst.msk [vmem:[#allocation3 + $0x88] sm:$0xff] %vm199, %v2323
      %2370 = vst.msk [vmem:[#allocation3 + $0x90] sm:$0xff] %vm199, %v2325
      %2371 = vst.msk [vmem:[#allocation3 + $0x98] sm:$0xff] %vm199, %v2326
      %2372 = vst.msk [vmem:[#allocation3 + $0xa0] sm:$0xff] %vm199, %v2328
      %2373 = vst.msk [vmem:[#allocation3 + $0xa8] sm:$0xff] %vm199, %v2329
      %2374 = vst.msk [vmem:[#allocation3 + $0xb0] sm:$0xff] %vm199, %v2331
      %2375 = vst.msk [vmem:[#allocation3 + $0xb8] sm:$0xff] %vm199, %v2332
      %2376 = vst.msk [vmem:[#allocation3 + $0xc0] sm:$0xff] %vm199, %v2334
      %2377 = vst.msk [vmem:[#allocation3 + $0xc8] sm:$0xff] %vm199, %v2335
      %2378 = vst.msk [vmem:[#allocation3 + $0xd0] sm:$0xff] %vm199, %v2337
      %2379 = vst.msk [vmem:[#allocation3 + $0xd8] sm:$0xff] %vm199, %v2338
      %2380 = vst.msk [vmem:[#allocation3 + $0xe0] sm:$0xff] %vm199, %v2340
      %2381 = vst.msk [vmem:[#allocation3 + $0xe8] sm:$0xff] %vm199, %v2341
      %2382 = vst.msk [vmem:[#allocation3 + $0xf0] sm:$0xff] %vm199, %v2343
      %2383 = vst.msk [vmem:[#allocation3 + $0xf8] sm:$0xff] %vm199, %v2344
      %v2432 = vrot.slane %v2298, 1
      %v2433 = vrot.slane %v2299, 1
      %v2434 = vsel %vm454, %v2432, %v2433
      %v2435 = vrot.slane %v2300, 1
      %v2436 = vsel %vm454, %v2433, %v2435
      %v2437 = vrot.slane %v2301, 1
      %v2438 = vrot.slane %v2302, 1
      %v2439 = vsel %vm454, %v2437, %v2438
      %v2440 = vrot.slane %v2303, 1
      %v2441 = vsel %vm454, %v2438, %v2440
      %v2442 = vrot.slane %v2304, 1
      %v2443 = vrot.slane %v2305, 1
      %v2444 = vsel %vm454, %v2442, %v2443
      %v2445 = vrot.slane %v2306, 1
      %v2446 = vsel %vm454, %v2443, %v2445
      %v2447 = vrot.slane %v2307, 1
      %v2448 = vrot.slane %v2308, 1
      %v2449 = vsel %vm454, %v2447, %v2448
      %v2450 = vrot.slane %v2309, 1
      %v2451 = vsel %vm454, %v2448, %v2450
      %v2452 = vrot.slane %v2310, 1
      %v2453 = vrot.slane %v2311, 1
      %v2454 = vsel %vm454, %v2452, %v2453
      %v2455 = vrot.slane %v2312, 1
      %v2456 = vsel %vm454, %v2453, %v2455
      %v2457 = vrot.slane %v2313, 1
      %v2458 = vrot.slane %v2314, 1
      %v2459 = vsel %vm454, %v2457, %v2458
      %v2460 = vrot.slane %v2315, 1
      %v2461 = vsel %vm454, %v2458, %v2460
      %v2462 = vrot.slane %v2316, 1
      %v2463 = vrot.slane %v2317, 1
      %v2464 = vsel %vm454, %v2462, %v2463
      %v2465 = vrot.slane %v2318, 1
      %v2466 = vsel %vm454, %v2463, %v2465
      %v2467 = vrot.slane %v2319, 1
      %v2468 = vrot.slane %v2320, 1
      %v2469 = vsel %vm454, %v2467, %v2468
      %v2470 = vrot.slane %v2321, 1
      %v2471 = vsel %vm454, %v2468, %v2470
      %v2472 = vrot.slane %v2322, 1
      %v2473 = vrot.slane %v2323, 1
      %v2474 = vsel %vm454, %v2472, %v2473
      %v2475 = vrot.slane %v2324, 1
      %v2476 = vsel %vm454, %v2473, %v2475
      %v2477 = vrot.slane %v2325, 1
      %v2478 = vrot.slane %v2326, 1
      %v2479 = vsel %vm454, %v2477, %v2478
      %v2480 = vrot.slane %v2327, 1
      %v2481 = vsel %vm454, %v2478, %v2480
      %v2482 = vrot.slane %v2328, 1
      %v2483 = vrot.slane %v2329, 1
      %v2484 = vsel %vm454, %v2482, %v2483
      %v2485 = vrot.slane %v2330, 1
      %v2486 = vsel %vm454, %v2483, %v2485
      %v2487 = vrot.slane %v2331, 1
      %v2488 = vrot.slane %v2332, 1
      %v2489 = vsel %vm454, %v2487, %v2488
      %v2490 = vrot.slane %v2333, 1
      %v2491 = vsel %vm454, %v2488, %v2490
      %v2492 = vrot.slane %v2334, 1
      %v2493 = vrot.slane %v2335, 1
      %v2494 = vsel %vm454, %v2492, %v2493
      %v2495 = vrot.slane %v2336, 1
      %v2496 = vsel %vm454, %v2493, %v2495
      %v2497 = vrot.slane %v2337, 1
      %v2498 = vrot.slane %v2338, 1
      %v2499 = vsel %vm454, %v2497, %v2498
      %v2500 = vrot.slane %v2339, 1
      %v2501 = vsel %vm454, %v2498, %v2500
      %v2502 = vrot.slane %v2340, 1
      %v2503 = vrot.slane %v2341, 1
      %v2504 = vsel %vm454, %v2502, %v2503
      %v2505 = vrot.slane %v2342, 1
      %v2506 = vsel %vm454, %v2503, %v2505
      %v2507 = vrot.slane %v2343, 1
      %v2508 = vrot.slane %v2344, 1
      %v2509 = vsel %vm454, %v2507, %v2508
      %v2510 = vrot.slane %v2345, 1
      %v2511 = vsel %vm454, %v2508, %v2510
      %2512 = vrot.lane.b32.xlu0 %v2434, 6
      %v2513 = vpop.permute.xlu0 %2512
      %2514 = vrot.lane.b32.xlu0 %v2436, 6
      %v2515 = vpop.permute.xlu0 %2514
      %2516 = vrot.lane.b32.xlu0 %v2439, 6
      %v2517 = vpop.permute.xlu0 %2516
      %2518 = vrot.lane.b32.xlu0 %v2441, 6
      %v2519 = vpop.permute.xlu0 %2518
      %2520 = vrot.lane.b32.xlu0 %v2444, 6
      %v2521 = vpop.permute.xlu0 %2520
      %2522 = vrot.lane.b32.xlu0 %v2446, 6
      %v2523 = vpop.permute.xlu0 %2522
      %2524 = vrot.lane.b32.xlu0 %v2449, 6
      %v2525 = vpop.permute.xlu0 %2524
      %2526 = vrot.lane.b32.xlu0 %v2451, 6
      %v2527 = vpop.permute.xlu0 %2526
      %2528 = vrot.lane.b32.xlu0 %v2454, 6
      %v2529 = vpop.permute.xlu0 %2528
      %2530 = vrot.lane.b32.xlu0 %v2456, 6
      %v2531 = vpop.permute.xlu0 %2530
      %2532 = vrot.lane.b32.xlu0 %v2459, 6
      %v2533 = vpop.permute.xlu0 %2532
      %2534 = vrot.lane.b32.xlu0 %v2461, 6
      %v2535 = vpop.permute.xlu0 %2534
      %2536 = vrot.lane.b32.xlu0 %v2464, 6
      %v2537 = vpop.permute.xlu0 %2536
      %2538 = vrot.lane.b32.xlu0 %v2466, 6
      %v2539 = vpop.permute.xlu0 %2538
      %2540 = vrot.lane.b32.xlu0 %v2469, 6
      %v2541 = vpop.permute.xlu0 %2540
      %2542 = vrot.lane.b32.xlu0 %v2471, 6
      %v2543 = vpop.permute.xlu0 %2542
      %2544 = vrot.lane.b32.xlu0 %v2474, 6
      %v2545 = vpop.permute.xlu0 %2544
      %2546 = vrot.lane.b32.xlu0 %v2476, 6
      %v2547 = vpop.permute.xlu0 %2546
      %2548 = vrot.lane.b32.xlu0 %v2479, 6
      %v2549 = vpop.permute.xlu0 %2548
      %2550 = vrot.lane.b32.xlu0 %v2481, 6
      %v2551 = vpop.permute.xlu0 %2550
      %2552 = vrot.lane.b32.xlu0 %v2484, 6
      %v2553 = vpop.permute.xlu0 %2552
      %2554 = vrot.lane.b32.xlu0 %v2486, 6
      %v2555 = vpop.permute.xlu0 %2554
      %2556 = vrot.lane.b32.xlu0 %v2489, 6
      %v2557 = vpop.permute.xlu0 %2556
      %2558 = vrot.lane.b32.xlu0 %v2491, 6
      %v2559 = vpop.permute.xlu0 %2558
      %2560 = vrot.lane.b32.xlu0 %v2494, 6
      %v2561 = vpop.permute.xlu0 %2560
      %2562 = vrot.lane.b32.xlu0 %v2496, 6
      %v2563 = vpop.permute.xlu0 %2562
      %2564 = vrot.lane.b32.xlu0 %v2499, 6
      %v2565 = vpop.permute.xlu0 %2564
      %2566 = vrot.lane.b32.xlu0 %v2501, 6
      %v2567 = vpop.permute.xlu0 %2566
      %2568 = vrot.lane.b32.xlu0 %v2504, 6
      %v2569 = vpop.permute.xlu0 %2568
      %2570 = vrot.lane.b32.xlu0 %v2506, 6
      %v2571 = vpop.permute.xlu0 %2570
      %2572 = vrot.lane.b32.xlu0 %v2509, 6
      %v2573 = vpop.permute.xlu0 %2572
      %2574 = vrot.lane.b32.xlu0 %v2511, 6
      %v2575 = vpop.permute.xlu0 %2574
      %2608 = vst.msk [vmem:[#allocation3] sm:$0xff] %vm631, %v2513
      %2609 = vst.msk [vmem:[#allocation3 + $0x8] sm:$0xff] %vm631, %v2515
      %2610 = vst.msk [vmem:[#allocation3 + $0x10] sm:$0xff] %vm631, %v2517
      %2611 = vst.msk [vmem:[#allocation3 + $0x18] sm:$0xff] %vm631, %v2519
      %2612 = vst.msk [vmem:[#allocation3 + $0x20] sm:$0xff] %vm631, %v2521
      %2613 = vst.msk [vmem:[#allocation3 + $0x28] sm:$0xff] %vm631, %v2523
      %2614 = vst.msk [vmem:[#allocation3 + $0x30] sm:$0xff] %vm631, %v2525
      %2615 = vst.msk [vmem:[#allocation3 + $0x38] sm:$0xff] %vm631, %v2527
      %2616 = vst.msk [vmem:[#allocation3 + $0x40] sm:$0xff] %vm631, %v2529
      %2617 = vst.msk [vmem:[#allocation3 + $0x48] sm:$0xff] %vm631, %v2531
      %2618 = vst.msk [vmem:[#allocation3 + $0x50] sm:$0xff] %vm631, %v2533
      %2619 = vst.msk [vmem:[#allocation3 + $0x58] sm:$0xff] %vm631, %v2535
      %2620 = vst.msk [vmem:[#allocation3 + $0x60] sm:$0xff] %vm631, %v2537
      %2621 = vst.msk [vmem:[#allocation3 + $0x68] sm:$0xff] %vm631, %v2539
      %2622 = vst.msk [vmem:[#allocation3 + $0x70] sm:$0xff] %vm631, %v2541
      %2623 = vst.msk [vmem:[#allocation3 + $0x78] sm:$0xff] %vm631, %v2543
      %2624 = vst.msk [vmem:[#allocation3 + $0x80] sm:$0xff] %vm631, %v2545
      %2625 = vst.msk [vmem:[#allocation3 + $0x88] sm:$0xff] %vm631, %v2547
      %2626 = vst.msk [vmem:[#allocation3 + $0x90] sm:$0xff] %vm631, %v2549
      %2627 = vst.msk [vmem:[#allocation3 + $0x98] sm:$0xff] %vm631, %v2551
      %2628 = vst.msk [vmem:[#allocation3 + $0xa0] sm:$0xff] %vm631, %v2553
      %2629 = vst.msk [vmem:[#allocation3 + $0xa8] sm:$0xff] %vm631, %v2555
      %2630 = vst.msk [vmem:[#allocation3 + $0xb0] sm:$0xff] %vm631, %v2557
      %2631 = vst.msk [vmem:[#allocation3 + $0xb8] sm:$0xff] %vm631, %v2559
      %2632 = vst.msk [vmem:[#allocation3 + $0xc0] sm:$0xff] %vm631, %v2561
      %2633 = vst.msk [vmem:[#allocation3 + $0xc8] sm:$0xff] %vm631, %v2563
      %2634 = vst.msk [vmem:[#allocation3 + $0xd0] sm:$0xff] %vm631, %v2565
      %2635 = vst.msk [vmem:[#allocation3 + $0xd8] sm:$0xff] %vm631, %v2567
      %2636 = vst.msk [vmem:[#allocation3 + $0xe0] sm:$0xff] %vm631, %v2569
      %2637 = vst.msk [vmem:[#allocation3 + $0xe8] sm:$0xff] %vm631, %v2571
      %2638 = vst.msk [vmem:[#allocation3 + $0xf0] sm:$0xff] %vm631, %v2573
      %2639 = vst.msk [vmem:[#allocation3 + $0xf8] sm:$0xff] %vm631, %v2575
      %v2640 = vrot.slane %v2298, 2
      %v2641 = vrot.slane %v2299, 2
      %v2642 = vsel %vm664, %v2640, %v2641
      %v2643 = vrot.slane %v2300, 2
      %v2644 = vsel %vm664, %v2641, %v2643
      %v2645 = vrot.slane %v2301, 2
      %v2646 = vrot.slane %v2302, 2
      %v2647 = vsel %vm664, %v2645, %v2646
      %v2648 = vrot.slane %v2303, 2
      %v2649 = vsel %vm664, %v2646, %v2648
      %v2650 = vrot.slane %v2304, 2
      %v2651 = vrot.slane %v2305, 2
      %v2652 = vsel %vm664, %v2650, %v2651
      %v2653 = vrot.slane %v2306, 2
      %v2654 = vsel %vm664, %v2651, %v2653
      %v2655 = vrot.slane %v2307, 2
      %v2656 = vrot.slane %v2308, 2
      %v2657 = vsel %vm664, %v2655, %v2656
      %v2658 = vrot.slane %v2309, 2
      %v2659 = vsel %vm664, %v2656, %v2658
      %v2660 = vrot.slane %v2310, 2
      %v2661 = vrot.slane %v2311, 2
      %v2662 = vsel %vm664, %v2660, %v2661
      %v2663 = vrot.slane %v2312, 2
      %v2664 = vsel %vm664, %v2661, %v2663
      %v2665 = vrot.slane %v2313, 2
      %v2666 = vrot.slane %v2314, 2
      %v2667 = vsel %vm664, %v2665, %v2666
      %v2668 = vrot.slane %v2315, 2
      %v2669 = vsel %vm664, %v2666, %v2668
      %v2670 = vrot.slane %v2316, 2
      %v2671 = vrot.slane %v2317, 2
      %v2672 = vsel %vm664, %v2670, %v2671
      %v2673 = vrot.slane %v2318, 2
      %v2674 = vsel %vm664, %v2671, %v2673
      %v2675 = vrot.slane %v2319, 2
      %v2676 = vrot.slane %v2320, 2
      %v2677 = vsel %vm664, %v2675, %v2676
      %v2678 = vrot.slane %v2321, 2
      %v2679 = vsel %vm664, %v2676, %v2678
      %v2680 = vrot.slane %v2322, 2
      %v2681 = vrot.slane %v2323, 2
      %v2682 = vsel %vm664, %v2680, %v2681
      %v2683 = vrot.slane %v2324, 2
      %v2684 = vsel %vm664, %v2681, %v2683
      %v2685 = vrot.slane %v2325, 2
      %v2686 = vrot.slane %v2326, 2
      %v2687 = vsel %vm664, %v2685, %v2686
      %v2688 = vrot.slane %v2327, 2
      %v2689 = vsel %vm664, %v2686, %v2688
      %v2690 = vrot.slane %v2328, 2
      %v2691 = vrot.slane %v2329, 2
      %v2692 = vsel %vm664, %v2690, %v2691
      %v2693 = vrot.slane %v2330, 2
      %v2694 = vsel %vm664, %v2691, %v2693
      %v2695 = vrot.slane %v2331, 2
      %v2696 = vrot.slane %v2332, 2
      %v2697 = vsel %vm664, %v2695, %v2696
      %v2698 = vrot.slane %v2333, 2
      %v2699 = vsel %vm664, %v2696, %v2698
      %v2700 = vrot.slane %v2334, 2
      %v2701 = vrot.slane %v2335, 2
      %v2702 = vsel %vm664, %v2700, %v2701
      %v2703 = vrot.slane %v2336, 2
      %v2704 = vsel %vm664, %v2701, %v2703
      %v2705 = vrot.slane %v2337, 2
      %v2706 = vrot.slane %v2338, 2
      %v2707 = vsel %vm664, %v2705, %v2706
      %v2708 = vrot.slane %v2339, 2
      %v2709 = vsel %vm664, %v2706, %v2708
      %v2710 = vrot.slane %v2340, 2
      %v2711 = vrot.slane %v2341, 2
      %v2712 = vsel %vm664, %v2710, %v2711
      %v2713 = vrot.slane %v2342, 2
      %v2714 = vsel %vm664, %v2711, %v2713
      %v2715 = vrot.slane %v2343, 2
      %v2716 = vrot.slane %v2344, 2
      %v2717 = vsel %vm664, %v2715, %v2716
      %v2718 = vrot.slane %v2345, 2
      %v2719 = vsel %vm664, %v2716, %v2718
      %2720 = vrot.lane.b32.xlu0 %v2642, 12
      %v2721 = vpop.permute.xlu0 %2720
      %2722 = vrot.lane.b32.xlu0 %v2644, 12
      %v2723 = vpop.permute.xlu0 %2722
      %2724 = vrot.lane.b32.xlu0 %v2647, 12
      %v2725 = vpop.permute.xlu0 %2724
      %2726 = vrot.lane.b32.xlu0 %v2649, 12
      %v2727 = vpop.permute.xlu0 %2726
      %2728 = vrot.lane.b32.xlu0 %v2652, 12
      %v2729 = vpop.permute.xlu0 %2728
      %2730 = vrot.lane.b32.xlu0 %v2654, 12
      %v2731 = vpop.permute.xlu0 %2730
      %2732 = vrot.lane.b32.xlu0 %v2657, 12
      %v2733 = vpop.permute.xlu0 %2732
      %2734 = vrot.lane.b32.xlu0 %v2659, 12
      %v2735 = vpop.permute.xlu0 %2734
      %2736 = vrot.lane.b32.xlu0 %v2662, 12
      %v2737 = vpop.permute.xlu0 %2736
      %2738 = vrot.lane.b32.xlu0 %v2664, 12
      %v2739 = vpop.permute.xlu0 %2738
      %2740 = vrot.lane.b32.xlu0 %v2667, 12
      %v2741 = vpop.permute.xlu0 %2740
      %2742 = vrot.lane.b32.xlu0 %v2669, 12
      %v2743 = vpop.permute.xlu0 %2742
      %2744 = vrot.lane.b32.xlu0 %v2672, 12
      %v2745 = vpop.permute.xlu0 %2744
      %2746 = vrot.lane.b32.xlu0 %v2674, 12
      %v2747 = vpop.permute.xlu0 %2746
      %2748 = vrot.lane.b32.xlu0 %v2677, 12
      %v2749 = vpop.permute.xlu0 %2748
      %2750 = vrot.lane.b32.xlu0 %v2679, 12
      %v2751 = vpop.permute.xlu0 %2750
      %2752 = vrot.lane.b32.xlu0 %v2682, 12
      %v2753 = vpop.permute.xlu0 %2752
      %2754 = vrot.lane.b32.xlu0 %v2684, 12
      %v2755 = vpop.permute.xlu0 %2754
      %2756 = vrot.lane.b32.xlu0 %v2687, 12
      %v2757 = vpop.permute.xlu0 %2756
      %2758 = vrot.lane.b32.xlu0 %v2689, 12
      %v2759 = vpop.permute.xlu0 %2758
      %2760 = vrot.lane.b32.xlu0 %v2692, 12
      %v2761 = vpop.permute.xlu0 %2760
      %2762 = vrot.lane.b32.xlu0 %v2694, 12
      %v2763 = vpop.permute.xlu0 %2762
      %2764 = vrot.lane.b32.xlu0 %v2697, 12
      %v2765 = vpop.permute.xlu0 %2764
      %2766 = vrot.lane.b32.xlu0 %v2699, 12
      %v2767 = vpop.permute.xlu0 %2766
      %2768 = vrot.lane.b32.xlu0 %v2702, 12
      %v2769 = vpop.permute.xlu0 %2768
      %2770 = vrot.lane.b32.xlu0 %v2704, 12
      %v2771 = vpop.permute.xlu0 %2770
      %2772 = vrot.lane.b32.xlu0 %v2707, 12
      %v2773 = vpop.permute.xlu0 %2772
      %2774 = vrot.lane.b32.xlu0 %v2709, 12
      %v2775 = vpop.permute.xlu0 %2774
      %2776 = vrot.lane.b32.xlu0 %v2712, 12
      %v2777 = vpop.permute.xlu0 %2776
      %2778 = vrot.lane.b32.xlu0 %v2714, 12
      %v2779 = vpop.permute.xlu0 %2778
      %2780 = vrot.lane.b32.xlu0 %v2717, 12
      %v2781 = vpop.permute.xlu0 %2780
      %2782 = vrot.lane.b32.xlu0 %v2719, 12
      %v2783 = vpop.permute.xlu0 %2782
      %2816 = vst.msk [vmem:[#allocation3] sm:$0xff] %vm841, %v2721
      %2817 = vst.msk [vmem:[#allocation3 + $0x8] sm:$0xff] %vm841, %v2723
      %2818 = vst.msk [vmem:[#allocation3 + $0x10] sm:$0xff] %vm841, %v2725
      %2819 = vst.msk [vmem:[#allocation3 + $0x18] sm:$0xff] %vm841, %v2727
      %2820 = vst.msk [vmem:[#allocation3 + $0x20] sm:$0xff] %vm841, %v2729
      %2821 = vst.msk [vmem:[#allocation3 + $0x28] sm:$0xff] %vm841, %v2731
      %2822 = vst.msk [vmem:[#allocation3 + $0x30] sm:$0xff] %vm841, %v2733
      %2823 = vst.msk [vmem:[#allocation3 + $0x38] sm:$0xff] %vm841, %v2735
      %2824 = vst.msk [vmem:[#allocation3 + $0x40] sm:$0xff] %vm841, %v2737
      %2825 = vst.msk [vmem:[#allocation3 + $0x48] sm:$0xff] %vm841, %v2739
      %2826 = vst.msk [vmem:[#allocation3 + $0x50] sm:$0xff] %vm841, %v2741
      %2827 = vst.msk [vmem:[#allocation3 + $0x58] sm:$0xff] %vm841, %v2743
      %2828 = vst.msk [vmem:[#allocation3 + $0x60] sm:$0xff] %vm841, %v2745
      %2829 = vst.msk [vmem:[#allocation3 + $0x68] sm:$0xff] %vm841, %v2747
      %2830 = vst.msk [vmem:[#allocation3 + $0x70] sm:$0xff] %vm841, %v2749
      %2831 = vst.msk [vmem:[#allocation3 + $0x78] sm:$0xff] %vm841, %v2751
      %2832 = vst.msk [vmem:[#allocation3 + $0x80] sm:$0xff] %vm841, %v2753
      %2833 = vst.msk [vmem:[#allocation3 + $0x88] sm:$0xff] %vm841, %v2755
      %2834 = vst.msk [vmem:[#allocation3 + $0x90] sm:$0xff] %vm841, %v2757
      %2835 = vst.msk [vmem:[#allocation3 + $0x98] sm:$0xff] %vm841, %v2759
      %2836 = vst.msk [vmem:[#allocation3 + $0xa0] sm:$0xff] %vm841, %v2761
      %2837 = vst.msk [vmem:[#allocation3 + $0xa8] sm:$0xff] %vm841, %v2763
      %2838 = vst.msk [vmem:[#allocation3 + $0xb0] sm:$0xff] %vm841, %v2765
      %2839 = vst.msk [vmem:[#allocation3 + $0xb8] sm:$0xff] %vm841, %v2767
      %2840 = vst.msk [vmem:[#allocation3 + $0xc0] sm:$0xff] %vm841, %v2769
      %2841 = vst.msk [vmem:[#allocation3 + $0xc8] sm:$0xff] %vm841, %v2771
      %2842 = vst.msk [vmem:[#allocation3 + $0xd0] sm:$0xff] %vm841, %v2773
      %2843 = vst.msk [vmem:[#allocation3 + $0xd8] sm:$0xff] %vm841, %v2775
      %2844 = vst.msk [vmem:[#allocation3 + $0xe0] sm:$0xff] %vm841, %v2777
      %2845 = vst.msk [vmem:[#allocation3 + $0xe8] sm:$0xff] %vm841, %v2779
      %2846 = vst.msk [vmem:[#allocation3 + $0xf0] sm:$0xff] %vm841, %v2781
      %2847 = vst.msk [vmem:[#allocation3 + $0xf8] sm:$0xff] %vm841, %v2783
      %2850 = vrot.lane.b32.xlu0 %v2301, 18
      %v2851 = vpop.permute.xlu0 %2850
      %2852 = vrot.lane.b32.xlu0 %v2302, 18
      %v2853 = vpop.permute.xlu0 %2852
      %2854 = vrot.lane.b32.xlu0 %v2304, 18
      %v2855 = vpop.permute.xlu0 %2854
      %2856 = vrot.lane.b32.xlu0 %v2305, 18
      %v2857 = vpop.permute.xlu0 %2856
      %2858 = vrot.lane.b32.xlu0 %v2307, 18
      %v2859 = vpop.permute.xlu0 %2858
      %2860 = vrot.lane.b32.xlu0 %v2308, 18
      %v2861 = vpop.permute.xlu0 %2860
      %2862 = vrot.lane.b32.xlu0 %v2310, 18
      %v2863 = vpop.permute.xlu0 %2862
      %2864 = vrot.lane.b32.xlu0 %v2311, 18
      %v2865 = vpop.permute.xlu0 %2864
      %2866 = vrot.lane.b32.xlu0 %v2313, 18
      %v2867 = vpop.permute.xlu0 %2866
      %2868 = vrot.lane.b32.xlu0 %v2314, 18
      %v2869 = vpop.permute.xlu0 %2868
      %2870 = vrot.lane.b32.xlu0 %v2316, 18
      %v2871 = vpop.permute.xlu0 %2870
      %2872 = vrot.lane.b32.xlu0 %v2317, 18
      %v2873 = vpop.permute.xlu0 %2872
      %2874 = vrot.lane.b32.xlu0 %v2319, 18
      %v2875 = vpop.permute.xlu0 %2874
      %2876 = vrot.lane.b32.xlu0 %v2320, 18
      %v2877 = vpop.permute.xlu0 %2876
      %2878 = vrot.lane.b32.xlu0 %v2322, 18
      %v2879 = vpop.permute.xlu0 %2878
      %2880 = vrot.lane.b32.xlu0 %v2323, 18
      %v2881 = vpop.permute.xlu0 %2880
      %2882 = vrot.lane.b32.xlu0 %v2325, 18
      %v2883 = vpop.permute.xlu0 %2882
      %2884 = vrot.lane.b32.xlu0 %v2326, 18
      %v2885 = vpop.permute.xlu0 %2884
      %2886 = vrot.lane.b32.xlu0 %v2328, 18
      %v2887 = vpop.permute.xlu0 %2886
      %2888 = vrot.lane.b32.xlu0 %v2329, 18
      %v2889 = vpop.permute.xlu0 %2888
      %2890 = vrot.lane.b32.xlu0 %v2331, 18
      %v2891 = vpop.permute.xlu0 %2890
      %2892 = vrot.lane.b32.xlu0 %v2332, 18
      %v2893 = vpop.permute.xlu0 %2892
      %2894 = vrot.lane.b32.xlu0 %v2334, 18
      %v2895 = vpop.permute.xlu0 %2894
      %2896 = vrot.lane.b32.xlu0 %v2335, 18
      %v2897 = vpop.permute.xlu0 %2896
      %2898 = vrot.lane.b32.xlu0 %v2337, 18
      %v2899 = vpop.permute.xlu0 %2898
      %2900 = vrot.lane.b32.xlu0 %v2338, 18
      %v2901 = vpop.permute.xlu0 %2900
      %2902 = vrot.lane.b32.xlu0 %v2340, 18
      %v2903 = vpop.permute.xlu0 %2902
      %2904 = vrot.lane.b32.xlu0 %v2341, 18
      %v2905 = vpop.permute.xlu0 %2904
      %2906 = vrot.lane.b32.xlu0 %v2343, 18
      %v2907 = vpop.permute.xlu0 %2906
      %2908 = vrot.lane.b32.xlu0 %v2344, 18
      %v2909 = vpop.permute.xlu0 %2908
      %2910 = vrot.lane.b32.xlu0 %v2346, 18
      %v2911 = vpop.permute.xlu0 %2910
      %2912 = vrot.lane.b32.xlu0 %v2347, 18
      %v2913 = vpop.permute.xlu0 %2912
      %2946 = vst.msk [vmem:[#allocation3] sm:$0xff] %vm972, %v2851
      %2947 = vst.msk [vmem:[#allocation3 + $0x8] sm:$0xff] %vm972, %v2853
      %2948 = vst.msk [vmem:[#allocation3 + $0x10] sm:$0xff] %vm972, %v2855
      %2949 = vst.msk [vmem:[#allocation3 + $0x18] sm:$0xff] %vm972, %v2857
      %2950 = vst.msk [vmem:[#allocation3 + $0x20] sm:$0xff] %vm972, %v2859
      %2951 = vst.msk [vmem:[#allocation3 + $0x28] sm:$0xff] %vm972, %v2861
      %2952 = vst.msk [vmem:[#allocation3 + $0x30] sm:$0xff] %vm972, %v2863
      %2953 = vst.msk [vmem:[#allocation3 + $0x38] sm:$0xff] %vm972, %v2865
      %2954 = vst.msk [vmem:[#allocation3 + $0x40] sm:$0xff] %vm972, %v2867
      %2955 = vst.msk [vmem:[#allocation3 + $0x48] sm:$0xff] %vm972, %v2869
      %2956 = vst.msk [vmem:[#allocation3 + $0x50] sm:$0xff] %vm972, %v2871
      %2957 = vst.msk [vmem:[#allocation3 + $0x58] sm:$0xff] %vm972, %v2873
      %2958 = vst.msk [vmem:[#allocation3 + $0x60] sm:$0xff] %vm972, %v2875
      %2959 = vst.msk [vmem:[#allocation3 + $0x68] sm:$0xff] %vm972, %v2877
      %2960 = vst.msk [vmem:[#allocation3 + $0x70] sm:$0xff] %vm972, %v2879
      %2961 = vst.msk [vmem:[#allocation3 + $0x78] sm:$0xff] %vm972, %v2881
      %2962 = vst.msk [vmem:[#allocation3 + $0x80] sm:$0xff] %vm972, %v2883
      %2963 = vst.msk [vmem:[#allocation3 + $0x88] sm:$0xff] %vm972, %v2885
      %2964 = vst.msk [vmem:[#allocation3 + $0x90] sm:$0xff] %vm972, %v2887
      %2965 = vst.msk [vmem:[#allocation3 + $0x98] sm:$0xff] %vm972, %v2889
      %2966 = vst.msk [vmem:[#allocation3 + $0xa0] sm:$0xff] %vm972, %v2891
      %2967 = vst.msk [vmem:[#allocation3 + $0xa8] sm:$0xff] %vm972, %v2893
      %2968 = vst.msk [vmem:[#allocation3 + $0xb0] sm:$0xff] %vm972, %v2895
      %2969 = vst.msk [vmem:[#allocation3 + $0xb8] sm:$0xff] %vm972, %v2897
      %2970 = vst.msk [vmem:[#allocation3 + $0xc0] sm:$0xff] %vm972, %v2899
      %2971 = vst.msk [vmem:[#allocation3 + $0xc8] sm:$0xff] %vm972, %v2901
      %2972 = vst.msk [vmem:[#allocation3 + $0xd0] sm:$0xff] %vm972, %v2903
      %2973 = vst.msk [vmem:[#allocation3 + $0xd8] sm:$0xff] %vm972, %v2905
      %2974 = vst.msk [vmem:[#allocation3 + $0xe0] sm:$0xff] %vm972, %v2907
      %2975 = vst.msk [vmem:[#allocation3 + $0xe8] sm:$0xff] %vm972, %v2909
      %2976 = vst.msk [vmem:[#allocation3 + $0xf0] sm:$0xff] %vm972, %v2911
      %2977 = vst.msk [vmem:[#allocation3 + $0xf8] sm:$0xff] %vm972, %v2913
      %v2979 = vrot.slane %v2346, 1
      %v2980 = vrot.slane %v2347, 1
      %v2981 = vsel %vm454, %v2979, %v2980
      %v2982 = vrot.slane %v2348, 1
      %v2983 = vsel %vm454, %v2980, %v2982
      %2984 = vrot.lane.b32.xlu0 %v2439, 24
      %v2985 = vpop.permute.xlu0 %2984
      %2986 = vrot.lane.b32.xlu0 %v2441, 24
      %v2987 = vpop.permute.xlu0 %2986
      %2988 = vrot.lane.b32.xlu0 %v2444, 24
      %v2989 = vpop.permute.xlu0 %2988
      %2990 = vrot.lane.b32.xlu0 %v2446, 24
      %v2991 = vpop.permute.xlu0 %2990
      %2992 = vrot.lane.b32.xlu0 %v2449, 24
      %v2993 = vpop.permute.xlu0 %2992
      %2994 = vrot.lane.b32.xlu0 %v2451, 24
      %v2995 = vpop.permute.xlu0 %2994
      %2996 = vrot.lane.b32.xlu0 %v2454, 24
      %v2997 = vpop.permute.xlu0 %2996
      %2998 = vrot.lane.b32.xlu0 %v2456, 24
      %v2999 = vpop.permute.xlu0 %2998
      %3000 = vrot.lane.b32.xlu0 %v2459, 24
      %v3001 = vpop.permute.xlu0 %3000
      %3002 = vrot.lane.b32.xlu0 %v2461, 24
      %v3003 = vpop.permute.xlu0 %3002
      %3004 = vrot.lane.b32.xlu0 %v2464, 24
      %v3005 = vpop.permute.xlu0 %3004
      %3006 = vrot.lane.b32.xlu0 %v2466, 24
      %v3007 = vpop.permute.xlu0 %3006
      %3008 = vrot.lane.b32.xlu0 %v2469, 24
      %v3009 = vpop.permute.xlu0 %3008
      %3010 = vrot.lane.b32.xlu0 %v2471, 24
      %v3011 = vpop.permute.xlu0 %3010
      %3012 = vrot.lane.b32.xlu0 %v2474, 24
      %v3013 = vpop.permute.xlu0 %3012
      %3014 = vrot.lane.b32.xlu0 %v2476, 24
      %v3015 = vpop.permute.xlu0 %3014
      %3016 = vrot.lane.b32.xlu0 %v2479, 24
      %v3017 = vpop.permute.xlu0 %3016
      %3018 = vrot.lane.b32.xlu0 %v2481, 24
      %v3019 = vpop.permute.xlu0 %3018
      %3020 = vrot.lane.b32.xlu0 %v2484, 24
      %v3021 = vpop.permute.xlu0 %3020
      %3022 = vrot.lane.b32.xlu0 %v2486, 24
      %v3023 = vpop.permute.xlu0 %3022
      %3024 = vrot.lane.b32.xlu0 %v2489, 24
      %v3025 = vpop.permute.xlu0 %3024
      %3026 = vrot.lane.b32.xlu0 %v2491, 24
      %v3027 = vpop.permute.xlu0 %3026
      %3028 = vrot.lane.b32.xlu0 %v2494, 24
      %v3029 = vpop.permute.xlu0 %3028
      %3030 = vrot.lane.b32.xlu0 %v2496, 24
      %v3031 = vpop.permute.xlu0 %3030
      %3032 = vrot.lane.b32.xlu0 %v2499, 24
      %v3033 = vpop.permute.xlu0 %3032
      %3034 = vrot.lane.b32.xlu0 %v2501, 24
      %v3035 = vpop.permute.xlu0 %3034
      %3036 = vrot.lane.b32.xlu0 %v2504, 24
      %v3037 = vpop.permute.xlu0 %3036
      %3038 = vrot.lane.b32.xlu0 %v2506, 24
      %v3039 = vpop.permute.xlu0 %3038
      %3040 = vrot.lane.b32.xlu0 %v2509, 24
      %v3041 = vpop.permute.xlu0 %3040
      %3042 = vrot.lane.b32.xlu0 %v2511, 24
      %v3043 = vpop.permute.xlu0 %3042
      %3044 = vrot.lane.b32.xlu0 %v2981, 24
      %v3045 = vpop.permute.xlu0 %3044
      %3046 = vrot.lane.b32.xlu0 %v2983, 24
      %v3047 = vpop.permute.xlu0 %3046
      %3080 = vst.msk [vmem:[#allocation3] sm:$0xff] %vm1107, %v2985
      %3081 = vst.msk [vmem:[#allocation3 + $0x8] sm:$0xff] %vm1107, %v2987
      %3082 = vst.msk [vmem:[#allocation3 + $0x10] sm:$0xff] %vm1107, %v2989
      %3083 = vst.msk [vmem:[#allocation3 + $0x18] sm:$0xff] %vm1107, %v2991
      %3084 = vst.msk [vmem:[#allocation3 + $0x20] sm:$0xff] %vm1107, %v2993
      %3085 = vst.msk [vmem:[#allocation3 + $0x28] sm:$0xff] %vm1107, %v2995
      %3086 = vst.msk [vmem:[#allocation3 + $0x30] sm:$0xff] %vm1107, %v2997
      %3087 = vst.msk [vmem:[#allocation3 + $0x38] sm:$0xff] %vm1107, %v2999
      %3088 = vst.msk [vmem:[#allocation3 + $0x40] sm:$0xff] %vm1107, %v3001
      %3089 = vst.msk [vmem:[#allocation3 + $0x48] sm:$0xff] %vm1107, %v3003
      %3090 = vst.msk [vmem:[#allocation3 + $0x50] sm:$0xff] %vm1107, %v3005
      %3091 = vst.msk [vmem:[#allocation3 + $0x58] sm:$0xff] %vm1107, %v3007
      %3092 = vst.msk [vmem:[#allocation3 + $0x60] sm:$0xff] %vm1107, %v3009
      %3093 = vst.msk [vmem:[#allocation3 + $0x68] sm:$0xff] %vm1107, %v3011
      %3094 = vst.msk [vmem:[#allocation3 + $0x70] sm:$0xff] %vm1107, %v3013
      %3095 = vst.msk [vmem:[#allocation3 + $0x78] sm:$0xff] %vm1107, %v3015
      %3096 = vst.msk [vmem:[#allocation3 + $0x80] sm:$0xff] %vm1107, %v3017
      %3097 = vst.msk [vmem:[#allocation3 + $0x88] sm:$0xff] %vm1107, %v3019
      %3098 = vst.msk [vmem:[#allocation3 + $0x90] sm:$0xff] %vm1107, %v3021
      %3099 = vst.msk [vmem:[#allocation3 + $0x98] sm:$0xff] %vm1107, %v3023
      %3100 = vst.msk [vmem:[#allocation3 + $0xa0] sm:$0xff] %vm1107, %v3025
      %3101 = vst.msk [vmem:[#allocation3 + $0xa8] sm:$0xff] %vm1107, %v3027
      %3102 = vst.msk [vmem:[#allocation3 + $0xb0] sm:$0xff] %vm1107, %v3029
      %3103 = vst.msk [vmem:[#allocation3 + $0xb8] sm:$0xff] %vm1107, %v3031
      %3104 = vst.msk [vmem:[#allocation3 + $0xc0] sm:$0xff] %vm1107, %v3033
      %3105 = vst.msk [vmem:[#allocation3 + $0xc8] sm:$0xff] %vm1107, %v3035
      %3106 = vst.msk [vmem:[#allocation3 + $0xd0] sm:$0xff] %vm1107, %v3037
      %3107 = vst.msk [vmem:[#allocation3 + $0xd8] sm:$0xff] %vm1107, %v3039
      %3108 = vst.msk [vmem:[#allocation3 + $0xe0] sm:$0xff] %vm1107, %v3041
      %3109 = vst.msk [vmem:[#allocation3 + $0xe8] sm:$0xff] %vm1107, %v3043
      %3110 = vst.msk [vmem:[#allocation3 + $0xf0] sm:$0xff] %vm1107, %v3045
      %3111 = vst.msk [vmem:[#allocation3 + $0xf8] sm:$0xff] %vm1107, %v3047
      %v3112 = vrot.slane %v2346, 2
      %v3113 = vrot.slane %v2347, 2
      %v3114 = vsel %vm664, %v3112, %v3113
      %v3115 = vrot.slane %v2348, 2
      %v3116 = vsel %vm664, %v3113, %v3115
      %3117 = vrot.lane.b32.xlu0 %v2647, 30
      %v3118 = vpop.permute.xlu0 %3117
      %3119 = vrot.lane.b32.xlu0 %v2649, 30
      %v3120 = vpop.permute.xlu0 %3119
      %3121 = vrot.lane.b32.xlu0 %v2652, 30
      %v3122 = vpop.permute.xlu0 %3121
      %3123 = vrot.lane.b32.xlu0 %v2654, 30
      %v3124 = vpop.permute.xlu0 %3123
      %3125 = vrot.lane.b32.xlu0 %v2657, 30
      %v3126 = vpop.permute.xlu0 %3125
      %3127 = vrot.lane.b32.xlu0 %v2659, 30
      %v3128 = vpop.permute.xlu0 %3127
      %3129 = vrot.lane.b32.xlu0 %v2662, 30
      %v3130 = vpop.permute.xlu0 %3129
      %3131 = vrot.lane.b32.xlu0 %v2664, 30
      %v3132 = vpop.permute.xlu0 %3131
      %3133 = vrot.lane.b32.xlu0 %v2667, 30
      %v3134 = vpop.permute.xlu0 %3133
      %3135 = vrot.lane.b32.xlu0 %v2669, 30
      %v3136 = vpop.permute.xlu0 %3135
      %3137 = vrot.lane.b32.xlu0 %v2672, 30
      %v3138 = vpop.permute.xlu0 %3137
      %3139 = vrot.lane.b32.xlu0 %v2674, 30
      %v3140 = vpop.permute.xlu0 %3139
      %3141 = vrot.lane.b32.xlu0 %v2677, 30
      %v3142 = vpop.permute.xlu0 %3141
      %3143 = vrot.lane.b32.xlu0 %v2679, 30
      %v3144 = vpop.permute.xlu0 %3143
      %3145 = vrot.lane.b32.xlu0 %v2682, 30
      %v3146 = vpop.permute.xlu0 %3145
      %3147 = vrot.lane.b32.xlu0 %v2684, 30
      %v3148 = vpop.permute.xlu0 %3147
      %3149 = vrot.lane.b32.xlu0 %v2687, 30
      %v3150 = vpop.permute.xlu0 %3149
      %3151 = vrot.lane.b32.xlu0 %v2689, 30
      %v3152 = vpop.permute.xlu0 %3151
      %3153 = vrot.lane.b32.xlu0 %v2692, 30
      %v3154 = vpop.permute.xlu0 %3153
      %3155 = vrot.lane.b32.xlu0 %v2694, 30
      %v3156 = vpop.permute.xlu0 %3155
      %3157 = vrot.lane.b32.xlu0 %v2697, 30
      %v3158 = vpop.permute.xlu0 %3157
      %3159 = vrot.lane.b32.xlu0 %v2699, 30
      %v3160 = vpop.permute.xlu0 %3159
      %3161 = vrot.lane.b32.xlu0 %v2702, 30
      %v3162 = vpop.permute.xlu0 %3161
      %3163 = vrot.lane.b32.xlu0 %v2704, 30
      %v3164 = vpop.permute.xlu0 %3163
      %3165 = vrot.lane.b32.xlu0 %v2707, 30
      %v3166 = vpop.permute.xlu0 %3165
      %3167 = vrot.lane.b32.xlu0 %v2709, 30
      %v3168 = vpop.permute.xlu0 %3167
      %3169 = vrot.lane.b32.xlu0 %v2712, 30
      %v3170 = vpop.permute.xlu0 %3169
      %3171 = vrot.lane.b32.xlu0 %v2714, 30
      %v3172 = vpop.permute.xlu0 %3171
      %3173 = vrot.lane.b32.xlu0 %v2717, 30
      %v3174 = vpop.permute.xlu0 %3173
      %3175 = vrot.lane.b32.xlu0 %v2719, 30
      %v3176 = vpop.permute.xlu0 %3175
      %3177 = vrot.lane.b32.xlu0 %v3114, 30
      %v3178 = vpop.permute.xlu0 %3177
      %3179 = vrot.lane.b32.xlu0 %v3116, 30
      %v3180 = vpop.permute.xlu0 %3179
      %3213 = vst.msk [vmem:[#allocation3] sm:$0xff] %vm1241, %v3118
      %3214 = vst.msk [vmem:[#allocation3 + $0x8] sm:$0xff] %vm1241, %v3120
      %3215 = vst.msk [vmem:[#allocation3 + $0x10] sm:$0xff] %vm1241, %v3122
      %3216 = vst.msk [vmem:[#allocation3 + $0x18] sm:$0xff] %vm1241, %v3124
      %3217 = vst.msk [vmem:[#allocation3 + $0x20] sm:$0xff] %vm1241, %v3126
      %3218 = vst.msk [vmem:[#allocation3 + $0x28] sm:$0xff] %vm1241, %v3128
      %3219 = vst.msk [vmem:[#allocation3 + $0x30] sm:$0xff] %vm1241, %v3130
      %3220 = vst.msk [vmem:[#allocation3 + $0x38] sm:$0xff] %vm1241, %v3132
      %3221 = vst.msk [vmem:[#allocation3 + $0x40] sm:$0xff] %vm1241, %v3134
      %3222 = vst.msk [vmem:[#allocation3 + $0x48] sm:$0xff] %vm1241, %v3136
      %3223 = vst.msk [vmem:[#allocation3 + $0x50] sm:$0xff] %vm1241, %v3138
      %3224 = vst.msk [vmem:[#allocation3 + $0x58] sm:$0xff] %vm1241, %v3140
      %3225 = vst.msk [vmem:[#allocation3 + $0x60] sm:$0xff] %vm1241, %v3142
      %3226 = vst.msk [vmem:[#allocation3 + $0x68] sm:$0xff] %vm1241, %v3144
      %3227 = vst.msk [vmem:[#allocation3 + $0x70] sm:$0xff] %vm1241, %v3146
      %3228 = vst.msk [vmem:[#allocation3 + $0x78] sm:$0xff] %vm1241, %v3148
      %3229 = vst.msk [vmem:[#allocation3 + $0x80] sm:$0xff] %vm1241, %v3150
      %3230 = vst.msk [vmem:[#allocation3 + $0x88] sm:$0xff] %vm1241, %v3152
      %3231 = vst.msk [vmem:[#allocation3 + $0x90] sm:$0xff] %vm1241, %v3154
      %3232 = vst.msk [vmem:[#allocation3 + $0x98] sm:$0xff] %vm1241, %v3156
      %3233 = vst.msk [vmem:[#allocation3 + $0xa0] sm:$0xff] %vm1241, %v3158
      %3234 = vst.msk [vmem:[#allocation3 + $0xa8] sm:$0xff] %vm1241, %v3160
      %3235 = vst.msk [vmem:[#allocation3 + $0xb0] sm:$0xff] %vm1241, %v3162
      %3236 = vst.msk [vmem:[#allocation3 + $0xb8] sm:$0xff] %vm1241, %v3164
      %3237 = vst.msk [vmem:[#allocation3 + $0xc0] sm:$0xff] %vm1241, %v3166
      %3238 = vst.msk [vmem:[#allocation3 + $0xc8] sm:$0xff] %vm1241, %v3168
      %3239 = vst.msk [vmem:[#allocation3 + $0xd0] sm:$0xff] %vm1241, %v3170
      %3240 = vst.msk [vmem:[#allocation3 + $0xd8] sm:$0xff] %vm1241, %v3172
      %3241 = vst.msk [vmem:[#allocation3 + $0xe0] sm:$0xff] %vm1241, %v3174
      %3242 = vst.msk [vmem:[#allocation3 + $0xe8] sm:$0xff] %vm1241, %v3176
      %3243 = vst.msk [vmem:[#allocation3 + $0xf0] sm:$0xff] %vm1241, %v3178
      %3244 = vst.msk [vmem:[#allocation3 + $0xf8] sm:$0xff] %vm1241, %v3180
      %3247 = vrot.lane.b32.xlu0 %v2304, 36
      %v3248 = vpop.permute.xlu0 %3247
      %3249 = vrot.lane.b32.xlu0 %v2305, 36
      %v3250 = vpop.permute.xlu0 %3249
      %3251 = vrot.lane.b32.xlu0 %v2307, 36
      %v3252 = vpop.permute.xlu0 %3251
      %3253 = vrot.lane.b32.xlu0 %v2308, 36
      %v3254 = vpop.permute.xlu0 %3253
      %3255 = vrot.lane.b32.xlu0 %v2310, 36
      %v3256 = vpop.permute.xlu0 %3255
      %3257 = vrot.lane.b32.xlu0 %v2311, 36
      %v3258 = vpop.permute.xlu0 %3257
      %3259 = vrot.lane.b32.xlu0 %v2313, 36
      %v3260 = vpop.permute.xlu0 %3259
      %3261 = vrot.lane.b32.xlu0 %v2314, 36
      %v3262 = vpop.permute.xlu0 %3261
      %3263 = vrot.lane.b32.xlu0 %v2316, 36
      %v3264 = vpop.permute.xlu0 %3263
      %3265 = vrot.lane.b32.xlu0 %v2317, 36
      %v3266 = vpop.permute.xlu0 %3265
      %3267 = vrot.lane.b32.xlu0 %v2319, 36
      %v3268 = vpop.permute.xlu0 %3267
      %3269 = vrot.lane.b32.xlu0 %v2320, 36
      %v3270 = vpop.permute.xlu0 %3269
      %3271 = vrot.lane.b32.xlu0 %v2322, 36
      %v3272 = vpop.permute.xlu0 %3271
      %3273 = vrot.lane.b32.xlu0 %v2323, 36
      %v3274 = vpop.permute.xlu0 %3273
      %3275 = vrot.lane.b32.xlu0 %v2325, 36
      %v3276 = vpop.permute.xlu0 %3275
      %3277 = vrot.lane.b32.xlu0 %v2326, 36
      %v3278 = vpop.permute.xlu0 %3277
      %3279 = vrot.lane.b32.xlu0 %v2328, 36
      %v3280 = vpop.permute.xlu0 %3279
      %3281 = vrot.lane.b32.xlu0 %v2329, 36
      %v3282 = vpop.permute.xlu0 %3281
      %3283 = vrot.lane.b32.xlu0 %v2331, 36
      %v3284 = vpop.permute.xlu0 %3283
      %3285 = vrot.lane.b32.xlu0 %v2332, 36
      %v3286 = vpop.permute.xlu0 %3285
      %3287 = vrot.lane.b32.xlu0 %v2334, 36
      %v3288 = vpop.permute.xlu0 %3287
      %3289 = vrot.lane.b32.xlu0 %v2335, 36
      %v3290 = vpop.permute.xlu0 %3289
      %3291 = vrot.lane.b32.xlu0 %v2337, 36
      %v3292 = vpop.permute.xlu0 %3291
      %3293 = vrot.lane.b32.xlu0 %v2338, 36
      %v3294 = vpop.permute.xlu0 %3293
      %3295 = vrot.lane.b32.xlu0 %v2340, 36
      %v3296 = vpop.permute.xlu0 %3295
      %3297 = vrot.lane.b32.xlu0 %v2341, 36
      %v3298 = vpop.permute.xlu0 %3297
      %3299 = vrot.lane.b32.xlu0 %v2343, 36
      %v3300 = vpop.permute.xlu0 %3299
      %3301 = vrot.lane.b32.xlu0 %v2344, 36
      %v3302 = vpop.permute.xlu0 %3301
      %3303 = vrot.lane.b32.xlu0 %v2346, 36
      %v3304 = vpop.permute.xlu0 %3303
      %3305 = vrot.lane.b32.xlu0 %v2347, 36
      %v3306 = vpop.permute.xlu0 %3305
      %3307 = vrot.lane.b32.xlu0 %v2349, 36
      %v3308 = vpop.permute.xlu0 %3307
      %3309 = vrot.lane.b32.xlu0 %v2350, 36
      %v3310 = vpop.permute.xlu0 %3309
      %3343 = vst.msk [vmem:[#allocation3] sm:$0xff] %vm1372, %v3248
      %3344 = vst.msk [vmem:[#allocation3 + $0x8] sm:$0xff] %vm1372, %v3250
      %3345 = vst.msk [vmem:[#allocation3 + $0x10] sm:$0xff] %vm1372, %v3252
      %3346 = vst.msk [vmem:[#allocation3 + $0x18] sm:$0xff] %vm1372, %v3254
      %3347 = vst.msk [vmem:[#allocation3 + $0x20] sm:$0xff] %vm1372, %v3256
      %3348 = vst.msk [vmem:[#allocation3 + $0x28] sm:$0xff] %vm1372, %v3258
      %3349 = vst.msk [vmem:[#allocation3 + $0x30] sm:$0xff] %vm1372, %v3260
      %3350 = vst.msk [vmem:[#allocation3 + $0x38] sm:$0xff] %vm1372, %v3262
      %3351 = vst.msk [vmem:[#allocation3 + $0x40] sm:$0xff] %vm1372, %v3264
      %3352 = vst.msk [vmem:[#allocation3 + $0x48] sm:$0xff] %vm1372, %v3266
      %3353 = vst.msk [vmem:[#allocation3 + $0x50] sm:$0xff] %vm1372, %v3268
      %3354 = vst.msk [vmem:[#allocation3 + $0x58] sm:$0xff] %vm1372, %v3270
      %3355 = vst.msk [vmem:[#allocation3 + $0x60] sm:$0xff] %vm1372, %v3272
      %3356 = vst.msk [vmem:[#allocation3 + $0x68] sm:$0xff] %vm1372, %v3274
      %3357 = vst.msk [vmem:[#allocation3 + $0x70] sm:$0xff] %vm1372, %v3276
      %3358 = vst.msk [vmem:[#allocation3 + $0x78] sm:$0xff] %vm1372, %v3278
      %3359 = vst.msk [vmem:[#allocation3 + $0x80] sm:$0xff] %vm1372, %v3280
      %3360 = vst.msk [vmem:[#allocation3 + $0x88] sm:$0xff] %vm1372, %v3282
      %3361 = vst.msk [vmem:[#allocation3 + $0x90] sm:$0xff] %vm1372, %v3284
      %3362 = vst.msk [vmem:[#allocation3 + $0x98] sm:$0xff] %vm1372, %v3286
      %3363 = vst.msk [vmem:[#allocation3 + $0xa0] sm:$0xff] %vm1372, %v3288
      %3364 = vst.msk [vmem:[#allocation3 + $0xa8] sm:$0xff] %vm1372, %v3290
      %3365 = vst.msk [vmem:[#allocation3 + $0xb0] sm:$0xff] %vm1372, %v3292
      %3366 = vst.msk [vmem:[#allocation3 + $0xb8] sm:$0xff] %vm1372, %v3294
      %3367 = vst.msk [vmem:[#allocation3 + $0xc0] sm:$0xff] %vm1372, %v3296
      %3368 = vst.msk [vmem:[#allocation3 + $0xc8] sm:$0xff] %vm1372, %v3298
      %3369 = vst.msk [vmem:[#allocation3 + $0xd0] sm:$0xff] %vm1372, %v3300
      %3370 = vst.msk [vmem:[#allocation3 + $0xd8] sm:$0xff] %vm1372, %v3302
      %3371 = vst.msk [vmem:[#allocation3 + $0xe0] sm:$0xff] %vm1372, %v3304
      %3372 = vst.msk [vmem:[#allocation3 + $0xe8] sm:$0xff] %vm1372, %v3306
      %3373 = vst.msk [vmem:[#allocation3 + $0xf0] sm:$0xff] %vm1372, %v3308
      %3374 = vst.msk [vmem:[#allocation3 + $0xf8] sm:$0xff] %vm1372, %v3310
      %v3376 = vrot.slane %v2349, 1
      %v3377 = vrot.slane %v2350, 1
      %v3378 = vsel %vm454, %v3376, %v3377
      %v3379 = vrot.slane %v2351, 1
      %v3380 = vsel %vm454, %v3377, %v3379
      %3381 = vrot.lane.b32.xlu0 %v2444, 42
      %v3382 = vpop.permute.xlu0 %3381
      %3383 = vrot.lane.b32.xlu0 %v2446, 42
      %v3384 = vpop.permute.xlu0 %3383
      %3385 = vrot.lane.b32.xlu0 %v2449, 42
      %v3386 = vpop.permute.xlu0 %3385
      %3387 = vrot.lane.b32.xlu0 %v2451, 42
      %v3388 = vpop.permute.xlu0 %3387
      %3389 = vrot.lane.b32.xlu0 %v2454, 42
      %v3390 = vpop.permute.xlu0 %3389
      %3391 = vrot.lane.b32.xlu0 %v2456, 42
      %v3392 = vpop.permute.xlu0 %3391
      %3393 = vrot.lane.b32.xlu0 %v2459, 42
      %v3394 = vpop.permute.xlu0 %3393
      %3395 = vrot.lane.b32.xlu0 %v2461, 42
      %v3396 = vpop.permute.xlu0 %3395
      %3397 = vrot.lane.b32.xlu0 %v2464, 42
      %v3398 = vpop.permute.xlu0 %3397
      %3399 = vrot.lane.b32.xlu0 %v2466, 42
      %v3400 = vpop.permute.xlu0 %3399
      %3401 = vrot.lane.b32.xlu0 %v2469, 42
      %v3402 = vpop.permute.xlu0 %3401
      %3403 = vrot.lane.b32.xlu0 %v2471, 42
      %v3404 = vpop.permute.xlu0 %3403
      %3405 = vrot.lane.b32.xlu0 %v2474, 42
      %v3406 = vpop.permute.xlu0 %3405
      %3407 = vrot.lane.b32.xlu0 %v2476, 42
      %v3408 = vpop.permute.xlu0 %3407
      %3409 = vrot.lane.b32.xlu0 %v2479, 42
      %v3410 = vpop.permute.xlu0 %3409
      %3411 = vrot.lane.b32.xlu0 %v2481, 42
      %v3412 = vpop.permute.xlu0 %3411
      %3413 = vrot.lane.b32.xlu0 %v2484, 42
      %v3414 = vpop.permute.xlu0 %3413
      %3415 = vrot.lane.b32.xlu0 %v2486, 42
      %v3416 = vpop.permute.xlu0 %3415
      %3417 = vrot.lane.b32.xlu0 %v2489, 42
      %v3418 = vpop.permute.xlu0 %3417
      %3419 = vrot.lane.b32.xlu0 %v2491, 42
      %v3420 = vpop.permute.xlu0 %3419
      %3421 = vrot.lane.b32.xlu0 %v2494, 42
      %v3422 = vpop.permute.xlu0 %3421
      %3423 = vrot.lane.b32.xlu0 %v2496, 42
      %v3424 = vpop.permute.xlu0 %3423
      %3425 = vrot.lane.b32.xlu0 %v2499, 42
      %v3426 = vpop.permute.xlu0 %3425
      %3427 = vrot.lane.b32.xlu0 %v2501, 42
      %v3428 = vpop.permute.xlu0 %3427
      %3429 = vrot.lane.b32.xlu0 %v2504, 42
      %v3430 = vpop.permute.xlu0 %3429
      %3431 = vrot.lane.b32.xlu0 %v2506, 42
      %v3432 = vpop.permute.xlu0 %3431
      %3433 = vrot.lane.b32.xlu0 %v2509, 42
      %v3434 = vpop.permute.xlu0 %3433
      %3435 = vrot.lane.b32.xlu0 %v2511, 42
      %v3436 = vpop.permute.xlu0 %3435
      %3437 = vrot.lane.b32.xlu0 %v2981, 42
      %v3438 = vpop.permute.xlu0 %3437
      %3439 = vrot.lane.b32.xlu0 %v2983, 42
      %v3440 = vpop.permute.xlu0 %3439
      %3441 = vrot.lane.b32.xlu0 %v3378, 42
      %v3442 = vpop.permute.xlu0 %3441
      %3443 = vrot.lane.b32.xlu0 %v3380, 42
      %v3444 = vpop.permute.xlu0 %3443
      %3477 = vst.msk [vmem:[#allocation3] sm:$0xff] %vm1507, %v3382
      %3478 = vst.msk [vmem:[#allocation3 + $0x8] sm:$0xff] %vm1507, %v3384
      %3479 = vst.msk [vmem:[#allocation3 + $0x10] sm:$0xff] %vm1507, %v3386
      %3480 = vst.msk [vmem:[#allocation3 + $0x18] sm:$0xff] %vm1507, %v3388
      %3481 = vst.msk [vmem:[#allocation3 + $0x20] sm:$0xff] %vm1507, %v3390
      %3482 = vst.msk [vmem:[#allocation3 + $0x28] sm:$0xff] %vm1507, %v3392
      %3483 = vst.msk [vmem:[#allocation3 + $0x30] sm:$0xff] %vm1507, %v3394
      %3484 = vst.msk [vmem:[#allocation3 + $0x38] sm:$0xff] %vm1507, %v3396
      %3485 = vst.msk [vmem:[#allocation3 + $0x40] sm:$0xff] %vm1507, %v3398
      %3486 = vst.msk [vmem:[#allocation3 + $0x48] sm:$0xff] %vm1507, %v3400
      %3487 = vst.msk [vmem:[#allocation3 + $0x50] sm:$0xff] %vm1507, %v3402
      %3488 = vst.msk [vmem:[#allocation3 + $0x58] sm:$0xff] %vm1507, %v3404
      %3489 = vst.msk [vmem:[#allocation3 + $0x60] sm:$0xff] %vm1507, %v3406
      %3490 = vst.msk [vmem:[#allocation3 + $0x68] sm:$0xff] %vm1507, %v3408
      %3491 = vst.msk [vmem:[#allocation3 + $0x70] sm:$0xff] %vm1507, %v3410
      %3492 = vst.msk [vmem:[#allocation3 + $0x78] sm:$0xff] %vm1507, %v3412
      %3493 = vst.msk [vmem:[#allocation3 + $0x80] sm:$0xff] %vm1507, %v3414
      %3494 = vst.msk [vmem:[#allocation3 + $0x88] sm:$0xff] %vm1507, %v3416
      %3495 = vst.msk [vmem:[#allocation3 + $0x90] sm:$0xff] %vm1507, %v3418
      %3496 = vst.msk [vmem:[#allocation3 + $0x98] sm:$0xff] %vm1507, %v3420
      %3497 = vst.msk [vmem:[#allocation3 + $0xa0] sm:$0xff] %vm1507, %v3422
      %3498 = vst.msk [vmem:[#allocation3 + $0xa8] sm:$0xff] %vm1507, %v3424
      %3499 = vst.msk [vmem:[#allocation3 + $0xb0] sm:$0xff] %vm1507, %v3426
      %3500 = vst.msk [vmem:[#allocation3 + $0xb8] sm:$0xff] %vm1507, %v3428
      %3501 = vst.msk [vmem:[#allocation3 + $0xc0] sm:$0xff] %vm1507, %v3430
      %3502 = vst.msk [vmem:[#allocation3 + $0xc8] sm:$0xff] %vm1507, %v3432
      %3503 = vst.msk [vmem:[#allocation3 + $0xd0] sm:$0xff] %vm1507, %v3434
      %3504 = vst.msk [vmem:[#allocation3 + $0xd8] sm:$0xff] %vm1507, %v3436
      %3505 = vst.msk [vmem:[#allocation3 + $0xe0] sm:$0xff] %vm1507, %v3438
      %3506 = vst.msk [vmem:[#allocation3 + $0xe8] sm:$0xff] %vm1507, %v3440
      %3507 = vst.msk [vmem:[#allocation3 + $0xf0] sm:$0xff] %vm1507, %v3442
      %3508 = vst.msk [vmem:[#allocation3 + $0xf8] sm:$0xff] %vm1507, %v3444
      %v3509 = vrot.slane %v2349, 2
      %v3510 = vrot.slane %v2350, 2
      %v3511 = vsel %vm664, %v3509, %v3510
      %v3512 = vrot.slane %v2351, 2
      %v3513 = vsel %vm664, %v3510, %v3512
      %3514 = vrot.lane.b32.xlu0 %v2652, 48
      %v3515 = vpop.permute.xlu0 %3514
      %3516 = vrot.lane.b32.xlu0 %v2654, 48
      %v3517 = vpop.permute.xlu0 %3516
      %3518 = vrot.lane.b32.xlu0 %v2657, 48
      %v3519 = vpop.permute.xlu0 %3518
      %3520 = vrot.lane.b32.xlu0 %v2659, 48
      %v3521 = vpop.permute.xlu0 %3520
      %3522 = vrot.lane.b32.xlu0 %v2662, 48
      %v3523 = vpop.permute.xlu0 %3522
      %3524 = vrot.lane.b32.xlu0 %v2664, 48
      %v3525 = vpop.permute.xlu0 %3524
      %3526 = vrot.lane.b32.xlu0 %v2667, 48
      %v3527 = vpop.permute.xlu0 %3526
      %3528 = vrot.lane.b32.xlu0 %v2669, 48
      %v3529 = vpop.permute.xlu0 %3528
      %3530 = vrot.lane.b32.xlu0 %v2672, 48
      %v3531 = vpop.permute.xlu0 %3530
      %3532 = vrot.lane.b32.xlu0 %v2674, 48
      %v3533 = vpop.permute.xlu0 %3532
      %3534 = vrot.lane.b32.xlu0 %v2677, 48
      %v3535 = vpop.permute.xlu0 %3534
      %3536 = vrot.lane.b32.xlu0 %v2679, 48
      %v3537 = vpop.permute.xlu0 %3536
      %3538 = vrot.lane.b32.xlu0 %v2682, 48
      %v3539 = vpop.permute.xlu0 %3538
      %3540 = vrot.lane.b32.xlu0 %v2684, 48
      %v3541 = vpop.permute.xlu0 %3540
      %3542 = vrot.lane.b32.xlu0 %v2687, 48
      %v3543 = vpop.permute.xlu0 %3542
      %3544 = vrot.lane.b32.xlu0 %v2689, 48
      %v3545 = vpop.permute.xlu0 %3544
      %3546 = vrot.lane.b32.xlu0 %v2692, 48
      %v3547 = vpop.permute.xlu0 %3546
      %3548 = vrot.lane.b32.xlu0 %v2694, 48
      %v3549 = vpop.permute.xlu0 %3548
      %3550 = vrot.lane.b32.xlu0 %v2697, 48
      %v3551 = vpop.permute.xlu0 %3550
      %3552 = vrot.lane.b32.xlu0 %v2699, 48
      %v3553 = vpop.permute.xlu0 %3552
      %3554 = vrot.lane.b32.xlu0 %v2702, 48
      %v3555 = vpop.permute.xlu0 %3554
      %3556 = vrot.lane.b32.xlu0 %v2704, 48
      %v3557 = vpop.permute.xlu0 %3556
      %3558 = vrot.lane.b32.xlu0 %v2707, 48
      %v3559 = vpop.permute.xlu0 %3558
      %3560 = vrot.lane.b32.xlu0 %v2709, 48
      %v3561 = vpop.permute.xlu0 %3560
      %3562 = vrot.lane.b32.xlu0 %v2712, 48
      %v3563 = vpop.permute.xlu0 %3562
      %3564 = vrot.lane.b32.xlu0 %v2714, 48
      %v3565 = vpop.permute.xlu0 %3564
      %3566 = vrot.lane.b32.xlu0 %v2717, 48
      %v3567 = vpop.permute.xlu0 %3566
      %3568 = vrot.lane.b32.xlu0 %v2719, 48
      %v3569 = vpop.permute.xlu0 %3568
      %3570 = vrot.lane.b32.xlu0 %v3114, 48
      %v3571 = vpop.permute.xlu0 %3570
      %3572 = vrot.lane.b32.xlu0 %v3116, 48
      %v3573 = vpop.permute.xlu0 %3572
      %3574 = vrot.lane.b32.xlu0 %v3511, 48
      %v3575 = vpop.permute.xlu0 %3574
      %3576 = vrot.lane.b32.xlu0 %v3513, 48
      %v3577 = vpop.permute.xlu0 %3576
      %3610 = vst.msk [vmem:[#allocation3] sm:$0xff] %vm1641, %v3515
      %3611 = vst.msk [vmem:[#allocation3 + $0x8] sm:$0xff] %vm1641, %v3517
      %3612 = vst.msk [vmem:[#allocation3 + $0x10] sm:$0xff] %vm1641, %v3519
      %3613 = vst.msk [vmem:[#allocation3 + $0x18] sm:$0xff] %vm1641, %v3521
      %3614 = vst.msk [vmem:[#allocation3 + $0x20] sm:$0xff] %vm1641, %v3523
      %3615 = vst.msk [vmem:[#allocation3 + $0x28] sm:$0xff] %vm1641, %v3525
      %3616 = vst.msk [vmem:[#allocation3 + $0x30] sm:$0xff] %vm1641, %v3527
      %3617 = vst.msk [vmem:[#allocation3 + $0x38] sm:$0xff] %vm1641, %v3529
      %3618 = vst.msk [vmem:[#allocation3 + $0x40] sm:$0xff] %vm1641, %v3531
      %3619 = vst.msk [vmem:[#allocation3 + $0x48] sm:$0xff] %vm1641, %v3533
      %3620 = vst.msk [vmem:[#allocation3 + $0x50] sm:$0xff] %vm1641, %v3535
      %3621 = vst.msk [vmem:[#allocation3 + $0x58] sm:$0xff] %vm1641, %v3537
      %3622 = vst.msk [vmem:[#allocation3 + $0x60] sm:$0xff] %vm1641, %v3539
      %3623 = vst.msk [vmem:[#allocation3 + $0x68] sm:$0xff] %vm1641, %v3541
      %3624 = vst.msk [vmem:[#allocation3 + $0x70] sm:$0xff] %vm1641, %v3543
      %3625 = vst.msk [vmem:[#allocation3 + $0x78] sm:$0xff] %vm1641, %v3545
      %3626 = vst.msk [vmem:[#allocation3 + $0x80] sm:$0xff] %vm1641, %v3547
      %3627 = vst.msk [vmem:[#allocation3 + $0x88] sm:$0xff] %vm1641, %v3549
      %3628 = vst.msk [vmem:[#allocation3 + $0x90] sm:$0xff] %vm1641, %v3551
      %3629 = vst.msk [vmem:[#allocation3 + $0x98] sm:$0xff] %vm1641, %v3553
      %3630 = vst.msk [vmem:[#allocation3 + $0xa0] sm:$0xff] %vm1641, %v3555
      %3631 = vst.msk [vmem:[#allocation3 + $0xa8] sm:$0xff] %vm1641, %v3557
      %3632 = vst.msk [vmem:[#allocation3 + $0xb0] sm:$0xff] %vm1641, %v3559
      %3633 = vst.msk [vmem:[#allocation3 + $0xb8] sm:$0xff] %vm1641, %v3561
      %3634 = vst.msk [vmem:[#allocation3 + $0xc0] sm:$0xff] %vm1641, %v3563
      %3635 = vst.msk [vmem:[#allocation3 + $0xc8] sm:$0xff] %vm1641, %v3565
      %3636 = vst.msk [vmem:[#allocation3 + $0xd0] sm:$0xff] %vm1641, %v3567
      %3637 = vst.msk [vmem:[#allocation3 + $0xd8] sm:$0xff] %vm1641, %v3569
      %3638 = vst.msk [vmem:[#allocation3 + $0xe0] sm:$0xff] %vm1641, %v3571
      %3639 = vst.msk [vmem:[#allocation3 + $0xe8] sm:$0xff] %vm1641, %v3573
      %3640 = vst.msk [vmem:[#allocation3 + $0xf0] sm:$0xff] %vm1641, %v3575
      %3641 = vst.msk [vmem:[#allocation3 + $0xf8] sm:$0xff] %vm1641, %v3577
      %v3642 = vld [vmem:[#allocation3] sm:$0xff]
      %v3643 = vld [vmem:[#allocation3 + $0x8] sm:$0xff]
      %v3644 = vld [vmem:[#allocation3 + $0x10] sm:$0xff]
      %v3645 = vld [vmem:[#allocation3 + $0x18] sm:$0xff]
      %v3646 = vld [vmem:[#allocation3 + $0x20] sm:$0xff]
      %v3647 = vld [vmem:[#allocation3 + $0x28] sm:$0xff]
      %v3648 = vld [vmem:[#allocation3 + $0x30] sm:$0xff]
      %v3649 = vld [vmem:[#allocation3 + $0x38] sm:$0xff]
      %v3650 = vld [vmem:[#allocation3 + $0x40] sm:$0xff]
      %v3651 = vld [vmem:[#allocation3 + $0x48] sm:$0xff]
      %v3652 = vld [vmem:[#allocation3 + $0x50] sm:$0xff]
      %v3653 = vld [vmem:[#allocation3 + $0x58] sm:$0xff]
      %v3654 = vld [vmem:[#allocation3 + $0x60] sm:$0xff]
      %v3655 = vld [vmem:[#allocation3 + $0x68] sm:$0xff]
      %v3656 = vld [vmem:[#allocation3 + $0x70] sm:$0xff]
      %v3657 = vld [vmem:[#allocation3 + $0x78] sm:$0xff]
      %v3658 = vld [vmem:[#allocation3 + $0x80] sm:$0xff]
      %v3659 = vld [vmem:[#allocation3 + $0x88] sm:$0xff]
      %v3660 = vld [vmem:[#allocation3 + $0x90] sm:$0xff]
      %v3661 = vld [vmem:[#allocation3 + $0x98] sm:$0xff]
      %v3662 = vld [vmem:[#allocation3 + $0xa0] sm:$0xff]
      %v3663 = vld [vmem:[#allocation3 + $0xa8] sm:$0xff]
      %v3664 = vld [vmem:[#allocation3 + $0xb0] sm:$0xff]
      %v3665 = vld [vmem:[#allocation3 + $0xb8] sm:$0xff]
      %v3666 = vld [vmem:[#allocation3 + $0xc0] sm:$0xff]
      %v3667 = vld [vmem:[#allocation3 + $0xc8] sm:$0xff]
      %v3668 = vld [vmem:[#allocation3 + $0xd0] sm:$0xff]
      %v3669 = vld [vmem:[#allocation3 + $0xd8] sm:$0xff]
      %v3670 = vld [vmem:[#allocation3 + $0xe0] sm:$0xff]
      %v3671 = vld [vmem:[#allocation3 + $0xe8] sm:$0xff]
      %v3672 = vld [vmem:[#allocation3 + $0xf0] sm:$0xff]
      %v3673 = vld [vmem:[#allocation3 + $0xf8] sm:$0xff]
      %v3674 = vpack.c.bf16 %v3643, %v3642
      %v3675 = vpack.c.bf16 %v3645, %v3644
      %v3676 = vpack.c.bf16 %v3647, %v3646
      %v3677 = vpack.c.bf16 %v3649, %v3648
      %v3678 = vpack.c.bf16 %v3651, %v3650
      %v3679 = vpack.c.bf16 %v3653, %v3652
      %v3680 = vpack.c.bf16 %v3655, %v3654
      %v3681 = vpack.c.bf16 %v3657, %v3656
      %v3682 = vpack.c.bf16 %v3659, %v3658
      %v3683 = vpack.c.bf16 %v3661, %v3660
      %v3684 = vpack.c.bf16 %v3663, %v3662
      %v3685 = vpack.c.bf16 %v3665, %v3664
      %v3686 = vpack.c.bf16 %v3667, %v3666
      %v3687 = vpack.c.bf16 %v3669, %v3668
      %v3688 = vpack.c.bf16 %v3671, %v3670
      %v3689 = vpack.c.bf16 %v3673, %v3672
      %s3690 = scalar_lea.vmem %s1, 28
      %v3691 = vld [vmem:[%s3690] sm:$0xf]
      %v3692 = vld [vmem:[%s3690 + $0x4] sm:$0xf]
      %v3693 = vld [vmem:[%s3690 + $0x8] sm:$0xf]
      %v3694 = vld [vmem:[%s3690 + $0xc] sm:$0xf]
      %v3695 = vld [vmem:[%s3690 + $0x10] sm:$0xf]
      %v3696 = vld [vmem:[%s3690 + $0x14] sm:$0xf]
      %v3697 = vld [vmem:[%s3690 + $0x18] sm:$0x7]
      %v3705 = vunpack.c.l.b16 %v3691
      %v3706 = vunpack.c.l.b16 %v3692
      %v3707 = vunpack.c.l.b16 %v3693
      %v3708 = vunpack.c.l.b16 %v3694
      %v3709 = vunpack.c.l.b16 %v3695
      %v3710 = vunpack.c.l.b16 %v3696
      %v3711 = vunpack.c.l.b16 %v3697
      %v3712 = vpack.c.b16 %v3706, %v3705
      %v3713 = vpack.c.b16 %v3708, %v3707
      %v3714 = vpack.c.b16 %v3710, %v3709
      %v3715 = vpack.c.b16 %v3711, %v3711
      %v3720 = vsel %vm1750, %v3674, 0
      %v3723 = vsel %vm1750, %v3675, 0
      %v3726 = vsel %vm1750, %v3676, 0
      %v3729 = vsel %vm1750, %v3677, 0
      %v3732 = vsel %vm1750, %v3678, 0
      %v3735 = vsel %vm1750, %v3679, 0
      %v3738 = vsel %vm1750, %v3680, 0
      %v3741 = vsel %vm1750, %v3681, 0
      %v3744 = vsel %vm1750, %v3682, 0
      %v3747 = vsel %vm1750, %v3683, 0
      %v3750 = vsel %vm1750, %v3684, 0
      %v3753 = vsel %vm1750, %v3685, 0
      %v3756 = vsel %vm1750, %v3686, 0
      %v3759 = vsel %vm1750, %v3687, 0
      %v3762 = vsel %vm1750, %v3688, 0
      %v3765 = vsel %vm1750, %v3689, 0
      %v3768 = vsel %vm1799, %v3715, 0
      %3770 = vmatprep.subr.bf16.mxu0 0
      %3771 = vmatpush1.bf16.msra.mxu0 0
      %3772 = vmatprep.subr.bf16.mxu0 0
      %3773 = vmatpush1.bf16.msra.mxu0 0
      %3774 = vmatprep.subr.bf16.mxu0 0
      %3775 = vmatpush1.bf16.msra.mxu0 0
      %3776 = vmatprep.subr.bf16.mxu0 0
      %3777 = vmatpush1.bf16.msra.mxu0 0
      %3778 = vmatprep.subr.bf16.mxu0 0
      %3779 = vmatpush1.bf16.msra.mxu0 %v3768
      %3780 = vmatprep.subr.bf16.mxu0 0
      %3781 = vmatpush1.bf16.msra.mxu0 %v3714
      %3782 = vmatprep.subr.bf16.mxu0 0
      %3783 = vmatpush1.bf16.msra.mxu0 %v3713
      %3784 = vmatprep.subr.bf16.mxu0 0
      %3785 = vmatpush1.bf16.msra.mxu0 %v3712
      %3786 = vmatprep.subr.bf16.mxu0 0
      %3787 = vmatpush2.bf16.msra.mxu0 0
      %3788 = vmatprep.subr.bf16.mxu0 0
      %3789 = vmatpush2.bf16.msra.mxu0 0
      %3790 = vmatprep.subr.bf16.mxu0 0
      %3791 = vmatpush2.bf16.msra.mxu0 0
      %3792 = vmatprep.subr.bf16.mxu0 0
      %3793 = vmatpush2.bf16.msra.mxu0 0
      %3794 = vmatprep.subr.bf16.mxu0 0
      %3795 = vmatpush2.bf16.msra.mxu0 0
      %3796 = vmatprep.subr.bf16.mxu0 0
      %3797 = vmatpush2.bf16.msra.mxu0 0
      %3798 = vmatprep.subr.bf16.mxu0 0
      %3799 = vmatpush2.bf16.msra.mxu0 0
      %3800 = vmatprep.subr.bf16.mxu0 0
      %3801 = vmatpush2.bf16.msra.mxu0 0
      %3802 = vmatprep.mubr.bf16.mxu0 0
      %3803 = vmatmul.mubr.bf16.gmra.mxu0 %v3720
      %v3804 = vpop.f32.mrf.mxu0
      %v3805 = vadd.f32 0.0, %v3804
      %v3806 = vpop.f32.mrf.mxu0
      %v3807 = vpop.f32.mrf.mxu0
      %v3808 = vadd.f32 0.0, %v3807
      %v3809 = vpop.f32.mrf.mxu0
      %3810 = vmatprep.mubr.bf16.mxu0 0
      %3811 = vmatmul.mubr.bf16.gmra.mxu0 %v3723
      %v3812 = vpop.f32.mrf.mxu0
      %v3813 = vadd.f32 0.0, %v3812
      %v3814 = vpop.f32.mrf.mxu0
      %v3815 = vpop.f32.mrf.mxu0
      %v3816 = vadd.f32 0.0, %v3815
      %v3817 = vpop.f32.mrf.mxu0
      %3818 = vmatprep.mubr.bf16.mxu0 0
      %3819 = vmatmul.mubr.bf16.gmra.mxu0 %v3726
      %v3820 = vpop.f32.mrf.mxu0
      %v3821 = vadd.f32 0.0, %v3820
      %v3822 = vpop.f32.mrf.mxu0
      %v3823 = vpop.f32.mrf.mxu0
      %v3824 = vadd.f32 0.0, %v3823
      %v3825 = vpop.f32.mrf.mxu0
      %3826 = vmatprep.mubr.bf16.mxu0 0
      %3827 = vmatmul.mubr.bf16.gmra.mxu0 %v3729
      %v3828 = vpop.f32.mrf.mxu0
      %v3829 = vadd.f32 0.0, %v3828
      %v3830 = vpop.f32.mrf.mxu0
      %v3831 = vpop.f32.mrf.mxu0
      %v3832 = vadd.f32 0.0, %v3831
      %v3833 = vpop.f32.mrf.mxu0
      %3834 = vmatprep.mubr.bf16.mxu0 0
      %3835 = vmatmul.mubr.bf16.gmra.mxu0 %v3732
      %v3836 = vpop.f32.mrf.mxu0
      %v3837 = vadd.f32 0.0, %v3836
      %v3838 = vpop.f32.mrf.mxu0
      %v3839 = vpop.f32.mrf.mxu0
      %v3840 = vadd.f32 0.0, %v3839
      %v3841 = vpop.f32.mrf.mxu0
      %3842 = vmatprep.mubr.bf16.mxu0 0
      %3843 = vmatmul.mubr.bf16.gmra.mxu0 %v3735
      %v3844 = vpop.f32.mrf.mxu0
      %v3845 = vadd.f32 0.0, %v3844
      %v3846 = vpop.f32.mrf.mxu0
      %v3847 = vpop.f32.mrf.mxu0
      %v3848 = vadd.f32 0.0, %v3847
      %v3849 = vpop.f32.mrf.mxu0
      %3850 = vmatprep.mubr.bf16.mxu0 0
      %3851 = vmatmul.mubr.bf16.gmra.mxu0 %v3738
      %v3852 = vpop.f32.mrf.mxu0
      %v3853 = vadd.f32 0.0, %v3852
      %v3854 = vpop.f32.mrf.mxu0
      %v3855 = vpop.f32.mrf.mxu0
      %v3856 = vadd.f32 0.0, %v3855
      %v3857 = vpop.f32.mrf.mxu0
      %3858 = vmatprep.mubr.bf16.mxu0 0
      %3859 = vmatmul.mubr.bf16.gmra.mxu0 %v3741
      %v3860 = vpop.f32.mrf.mxu0
      %v3861 = vadd.f32 0.0, %v3860
      %v3862 = vpop.f32.mrf.mxu0
      %v3863 = vpop.f32.mrf.mxu0
      %v3864 = vadd.f32 0.0, %v3863
      %v3865 = vpop.f32.mrf.mxu0
      %3866 = vmatprep.mubr.bf16.mxu0 0
      %3867 = vmatmul.mubr.bf16.gmra.mxu0 %v3744
      %v3868 = vpop.f32.mrf.mxu0
      %v3869 = vadd.f32 0.0, %v3868
      %v3870 = vpop.f32.mrf.mxu0
      %v3871 = vpop.f32.mrf.mxu0
      %v3872 = vadd.f32 0.0, %v3871
      %v3873 = vpop.f32.mrf.mxu0
      %3874 = vmatprep.mubr.bf16.mxu0 0
      %3875 = vmatmul.mubr.bf16.gmra.mxu0 %v3747
      %v3876 = vpop.f32.mrf.mxu0
      %v3877 = vadd.f32 0.0, %v3876
      %v3878 = vpop.f32.mrf.mxu0
      %v3879 = vpop.f32.mrf.mxu0
      %v3880 = vadd.f32 0.0, %v3879
      %v3881 = vpop.f32.mrf.mxu0
      %3882 = vmatprep.mubr.bf16.mxu0 0
      %3883 = vmatmul.mubr.bf16.gmra.mxu0 %v3750
      %v3884 = vpop.f32.mrf.mxu0
      %v3885 = vadd.f32 0.0, %v3884
      %v3886 = vpop.f32.mrf.mxu0
      %v3887 = vpop.f32.mrf.mxu0
      %v3888 = vadd.f32 0.0, %v3887
      %v3889 = vpop.f32.mrf.mxu0
      %3890 = vmatprep.mubr.bf16.mxu0 0
      %3891 = vmatmul.mubr.bf16.gmra.mxu0 %v3753
      %v3892 = vpop.f32.mrf.mxu0
      %v3893 = vadd.f32 0.0, %v3892
      %v3894 = vpop.f32.mrf.mxu0
      %v3895 = vpop.f32.mrf.mxu0
      %v3896 = vadd.f32 0.0, %v3895
      %v3897 = vpop.f32.mrf.mxu0
      %3898 = vmatprep.mubr.bf16.mxu0 0
      %3899 = vmatmul.mubr.bf16.gmra.mxu0 %v3756
      %v3900 = vpop.f32.mrf.mxu0
      %v3901 = vadd.f32 0.0, %v3900
      %v3902 = vpop.f32.mrf.mxu0
      %v3903 = vpop.f32.mrf.mxu0
      %v3904 = vadd.f32 0.0, %v3903
      %v3905 = vpop.f32.mrf.mxu0
      %3906 = vmatprep.mubr.bf16.mxu0 0
      %3907 = vmatmul.mubr.bf16.gmra.mxu0 %v3759
      %v3908 = vpop.f32.mrf.mxu0
      %v3909 = vadd.f32 0.0, %v3908
      %v3910 = vpop.f32.mrf.mxu0
      %v3911 = vpop.f32.mrf.mxu0
      %v3912 = vadd.f32 0.0, %v3911
      %v3913 = vpop.f32.mrf.mxu0
      %3914 = vmatprep.mubr.bf16.mxu0 0
      %3915 = vmatmul.mubr.bf16.gmra.mxu0 %v3762
      %v3916 = vpop.f32.mrf.mxu0
      %v3917 = vadd.f32 0.0, %v3916
      %v3918 = vpop.f32.mrf.mxu0
      %v3919 = vpop.f32.mrf.mxu0
      %v3920 = vadd.f32 0.0, %v3919
      %v3921 = vpop.f32.mrf.mxu0
      %3922 = vmatprep.mubr.bf16.mxu0 0
      %3923 = vmatmul.mubr.bf16.gmra.mxu0 %v3765
      %v3924 = vpop.f32.mrf.mxu0
      %v3925 = vadd.f32 0.0, %v3924
      %v3926 = vpop.f32.mrf.mxu0
      %v3927 = vpop.f32.mrf.mxu0
      %v3928 = vadd.f32 0.0, %v3927
      %v3929 = vpop.f32.mrf.mxu0
      %3930 = vdwg.mxu0
      %s3931 = scalar_lea.vmem %s2, 1
      %v3932 = vld [vmem:[%s3931] sm:$0x1]
      %v3934 = vlaneseq
      %v3935 = vshrl.u32 %v3934, 7
      %v3936 = vsub.s32 0, %v3935
      %v3937 = vrot.slane %v3932, %v3936
      %v3939 = vmul.f32 %v3805, %v3937
      %v3940 = vmul.f32 %v3808, %v3937
      %v3941 = vmul.f32 %v3813, %v3937
      %v3942 = vmul.f32 %v3816, %v3937
      %v3943 = vmul.f32 %v3821, %v3937
      %v3944 = vmul.f32 %v3824, %v3937
      %v3945 = vmul.f32 %v3829, %v3937
      %v3946 = vmul.f32 %v3832, %v3937
      %v3947 = vmul.f32 %v3837, %v3937
      %v3948 = vmul.f32 %v3840, %v3937
      %v3949 = vmul.f32 %v3845, %v3937
      %v3950 = vmul.f32 %v3848, %v3937
      %v3951 = vmul.f32 %v3853, %v3937
      %v3952 = vmul.f32 %v3856, %v3937
      %v3953 = vmul.f32 %v3861, %v3937
      %v3954 = vmul.f32 %v3864, %v3937
      %v3955 = vmul.f32 %v3869, %v3937
      %v3956 = vmul.f32 %v3872, %v3937
      %v3957 = vmul.f32 %v3877, %v3937
      %v3958 = vmul.f32 %v3880, %v3937
      %v3959 = vmul.f32 %v3885, %v3937
      %v3960 = vmul.f32 %v3888, %v3937
      %v3961 = vmul.f32 %v3893, %v3937
      %v3962 = vmul.f32 %v3896, %v3937
      %v3963 = vmul.f32 %v3901, %v3937
      %v3964 = vmul.f32 %v3904, %v3937
      %v3965 = vmul.f32 %v3909, %v3937
      %v3966 = vmul.f32 %v3912, %v3937
      %v3967 = vmul.f32 %v3917, %v3937
      %v3968 = vmul.f32 %v3920, %v3937
      %v3969 = vmul.f32 %v3925, %v3937
      %v3970 = vmul.f32 %v3928, %v3937
      %s3971 = scalar_lea.vmem %s3, 1
      %v3972 = vld [vmem:[%s3971] sm:$0x1]
      %v3974 = vlaneseq
      %v3975 = vshrl.u32 %v3974, 7
      %v3976 = vsub.s32 0, %v3975
      %v3977 = vrot.slane %v3972, %v3976
      %v3979 = vadd.f32 %v3939, %v3977
      %v3980 = vadd.f32 %v3940, %v3977
      %v3981 = vadd.f32 %v3941, %v3977
      %v3982 = vadd.f32 %v3942, %v3977
      %v3983 = vadd.f32 %v3943, %v3977
      %v3984 = vadd.f32 %v3944, %v3977
      %v3985 = vadd.f32 %v3945, %v3977
      %v3986 = vadd.f32 %v3946, %v3977
      %v3987 = vadd.f32 %v3947, %v3977
      %v3988 = vadd.f32 %v3948, %v3977
      %v3989 = vadd.f32 %v3949, %v3977
      %v3990 = vadd.f32 %v3950, %v3977
      %v3991 = vadd.f32 %v3951, %v3977
      %v3992 = vadd.f32 %v3952, %v3977
      %v3993 = vadd.f32 %v3953, %v3977
      %v3994 = vadd.f32 %v3954, %v3977
      %v3995 = vadd.f32 %v3955, %v3977
      %v3996 = vadd.f32 %v3956, %v3977
      %v3997 = vadd.f32 %v3957, %v3977
      %v3998 = vadd.f32 %v3958, %v3977
      %v3999 = vadd.f32 %v3959, %v3977
      %v4000 = vadd.f32 %v3960, %v3977
      %v4001 = vadd.f32 %v3961, %v3977
      %v4002 = vadd.f32 %v3962, %v3977
      %v4003 = vadd.f32 %v3963, %v3977
      %v4004 = vadd.f32 %v3964, %v3977
      %v4005 = vadd.f32 %v3965, %v3977
      %v4006 = vadd.f32 %v3966, %v3977
      %v4007 = vadd.f32 %v3967, %v3977
      %v4008 = vadd.f32 %v3968, %v3977
      %v4009 = vadd.f32 %v3969, %v3977
      %v4010 = vadd.f32 %v3970, %v3977
      %v4011 = vmax.f32 %v3979, 0.0
      %v4012 = vmax.f32 %v3980, 0.0
      %v4013 = vmax.f32 %v3981, 0.0
      %v4014 = vmax.f32 %v3982, 0.0
      %v4015 = vmax.f32 %v3983, 0.0
      %v4016 = vmax.f32 %v3984, 0.0
      %v4017 = vmax.f32 %v3985, 0.0
      %v4018 = vmax.f32 %v3986, 0.0
      %v4019 = vmax.f32 %v3987, 0.0
      %v4020 = vmax.f32 %v3988, 0.0
      %v4021 = vmax.f32 %v3989, 0.0
      %v4022 = vmax.f32 %v3990, 0.0
      %v4023 = vmax.f32 %v3991, 0.0
      %v4024 = vmax.f32 %v3992, 0.0
      %v4025 = vmax.f32 %v3993, 0.0
      %v4026 = vmax.f32 %v3994, 0.0
      %v4027 = vmax.f32 %v3995, 0.0
      %v4028 = vmax.f32 %v3996, 0.0
      %v4029 = vmax.f32 %v3997, 0.0
      %v4030 = vmax.f32 %v3998, 0.0
      %v4031 = vmax.f32 %v3999, 0.0
      %v4032 = vmax.f32 %v4000, 0.0
      %v4033 = vmax.f32 %v4001, 0.0
      %v4034 = vmax.f32 %v4002, 0.0
      %v4035 = vmax.f32 %v4003, 0.0
      %v4036 = vmax.f32 %v4004, 0.0
      %v4037 = vmax.f32 %v4005, 0.0
      %v4038 = vmax.f32 %v4006, 0.0
      %v4039 = vmax.f32 %v4007, 0.0
      %v4040 = vmax.f32 %v4008, 0.0
      %v4041 = vmax.f32 %v4009, 0.0
      %v4042 = vmax.f32 %v4010, 0.0
      %4075 = vrot.lane.b32.xlu0 %v4011, 6
      %v4076 = vpop.permute.xlu0 %4075
      %4077 = vrot.lane.b32.xlu0 %v4012, 6
      %v4078 = vpop.permute.xlu0 %4077
      %4079 = vrot.lane.b32.xlu0 %v4013, 6
      %v4080 = vpop.permute.xlu0 %4079
      %4081 = vrot.lane.b32.xlu0 %v4014, 6
      %v4082 = vpop.permute.xlu0 %4081
      %4083 = vrot.lane.b32.xlu0 %v4015, 6
      %v4084 = vpop.permute.xlu0 %4083
      %4085 = vrot.lane.b32.xlu0 %v4016, 6
      %v4086 = vpop.permute.xlu0 %4085
      %4087 = vrot.lane.b32.xlu0 %v4017, 6
      %v4088 = vpop.permute.xlu0 %4087
      %4089 = vrot.lane.b32.xlu0 %v4018, 6
      %v4090 = vpop.permute.xlu0 %4089
      %4091 = vrot.lane.b32.xlu0 %v4019, 6
      %v4092 = vpop.permute.xlu0 %4091
      %4093 = vrot.lane.b32.xlu0 %v4020, 6
      %v4094 = vpop.permute.xlu0 %4093
      %4095 = vrot.lane.b32.xlu0 %v4021, 6
      %v4096 = vpop.permute.xlu0 %4095
      %4097 = vrot.lane.b32.xlu0 %v4022, 6
      %v4098 = vpop.permute.xlu0 %4097
      %4099 = vrot.lane.b32.xlu0 %v4023, 6
      %v4100 = vpop.permute.xlu0 %4099
      %4101 = vrot.lane.b32.xlu0 %v4024, 6
      %v4102 = vpop.permute.xlu0 %4101
      %4103 = vrot.lane.b32.xlu0 %v4025, 6
      %v4104 = vpop.permute.xlu0 %4103
      %4105 = vrot.lane.b32.xlu0 %v4026, 6
      %v4106 = vpop.permute.xlu0 %4105
      %4107 = vrot.lane.b32.xlu0 %v4027, 6
      %v4108 = vpop.permute.xlu0 %4107
      %4109 = vrot.lane.b32.xlu0 %v4028, 6
      %v4110 = vpop.permute.xlu0 %4109
      %4111 = vrot.lane.b32.xlu0 %v4029, 6
      %v4112 = vpop.permute.xlu0 %4111
      %4113 = vrot.lane.b32.xlu0 %v4030, 6
      %v4114 = vpop.permute.xlu0 %4113
      %4115 = vrot.lane.b32.xlu0 %v4031, 6
      %v4116 = vpop.permute.xlu0 %4115
      %4117 = vrot.lane.b32.xlu0 %v4032, 6
      %v4118 = vpop.permute.xlu0 %4117
      %4119 = vrot.lane.b32.xlu0 %v4033, 6
      %v4120 = vpop.permute.xlu0 %4119
      %4121 = vrot.lane.b32.xlu0 %v4034, 6
      %v4122 = vpop.permute.xlu0 %4121
      %4123 = vrot.lane.b32.xlu0 %v4035, 6
      %v4124 = vpop.permute.xlu0 %4123
      %4125 = vrot.lane.b32.xlu0 %v4036, 6
      %v4126 = vpop.permute.xlu0 %4125
      %4127 = vrot.lane.b32.xlu0 %v4037, 6
      %v4128 = vpop.permute.xlu0 %4127
      %4129 = vrot.lane.b32.xlu0 %v4038, 6
      %v4130 = vpop.permute.xlu0 %4129
      %4131 = vrot.lane.b32.xlu0 %v4039, 6
      %v4132 = vpop.permute.xlu0 %4131
      %4133 = vrot.lane.b32.xlu0 %v4040, 6
      %v4134 = vpop.permute.xlu0 %4133
      %4135 = vrot.lane.b32.xlu0 %v4041, 6
      %v4136 = vpop.permute.xlu0 %4135
      %4137 = vrot.lane.b32.xlu0 %v4042, 6
      %v4138 = vpop.permute.xlu0 %4137
      %4171 = vst.msk [vmem:[%s197] sm:$0xff] %vm631, %v4076
      %4172 = vst.msk [vmem:[%s197 + $0x8] sm:$0xff] %vm631, %v4078
      %4173 = vst.msk [vmem:[%s197 + $0x10] sm:$0xff] %vm631, %v4080
      %4174 = vst.msk [vmem:[%s197 + $0x18] sm:$0xff] %vm631, %v4082
      %4175 = vst.msk [vmem:[%s197 + $0x20] sm:$0xff] %vm631, %v4084
      %4176 = vst.msk [vmem:[%s197 + $0x28] sm:$0xff] %vm631, %v4086
      %4177 = vst.msk [vmem:[%s197 + $0x30] sm:$0xff] %vm631, %v4088
      %4178 = vst.msk [vmem:[%s197 + $0x38] sm:$0xff] %vm631, %v4090
      %4179 = vst.msk [vmem:[%s197 + $0x40] sm:$0xff] %vm631, %v4092
      %4180 = vst.msk [vmem:[%s197 + $0x48] sm:$0xff] %vm631, %v4094
      %4181 = vst.msk [vmem:[%s197 + $0x50] sm:$0xff] %vm631, %v4096
      %4182 = vst.msk [vmem:[%s197 + $0x58] sm:$0xff] %vm631, %v4098
      %4183 = vst.msk [vmem:[%s197 + $0x60] sm:$0xff] %vm631, %v4100
      %4184 = vst.msk [vmem:[%s197 + $0x68] sm:$0xff] %vm631, %v4102
      %4185 = vst.msk [vmem:[%s197 + $0x70] sm:$0xff] %vm631, %v4104
      %4186 = vst.msk [vmem:[%s197 + $0x78] sm:$0xff] %vm631, %v4106
      %4187 = vst.msk [vmem:[%s197 + $0x80] sm:$0xff] %vm631, %v4108
      %4188 = vst.msk [vmem:[%s197 + $0x88] sm:$0xff] %vm631, %v4110
      %4189 = vst.msk [vmem:[%s197 + $0x90] sm:$0xff] %vm631, %v4112
      %4190 = vst.msk [vmem:[%s197 + $0x98] sm:$0xff] %vm631, %v4114
      %4191 = vst.msk [vmem:[%s197 + $0xa0] sm:$0xff] %vm631, %v4116
      %4192 = vst.msk [vmem:[%s197 + $0xa8] sm:$0xff] %vm631, %v4118
      %4193 = vst.msk [vmem:[%s197 + $0xb0] sm:$0xff] %vm631, %v4120
      %4194 = vst.msk [vmem:[%s197 + $0xb8] sm:$0xff] %vm631, %v4122
      %4195 = vst.msk [vmem:[%s197 + $0xc0] sm:$0xff] %vm631, %v4124
      %4196 = vst.msk [vmem:[%s197 + $0xc8] sm:$0xff] %vm631, %v4126
      %4197 = vst.msk [vmem:[%s197 + $0xd0] sm:$0xff] %vm631, %v4128
      %4198 = vst.msk [vmem:[%s197 + $0xd8] sm:$0xff] %vm631, %v4130
      %4199 = vst.msk [vmem:[%s197 + $0xe0] sm:$0xff] %vm631, %v4132
      %4200 = vst.msk [vmem:[%s197 + $0xe8] sm:$0xff] %vm631, %v4134
      %4201 = vst.msk [vmem:[%s197 + $0xf0] sm:$0xff] %vm631, %v4136
      %4202 = vst.msk [vmem:[%s197 + $0xf8] sm:$0xff] %vm631, %v4138
      %4203 = vrot.lane.b32.xlu0 %v255, 116
      %v4204 = vpop.permute.xlu0 %4203
      %4205 = vrot.lane.b32.xlu0 %v256, 116
      %v4206 = vpop.permute.xlu0 %4205
      %4207 = vrot.lane.b32.xlu0 %v257, 116
      %v4208 = vpop.permute.xlu0 %4207
      %4209 = vrot.lane.b32.xlu0 %v258, 116
      %v4210 = vpop.permute.xlu0 %4209
      %4211 = vrot.lane.b32.xlu0 %v259, 116
      %v4212 = vpop.permute.xlu0 %4211
      %4213 = vrot.lane.b32.xlu0 %v260, 116
      %v4214 = vpop.permute.xlu0 %4213
      %4215 = vrot.lane.b32.xlu0 %v261, 116
      %v4216 = vpop.permute.xlu0 %4215
      %4217 = vrot.lane.b32.xlu0 %v262, 116
      %v4218 = vpop.permute.xlu0 %4217
      %4219 = vrot.lane.b32.xlu0 %v263, 116
      %v4220 = vpop.permute.xlu0 %4219
      %4221 = vrot.lane.b32.xlu0 %v264, 116
      %v4222 = vpop.permute.xlu0 %4221
      %4223 = vrot.lane.b32.xlu0 %v265, 116
      %v4224 = vpop.permute.xlu0 %4223
      %4225 = vrot.lane.b32.xlu0 %v266, 116
      %v4226 = vpop.permute.xlu0 %4225
      %4227 = vrot.lane.b32.xlu0 %v267, 116
      %v4228 = vpop.permute.xlu0 %4227
      %4229 = vrot.lane.b32.xlu0 %v268, 116
      %v4230 = vpop.permute.xlu0 %4229
      %4231 = vrot.lane.b32.xlu0 %v269, 116
      %v4232 = vpop.permute.xlu0 %4231
      %4233 = vrot.lane.b32.xlu0 %v270, 116
      %v4234 = vpop.permute.xlu0 %4233
      %4235 = vrot.lane.b32.xlu0 %v271, 116
      %v4236 = vpop.permute.xlu0 %4235
      %4237 = vrot.lane.b32.xlu0 %v272, 116
      %v4238 = vpop.permute.xlu0 %4237
      %4239 = vrot.lane.b32.xlu0 %v273, 116
      %v4240 = vpop.permute.xlu0 %4239
      %4241 = vrot.lane.b32.xlu0 %v274, 116
      %v4242 = vpop.permute.xlu0 %4241
      %4243 = vrot.lane.b32.xlu0 %v275, 116
      %v4244 = vpop.permute.xlu0 %4243
      %4245 = vrot.lane.b32.xlu0 %v276, 116
      %v4246 = vpop.permute.xlu0 %4245
      %4247 = vrot.lane.b32.xlu0 %v277, 116
      %v4248 = vpop.permute.xlu0 %4247
      %4249 = vrot.lane.b32.xlu0 %v278, 116
      %v4250 = vpop.permute.xlu0 %4249
      %4251 = vrot.lane.b32.xlu0 %v279, 116
      %v4252 = vpop.permute.xlu0 %4251
      %4253 = vrot.lane.b32.xlu0 %v280, 116
      %v4254 = vpop.permute.xlu0 %4253
      %4255 = vrot.lane.b32.xlu0 %v281, 116
      %v4256 = vpop.permute.xlu0 %4255
      %4257 = vrot.lane.b32.xlu0 %v282, 116
      %v4258 = vpop.permute.xlu0 %4257
      %4259 = vrot.lane.b32.xlu0 %v283, 116
      %v4260 = vpop.permute.xlu0 %4259
      %4261 = vrot.lane.b32.xlu0 %v284, 116
      %v4262 = vpop.permute.xlu0 %4261
      %4263 = vrot.lane.b32.xlu0 %v285, 116
      %v4264 = vpop.permute.xlu0 %4263
      %4265 = vrot.lane.b32.xlu0 %v286, 116
      %v4266 = vpop.permute.xlu0 %4265
      %v4299 = vadd.f32 %v4011, %v4204
      %v4300 = vadd.f32 %v4012, %v4206
      %v4301 = vadd.f32 %v4013, %v4208
      %v4302 = vadd.f32 %v4014, %v4210
      %v4303 = vadd.f32 %v4015, %v4212
      %v4304 = vadd.f32 %v4016, %v4214
      %v4305 = vadd.f32 %v4017, %v4216
      %v4306 = vadd.f32 %v4018, %v4218
      %v4307 = vadd.f32 %v4019, %v4220
      %v4308 = vadd.f32 %v4020, %v4222
      %v4309 = vadd.f32 %v4021, %v4224
      %v4310 = vadd.f32 %v4022, %v4226
      %v4311 = vadd.f32 %v4023, %v4228
      %v4312 = vadd.f32 %v4024, %v4230
      %v4313 = vadd.f32 %v4025, %v4232
      %v4314 = vadd.f32 %v4026, %v4234
      %v4315 = vadd.f32 %v4027, %v4236
      %v4316 = vadd.f32 %v4028, %v4238
      %v4317 = vadd.f32 %v4029, %v4240
      %v4318 = vadd.f32 %v4030, %v4242
      %v4319 = vadd.f32 %v4031, %v4244
      %v4320 = vadd.f32 %v4032, %v4246
      %v4321 = vadd.f32 %v4033, %v4248
      %v4322 = vadd.f32 %v4034, %v4250
      %v4323 = vadd.f32 %v4035, %v4252
      %v4324 = vadd.f32 %v4036, %v4254
      %v4325 = vadd.f32 %v4037, %v4256
      %v4326 = vadd.f32 %v4038, %v4258
      %v4327 = vadd.f32 %v4039, %v4260
      %v4328 = vadd.f32 %v4040, %v4262
      %v4329 = vadd.f32 %v4041, %v4264
      %v4330 = vadd.f32 %v4042, %v4266
      %4331 = vst.msk [vmem:[%s287 + $0x1] sm:$0xff] %vm199, %v4299
      %4332 = vst.msk [vmem:[%s287 + $0x9] sm:$0xff] %vm199, %v4300
      %4333 = vst.msk [vmem:[%s287 + $0x19] sm:$0xff] %vm199, %v4301
      %4334 = vst.msk [vmem:[%s287 + $0x21] sm:$0xff] %vm199, %v4302
      %4335 = vst.msk [vmem:[%s287 + $0x31] sm:$0xff] %vm199, %v4303
      %4336 = vst.msk [vmem:[%s287 + $0x39] sm:$0xff] %vm199, %v4304
      %4337 = vst.msk [vmem:[%s287 + $0x49] sm:$0xff] %vm199, %v4305
      %4338 = vst.msk [vmem:[%s287 + $0x51] sm:$0xff] %vm199, %v4306
      %4339 = vst.msk [vmem:[%s287 + $0x61] sm:$0xff] %vm199, %v4307
      %4340 = vst.msk [vmem:[%s287 + $0x69] sm:$0xff] %vm199, %v4308
      %4341 = vst.msk [vmem:[%s287 + $0x79] sm:$0xff] %vm199, %v4309
      %4342 = vst.msk [vmem:[%s287 + $0x81] sm:$0xff] %vm199, %v4310
      %4343 = vst.msk [vmem:[%s287 + $0x91] sm:$0xff] %vm199, %v4311
      %4344 = vst.msk [vmem:[%s287 + $0x99] sm:$0xff] %vm199, %v4312
      %4345 = vst.msk [vmem:[%s287 + $0xa9] sm:$0xff] %vm199, %v4313
      %4346 = vst.msk [vmem:[%s287 + $0xb1] sm:$0xff] %vm199, %v4314
      %4347 = vst.msk [vmem:[%s287 + $0xc1] sm:$0xff] %vm199, %v4315
      %4348 = vst.msk [vmem:[%s287 + $0xc9] sm:$0xff] %vm199, %v4316
      %4349 = vst.msk [vmem:[%s287 + $0xd9] sm:$0xff] %vm199, %v4317
      %4350 = vst.msk [vmem:[%s287 + $0xe1] sm:$0xff] %vm199, %v4318
      %4351 = vst.msk [vmem:[%s287 + $0xf1] sm:$0xff] %vm199, %v4319
      %4352 = vst.msk [vmem:[%s287 + $0xf9] sm:$0xff] %vm199, %v4320
      %4353 = vst.msk [vmem:[%s287 + $0x109] sm:$0xff] %vm199, %v4321
      %4354 = vst.msk [vmem:[%s287 + $0x111] sm:$0xff] %vm199, %v4322
      %4355 = vst.msk [vmem:[%s287 + $0x121] sm:$0xff] %vm199, %v4323
      %4356 = vst.msk [vmem:[%s287 + $0x129] sm:$0xff] %vm199, %v4324
      %4357 = vst.msk [vmem:[%s287 + $0x139] sm:$0xff] %vm199, %v4325
      %4358 = vst.msk [vmem:[%s287 + $0x141] sm:$0xff] %vm199, %v4326
      %4359 = vst.msk [vmem:[%s287 + $0x151] sm:$0xff] %vm199, %v4327
      %4360 = vst.msk [vmem:[%s287 + $0x159] sm:$0xff] %vm199, %v4328
      %4361 = vst.msk [vmem:[%s287 + $0x169] sm:$0xff] %vm199, %v4329
      %4362 = vst.msk [vmem:[%s287 + $0x171] sm:$0xff] %vm199, %v4330
      %v4363 = vld [vmem:[#allocation2] sm:$0xff]
      %v4364 = vld [vmem:[#allocation2 + $0x8] sm:$0xff]
      %v4365 = vld [vmem:[#allocation2 + $0x10] sm:$0x3]
      %v4366 = vld [vmem:[#allocation2 + $0x18] sm:$0xff]
      %v4367 = vld [vmem:[#allocation2 + $0x20] sm:$0xff]
      %v4368 = vld [vmem:[#allocation2 + $0x28] sm:$0x3]
      %v4369 = vld [vmem:[#allocation2 + $0x30] sm:$0xff]
      %v4370 = vld [vmem:[#allocation2 + $0x38] sm:$0xff]
      %v4371 = vld [vmem:[#allocation2 + $0x40] sm:$0x3]
      %v4372 = vld [vmem:[#allocation2 + $0x48] sm:$0xff]
      %v4373 = vld [vmem:[#allocation2 + $0x50] sm:$0xff]
      %v4374 = vld [vmem:[#allocation2 + $0x58] sm:$0x3]
      %v4375 = vld [vmem:[#allocation2 + $0x60] sm:$0xff]
      %v4376 = vld [vmem:[#allocation2 + $0x68] sm:$0xff]
      %v4377 = vld [vmem:[#allocation2 + $0x70] sm:$0x3]
      %v4378 = vld [vmem:[#allocation2 + $0x78] sm:$0xff]
      %v4379 = vld [vmem:[#allocation2 + $0x80] sm:$0xff]
      %v4380 = vld [vmem:[#allocation2 + $0x88] sm:$0x3]
      %v4381 = vld [vmem:[#allocation2 + $0x90] sm:$0xff]
      %v4382 = vld [vmem:[#allocation2 + $0x98] sm:$0xff]
      %v4383 = vld [vmem:[#allocation2 + $0xa0] sm:$0x3]
      %v4384 = vld [vmem:[#allocation2 + $0xa8] sm:$0xff]
      %v4385 = vld [vmem:[#allocation2 + $0xb0] sm:$0xff]
      %v4386 = vld [vmem:[#allocation2 + $0xb8] sm:$0x3]
      %v4387 = vld [vmem:[#allocation2 + $0xc0] sm:$0xff]
      %v4388 = vld [vmem:[#allocation2 + $0xc8] sm:$0xff]
      %v4389 = vld [vmem:[#allocation2 + $0xd0] sm:$0x3]
      %v4390 = vld [vmem:[#allocation2 + $0xd8] sm:$0xff]
      %v4391 = vld [vmem:[#allocation2 + $0xe0] sm:$0xff]
      %v4392 = vld [vmem:[#allocation2 + $0xe8] sm:$0x3]
      %v4393 = vld [vmem:[#allocation2 + $0xf0] sm:$0xff]
      %v4394 = vld [vmem:[#allocation2 + $0xf8] sm:$0xff]
      %v4395 = vld [vmem:[#allocation2 + $0x100] sm:$0x3]
      %v4396 = vld [vmem:[#allocation2 + $0x108] sm:$0xff]
      %v4397 = vld [vmem:[#allocation2 + $0x110] sm:$0xff]
      %v4398 = vld [vmem:[#allocation2 + $0x118] sm:$0x3]
      %v4399 = vld [vmem:[#allocation2 + $0x120] sm:$0xff]
      %v4400 = vld [vmem:[#allocation2 + $0x128] sm:$0xff]
      %v4401 = vld [vmem:[#allocation2 + $0x130] sm:$0x3]
      %v4402 = vld [vmem:[#allocation2 + $0x138] sm:$0xff]
      %v4403 = vld [vmem:[#allocation2 + $0x140] sm:$0xff]
      %v4404 = vld [vmem:[#allocation2 + $0x148] sm:$0x3]
      %v4405 = vld [vmem:[#allocation2 + $0x150] sm:$0xff]
      %v4406 = vld [vmem:[#allocation2 + $0x158] sm:$0xff]
      %v4407 = vld [vmem:[#allocation2 + $0x160] sm:$0x3]
      %v4408 = vld [vmem:[#allocation2 + $0x168] sm:$0xff]
      %v4409 = vld [vmem:[#allocation2 + $0x170] sm:$0xff]
      %v4410 = vld [vmem:[#allocation2 + $0x178] sm:$0x3]
      %v4411 = vld [vmem:[#allocation2 + $0x180] sm:$0xff]
      %v4412 = vld [vmem:[#allocation2 + $0x188] sm:$0xff]
      %v4413 = vld [vmem:[#allocation2 + $0x190] sm:$0x3]
      %v4414 = vld [vmem:[#allocation2 + $0x198] sm:$0xff]
      %v4415 = vld [vmem:[#allocation2 + $0x1a0] sm:$0xff]
      %v4416 = vld [vmem:[#allocation2 + $0x1a8] sm:$0x3]
      %4417 = vst.msk [vmem:[#allocation3] sm:$0xff] %vm199, %v4363
      %4418 = vst.msk [vmem:[#allocation3 + $0x8] sm:$0xff] %vm199, %v4364
      %4419 = vst.msk [vmem:[#allocation3 + $0x10] sm:$0xff] %vm199, %v4366
      %4420 = vst.msk [vmem:[#allocation3 + $0x18] sm:$0xff] %vm199, %v4367
      %4421 = vst.msk [vmem:[#allocation3 + $0x20] sm:$0xff] %vm199, %v4369
      %4422 = vst.msk [vmem:[#allocation3 + $0x28] sm:$0xff] %vm199, %v4370
      %4423 = vst.msk [vmem:[#allocation3 + $0x30] sm:$0xff] %vm199, %v4372
      %4424 = vst.msk [vmem:[#allocation3 + $0x38] sm:$0xff] %vm199, %v4373
      %4425 = vst.msk [vmem:[#allocation3 + $0x40] sm:$0xff] %vm199, %v4375
      %4426 = vst.msk [vmem:[#allocation3 + $0x48] sm:$0xff] %vm199, %v4376
      %4427 = vst.msk [vmem:[#allocation3 + $0x50] sm:$0xff] %vm199, %v4378
      %4428 = vst.msk [vmem:[#allocation3 + $0x58] sm:$0xff] %vm199, %v4379
      %4429 = vst.msk [vmem:[#allocation3 + $0x60] sm:$0xff] %vm199, %v4381
      %4430 = vst.msk [vmem:[#allocation3 + $0x68] sm:$0xff] %vm199, %v4382
      %4431 = vst.msk [vmem:[#allocation3 + $0x70] sm:$0xff] %vm199, %v4384
      %4432 = vst.msk [vmem:[#allocation3 + $0x78] sm:$0xff] %vm199, %v4385
      %4433 = vst.msk [vmem:[#allocation3 + $0x80] sm:$0xff] %vm199, %v4387
      %4434 = vst.msk [vmem:[#allocation3 + $0x88] sm:$0xff] %vm199, %v4388
      %4435 = vst.msk [vmem:[#allocation3 + $0x90] sm:$0xff] %vm199, %v4390
      %4436 = vst.msk [vmem:[#allocation3 + $0x98] sm:$0xff] %vm199, %v4391
      %4437 = vst.msk [vmem:[#allocation3 + $0xa0] sm:$0xff] %vm199, %v4393
      %4438 = vst.msk [vmem:[#allocation3 + $0xa8] sm:$0xff] %vm199, %v4394
      %4439 = vst.msk [vmem:[#allocation3 + $0xb0] sm:$0xff] %vm199, %v4396
      %4440 = vst.msk [vmem:[#allocation3 + $0xb8] sm:$0xff] %vm199, %v4397
      %4441 = vst.msk [vmem:[#allocation3 + $0xc0] sm:$0xff] %vm199, %v4399
      %4442 = vst.msk [vmem:[#allocation3 + $0xc8] sm:$0xff] %vm199, %v4400
      %4443 = vst.msk [vmem:[#allocation3 + $0xd0] sm:$0xff] %vm199, %v4402
      %4444 = vst.msk [vmem:[#allocation3 + $0xd8] sm:$0xff] %vm199, %v4403
      %4445 = vst.msk [vmem:[#allocation3 + $0xe0] sm:$0xff] %vm199, %v4405
      %4446 = vst.msk [vmem:[#allocation3 + $0xe8] sm:$0xff] %vm199, %v4406
      %4447 = vst.msk [vmem:[#allocation3 + $0xf0] sm:$0xff] %vm199, %v4408
      %4448 = vst.msk [vmem:[#allocation3 + $0xf8] sm:$0xff] %vm199, %v4409
      %v4497 = vrot.slane %v4363, 1
      %v4498 = vrot.slane %v4364, 1
      %v4499 = vsel %vm454, %v4497, %v4498
      %v4500 = vrot.slane %v4365, 1
      %v4501 = vsel %vm454, %v4498, %v4500
      %v4502 = vrot.slane %v4366, 1
      %v4503 = vrot.slane %v4367, 1
      %v4504 = vsel %vm454, %v4502, %v4503
      %v4505 = vrot.slane %v4368, 1
      %v4506 = vsel %vm454, %v4503, %v4505
      %v4507 = vrot.slane %v4369, 1
      %v4508 = vrot.slane %v4370, 1
      %v4509 = vsel %vm454, %v4507, %v4508
      %v4510 = vrot.slane %v4371, 1
      %v4511 = vsel %vm454, %v4508, %v4510
      %v4512 = vrot.slane %v4372, 1
      %v4513 = vrot.slane %v4373, 1
      %v4514 = vsel %vm454, %v4512, %v4513
      %v4515 = vrot.slane %v4374, 1
      %v4516 = vsel %vm454, %v4513, %v4515
      %v4517 = vrot.slane %v4375, 1
      %v4518 = vrot.slane %v4376, 1
      %v4519 = vsel %vm454, %v4517, %v4518
      %v4520 = vrot.slane %v4377, 1
      %v4521 = vsel %vm454, %v4518, %v4520
      %v4522 = vrot.slane %v4378, 1
      %v4523 = vrot.slane %v4379, 1
      %v4524 = vsel %vm454, %v4522, %v4523
      %v4525 = vrot.slane %v4380, 1
      %v4526 = vsel %vm454, %v4523, %v4525
      %v4527 = vrot.slane %v4381, 1
      %v4528 = vrot.slane %v4382, 1
      %v4529 = vsel %vm454, %v4527, %v4528
      %v4530 = vrot.slane %v4383, 1
      %v4531 = vsel %vm454, %v4528, %v4530
      %v4532 = vrot.slane %v4384, 1
      %v4533 = vrot.slane %v4385, 1
      %v4534 = vsel %vm454, %v4532, %v4533
      %v4535 = vrot.slane %v4386, 1
      %v4536 = vsel %vm454, %v4533, %v4535
      %v4537 = vrot.slane %v4387, 1
      %v4538 = vrot.slane %v4388, 1
      %v4539 = vsel %vm454, %v4537, %v4538
      %v4540 = vrot.slane %v4389, 1
      %v4541 = vsel %vm454, %v4538, %v4540
      %v4542 = vrot.slane %v4390, 1
      %v4543 = vrot.slane %v4391, 1
      %v4544 = vsel %vm454, %v4542, %v4543
      %v4545 = vrot.slane %v4392, 1
      %v4546 = vsel %vm454, %v4543, %v4545
      %v4547 = vrot.slane %v4393, 1
      %v4548 = vrot.slane %v4394, 1
      %v4549 = vsel %vm454, %v4547, %v4548
      %v4550 = vrot.slane %v4395, 1
      %v4551 = vsel %vm454, %v4548, %v4550
      %v4552 = vrot.slane %v4396, 1
      %v4553 = vrot.slane %v4397, 1
      %v4554 = vsel %vm454, %v4552, %v4553
      %v4555 = vrot.slane %v4398, 1
      %v4556 = vsel %vm454, %v4553, %v4555
      %v4557 = vrot.slane %v4399, 1
      %v4558 = vrot.slane %v4400, 1
      %v4559 = vsel %vm454, %v4557, %v4558
      %v4560 = vrot.slane %v4401, 1
      %v4561 = vsel %vm454, %v4558, %v4560
      %v4562 = vrot.slane %v4402, 1
      %v4563 = vrot.slane %v4403, 1
      %v4564 = vsel %vm454, %v4562, %v4563
      %v4565 = vrot.slane %v4404, 1
      %v4566 = vsel %vm454, %v4563, %v4565
      %v4567 = vrot.slane %v4405, 1
      %v4568 = vrot.slane %v4406, 1
      %v4569 = vsel %vm454, %v4567, %v4568
      %v4570 = vrot.slane %v4407, 1
      %v4571 = vsel %vm454, %v4568, %v4570
      %v4572 = vrot.slane %v4408, 1
      %v4573 = vrot.slane %v4409, 1
      %v4574 = vsel %vm454, %v4572, %v4573
      %v4575 = vrot.slane %v4410, 1
      %v4576 = vsel %vm454, %v4573, %v4575
      %4577 = vrot.lane.b32.xlu0 %v4499, 6
      %v4578 = vpop.permute.xlu0 %4577
      %4579 = vrot.lane.b32.xlu0 %v4501, 6
      %v4580 = vpop.permute.xlu0 %4579
      %4581 = vrot.lane.b32.xlu0 %v4504, 6
      %v4582 = vpop.permute.xlu0 %4581
      %4583 = vrot.lane.b32.xlu0 %v4506, 6
      %v4584 = vpop.permute.xlu0 %4583
      %4585 = vrot.lane.b32.xlu0 %v4509, 6
      %v4586 = vpop.permute.xlu0 %4585
      %4587 = vrot.lane.b32.xlu0 %v4511, 6
      %v4588 = vpop.permute.xlu0 %4587
      %4589 = vrot.lane.b32.xlu0 %v4514, 6
      %v4590 = vpop.permute.xlu0 %4589
      %4591 = vrot.lane.b32.xlu0 %v4516, 6
      %v4592 = vpop.permute.xlu0 %4591
      %4593 = vrot.lane.b32.xlu0 %v4519, 6
      %v4594 = vpop.permute.xlu0 %4593
      %4595 = vrot.lane.b32.xlu0 %v4521, 6
      %v4596 = vpop.permute.xlu0 %4595
      %4597 = vrot.lane.b32.xlu0 %v4524, 6
      %v4598 = vpop.permute.xlu0 %4597
      %4599 = vrot.lane.b32.xlu0 %v4526, 6
      %v4600 = vpop.permute.xlu0 %4599
      %4601 = vrot.lane.b32.xlu0 %v4529, 6
      %v4602 = vpop.permute.xlu0 %4601
      %4603 = vrot.lane.b32.xlu0 %v4531, 6
      %v4604 = vpop.permute.xlu0 %4603
      %4605 = vrot.lane.b32.xlu0 %v4534, 6
      %v4606 = vpop.permute.xlu0 %4605
      %4607 = vrot.lane.b32.xlu0 %v4536, 6
      %v4608 = vpop.permute.xlu0 %4607
      %4609 = vrot.lane.b32.xlu0 %v4539, 6
      %v4610 = vpop.permute.xlu0 %4609
      %4611 = vrot.lane.b32.xlu0 %v4541, 6
      %v4612 = vpop.permute.xlu0 %4611
      %4613 = vrot.lane.b32.xlu0 %v4544, 6
      %v4614 = vpop.permute.xlu0 %4613
      %4615 = vrot.lane.b32.xlu0 %v4546, 6
      %v4616 = vpop.permute.xlu0 %4615
      %4617 = vrot.lane.b32.xlu0 %v4549, 6
      %v4618 = vpop.permute.xlu0 %4617
      %4619 = vrot.lane.b32.xlu0 %v4551, 6
      %v4620 = vpop.permute.xlu0 %4619
      %4621 = vrot.lane.b32.xlu0 %v4554, 6
      %v4622 = vpop.permute.xlu0 %4621
      %4623 = vrot.lane.b32.xlu0 %v4556, 6
      %v4624 = vpop.permute.xlu0 %4623
      %4625 = vrot.lane.b32.xlu0 %v4559, 6
      %v4626 = vpop.permute.xlu0 %4625
      %4627 = vrot.lane.b32.xlu0 %v4561, 6
      %v4628 = vpop.permute.xlu0 %4627
      %4629 = vrot.lane.b32.xlu0 %v4564, 6
      %v4630 = vpop.permute.xlu0 %4629
      %4631 = vrot.lane.b32.xlu0 %v4566, 6
      %v4632 = vpop.permute.xlu0 %4631
      %4633 = vrot.lane.b32.xlu0 %v4569, 6
      %v4634 = vpop.permute.xlu0 %4633
      %4635 = vrot.lane.b32.xlu0 %v4571, 6
      %v4636 = vpop.permute.xlu0 %4635
      %4637 = vrot.lane.b32.xlu0 %v4574, 6
      %v4638 = vpop.permute.xlu0 %4637
      %4639 = vrot.lane.b32.xlu0 %v4576, 6
      %v4640 = vpop.permute.xlu0 %4639
      %4673 = vst.msk [vmem:[#allocation3] sm:$0xff] %vm631, %v4578
      %4674 = vst.msk [vmem:[#allocation3 + $0x8] sm:$0xff] %vm631, %v4580
      %4675 = vst.msk [vmem:[#allocation3 + $0x10] sm:$0xff] %vm631, %v4582
      %4676 = vst.msk [vmem:[#allocation3 + $0x18] sm:$0xff] %vm631, %v4584
      %4677 = vst.msk [vmem:[#allocation3 + $0x20] sm:$0xff] %vm631, %v4586
      %4678 = vst.msk [vmem:[#allocation3 + $0x28] sm:$0xff] %vm631, %v4588
      %4679 = vst.msk [vmem:[#allocation3 + $0x30] sm:$0xff] %vm631, %v4590
      %4680 = vst.msk [vmem:[#allocation3 + $0x38] sm:$0xff] %vm631, %v4592
      %4681 = vst.msk [vmem:[#allocation3 + $0x40] sm:$0xff] %vm631, %v4594
      %4682 = vst.msk [vmem:[#allocation3 + $0x48] sm:$0xff] %vm631, %v4596
      %4683 = vst.msk [vmem:[#allocation3 + $0x50] sm:$0xff] %vm631, %v4598
      %4684 = vst.msk [vmem:[#allocation3 + $0x58] sm:$0xff] %vm631, %v4600
      %4685 = vst.msk [vmem:[#allocation3 + $0x60] sm:$0xff] %vm631, %v4602
      %4686 = vst.msk [vmem:[#allocation3 + $0x68] sm:$0xff] %vm631, %v4604
      %4687 = vst.msk [vmem:[#allocation3 + $0x70] sm:$0xff] %vm631, %v4606
      %4688 = vst.msk [vmem:[#allocation3 + $0x78] sm:$0xff] %vm631, %v4608
      %4689 = vst.msk [vmem:[#allocation3 + $0x80] sm:$0xff] %vm631, %v4610
      %4690 = vst.msk [vmem:[#allocation3 + $0x88] sm:$0xff] %vm631, %v4612
      %4691 = vst.msk [vmem:[#allocation3 + $0x90] sm:$0xff] %vm631, %v4614
      %4692 = vst.msk [vmem:[#allocation3 + $0x98] sm:$0xff] %vm631, %v4616
      %4693 = vst.msk [vmem:[#allocation3 + $0xa0] sm:$0xff] %vm631, %v4618
      %4694 = vst.msk [vmem:[#allocation3 + $0xa8] sm:$0xff] %vm631, %v4620
      %4695 = vst.msk [vmem:[#allocation3 + $0xb0] sm:$0xff] %vm631, %v4622
      %4696 = vst.msk [vmem:[#allocation3 + $0xb8] sm:$0xff] %vm631, %v4624
      %4697 = vst.msk [vmem:[#allocation3 + $0xc0] sm:$0xff] %vm631, %v4626
      %4698 = vst.msk [vmem:[#allocation3 + $0xc8] sm:$0xff] %vm631, %v4628
      %4699 = vst.msk [vmem:[#allocation3 + $0xd0] sm:$0xff] %vm631, %v4630
      %4700 = vst.msk [vmem:[#allocation3 + $0xd8] sm:$0xff] %vm631, %v4632
      %4701 = vst.msk [vmem:[#allocation3 + $0xe0] sm:$0xff] %vm631, %v4634
      %4702 = vst.msk [vmem:[#allocation3 + $0xe8] sm:$0xff] %vm631, %v4636
      %4703 = vst.msk [vmem:[#allocation3 + $0xf0] sm:$0xff] %vm631, %v4638
      %4704 = vst.msk [vmem:[#allocation3 + $0xf8] sm:$0xff] %vm631, %v4640
      %v4705 = vrot.slane %v4363, 2
      %v4706 = vrot.slane %v4364, 2
      %v4707 = vsel %vm664, %v4705, %v4706
      %v4708 = vrot.slane %v4365, 2
      %v4709 = vsel %vm664, %v4706, %v4708
      %v4710 = vrot.slane %v4366, 2
      %v4711 = vrot.slane %v4367, 2
      %v4712 = vsel %vm664, %v4710, %v4711
      %v4713 = vrot.slane %v4368, 2
      %v4714 = vsel %vm664, %v4711, %v4713
      %v4715 = vrot.slane %v4369, 2
      %v4716 = vrot.slane %v4370, 2
      %v4717 = vsel %vm664, %v4715, %v4716
      %v4718 = vrot.slane %v4371, 2
      %v4719 = vsel %vm664, %v4716, %v4718
      %v4720 = vrot.slane %v4372, 2
      %v4721 = vrot.slane %v4373, 2
      %v4722 = vsel %vm664, %v4720, %v4721
      %v4723 = vrot.slane %v4374, 2
      %v4724 = vsel %vm664, %v4721, %v4723
      %v4725 = vrot.slane %v4375, 2
      %v4726 = vrot.slane %v4376, 2
      %v4727 = vsel %vm664, %v4725, %v4726
      %v4728 = vrot.slane %v4377, 2
      %v4729 = vsel %vm664, %v4726, %v4728
      %v4730 = vrot.slane %v4378, 2
      %v4731 = vrot.slane %v4379, 2
      %v4732 = vsel %vm664, %v4730, %v4731
      %v4733 = vrot.slane %v4380, 2
      %v4734 = vsel %vm664, %v4731, %v4733
      %v4735 = vrot.slane %v4381, 2
      %v4736 = vrot.slane %v4382, 2
      %v4737 = vsel %vm664, %v4735, %v4736
      %v4738 = vrot.slane %v4383, 2
      %v4739 = vsel %vm664, %v4736, %v4738
      %v4740 = vrot.slane %v4384, 2
      %v4741 = vrot.slane %v4385, 2
      %v4742 = vsel %vm664, %v4740, %v4741
      %v4743 = vrot.slane %v4386, 2
      %v4744 = vsel %vm664, %v4741, %v4743
      %v4745 = vrot.slane %v4387, 2
      %v4746 = vrot.slane %v4388, 2
      %v4747 = vsel %vm664, %v4745, %v4746
      %v4748 = vrot.slane %v4389, 2
      %v4749 = vsel %vm664, %v4746, %v4748
      %v4750 = vrot.slane %v4390, 2
      %v4751 = vrot.slane %v4391, 2
      %v4752 = vsel %vm664, %v4750, %v4751
      %v4753 = vrot.slane %v4392, 2
      %v4754 = vsel %vm664, %v4751, %v4753
      %v4755 = vrot.slane %v4393, 2
      %v4756 = vrot.slane %v4394, 2
      %v4757 = vsel %vm664, %v4755, %v4756
      %v4758 = vrot.slane %v4395, 2
      %v4759 = vsel %vm664, %v4756, %v4758
      %v4760 = vrot.slane %v4396, 2
      %v4761 = vrot.slane %v4397, 2
      %v4762 = vsel %vm664, %v4760, %v4761
      %v4763 = vrot.slane %v4398, 2
      %v4764 = vsel %vm664, %v4761, %v4763
      %v4765 = vrot.slane %v4399, 2
      %v4766 = vrot.slane %v4400, 2
      %v4767 = vsel %vm664, %v4765, %v4766
      %v4768 = vrot.slane %v4401, 2
      %v4769 = vsel %vm664, %v4766, %v4768
      %v4770 = vrot.slane %v4402, 2
      %v4771 = vrot.slane %v4403, 2
      %v4772 = vsel %vm664, %v4770, %v4771
      %v4773 = vrot.slane %v4404, 2
      %v4774 = vsel %vm664, %v4771, %v4773
      %v4775 = vrot.slane %v4405, 2
      %v4776 = vrot.slane %v4406, 2
      %v4777 = vsel %vm664, %v4775, %v4776
      %v4778 = vrot.slane %v4407, 2
      %v4779 = vsel %vm664, %v4776, %v4778
      %v4780 = vrot.slane %v4408, 2
      %v4781 = vrot.slane %v4409, 2
      %v4782 = vsel %vm664, %v4780, %v4781
      %v4783 = vrot.slane %v4410, 2
      %v4784 = vsel %vm664, %v4781, %v4783
      %4785 = vrot.lane.b32.xlu0 %v4707, 12
      %v4786 = vpop.permute.xlu0 %4785
      %4787 = vrot.lane.b32.xlu0 %v4709, 12
      %v4788 = vpop.permute.xlu0 %4787
      %4789 = vrot.lane.b32.xlu0 %v4712, 12
      %v4790 = vpop.permute.xlu0 %4789
      %4791 = vrot.lane.b32.xlu0 %v4714, 12
      %v4792 = vpop.permute.xlu0 %4791
      %4793 = vrot.lane.b32.xlu0 %v4717, 12
      %v4794 = vpop.permute.xlu0 %4793
      %4795 = vrot.lane.b32.xlu0 %v4719, 12
      %v4796 = vpop.permute.xlu0 %4795
      %4797 = vrot.lane.b32.xlu0 %v4722, 12
      %v4798 = vpop.permute.xlu0 %4797
      %4799 = vrot.lane.b32.xlu0 %v4724, 12
      %v4800 = vpop.permute.xlu0 %4799
      %4801 = vrot.lane.b32.xlu0 %v4727, 12
      %v4802 = vpop.permute.xlu0 %4801
      %4803 = vrot.lane.b32.xlu0 %v4729, 12
      %v4804 = vpop.permute.xlu0 %4803
      %4805 = vrot.lane.b32.xlu0 %v4732, 12
      %v4806 = vpop.permute.xlu0 %4805
      %4807 = vrot.lane.b32.xlu0 %v4734, 12
      %v4808 = vpop.permute.xlu0 %4807
      %4809 = vrot.lane.b32.xlu0 %v4737, 12
      %v4810 = vpop.permute.xlu0 %4809
      %4811 = vrot.lane.b32.xlu0 %v4739, 12
      %v4812 = vpop.permute.xlu0 %4811
      %4813 = vrot.lane.b32.xlu0 %v4742, 12
      %v4814 = vpop.permute.xlu0 %4813
      %4815 = vrot.lane.b32.xlu0 %v4744, 12
      %v4816 = vpop.permute.xlu0 %4815
      %4817 = vrot.lane.b32.xlu0 %v4747, 12
      %v4818 = vpop.permute.xlu0 %4817
      %4819 = vrot.lane.b32.xlu0 %v4749, 12
      %v4820 = vpop.permute.xlu0 %4819
      %4821 = vrot.lane.b32.xlu0 %v4752, 12
      %v4822 = vpop.permute.xlu0 %4821
      %4823 = vrot.lane.b32.xlu0 %v4754, 12
      %v4824 = vpop.permute.xlu0 %4823
      %4825 = vrot.lane.b32.xlu0 %v4757, 12
      %v4826 = vpop.permute.xlu0 %4825
      %4827 = vrot.lane.b32.xlu0 %v4759, 12
      %v4828 = vpop.permute.xlu0 %4827
      %4829 = vrot.lane.b32.xlu0 %v4762, 12
      %v4830 = vpop.permute.xlu0 %4829
      %4831 = vrot.lane.b32.xlu0 %v4764, 12
      %v4832 = vpop.permute.xlu0 %4831
      %4833 = vrot.lane.b32.xlu0 %v4767, 12
      %v4834 = vpop.permute.xlu0 %4833
      %4835 = vrot.lane.b32.xlu0 %v4769, 12
      %v4836 = vpop.permute.xlu0 %4835
      %4837 = vrot.lane.b32.xlu0 %v4772, 12
      %v4838 = vpop.permute.xlu0 %4837
      %4839 = vrot.lane.b32.xlu0 %v4774, 12
      %v4840 = vpop.permute.xlu0 %4839
      %4841 = vrot.lane.b32.xlu0 %v4777, 12
      %v4842 = vpop.permute.xlu0 %4841
      %4843 = vrot.lane.b32.xlu0 %v4779, 12
      %v4844 = vpop.permute.xlu0 %4843
      %4845 = vrot.lane.b32.xlu0 %v4782, 12
      %v4846 = vpop.permute.xlu0 %4845
      %4847 = vrot.lane.b32.xlu0 %v4784, 12
      %v4848 = vpop.permute.xlu0 %4847
      %4881 = vst.msk [vmem:[#allocation3] sm:$0xff] %vm841, %v4786
      %4882 = vst.msk [vmem:[#allocation3 + $0x8] sm:$0xff] %vm841, %v4788
      %4883 = vst.msk [vmem:[#allocation3 + $0x10] sm:$0xff] %vm841, %v4790
      %4884 = vst.msk [vmem:[#allocation3 + $0x18] sm:$0xff] %vm841, %v4792
      %4885 = vst.msk [vmem:[#allocation3 + $0x20] sm:$0xff] %vm841, %v4794
      %4886 = vst.msk [vmem:[#allocation3 + $0x28] sm:$0xff] %vm841, %v4796
      %4887 = vst.msk [vmem:[#allocation3 + $0x30] sm:$0xff] %vm841, %v4798
      %4888 = vst.msk [vmem:[#allocation3 + $0x38] sm:$0xff] %vm841, %v4800
      %4889 = vst.msk [vmem:[#allocation3 + $0x40] sm:$0xff] %vm841, %v4802
      %4890 = vst.msk [vmem:[#allocation3 + $0x48] sm:$0xff] %vm841, %v4804
      %4891 = vst.msk [vmem:[#allocation3 + $0x50] sm:$0xff] %vm841, %v4806
      %4892 = vst.msk [vmem:[#allocation3 + $0x58] sm:$0xff] %vm841, %v4808
      %4893 = vst.msk [vmem:[#allocation3 + $0x60] sm:$0xff] %vm841, %v4810
      %4894 = vst.msk [vmem:[#allocation3 + $0x68] sm:$0xff] %vm841, %v4812
      %4895 = vst.msk [vmem:[#allocation3 + $0x70] sm:$0xff] %vm841, %v4814
      %4896 = vst.msk [vmem:[#allocation3 + $0x78] sm:$0xff] %vm841, %v4816
      %4897 = vst.msk [vmem:[#allocation3 + $0x80] sm:$0xff] %vm841, %v4818
      %4898 = vst.msk [vmem:[#allocation3 + $0x88] sm:$0xff] %vm841, %v4820
      %4899 = vst.msk [vmem:[#allocation3 + $0x90] sm:$0xff] %vm841, %v4822
      %4900 = vst.msk [vmem:[#allocation3 + $0x98] sm:$0xff] %vm841, %v4824
      %4901 = vst.msk [vmem:[#allocation3 + $0xa0] sm:$0xff] %vm841, %v4826
      %4902 = vst.msk [vmem:[#allocation3 + $0xa8] sm:$0xff] %vm841, %v4828
      %4903 = vst.msk [vmem:[#allocation3 + $0xb0] sm:$0xff] %vm841, %v4830
      %4904 = vst.msk [vmem:[#allocation3 + $0xb8] sm:$0xff] %vm841, %v4832
      %4905 = vst.msk [vmem:[#allocation3 + $0xc0] sm:$0xff] %vm841, %v4834
      %4906 = vst.msk [vmem:[#allocation3 + $0xc8] sm:$0xff] %vm841, %v4836
      %4907 = vst.msk [vmem:[#allocation3 + $0xd0] sm:$0xff] %vm841, %v4838
      %4908 = vst.msk [vmem:[#allocation3 + $0xd8] sm:$0xff] %vm841, %v4840
      %4909 = vst.msk [vmem:[#allocation3 + $0xe0] sm:$0xff] %vm841, %v4842
      %4910 = vst.msk [vmem:[#allocation3 + $0xe8] sm:$0xff] %vm841, %v4844
      %4911 = vst.msk [vmem:[#allocation3 + $0xf0] sm:$0xff] %vm841, %v4846
      %4912 = vst.msk [vmem:[#allocation3 + $0xf8] sm:$0xff] %vm841, %v4848
      %4915 = vrot.lane.b32.xlu0 %v4366, 18
      %v4916 = vpop.permute.xlu0 %4915
      %4917 = vrot.lane.b32.xlu0 %v4367, 18
      %v4918 = vpop.permute.xlu0 %4917
      %4919 = vrot.lane.b32.xlu0 %v4369, 18
      %v4920 = vpop.permute.xlu0 %4919
      %4921 = vrot.lane.b32.xlu0 %v4370, 18
      %v4922 = vpop.permute.xlu0 %4921
      %4923 = vrot.lane.b32.xlu0 %v4372, 18
      %v4924 = vpop.permute.xlu0 %4923
      %4925 = vrot.lane.b32.xlu0 %v4373, 18
      %v4926 = vpop.permute.xlu0 %4925
      %4927 = vrot.lane.b32.xlu0 %v4375, 18
      %v4928 = vpop.permute.xlu0 %4927
      %4929 = vrot.lane.b32.xlu0 %v4376, 18
      %v4930 = vpop.permute.xlu0 %4929
      %4931 = vrot.lane.b32.xlu0 %v4378, 18
      %v4932 = vpop.permute.xlu0 %4931
      %4933 = vrot.lane.b32.xlu0 %v4379, 18
      %v4934 = vpop.permute.xlu0 %4933
      %4935 = vrot.lane.b32.xlu0 %v4381, 18
      %v4936 = vpop.permute.xlu0 %4935
      %4937 = vrot.lane.b32.xlu0 %v4382, 18
      %v4938 = vpop.permute.xlu0 %4937
      %4939 = vrot.lane.b32.xlu0 %v4384, 18
      %v4940 = vpop.permute.xlu0 %4939
      %4941 = vrot.lane.b32.xlu0 %v4385, 18
      %v4942 = vpop.permute.xlu0 %4941
      %4943 = vrot.lane.b32.xlu0 %v4387, 18
      %v4944 = vpop.permute.xlu0 %4943
      %4945 = vrot.lane.b32.xlu0 %v4388, 18
      %v4946 = vpop.permute.xlu0 %4945
      %4947 = vrot.lane.b32.xlu0 %v4390, 18
      %v4948 = vpop.permute.xlu0 %4947
      %4949 = vrot.lane.b32.xlu0 %v4391, 18
      %v4950 = vpop.permute.xlu0 %4949
      %4951 = vrot.lane.b32.xlu0 %v4393, 18
      %v4952 = vpop.permute.xlu0 %4951
      %4953 = vrot.lane.b32.xlu0 %v4394, 18
      %v4954 = vpop.permute.xlu0 %4953
      %4955 = vrot.lane.b32.xlu0 %v4396, 18
      %v4956 = vpop.permute.xlu0 %4955
      %4957 = vrot.lane.b32.xlu0 %v4397, 18
      %v4958 = vpop.permute.xlu0 %4957
      %4959 = vrot.lane.b32.xlu0 %v4399, 18
      %v4960 = vpop.permute.xlu0 %4959
      %4961 = vrot.lane.b32.xlu0 %v4400, 18
      %v4962 = vpop.permute.xlu0 %4961
      %4963 = vrot.lane.b32.xlu0 %v4402, 18
      %v4964 = vpop.permute.xlu0 %4963
      %4965 = vrot.lane.b32.xlu0 %v4403, 18
      %v4966 = vpop.permute.xlu0 %4965
      %4967 = vrot.lane.b32.xlu0 %v4405, 18
      %v4968 = vpop.permute.xlu0 %4967
      %4969 = vrot.lane.b32.xlu0 %v4406, 18
      %v4970 = vpop.permute.xlu0 %4969
      %4971 = vrot.lane.b32.xlu0 %v4408, 18
      %v4972 = vpop.permute.xlu0 %4971
      %4973 = vrot.lane.b32.xlu0 %v4409, 18
      %v4974 = vpop.permute.xlu0 %4973
      %4975 = vrot.lane.b32.xlu0 %v4411, 18
      %v4976 = vpop.permute.xlu0 %4975
      %4977 = vrot.lane.b32.xlu0 %v4412, 18
      %v4978 = vpop.permute.xlu0 %4977
      %5011 = vst.msk [vmem:[#allocation3] sm:$0xff] %vm972, %v4916
      %5012 = vst.msk [vmem:[#allocation3 + $0x8] sm:$0xff] %vm972, %v4918
      %5013 = vst.msk [vmem:[#allocation3 + $0x10] sm:$0xff] %vm972, %v4920
      %5014 = vst.msk [vmem:[#allocation3 + $0x18] sm:$0xff] %vm972, %v4922
      %5015 = vst.msk [vmem:[#allocation3 + $0x20] sm:$0xff] %vm972, %v4924
      %5016 = vst.msk [vmem:[#allocation3 + $0x28] sm:$0xff] %vm972, %v4926
      %5017 = vst.msk [vmem:[#allocation3 + $0x30] sm:$0xff] %vm972, %v4928
      %5018 = vst.msk [vmem:[#allocation3 + $0x38] sm:$0xff] %vm972, %v4930
      %5019 = vst.msk [vmem:[#allocation3 + $0x40] sm:$0xff] %vm972, %v4932
      %5020 = vst.msk [vmem:[#allocation3 + $0x48] sm:$0xff] %vm972, %v4934
      %5021 = vst.msk [vmem:[#allocation3 + $0x50] sm:$0xff] %vm972, %v4936
      %5022 = vst.msk [vmem:[#allocation3 + $0x58] sm:$0xff] %vm972, %v4938
      %5023 = vst.msk [vmem:[#allocation3 + $0x60] sm:$0xff] %vm972, %v4940
      %5024 = vst.msk [vmem:[#allocation3 + $0x68] sm:$0xff] %vm972, %v4942
      %5025 = vst.msk [vmem:[#allocation3 + $0x70] sm:$0xff] %vm972, %v4944
      %5026 = vst.msk [vmem:[#allocation3 + $0x78] sm:$0xff] %vm972, %v4946
      %5027 = vst.msk [vmem:[#allocation3 + $0x80] sm:$0xff] %vm972, %v4948
      %5028 = vst.msk [vmem:[#allocation3 + $0x88] sm:$0xff] %vm972, %v4950
      %5029 = vst.msk [vmem:[#allocation3 + $0x90] sm:$0xff] %vm972, %v4952
      %5030 = vst.msk [vmem:[#allocation3 + $0x98] sm:$0xff] %vm972, %v4954
      %5031 = vst.msk [vmem:[#allocation3 + $0xa0] sm:$0xff] %vm972, %v4956
      %5032 = vst.msk [vmem:[#allocation3 + $0xa8] sm:$0xff] %vm972, %v4958
      %5033 = vst.msk [vmem:[#allocation3 + $0xb0] sm:$0xff] %vm972, %v4960
      %5034 = vst.msk [vmem:[#allocation3 + $0xb8] sm:$0xff] %vm972, %v4962
      %5035 = vst.msk [vmem:[#allocation3 + $0xc0] sm:$0xff] %vm972, %v4964
      %5036 = vst.msk [vmem:[#allocation3 + $0xc8] sm:$0xff] %vm972, %v4966
      %5037 = vst.msk [vmem:[#allocation3 + $0xd0] sm:$0xff] %vm972, %v4968
      %5038 = vst.msk [vmem:[#allocation3 + $0xd8] sm:$0xff] %vm972, %v4970
      %5039 = vst.msk [vmem:[#allocation3 + $0xe0] sm:$0xff] %vm972, %v4972
      %5040 = vst.msk [vmem:[#allocation3 + $0xe8] sm:$0xff] %vm972, %v4974
      %5041 = vst.msk [vmem:[#allocation3 + $0xf0] sm:$0xff] %vm972, %v4976
      %5042 = vst.msk [vmem:[#allocation3 + $0xf8] sm:$0xff] %vm972, %v4978
      %v5044 = vrot.slane %v4411, 1
      %v5045 = vrot.slane %v4412, 1
      %v5046 = vsel %vm454, %v5044, %v5045
      %v5047 = vrot.slane %v4413, 1
      %v5048 = vsel %vm454, %v5045, %v5047
      %5049 = vrot.lane.b32.xlu0 %v4504, 24
      %v5050 = vpop.permute.xlu0 %5049
      %5051 = vrot.lane.b32.xlu0 %v4506, 24
      %v5052 = vpop.permute.xlu0 %5051
      %5053 = vrot.lane.b32.xlu0 %v4509, 24
      %v5054 = vpop.permute.xlu0 %5053
      %5055 = vrot.lane.b32.xlu0 %v4511, 24
      %v5056 = vpop.permute.xlu0 %5055
      %5057 = vrot.lane.b32.xlu0 %v4514, 24
      %v5058 = vpop.permute.xlu0 %5057
      %5059 = vrot.lane.b32.xlu0 %v4516, 24
      %v5060 = vpop.permute.xlu0 %5059
      %5061 = vrot.lane.b32.xlu0 %v4519, 24
      %v5062 = vpop.permute.xlu0 %5061
      %5063 = vrot.lane.b32.xlu0 %v4521, 24
      %v5064 = vpop.permute.xlu0 %5063
      %5065 = vrot.lane.b32.xlu0 %v4524, 24
      %v5066 = vpop.permute.xlu0 %5065
      %5067 = vrot.lane.b32.xlu0 %v4526, 24
      %v5068 = vpop.permute.xlu0 %5067
      %5069 = vrot.lane.b32.xlu0 %v4529, 24
      %v5070 = vpop.permute.xlu0 %5069
      %5071 = vrot.lane.b32.xlu0 %v4531, 24
      %v5072 = vpop.permute.xlu0 %5071
      %5073 = vrot.lane.b32.xlu0 %v4534, 24
      %v5074 = vpop.permute.xlu0 %5073
      %5075 = vrot.lane.b32.xlu0 %v4536, 24
      %v5076 = vpop.permute.xlu0 %5075
      %5077 = vrot.lane.b32.xlu0 %v4539, 24
      %v5078 = vpop.permute.xlu0 %5077
      %5079 = vrot.lane.b32.xlu0 %v4541, 24
      %v5080 = vpop.permute.xlu0 %5079
      %5081 = vrot.lane.b32.xlu0 %v4544, 24
      %v5082 = vpop.permute.xlu0 %5081
      %5083 = vrot.lane.b32.xlu0 %v4546, 24
      %v5084 = vpop.permute.xlu0 %5083
      %5085 = vrot.lane.b32.xlu0 %v4549, 24
      %v5086 = vpop.permute.xlu0 %5085
      %5087 = vrot.lane.b32.xlu0 %v4551, 24
      %v5088 = vpop.permute.xlu0 %5087
      %5089 = vrot.lane.b32.xlu0 %v4554, 24
      %v5090 = vpop.permute.xlu0 %5089
      %5091 = vrot.lane.b32.xlu0 %v4556, 24
      %v5092 = vpop.permute.xlu0 %5091
      %5093 = vrot.lane.b32.xlu0 %v4559, 24
      %v5094 = vpop.permute.xlu0 %5093
      %5095 = vrot.lane.b32.xlu0 %v4561, 24
      %v5096 = vpop.permute.xlu0 %5095
      %5097 = vrot.lane.b32.xlu0 %v4564, 24
      %v5098 = vpop.permute.xlu0 %5097
      %5099 = vrot.lane.b32.xlu0 %v4566, 24
      %v5100 = vpop.permute.xlu0 %5099
      %5101 = vrot.lane.b32.xlu0 %v4569, 24
      %v5102 = vpop.permute.xlu0 %5101
      %5103 = vrot.lane.b32.xlu0 %v4571, 24
      %v5104 = vpop.permute.xlu0 %5103
      %5105 = vrot.lane.b32.xlu0 %v4574, 24
      %v5106 = vpop.permute.xlu0 %5105
      %5107 = vrot.lane.b32.xlu0 %v4576, 24
      %v5108 = vpop.permute.xlu0 %5107
      %5109 = vrot.lane.b32.xlu0 %v5046, 24
      %v5110 = vpop.permute.xlu0 %5109
      %5111 = vrot.lane.b32.xlu0 %v5048, 24
      %v5112 = vpop.permute.xlu0 %5111
      %5145 = vst.msk [vmem:[#allocation3] sm:$0xff] %vm1107, %v5050
      %5146 = vst.msk [vmem:[#allocation3 + $0x8] sm:$0xff] %vm1107, %v5052
      %5147 = vst.msk [vmem:[#allocation3 + $0x10] sm:$0xff] %vm1107, %v5054
      %5148 = vst.msk [vmem:[#allocation3 + $0x18] sm:$0xff] %vm1107, %v5056
      %5149 = vst.msk [vmem:[#allocation3 + $0x20] sm:$0xff] %vm1107, %v5058
      %5150 = vst.msk [vmem:[#allocation3 + $0x28] sm:$0xff] %vm1107, %v5060
      %5151 = vst.msk [vmem:[#allocation3 + $0x30] sm:$0xff] %vm1107, %v5062
      %5152 = vst.msk [vmem:[#allocation3 + $0x38] sm:$0xff] %vm1107, %v5064
      %5153 = vst.msk [vmem:[#allocation3 + $0x40] sm:$0xff] %vm1107, %v5066
      %5154 = vst.msk [vmem:[#allocation3 + $0x48] sm:$0xff] %vm1107, %v5068
      %5155 = vst.msk [vmem:[#allocation3 + $0x50] sm:$0xff] %vm1107, %v5070
      %5156 = vst.msk [vmem:[#allocation3 + $0x58] sm:$0xff] %vm1107, %v5072
      %5157 = vst.msk [vmem:[#allocation3 + $0x60] sm:$0xff] %vm1107, %v5074
      %5158 = vst.msk [vmem:[#allocation3 + $0x68] sm:$0xff] %vm1107, %v5076
      %5159 = vst.msk [vmem:[#allocation3 + $0x70] sm:$0xff] %vm1107, %v5078
      %5160 = vst.msk [vmem:[#allocation3 + $0x78] sm:$0xff] %vm1107, %v5080
      %5161 = vst.msk [vmem:[#allocation3 + $0x80] sm:$0xff] %vm1107, %v5082
      %5162 = vst.msk [vmem:[#allocation3 + $0x88] sm:$0xff] %vm1107, %v5084
      %5163 = vst.msk [vmem:[#allocation3 + $0x90] sm:$0xff] %vm1107, %v5086
      %5164 = vst.msk [vmem:[#allocation3 + $0x98] sm:$0xff] %vm1107, %v5088
      %5165 = vst.msk [vmem:[#allocation3 + $0xa0] sm:$0xff] %vm1107, %v5090
      %5166 = vst.msk [vmem:[#allocation3 + $0xa8] sm:$0xff] %vm1107, %v5092
      %5167 = vst.msk [vmem:[#allocation3 + $0xb0] sm:$0xff] %vm1107, %v5094
      %5168 = vst.msk [vmem:[#allocation3 + $0xb8] sm:$0xff] %vm1107, %v5096
      %5169 = vst.msk [vmem:[#allocation3 + $0xc0] sm:$0xff] %vm1107, %v5098
      %5170 = vst.msk [vmem:[#allocation3 + $0xc8] sm:$0xff] %vm1107, %v5100
      %5171 = vst.msk [vmem:[#allocation3 + $0xd0] sm:$0xff] %vm1107, %v5102
      %5172 = vst.msk [vmem:[#allocation3 + $0xd8] sm:$0xff] %vm1107, %v5104
      %5173 = vst.msk [vmem:[#allocation3 + $0xe0] sm:$0xff] %vm1107, %v5106
      %5174 = vst.msk [vmem:[#allocation3 + $0xe8] sm:$0xff] %vm1107, %v5108
      %5175 = vst.msk [vmem:[#allocation3 + $0xf0] sm:$0xff] %vm1107, %v5110
      %5176 = vst.msk [vmem:[#allocation3 + $0xf8] sm:$0xff] %vm1107, %v5112
      %v5177 = vrot.slane %v4411, 2
      %v5178 = vrot.slane %v4412, 2
      %v5179 = vsel %vm664, %v5177, %v5178
      %v5180 = vrot.slane %v4413, 2
      %v5181 = vsel %vm664, %v5178, %v5180
      %5182 = vrot.lane.b32.xlu0 %v4712, 30
      %v5183 = vpop.permute.xlu0 %5182
      %5184 = vrot.lane.b32.xlu0 %v4714, 30
      %v5185 = vpop.permute.xlu0 %5184
      %5186 = vrot.lane.b32.xlu0 %v4717, 30
      %v5187 = vpop.permute.xlu0 %5186
      %5188 = vrot.lane.b32.xlu0 %v4719, 30
      %v5189 = vpop.permute.xlu0 %5188
      %5190 = vrot.lane.b32.xlu0 %v4722, 30
      %v5191 = vpop.permute.xlu0 %5190
      %5192 = vrot.lane.b32.xlu0 %v4724, 30
      %v5193 = vpop.permute.xlu0 %5192
      %5194 = vrot.lane.b32.xlu0 %v4727, 30
      %v5195 = vpop.permute.xlu0 %5194
      %5196 = vrot.lane.b32.xlu0 %v4729, 30
      %v5197 = vpop.permute.xlu0 %5196
      %5198 = vrot.lane.b32.xlu0 %v4732, 30
      %v5199 = vpop.permute.xlu0 %5198
      %5200 = vrot.lane.b32.xlu0 %v4734, 30
      %v5201 = vpop.permute.xlu0 %5200
      %5202 = vrot.lane.b32.xlu0 %v4737, 30
      %v5203 = vpop.permute.xlu0 %5202
      %5204 = vrot.lane.b32.xlu0 %v4739, 30
      %v5205 = vpop.permute.xlu0 %5204
      %5206 = vrot.lane.b32.xlu0 %v4742, 30
      %v5207 = vpop.permute.xlu0 %5206
      %5208 = vrot.lane.b32.xlu0 %v4744, 30
      %v5209 = vpop.permute.xlu0 %5208
      %5210 = vrot.lane.b32.xlu0 %v4747, 30
      %v5211 = vpop.permute.xlu0 %5210
      %5212 = vrot.lane.b32.xlu0 %v4749, 30
      %v5213 = vpop.permute.xlu0 %5212
      %5214 = vrot.lane.b32.xlu0 %v4752, 30
      %v5215 = vpop.permute.xlu0 %5214
      %5216 = vrot.lane.b32.xlu0 %v4754, 30
      %v5217 = vpop.permute.xlu0 %5216
      %5218 = vrot.lane.b32.xlu0 %v4757, 30
      %v5219 = vpop.permute.xlu0 %5218
      %5220 = vrot.lane.b32.xlu0 %v4759, 30
      %v5221 = vpop.permute.xlu0 %5220
      %5222 = vrot.lane.b32.xlu0 %v4762, 30
      %v5223 = vpop.permute.xlu0 %5222
      %5224 = vrot.lane.b32.xlu0 %v4764, 30
      %v5225 = vpop.permute.xlu0 %5224
      %5226 = vrot.lane.b32.xlu0 %v4767, 30
      %v5227 = vpop.permute.xlu0 %5226
      %5228 = vrot.lane.b32.xlu0 %v4769, 30
      %v5229 = vpop.permute.xlu0 %5228
      %5230 = vrot.lane.b32.xlu0 %v4772, 30
      %v5231 = vpop.permute.xlu0 %5230
      %5232 = vrot.lane.b32.xlu0 %v4774, 30
      %v5233 = vpop.permute.xlu0 %5232
      %5234 = vrot.lane.b32.xlu0 %v4777, 30
      %v5235 = vpop.permute.xlu0 %5234
      %5236 = vrot.lane.b32.xlu0 %v4779, 30
      %v5237 = vpop.permute.xlu0 %5236
      %5238 = vrot.lane.b32.xlu0 %v4782, 30
      %v5239 = vpop.permute.xlu0 %5238
      %5240 = vrot.lane.b32.xlu0 %v4784, 30
      %v5241 = vpop.permute.xlu0 %5240
      %5242 = vrot.lane.b32.xlu0 %v5179, 30
      %v5243 = vpop.permute.xlu0 %5242
      %5244 = vrot.lane.b32.xlu0 %v5181, 30
      %v5245 = vpop.permute.xlu0 %5244
      %5278 = vst.msk [vmem:[#allocation3] sm:$0xff] %vm1241, %v5183
      %5279 = vst.msk [vmem:[#allocation3 + $0x8] sm:$0xff] %vm1241, %v5185
      %5280 = vst.msk [vmem:[#allocation3 + $0x10] sm:$0xff] %vm1241, %v5187
      %5281 = vst.msk [vmem:[#allocation3 + $0x18] sm:$0xff] %vm1241, %v5189
      %5282 = vst.msk [vmem:[#allocation3 + $0x20] sm:$0xff] %vm1241, %v5191
      %5283 = vst.msk [vmem:[#allocation3 + $0x28] sm:$0xff] %vm1241, %v5193
      %5284 = vst.msk [vmem:[#allocation3 + $0x30] sm:$0xff] %vm1241, %v5195
      %5285 = vst.msk [vmem:[#allocation3 + $0x38] sm:$0xff] %vm1241, %v5197
      %5286 = vst.msk [vmem:[#allocation3 + $0x40] sm:$0xff] %vm1241, %v5199
      %5287 = vst.msk [vmem:[#allocation3 + $0x48] sm:$0xff] %vm1241, %v5201
      %5288 = vst.msk [vmem:[#allocation3 + $0x50] sm:$0xff] %vm1241, %v5203
      %5289 = vst.msk [vmem:[#allocation3 + $0x58] sm:$0xff] %vm1241, %v5205
      %5290 = vst.msk [vmem:[#allocation3 + $0x60] sm:$0xff] %vm1241, %v5207
      %5291 = vst.msk [vmem:[#allocation3 + $0x68] sm:$0xff] %vm1241, %v5209
      %5292 = vst.msk [vmem:[#allocation3 + $0x70] sm:$0xff] %vm1241, %v5211
      %5293 = vst.msk [vmem:[#allocation3 + $0x78] sm:$0xff] %vm1241, %v5213
      %5294 = vst.msk [vmem:[#allocation3 + $0x80] sm:$0xff] %vm1241, %v5215
      %5295 = vst.msk [vmem:[#allocation3 + $0x88] sm:$0xff] %vm1241, %v5217
      %5296 = vst.msk [vmem:[#allocation3 + $0x90] sm:$0xff] %vm1241, %v5219
      %5297 = vst.msk [vmem:[#allocation3 + $0x98] sm:$0xff] %vm1241, %v5221
      %5298 = vst.msk [vmem:[#allocation3 + $0xa0] sm:$0xff] %vm1241, %v5223
      %5299 = vst.msk [vmem:[#allocation3 + $0xa8] sm:$0xff] %vm1241, %v5225
      %5300 = vst.msk [vmem:[#allocation3 + $0xb0] sm:$0xff] %vm1241, %v5227
      %5301 = vst.msk [vmem:[#allocation3 + $0xb8] sm:$0xff] %vm1241, %v5229
      %5302 = vst.msk [vmem:[#allocation3 + $0xc0] sm:$0xff] %vm1241, %v5231
      %5303 = vst.msk [vmem:[#allocation3 + $0xc8] sm:$0xff] %vm1241, %v5233
      %5304 = vst.msk [vmem:[#allocation3 + $0xd0] sm:$0xff] %vm1241, %v5235
      %5305 = vst.msk [vmem:[#allocation3 + $0xd8] sm:$0xff] %vm1241, %v5237
      %5306 = vst.msk [vmem:[#allocation3 + $0xe0] sm:$0xff] %vm1241, %v5239
      %5307 = vst.msk [vmem:[#allocation3 + $0xe8] sm:$0xff] %vm1241, %v5241
      %5308 = vst.msk [vmem:[#allocation3 + $0xf0] sm:$0xff] %vm1241, %v5243
      %5309 = vst.msk [vmem:[#allocation3 + $0xf8] sm:$0xff] %vm1241, %v5245
      %5312 = vrot.lane.b32.xlu0 %v4369, 36
      %v5313 = vpop.permute.xlu0 %5312
      %5314 = vrot.lane.b32.xlu0 %v4370, 36
      %v5315 = vpop.permute.xlu0 %5314
      %5316 = vrot.lane.b32.xlu0 %v4372, 36
      %v5317 = vpop.permute.xlu0 %5316
      %5318 = vrot.lane.b32.xlu0 %v4373, 36
      %v5319 = vpop.permute.xlu0 %5318
      %5320 = vrot.lane.b32.xlu0 %v4375, 36
      %v5321 = vpop.permute.xlu0 %5320
      %5322 = vrot.lane.b32.xlu0 %v4376, 36
      %v5323 = vpop.permute.xlu0 %5322
      %5324 = vrot.lane.b32.xlu0 %v4378, 36
      %v5325 = vpop.permute.xlu0 %5324
      %5326 = vrot.lane.b32.xlu0 %v4379, 36
      %v5327 = vpop.permute.xlu0 %5326
      %5328 = vrot.lane.b32.xlu0 %v4381, 36
      %v5329 = vpop.permute.xlu0 %5328
      %5330 = vrot.lane.b32.xlu0 %v4382, 36
      %v5331 = vpop.permute.xlu0 %5330
      %5332 = vrot.lane.b32.xlu0 %v4384, 36
      %v5333 = vpop.permute.xlu0 %5332
      %5334 = vrot.lane.b32.xlu0 %v4385, 36
      %v5335 = vpop.permute.xlu0 %5334
      %5336 = vrot.lane.b32.xlu0 %v4387, 36
      %v5337 = vpop.permute.xlu0 %5336
      %5338 = vrot.lane.b32.xlu0 %v4388, 36
      %v5339 = vpop.permute.xlu0 %5338
      %5340 = vrot.lane.b32.xlu0 %v4390, 36
      %v5341 = vpop.permute.xlu0 %5340
      %5342 = vrot.lane.b32.xlu0 %v4391, 36
      %v5343 = vpop.permute.xlu0 %5342
      %5344 = vrot.lane.b32.xlu0 %v4393, 36
      %v5345 = vpop.permute.xlu0 %5344
      %5346 = vrot.lane.b32.xlu0 %v4394, 36
      %v5347 = vpop.permute.xlu0 %5346
      %5348 = vrot.lane.b32.xlu0 %v4396, 36
      %v5349 = vpop.permute.xlu0 %5348
      %5350 = vrot.lane.b32.xlu0 %v4397, 36
      %v5351 = vpop.permute.xlu0 %5350
      %5352 = vrot.lane.b32.xlu0 %v4399, 36
      %v5353 = vpop.permute.xlu0 %5352
      %5354 = vrot.lane.b32.xlu0 %v4400, 36
      %v5355 = vpop.permute.xlu0 %5354
      %5356 = vrot.lane.b32.xlu0 %v4402, 36
      %v5357 = vpop.permute.xlu0 %5356
      %5358 = vrot.lane.b32.xlu0 %v4403, 36
      %v5359 = vpop.permute.xlu0 %5358
      %5360 = vrot.lane.b32.xlu0 %v4405, 36
      %v5361 = vpop.permute.xlu0 %5360
      %5362 = vrot.lane.b32.xlu0 %v4406, 36
      %v5363 = vpop.permute.xlu0 %5362
      %5364 = vrot.lane.b32.xlu0 %v4408, 36
      %v5365 = vpop.permute.xlu0 %5364
      %5366 = vrot.lane.b32.xlu0 %v4409, 36
      %v5367 = vpop.permute.xlu0 %5366
      %5368 = vrot.lane.b32.xlu0 %v4411, 36
      %v5369 = vpop.permute.xlu0 %5368
      %5370 = vrot.lane.b32.xlu0 %v4412, 36
      %v5371 = vpop.permute.xlu0 %5370
      %5372 = vrot.lane.b32.xlu0 %v4414, 36
      %v5373 = vpop.permute.xlu0 %5372
      %5374 = vrot.lane.b32.xlu0 %v4415, 36
      %v5375 = vpop.permute.xlu0 %5374
      %5408 = vst.msk [vmem:[#allocation3] sm:$0xff] %vm1372, %v5313
      %5409 = vst.msk [vmem:[#allocation3 + $0x8] sm:$0xff] %vm1372, %v5315
      %5410 = vst.msk [vmem:[#allocation3 + $0x10] sm:$0xff] %vm1372, %v5317
      %5411 = vst.msk [vmem:[#allocation3 + $0x18] sm:$0xff] %vm1372, %v5319
      %5412 = vst.msk [vmem:[#allocation3 + $0x20] sm:$0xff] %vm1372, %v5321
      %5413 = vst.msk [vmem:[#allocation3 + $0x28] sm:$0xff] %vm1372, %v5323
      %5414 = vst.msk [vmem:[#allocation3 + $0x30] sm:$0xff] %vm1372, %v5325
      %5415 = vst.msk [vmem:[#allocation3 + $0x38] sm:$0xff] %vm1372, %v5327
      %5416 = vst.msk [vmem:[#allocation3 + $0x40] sm:$0xff] %vm1372, %v5329
      %5417 = vst.msk [vmem:[#allocation3 + $0x48] sm:$0xff] %vm1372, %v5331
      %5418 = vst.msk [vmem:[#allocation3 + $0x50] sm:$0xff] %vm1372, %v5333
      %5419 = vst.msk [vmem:[#allocation3 + $0x58] sm:$0xff] %vm1372, %v5335
      %5420 = vst.msk [vmem:[#allocation3 + $0x60] sm:$0xff] %vm1372, %v5337
      %5421 = vst.msk [vmem:[#allocation3 + $0x68] sm:$0xff] %vm1372, %v5339
      %5422 = vst.msk [vmem:[#allocation3 + $0x70] sm:$0xff] %vm1372, %v5341
      %5423 = vst.msk [vmem:[#allocation3 + $0x78] sm:$0xff] %vm1372, %v5343
      %5424 = vst.msk [vmem:[#allocation3 + $0x80] sm:$0xff] %vm1372, %v5345
      %5425 = vst.msk [vmem:[#allocation3 + $0x88] sm:$0xff] %vm1372, %v5347
      %5426 = vst.msk [vmem:[#allocation3 + $0x90] sm:$0xff] %vm1372, %v5349
      %5427 = vst.msk [vmem:[#allocation3 + $0x98] sm:$0xff] %vm1372, %v5351
      %5428 = vst.msk [vmem:[#allocation3 + $0xa0] sm:$0xff] %vm1372, %v5353
      %5429 = vst.msk [vmem:[#allocation3 + $0xa8] sm:$0xff] %vm1372, %v5355
      %5430 = vst.msk [vmem:[#allocation3 + $0xb0] sm:$0xff] %vm1372, %v5357
      %5431 = vst.msk [vmem:[#allocation3 + $0xb8] sm:$0xff] %vm1372, %v5359
      %5432 = vst.msk [vmem:[#allocation3 + $0xc0] sm:$0xff] %vm1372, %v5361
      %5433 = vst.msk [vmem:[#allocation3 + $0xc8] sm:$0xff] %vm1372, %v5363
      %5434 = vst.msk [vmem:[#allocation3 + $0xd0] sm:$0xff] %vm1372, %v5365
      %5435 = vst.msk [vmem:[#allocation3 + $0xd8] sm:$0xff] %vm1372, %v5367
      %5436 = vst.msk [vmem:[#allocation3 + $0xe0] sm:$0xff] %vm1372, %v5369
      %5437 = vst.msk [vmem:[#allocation3 + $0xe8] sm:$0xff] %vm1372, %v5371
      %5438 = vst.msk [vmem:[#allocation3 + $0xf0] sm:$0xff] %vm1372, %v5373
      %5439 = vst.msk [vmem:[#allocation3 + $0xf8] sm:$0xff] %vm1372, %v5375
      %v5441 = vrot.slane %v4414, 1
      %v5442 = vrot.slane %v4415, 1
      %v5443 = vsel %vm454, %v5441, %v5442
      %v5444 = vrot.slane %v4416, 1
      %v5445 = vsel %vm454, %v5442, %v5444
      %5446 = vrot.lane.b32.xlu0 %v4509, 42
      %v5447 = vpop.permute.xlu0 %5446
      %5448 = vrot.lane.b32.xlu0 %v4511, 42
      %v5449 = vpop.permute.xlu0 %5448
      %5450 = vrot.lane.b32.xlu0 %v4514, 42
      %v5451 = vpop.permute.xlu0 %5450
      %5452 = vrot.lane.b32.xlu0 %v4516, 42
      %v5453 = vpop.permute.xlu0 %5452
      %5454 = vrot.lane.b32.xlu0 %v4519, 42
      %v5455 = vpop.permute.xlu0 %5454
      %5456 = vrot.lane.b32.xlu0 %v4521, 42
      %v5457 = vpop.permute.xlu0 %5456
      %5458 = vrot.lane.b32.xlu0 %v4524, 42
      %v5459 = vpop.permute.xlu0 %5458
      %5460 = vrot.lane.b32.xlu0 %v4526, 42
      %v5461 = vpop.permute.xlu0 %5460
      %5462 = vrot.lane.b32.xlu0 %v4529, 42
      %v5463 = vpop.permute.xlu0 %5462
      %5464 = vrot.lane.b32.xlu0 %v4531, 42
      %v5465 = vpop.permute.xlu0 %5464
      %5466 = vrot.lane.b32.xlu0 %v4534, 42
      %v5467 = vpop.permute.xlu0 %5466
      %5468 = vrot.lane.b32.xlu0 %v4536, 42
      %v5469 = vpop.permute.xlu0 %5468
      %5470 = vrot.lane.b32.xlu0 %v4539, 42
      %v5471 = vpop.permute.xlu0 %5470
      %5472 = vrot.lane.b32.xlu0 %v4541, 42
      %v5473 = vpop.permute.xlu0 %5472
      %5474 = vrot.lane.b32.xlu0 %v4544, 42
      %v5475 = vpop.permute.xlu0 %5474
      %5476 = vrot.lane.b32.xlu0 %v4546, 42
      %v5477 = vpop.permute.xlu0 %5476
      %5478 = vrot.lane.b32.xlu0 %v4549, 42
      %v5479 = vpop.permute.xlu0 %5478
      %5480 = vrot.lane.b32.xlu0 %v4551, 42
      %v5481 = vpop.permute.xlu0 %5480
      %5482 = vrot.lane.b32.xlu0 %v4554, 42
      %v5483 = vpop.permute.xlu0 %5482
      %5484 = vrot.lane.b32.xlu0 %v4556, 42
      %v5485 = vpop.permute.xlu0 %5484
      %5486 = vrot.lane.b32.xlu0 %v4559, 42
      %v5487 = vpop.permute.xlu0 %5486
      %5488 = vrot.lane.b32.xlu0 %v4561, 42
      %v5489 = vpop.permute.xlu0 %5488
      %5490 = vrot.lane.b32.xlu0 %v4564, 42
      %v5491 = vpop.permute.xlu0 %5490
      %5492 = vrot.lane.b32.xlu0 %v4566, 42
      %v5493 = vpop.permute.xlu0 %5492
      %5494 = vrot.lane.b32.xlu0 %v4569, 42
      %v5495 = vpop.permute.xlu0 %5494
      %5496 = vrot.lane.b32.xlu0 %v4571, 42
      %v5497 = vpop.permute.xlu0 %5496
      %5498 = vrot.lane.b32.xlu0 %v4574, 42
      %v5499 = vpop.permute.xlu0 %5498
      %5500 = vrot.lane.b32.xlu0 %v4576, 42
      %v5501 = vpop.permute.xlu0 %5500
      %5502 = vrot.lane.b32.xlu0 %v5046, 42
      %v5503 = vpop.permute.xlu0 %5502
      %5504 = vrot.lane.b32.xlu0 %v5048, 42
      %v5505 = vpop.permute.xlu0 %5504
      %5506 = vrot.lane.b32.xlu0 %v5443, 42
      %v5507 = vpop.permute.xlu0 %5506
      %5508 = vrot.lane.b32.xlu0 %v5445, 42
      %v5509 = vpop.permute.xlu0 %5508
      %5542 = vst.msk [vmem:[#allocation3] sm:$0xff] %vm1507, %v5447
      %5543 = vst.msk [vmem:[#allocation3 + $0x8] sm:$0xff] %vm1507, %v5449
      %5544 = vst.msk [vmem:[#allocation3 + $0x10] sm:$0xff] %vm1507, %v5451
      %5545 = vst.msk [vmem:[#allocation3 + $0x18] sm:$0xff] %vm1507, %v5453
      %5546 = vst.msk [vmem:[#allocation3 + $0x20] sm:$0xff] %vm1507, %v5455
      %5547 = vst.msk [vmem:[#allocation3 + $0x28] sm:$0xff] %vm1507, %v5457
      %5548 = vst.msk [vmem:[#allocation3 + $0x30] sm:$0xff] %vm1507, %v5459
      %5549 = vst.msk [vmem:[#allocation3 + $0x38] sm:$0xff] %vm1507, %v5461
      %5550 = vst.msk [vmem:[#allocation3 + $0x40] sm:$0xff] %vm1507, %v5463
      %5551 = vst.msk [vmem:[#allocation3 + $0x48] sm:$0xff] %vm1507, %v5465
      %5552 = vst.msk [vmem:[#allocation3 + $0x50] sm:$0xff] %vm1507, %v5467
      %5553 = vst.msk [vmem:[#allocation3 + $0x58] sm:$0xff] %vm1507, %v5469
      %5554 = vst.msk [vmem:[#allocation3 + $0x60] sm:$0xff] %vm1507, %v5471
      %5555 = vst.msk [vmem:[#allocation3 + $0x68] sm:$0xff] %vm1507, %v5473
      %5556 = vst.msk [vmem:[#allocation3 + $0x70] sm:$0xff] %vm1507, %v5475
      %5557 = vst.msk [vmem:[#allocation3 + $0x78] sm:$0xff] %vm1507, %v5477
      %5558 = vst.msk [vmem:[#allocation3 + $0x80] sm:$0xff] %vm1507, %v5479
      %5559 = vst.msk [vmem:[#allocation3 + $0x88] sm:$0xff] %vm1507, %v5481
      %5560 = vst.msk [vmem:[#allocation3 + $0x90] sm:$0xff] %vm1507, %v5483
      %5561 = vst.msk [vmem:[#allocation3 + $0x98] sm:$0xff] %vm1507, %v5485
      %5562 = vst.msk [vmem:[#allocation3 + $0xa0] sm:$0xff] %vm1507, %v5487
      %5563 = vst.msk [vmem:[#allocation3 + $0xa8] sm:$0xff] %vm1507, %v5489
      %5564 = vst.msk [vmem:[#allocation3 + $0xb0] sm:$0xff] %vm1507, %v5491
      %5565 = vst.msk [vmem:[#allocation3 + $0xb8] sm:$0xff] %vm1507, %v5493
      %5566 = vst.msk [vmem:[#allocation3 + $0xc0] sm:$0xff] %vm1507, %v5495
      %5567 = vst.msk [vmem:[#allocation3 + $0xc8] sm:$0xff] %vm1507, %v5497
      %5568 = vst.msk [vmem:[#allocation3 + $0xd0] sm:$0xff] %vm1507, %v5499
      %5569 = vst.msk [vmem:[#allocation3 + $0xd8] sm:$0xff] %vm1507, %v5501
      %5570 = vst.msk [vmem:[#allocation3 + $0xe0] sm:$0xff] %vm1507, %v5503
      %5571 = vst.msk [vmem:[#allocation3 + $0xe8] sm:$0xff] %vm1507, %v5505
      %5572 = vst.msk [vmem:[#allocation3 + $0xf0] sm:$0xff] %vm1507, %v5507
      %5573 = vst.msk [vmem:[#allocation3 + $0xf8] sm:$0xff] %vm1507, %v5509
      %v5574 = vrot.slane %v4414, 2
      %v5575 = vrot.slane %v4415, 2
      %v5576 = vsel %vm664, %v5574, %v5575
      %v5577 = vrot.slane %v4416, 2
      %v5578 = vsel %vm664, %v5575, %v5577
      %5579 = vrot.lane.b32.xlu0 %v4717, 48
      %v5580 = vpop.permute.xlu0 %5579
      %5581 = vrot.lane.b32.xlu0 %v4719, 48
      %v5582 = vpop.permute.xlu0 %5581
      %5583 = vrot.lane.b32.xlu0 %v4722, 48
      %v5584 = vpop.permute.xlu0 %5583
      %5585 = vrot.lane.b32.xlu0 %v4724, 48
      %v5586 = vpop.permute.xlu0 %5585
      %5587 = vrot.lane.b32.xlu0 %v4727, 48
      %v5588 = vpop.permute.xlu0 %5587
      %5589 = vrot.lane.b32.xlu0 %v4729, 48
      %v5590 = vpop.permute.xlu0 %5589
      %5591 = vrot.lane.b32.xlu0 %v4732, 48
      %v5592 = vpop.permute.xlu0 %5591
      %5593 = vrot.lane.b32.xlu0 %v4734, 48
      %v5594 = vpop.permute.xlu0 %5593
      %5595 = vrot.lane.b32.xlu0 %v4737, 48
      %v5596 = vpop.permute.xlu0 %5595
      %5597 = vrot.lane.b32.xlu0 %v4739, 48
      %v5598 = vpop.permute.xlu0 %5597
      %5599 = vrot.lane.b32.xlu0 %v4742, 48
      %v5600 = vpop.permute.xlu0 %5599
      %5601 = vrot.lane.b32.xlu0 %v4744, 48
      %v5602 = vpop.permute.xlu0 %5601
      %5603 = vrot.lane.b32.xlu0 %v4747, 48
      %v5604 = vpop.permute.xlu0 %5603
      %5605 = vrot.lane.b32.xlu0 %v4749, 48
      %v5606 = vpop.permute.xlu0 %5605
      %5607 = vrot.lane.b32.xlu0 %v4752, 48
      %v5608 = vpop.permute.xlu0 %5607
      %5609 = vrot.lane.b32.xlu0 %v4754, 48
      %v5610 = vpop.permute.xlu0 %5609
      %5611 = vrot.lane.b32.xlu0 %v4757, 48
      %v5612 = vpop.permute.xlu0 %5611
      %5613 = vrot.lane.b32.xlu0 %v4759, 48
      %v5614 = vpop.permute.xlu0 %5613
      %5615 = vrot.lane.b32.xlu0 %v4762, 48
      %v5616 = vpop.permute.xlu0 %5615
      %5617 = vrot.lane.b32.xlu0 %v4764, 48
      %v5618 = vpop.permute.xlu0 %5617
      %5619 = vrot.lane.b32.xlu0 %v4767, 48
      %v5620 = vpop.permute.xlu0 %5619
      %5621 = vrot.lane.b32.xlu0 %v4769, 48
      %v5622 = vpop.permute.xlu0 %5621
      %5623 = vrot.lane.b32.xlu0 %v4772, 48
      %v5624 = vpop.permute.xlu0 %5623
      %5625 = vrot.lane.b32.xlu0 %v4774, 48
      %v5626 = vpop.permute.xlu0 %5625
      %5627 = vrot.lane.b32.xlu0 %v4777, 48
      %v5628 = vpop.permute.xlu0 %5627
      %5629 = vrot.lane.b32.xlu0 %v4779, 48
      %v5630 = vpop.permute.xlu0 %5629
      %5631 = vrot.lane.b32.xlu0 %v4782, 48
      %v5632 = vpop.permute.xlu0 %5631
      %5633 = vrot.lane.b32.xlu0 %v4784, 48
      %v5634 = vpop.permute.xlu0 %5633
      %5635 = vrot.lane.b32.xlu0 %v5179, 48
      %v5636 = vpop.permute.xlu0 %5635
      %5637 = vrot.lane.b32.xlu0 %v5181, 48
      %v5638 = vpop.permute.xlu0 %5637
      %5639 = vrot.lane.b32.xlu0 %v5576, 48
      %v5640 = vpop.permute.xlu0 %5639
      %5641 = vrot.lane.b32.xlu0 %v5578, 48
      %v5642 = vpop.permute.xlu0 %5641
      %5675 = vst.msk [vmem:[#allocation3] sm:$0xff] %vm1641, %v5580
      %5676 = vst.msk [vmem:[#allocation3 + $0x8] sm:$0xff] %vm1641, %v5582
      %5677 = vst.msk [vmem:[#allocation3 + $0x10] sm:$0xff] %vm1641, %v5584
      %5678 = vst.msk [vmem:[#allocation3 + $0x18] sm:$0xff] %vm1641, %v5586
      %5679 = vst.msk [vmem:[#allocation3 + $0x20] sm:$0xff] %vm1641, %v5588
      %5680 = vst.msk [vmem:[#allocation3 + $0x28] sm:$0xff] %vm1641, %v5590
      %5681 = vst.msk [vmem:[#allocation3 + $0x30] sm:$0xff] %vm1641, %v5592
      %5682 = vst.msk [vmem:[#allocation3 + $0x38] sm:$0xff] %vm1641, %v5594
      %5683 = vst.msk [vmem:[#allocation3 + $0x40] sm:$0xff] %vm1641, %v5596
      %5684 = vst.msk [vmem:[#allocation3 + $0x48] sm:$0xff] %vm1641, %v5598
      %5685 = vst.msk [vmem:[#allocation3 + $0x50] sm:$0xff] %vm1641, %v5600
      %5686 = vst.msk [vmem:[#allocation3 + $0x58] sm:$0xff] %vm1641, %v5602
      %5687 = vst.msk [vmem:[#allocation3 + $0x60] sm:$0xff] %vm1641, %v5604
      %5688 = vst.msk [vmem:[#allocation3 + $0x68] sm:$0xff] %vm1641, %v5606
      %5689 = vst.msk [vmem:[#allocation3 + $0x70] sm:$0xff] %vm1641, %v5608
      %5690 = vst.msk [vmem:[#allocation3 + $0x78] sm:$0xff] %vm1641, %v5610
      %5691 = vst.msk [vmem:[#allocation3 + $0x80] sm:$0xff] %vm1641, %v5612
      %5692 = vst.msk [vmem:[#allocation3 + $0x88] sm:$0xff] %vm1641, %v5614
      %5693 = vst.msk [vmem:[#allocation3 + $0x90] sm:$0xff] %vm1641, %v5616
      %5694 = vst.msk [vmem:[#allocation3 + $0x98] sm:$0xff] %vm1641, %v5618
      %5695 = vst.msk [vmem:[#allocation3 + $0xa0] sm:$0xff] %vm1641, %v5620
      %5696 = vst.msk [vmem:[#allocation3 + $0xa8] sm:$0xff] %vm1641, %v5622
      %5697 = vst.msk [vmem:[#allocation3 + $0xb0] sm:$0xff] %vm1641, %v5624
      %5698 = vst.msk [vmem:[#allocation3 + $0xb8] sm:$0xff] %vm1641, %v5626
      %5699 = vst.msk [vmem:[#allocation3 + $0xc0] sm:$0xff] %vm1641, %v5628
      %5700 = vst.msk [vmem:[#allocation3 + $0xc8] sm:$0xff] %vm1641, %v5630
      %5701 = vst.msk [vmem:[#allocation3 + $0xd0] sm:$0xff] %vm1641, %v5632
      %5702 = vst.msk [vmem:[#allocation3 + $0xd8] sm:$0xff] %vm1641, %v5634
      %5703 = vst.msk [vmem:[#allocation3 + $0xe0] sm:$0xff] %vm1641, %v5636
      %5704 = vst.msk [vmem:[#allocation3 + $0xe8] sm:$0xff] %vm1641, %v5638
      %5705 = vst.msk [vmem:[#allocation3 + $0xf0] sm:$0xff] %vm1641, %v5640
      %5706 = vst.msk [vmem:[#allocation3 + $0xf8] sm:$0xff] %vm1641, %v5642
      %v5707 = vld [vmem:[#allocation3] sm:$0xff]
      %v5708 = vld [vmem:[#allocation3 + $0x8] sm:$0xff]
      %v5709 = vld [vmem:[#allocation3 + $0x10] sm:$0xff]
      %v5710 = vld [vmem:[#allocation3 + $0x18] sm:$0xff]
      %v5711 = vld [vmem:[#allocation3 + $0x20] sm:$0xff]
      %v5712 = vld [vmem:[#allocation3 + $0x28] sm:$0xff]
      %v5713 = vld [vmem:[#allocation3 + $0x30] sm:$0xff]
      %v5714 = vld [vmem:[#allocation3 + $0x38] sm:$0xff]
      %v5715 = vld [vmem:[#allocation3 + $0x40] sm:$0xff]
      %v5716 = vld [vmem:[#allocation3 + $0x48] sm:$0xff]
      %v5717 = vld [vmem:[#allocation3 + $0x50] sm:$0xff]
      %v5718 = vld [vmem:[#allocation3 + $0x58] sm:$0xff]
      %v5719 = vld [vmem:[#allocation3 + $0x60] sm:$0xff]
      %v5720 = vld [vmem:[#allocation3 + $0x68] sm:$0xff]
      %v5721 = vld [vmem:[#allocation3 + $0x70] sm:$0xff]
      %v5722 = vld [vmem:[#allocation3 + $0x78] sm:$0xff]
      %v5723 = vld [vmem:[#allocation3 + $0x80] sm:$0xff]
      %v5724 = vld [vmem:[#allocation3 + $0x88] sm:$0xff]
      %v5725 = vld [vmem:[#allocation3 + $0x90] sm:$0xff]
      %v5726 = vld [vmem:[#allocation3 + $0x98] sm:$0xff]
      %v5727 = vld [vmem:[#allocation3 + $0xa0] sm:$0xff]
      %v5728 = vld [vmem:[#allocation3 + $0xa8] sm:$0xff]
      %v5729 = vld [vmem:[#allocation3 + $0xb0] sm:$0xff]
      %v5730 = vld [vmem:[#allocation3 + $0xb8] sm:$0xff]
      %v5731 = vld [vmem:[#allocation3 + $0xc0] sm:$0xff]
      %v5732 = vld [vmem:[#allocation3 + $0xc8] sm:$0xff]
      %v5733 = vld [vmem:[#allocation3 + $0xd0] sm:$0xff]
      %v5734 = vld [vmem:[#allocation3 + $0xd8] sm:$0xff]
      %v5735 = vld [vmem:[#allocation3 + $0xe0] sm:$0xff]
      %v5736 = vld [vmem:[#allocation3 + $0xe8] sm:$0xff]
      %v5737 = vld [vmem:[#allocation3 + $0xf0] sm:$0xff]
      %v5738 = vld [vmem:[#allocation3 + $0xf8] sm:$0xff]
      %v5739 = vpack.c.bf16 %v5708, %v5707
      %v5740 = vpack.c.bf16 %v5710, %v5709
      %v5741 = vpack.c.bf16 %v5712, %v5711
      %v5742 = vpack.c.bf16 %v5714, %v5713
      %v5743 = vpack.c.bf16 %v5716, %v5715
      %v5744 = vpack.c.bf16 %v5718, %v5717
      %v5745 = vpack.c.bf16 %v5720, %v5719
      %v5746 = vpack.c.bf16 %v5722, %v5721
      %v5747 = vpack.c.bf16 %v5724, %v5723
      %v5748 = vpack.c.bf16 %v5726, %v5725
      %v5749 = vpack.c.bf16 %v5728, %v5727
      %v5750 = vpack.c.bf16 %v5730, %v5729
      %v5751 = vpack.c.bf16 %v5732, %v5731
      %v5752 = vpack.c.bf16 %v5734, %v5733
      %v5753 = vpack.c.bf16 %v5736, %v5735
      %v5754 = vpack.c.bf16 %v5738, %v5737
      %s5755 = scalar_lea.vmem %s1, 56
      %v5756 = vld [vmem:[%s5755] sm:$0xf]
      %v5757 = vld [vmem:[%s5755 + $0x4] sm:$0xf]
      %v5758 = vld [vmem:[%s5755 + $0x8] sm:$0xf]
      %v5759 = vld [vmem:[%s5755 + $0xc] sm:$0xf]
      %v5760 = vld [vmem:[%s5755 + $0x10] sm:$0xf]
      %v5761 = vld [vmem:[%s5755 + $0x14] sm:$0xf]
      %v5762 = vld [vmem:[%s5755 + $0x18] sm:$0x7]
      %v5770 = vunpack.c.l.b16 %v5756
      %v5771 = vunpack.c.l.b16 %v5757
      %v5772 = vunpack.c.l.b16 %v5758
      %v5773 = vunpack.c.l.b16 %v5759
      %v5774 = vunpack.c.l.b16 %v5760
      %v5775 = vunpack.c.l.b16 %v5761
      %v5776 = vunpack.c.l.b16 %v5762
      %v5777 = vpack.c.b16 %v5771, %v5770
      %v5778 = vpack.c.b16 %v5773, %v5772
      %v5779 = vpack.c.b16 %v5775, %v5774
      %v5780 = vpack.c.b16 %v5776, %v5776
      %v5785 = vsel %vm1750, %v5739, 0
      %v5788 = vsel %vm1750, %v5740, 0
      %v5791 = vsel %vm1750, %v5741, 0
      %v5794 = vsel %vm1750, %v5742, 0
      %v5797 = vsel %vm1750, %v5743, 0
      %v5800 = vsel %vm1750, %v5744, 0
      %v5803 = vsel %vm1750, %v5745, 0
      %v5806 = vsel %vm1750, %v5746, 0
      %v5809 = vsel %vm1750, %v5747, 0
      %v5812 = vsel %vm1750, %v5748, 0
      %v5815 = vsel %vm1750, %v5749, 0
      %v5818 = vsel %vm1750, %v5750, 0
      %v5821 = vsel %vm1750, %v5751, 0
      %v5824 = vsel %vm1750, %v5752, 0
      %v5827 = vsel %vm1750, %v5753, 0
      %v5830 = vsel %vm1750, %v5754, 0
      %v5833 = vsel %vm1799, %v5780, 0
      %5835 = vmatprep.subr.bf16.mxu0 0
      %5836 = vmatpush1.bf16.msra.mxu0 0
      %5837 = vmatprep.subr.bf16.mxu0 0
      %5838 = vmatpush1.bf16.msra.mxu0 0
      %5839 = vmatprep.subr.bf16.mxu0 0
      %5840 = vmatpush1.bf16.msra.mxu0 0
      %5841 = vmatprep.subr.bf16.mxu0 0
      %5842 = vmatpush1.bf16.msra.mxu0 0
      %5843 = vmatprep.subr.bf16.mxu0 0
      %5844 = vmatpush1.bf16.msra.mxu0 %v5833
      %5845 = vmatprep.subr.bf16.mxu0 0
      %5846 = vmatpush1.bf16.msra.mxu0 %v5779
      %5847 = vmatprep.subr.bf16.mxu0 0
      %5848 = vmatpush1.bf16.msra.mxu0 %v5778
      %5849 = vmatprep.subr.bf16.mxu0 0
      %5850 = vmatpush1.bf16.msra.mxu0 %v5777
      %5851 = vmatprep.subr.bf16.mxu0 0
      %5852 = vmatpush2.bf16.msra.mxu0 0
      %5853 = vmatprep.subr.bf16.mxu0 0
      %5854 = vmatpush2.bf16.msra.mxu0 0
      %5855 = vmatprep.subr.bf16.mxu0 0
      %5856 = vmatpush2.bf16.msra.mxu0 0
      %5857 = vmatprep.subr.bf16.mxu0 0
      %5858 = vmatpush2.bf16.msra.mxu0 0
      %5859 = vmatprep.subr.bf16.mxu0 0
      %5860 = vmatpush2.bf16.msra.mxu0 0
      %5861 = vmatprep.subr.bf16.mxu0 0
      %5862 = vmatpush2.bf16.msra.mxu0 0
      %5863 = vmatprep.subr.bf16.mxu0 0
      %5864 = vmatpush2.bf16.msra.mxu0 0
      %5865 = vmatprep.subr.bf16.mxu0 0
      %5866 = vmatpush2.bf16.msra.mxu0 0
      %5867 = vmatprep.mubr.bf16.mxu0 0
      %5868 = vmatmul.mubr.bf16.gmra.mxu0 %v5785
      %v5869 = vpop.f32.mrf.mxu0
      %v5870 = vadd.f32 0.0, %v5869
      %v5871 = vpop.f32.mrf.mxu0
      %v5872 = vpop.f32.mrf.mxu0
      %v5873 = vadd.f32 0.0, %v5872
      %v5874 = vpop.f32.mrf.mxu0
      %5875 = vmatprep.mubr.bf16.mxu0 0
      %5876 = vmatmul.mubr.bf16.gmra.mxu0 %v5788
      %v5877 = vpop.f32.mrf.mxu0
      %v5878 = vadd.f32 0.0, %v5877
      %v5879 = vpop.f32.mrf.mxu0
      %v5880 = vpop.f32.mrf.mxu0
      %v5881 = vadd.f32 0.0, %v5880
      %v5882 = vpop.f32.mrf.mxu0
      %5883 = vmatprep.mubr.bf16.mxu0 0
      %5884 = vmatmul.mubr.bf16.gmra.mxu0 %v5791
      %v5885 = vpop.f32.mrf.mxu0
      %v5886 = vadd.f32 0.0, %v5885
      %v5887 = vpop.f32.mrf.mxu0
      %v5888 = vpop.f32.mrf.mxu0
      %v5889 = vadd.f32 0.0, %v5888
      %v5890 = vpop.f32.mrf.mxu0
      %5891 = vmatprep.mubr.bf16.mxu0 0
      %5892 = vmatmul.mubr.bf16.gmra.mxu0 %v5794
      %v5893 = vpop.f32.mrf.mxu0
      %v5894 = vadd.f32 0.0, %v5893
      %v5895 = vpop.f32.mrf.mxu0
      %v5896 = vpop.f32.mrf.mxu0
      %v5897 = vadd.f32 0.0, %v5896
      %v5898 = vpop.f32.mrf.mxu0
      %5899 = vmatprep.mubr.bf16.mxu0 0
      %5900 = vmatmul.mubr.bf16.gmra.mxu0 %v5797
      %v5901 = vpop.f32.mrf.mxu0
      %v5902 = vadd.f32 0.0, %v5901
      %v5903 = vpop.f32.mrf.mxu0
      %v5904 = vpop.f32.mrf.mxu0
      %v5905 = vadd.f32 0.0, %v5904
      %v5906 = vpop.f32.mrf.mxu0
      %5907 = vmatprep.mubr.bf16.mxu0 0
      %5908 = vmatmul.mubr.bf16.gmra.mxu0 %v5800
      %v5909 = vpop.f32.mrf.mxu0
      %v5910 = vadd.f32 0.0, %v5909
      %v5911 = vpop.f32.mrf.mxu0
      %v5912 = vpop.f32.mrf.mxu0
      %v5913 = vadd.f32 0.0, %v5912
      %v5914 = vpop.f32.mrf.mxu0
      %5915 = vmatprep.mubr.bf16.mxu0 0
      %5916 = vmatmul.mubr.bf16.gmra.mxu0 %v5803
      %v5917 = vpop.f32.mrf.mxu0
      %v5918 = vadd.f32 0.0, %v5917
      %v5919 = vpop.f32.mrf.mxu0
      %v5920 = vpop.f32.mrf.mxu0
      %v5921 = vadd.f32 0.0, %v5920
      %v5922 = vpop.f32.mrf.mxu0
      %5923 = vmatprep.mubr.bf16.mxu0 0
      %5924 = vmatmul.mubr.bf16.gmra.mxu0 %v5806
      %v5925 = vpop.f32.mrf.mxu0
      %v5926 = vadd.f32 0.0, %v5925
      %v5927 = vpop.f32.mrf.mxu0
      %v5928 = vpop.f32.mrf.mxu0
      %v5929 = vadd.f32 0.0, %v5928
      %v5930 = vpop.f32.mrf.mxu0
      %5931 = vmatprep.mubr.bf16.mxu0 0
      %5932 = vmatmul.mubr.bf16.gmra.mxu0 %v5809
      %v5933 = vpop.f32.mrf.mxu0
      %v5934 = vadd.f32 0.0, %v5933
      %v5935 = vpop.f32.mrf.mxu0
      %v5936 = vpop.f32.mrf.mxu0
      %v5937 = vadd.f32 0.0, %v5936
      %v5938 = vpop.f32.mrf.mxu0
      %5939 = vmatprep.mubr.bf16.mxu0 0
      %5940 = vmatmul.mubr.bf16.gmra.mxu0 %v5812
      %v5941 = vpop.f32.mrf.mxu0
      %v5942 = vadd.f32 0.0, %v5941
      %v5943 = vpop.f32.mrf.mxu0
      %v5944 = vpop.f32.mrf.mxu0
      %v5945 = vadd.f32 0.0, %v5944
      %v5946 = vpop.f32.mrf.mxu0
      %5947 = vmatprep.mubr.bf16.mxu0 0
      %5948 = vmatmul.mubr.bf16.gmra.mxu0 %v5815
      %v5949 = vpop.f32.mrf.mxu0
      %v5950 = vadd.f32 0.0, %v5949
      %v5951 = vpop.f32.mrf.mxu0
      %v5952 = vpop.f32.mrf.mxu0
      %v5953 = vadd.f32 0.0, %v5952
      %v5954 = vpop.f32.mrf.mxu0
      %5955 = vmatprep.mubr.bf16.mxu0 0
      %5956 = vmatmul.mubr.bf16.gmra.mxu0 %v5818
      %v5957 = vpop.f32.mrf.mxu0
      %v5958 = vadd.f32 0.0, %v5957
      %v5959 = vpop.f32.mrf.mxu0
      %v5960 = vpop.f32.mrf.mxu0
      %v5961 = vadd.f32 0.0, %v5960
      %v5962 = vpop.f32.mrf.mxu0
      %5963 = vmatprep.mubr.bf16.mxu0 0
      %5964 = vmatmul.mubr.bf16.gmra.mxu0 %v5821
      %v5965 = vpop.f32.mrf.mxu0
      %v5966 = vadd.f32 0.0, %v5965
      %v5967 = vpop.f32.mrf.mxu0
      %v5968 = vpop.f32.mrf.mxu0
      %v5969 = vadd.f32 0.0, %v5968
      %v5970 = vpop.f32.mrf.mxu0
      %5971 = vmatprep.mubr.bf16.mxu0 0
      %5972 = vmatmul.mubr.bf16.gmra.mxu0 %v5824
      %v5973 = vpop.f32.mrf.mxu0
      %v5974 = vadd.f32 0.0, %v5973
      %v5975 = vpop.f32.mrf.mxu0
      %v5976 = vpop.f32.mrf.mxu0
      %v5977 = vadd.f32 0.0, %v5976
      %v5978 = vpop.f32.mrf.mxu0
      %5979 = vmatprep.mubr.bf16.mxu0 0
      %5980 = vmatmul.mubr.bf16.gmra.mxu0 %v5827
      %v5981 = vpop.f32.mrf.mxu0
      %v5982 = vadd.f32 0.0, %v5981
      %v5983 = vpop.f32.mrf.mxu0
      %v5984 = vpop.f32.mrf.mxu0
      %v5985 = vadd.f32 0.0, %v5984
      %v5986 = vpop.f32.mrf.mxu0
      %5987 = vmatprep.mubr.bf16.mxu0 0
      %5988 = vmatmul.mubr.bf16.gmra.mxu0 %v5830
      %v5989 = vpop.f32.mrf.mxu0
      %v5990 = vadd.f32 0.0, %v5989
      %v5991 = vpop.f32.mrf.mxu0
      %v5992 = vpop.f32.mrf.mxu0
      %v5993 = vadd.f32 0.0, %v5992
      %v5994 = vpop.f32.mrf.mxu0
      %5995 = vdwg.mxu0
      %s5996 = scalar_lea.vmem %s2, 2
      %v5997 = vld [vmem:[%s5996] sm:$0x1]
      %v5999 = vlaneseq
      %v6000 = vshrl.u32 %v5999, 7
      %v6001 = vsub.s32 0, %v6000
      %v6002 = vrot.slane %v5997, %v6001
      %v6004 = vmul.f32 %v5870, %v6002
      %v6005 = vmul.f32 %v5873, %v6002
      %v6006 = vmul.f32 %v5878, %v6002
      %v6007 = vmul.f32 %v5881, %v6002
      %v6008 = vmul.f32 %v5886, %v6002
      %v6009 = vmul.f32 %v5889, %v6002
      %v6010 = vmul.f32 %v5894, %v6002
      %v6011 = vmul.f32 %v5897, %v6002
      %v6012 = vmul.f32 %v5902, %v6002
      %v6013 = vmul.f32 %v5905, %v6002
      %v6014 = vmul.f32 %v5910, %v6002
      %v6015 = vmul.f32 %v5913, %v6002
      %v6016 = vmul.f32 %v5918, %v6002
      %v6017 = vmul.f32 %v5921, %v6002
      %v6018 = vmul.f32 %v5926, %v6002
      %v6019 = vmul.f32 %v5929, %v6002
      %v6020 = vmul.f32 %v5934, %v6002
      %v6021 = vmul.f32 %v5937, %v6002
      %v6022 = vmul.f32 %v5942, %v6002
      %v6023 = vmul.f32 %v5945, %v6002
      %v6024 = vmul.f32 %v5950, %v6002
      %v6025 = vmul.f32 %v5953, %v6002
      %v6026 = vmul.f32 %v5958, %v6002
      %v6027 = vmul.f32 %v5961, %v6002
      %v6028 = vmul.f32 %v5966, %v6002
      %v6029 = vmul.f32 %v5969, %v6002
      %v6030 = vmul.f32 %v5974, %v6002
      %v6031 = vmul.f32 %v5977, %v6002
      %v6032 = vmul.f32 %v5982, %v6002
      %v6033 = vmul.f32 %v5985, %v6002
      %v6034 = vmul.f32 %v5990, %v6002
      %v6035 = vmul.f32 %v5993, %v6002
      %s6036 = scalar_lea.vmem %s3, 2
      %v6037 = vld [vmem:[%s6036] sm:$0x1]
      %v6039 = vlaneseq
      %v6040 = vshrl.u32 %v6039, 7
      %v6041 = vsub.s32 0, %v6040
      %v6042 = vrot.slane %v6037, %v6041
      %v6044 = vadd.f32 %v6004, %v6042
      %v6045 = vadd.f32 %v6005, %v6042
      %v6046 = vadd.f32 %v6006, %v6042
      %v6047 = vadd.f32 %v6007, %v6042
      %v6048 = vadd.f32 %v6008, %v6042
      %v6049 = vadd.f32 %v6009, %v6042
      %v6050 = vadd.f32 %v6010, %v6042
      %v6051 = vadd.f32 %v6011, %v6042
      %v6052 = vadd.f32 %v6012, %v6042
      %v6053 = vadd.f32 %v6013, %v6042
      %v6054 = vadd.f32 %v6014, %v6042
      %v6055 = vadd.f32 %v6015, %v6042
      %v6056 = vadd.f32 %v6016, %v6042
      %v6057 = vadd.f32 %v6017, %v6042
      %v6058 = vadd.f32 %v6018, %v6042
      %v6059 = vadd.f32 %v6019, %v6042
      %v6060 = vadd.f32 %v6020, %v6042
      %v6061 = vadd.f32 %v6021, %v6042
      %v6062 = vadd.f32 %v6022, %v6042
      %v6063 = vadd.f32 %v6023, %v6042
      %v6064 = vadd.f32 %v6024, %v6042
      %v6065 = vadd.f32 %v6025, %v6042
      %v6066 = vadd.f32 %v6026, %v6042
      %v6067 = vadd.f32 %v6027, %v6042
      %v6068 = vadd.f32 %v6028, %v6042
      %v6069 = vadd.f32 %v6029, %v6042
      %v6070 = vadd.f32 %v6030, %v6042
      %v6071 = vadd.f32 %v6031, %v6042
      %v6072 = vadd.f32 %v6032, %v6042
      %v6073 = vadd.f32 %v6033, %v6042
      %v6074 = vadd.f32 %v6034, %v6042
      %v6075 = vadd.f32 %v6035, %v6042
      %v6076 = vmax.f32 %v6044, 0.0
      %v6077 = vmax.f32 %v6045, 0.0
      %v6078 = vmax.f32 %v6046, 0.0
      %v6079 = vmax.f32 %v6047, 0.0
      %v6080 = vmax.f32 %v6048, 0.0
      %v6081 = vmax.f32 %v6049, 0.0
      %v6082 = vmax.f32 %v6050, 0.0
      %v6083 = vmax.f32 %v6051, 0.0
      %v6084 = vmax.f32 %v6052, 0.0
      %v6085 = vmax.f32 %v6053, 0.0
      %v6086 = vmax.f32 %v6054, 0.0
      %v6087 = vmax.f32 %v6055, 0.0
      %v6088 = vmax.f32 %v6056, 0.0
      %v6089 = vmax.f32 %v6057, 0.0
      %v6090 = vmax.f32 %v6058, 0.0
      %v6091 = vmax.f32 %v6059, 0.0
      %v6092 = vmax.f32 %v6060, 0.0
      %v6093 = vmax.f32 %v6061, 0.0
      %v6094 = vmax.f32 %v6062, 0.0
      %v6095 = vmax.f32 %v6063, 0.0
      %v6096 = vmax.f32 %v6064, 0.0
      %v6097 = vmax.f32 %v6065, 0.0
      %v6098 = vmax.f32 %v6066, 0.0
      %v6099 = vmax.f32 %v6067, 0.0
      %v6100 = vmax.f32 %v6068, 0.0
      %v6101 = vmax.f32 %v6069, 0.0
      %v6102 = vmax.f32 %v6070, 0.0
      %v6103 = vmax.f32 %v6071, 0.0
      %v6104 = vmax.f32 %v6072, 0.0
      %v6105 = vmax.f32 %v6073, 0.0
      %v6106 = vmax.f32 %v6074, 0.0
      %v6107 = vmax.f32 %v6075, 0.0
      %6140 = vrot.lane.b32.xlu0 %v6076, 12
      %v6141 = vpop.permute.xlu0 %6140
      %6142 = vrot.lane.b32.xlu0 %v6077, 12
      %v6143 = vpop.permute.xlu0 %6142
      %6144 = vrot.lane.b32.xlu0 %v6078, 12
      %v6145 = vpop.permute.xlu0 %6144
      %6146 = vrot.lane.b32.xlu0 %v6079, 12
      %v6147 = vpop.permute.xlu0 %6146
      %6148 = vrot.lane.b32.xlu0 %v6080, 12
      %v6149 = vpop.permute.xlu0 %6148
      %6150 = vrot.lane.b32.xlu0 %v6081, 12
      %v6151 = vpop.permute.xlu0 %6150
      %6152 = vrot.lane.b32.xlu0 %v6082, 12
      %v6153 = vpop.permute.xlu0 %6152
      %6154 = vrot.lane.b32.xlu0 %v6083, 12
      %v6155 = vpop.permute.xlu0 %6154
      %6156 = vrot.lane.b32.xlu0 %v6084, 12
      %v6157 = vpop.permute.xlu0 %6156
      %6158 = vrot.lane.b32.xlu0 %v6085, 12
      %v6159 = vpop.permute.xlu0 %6158
      %6160 = vrot.lane.b32.xlu0 %v6086, 12
      %v6161 = vpop.permute.xlu0 %6160
      %6162 = vrot.lane.b32.xlu0 %v6087, 12
      %v6163 = vpop.permute.xlu0 %6162
      %6164 = vrot.lane.b32.xlu0 %v6088, 12
      %v6165 = vpop.permute.xlu0 %6164
      %6166 = vrot.lane.b32.xlu0 %v6089, 12
      %v6167 = vpop.permute.xlu0 %6166
      %6168 = vrot.lane.b32.xlu0 %v6090, 12
      %v6169 = vpop.permute.xlu0 %6168
      %6170 = vrot.lane.b32.xlu0 %v6091, 12
      %v6171 = vpop.permute.xlu0 %6170
      %6172 = vrot.lane.b32.xlu0 %v6092, 12
      %v6173 = vpop.permute.xlu0 %6172
      %6174 = vrot.lane.b32.xlu0 %v6093, 12
      %v6175 = vpop.permute.xlu0 %6174
      %6176 = vrot.lane.b32.xlu0 %v6094, 12
      %v6177 = vpop.permute.xlu0 %6176
      %6178 = vrot.lane.b32.xlu0 %v6095, 12
      %v6179 = vpop.permute.xlu0 %6178
      %6180 = vrot.lane.b32.xlu0 %v6096, 12
      %v6181 = vpop.permute.xlu0 %6180
      %6182 = vrot.lane.b32.xlu0 %v6097, 12
      %v6183 = vpop.permute.xlu0 %6182
      %6184 = vrot.lane.b32.xlu0 %v6098, 12
      %v6185 = vpop.permute.xlu0 %6184
      %6186 = vrot.lane.b32.xlu0 %v6099, 12
      %v6187 = vpop.permute.xlu0 %6186
      %6188 = vrot.lane.b32.xlu0 %v6100, 12
      %v6189 = vpop.permute.xlu0 %6188
      %6190 = vrot.lane.b32.xlu0 %v6101, 12
      %v6191 = vpop.permute.xlu0 %6190
      %6192 = vrot.lane.b32.xlu0 %v6102, 12
      %v6193 = vpop.permute.xlu0 %6192
      %6194 = vrot.lane.b32.xlu0 %v6103, 12
      %v6195 = vpop.permute.xlu0 %6194
      %6196 = vrot.lane.b32.xlu0 %v6104, 12
      %v6197 = vpop.permute.xlu0 %6196
      %6198 = vrot.lane.b32.xlu0 %v6105, 12
      %v6199 = vpop.permute.xlu0 %6198
      %6200 = vrot.lane.b32.xlu0 %v6106, 12
      %v6201 = vpop.permute.xlu0 %6200
      %6202 = vrot.lane.b32.xlu0 %v6107, 12
      %v6203 = vpop.permute.xlu0 %6202
      %6236 = vst.msk [vmem:[%s197] sm:$0xff] %vm841, %v6141
      %6237 = vst.msk [vmem:[%s197 + $0x8] sm:$0xff] %vm841, %v6143
      %6238 = vst.msk [vmem:[%s197 + $0x10] sm:$0xff] %vm841, %v6145
      %6239 = vst.msk [vmem:[%s197 + $0x18] sm:$0xff] %vm841, %v6147
      %6240 = vst.msk [vmem:[%s197 + $0x20] sm:$0xff] %vm841, %v6149
      %6241 = vst.msk [vmem:[%s197 + $0x28] sm:$0xff] %vm841, %v6151
      %6242 = vst.msk [vmem:[%s197 + $0x30] sm:$0xff] %vm841, %v6153
      %6243 = vst.msk [vmem:[%s197 + $0x38] sm:$0xff] %vm841, %v6155
      %6244 = vst.msk [vmem:[%s197 + $0x40] sm:$0xff] %vm841, %v6157
      %6245 = vst.msk [vmem:[%s197 + $0x48] sm:$0xff] %vm841, %v6159
      %6246 = vst.msk [vmem:[%s197 + $0x50] sm:$0xff] %vm841, %v6161
      %6247 = vst.msk [vmem:[%s197 + $0x58] sm:$0xff] %vm841, %v6163
      %6248 = vst.msk [vmem:[%s197 + $0x60] sm:$0xff] %vm841, %v6165
      %6249 = vst.msk [vmem:[%s197 + $0x68] sm:$0xff] %vm841, %v6167
      %6250 = vst.msk [vmem:[%s197 + $0x70] sm:$0xff] %vm841, %v6169
      %6251 = vst.msk [vmem:[%s197 + $0x78] sm:$0xff] %vm841, %v6171
      %6252 = vst.msk [vmem:[%s197 + $0x80] sm:$0xff] %vm841, %v6173
      %6253 = vst.msk [vmem:[%s197 + $0x88] sm:$0xff] %vm841, %v6175
      %6254 = vst.msk [vmem:[%s197 + $0x90] sm:$0xff] %vm841, %v6177
      %6255 = vst.msk [vmem:[%s197 + $0x98] sm:$0xff] %vm841, %v6179
      %6256 = vst.msk [vmem:[%s197 + $0xa0] sm:$0xff] %vm841, %v6181
      %6257 = vst.msk [vmem:[%s197 + $0xa8] sm:$0xff] %vm841, %v6183
      %6258 = vst.msk [vmem:[%s197 + $0xb0] sm:$0xff] %vm841, %v6185
      %6259 = vst.msk [vmem:[%s197 + $0xb8] sm:$0xff] %vm841, %v6187
      %6260 = vst.msk [vmem:[%s197 + $0xc0] sm:$0xff] %vm841, %v6189
      %6261 = vst.msk [vmem:[%s197 + $0xc8] sm:$0xff] %vm841, %v6191
      %6262 = vst.msk [vmem:[%s197 + $0xd0] sm:$0xff] %vm841, %v6193
      %6263 = vst.msk [vmem:[%s197 + $0xd8] sm:$0xff] %vm841, %v6195
      %6264 = vst.msk [vmem:[%s197 + $0xe0] sm:$0xff] %vm841, %v6197
      %6265 = vst.msk [vmem:[%s197 + $0xe8] sm:$0xff] %vm841, %v6199
      %6266 = vst.msk [vmem:[%s197 + $0xf0] sm:$0xff] %vm841, %v6201
      %6267 = vst.msk [vmem:[%s197 + $0xf8] sm:$0xff] %vm841, %v6203
      %6268 = vst.msk [vmem:[%s197] sm:$0xff] %vm972, %v255
      %6269 = vst.msk [vmem:[%s197 + $0x8] sm:$0xff] %vm972, %v256
      %6270 = vst.msk [vmem:[%s197 + $0x10] sm:$0xff] %vm972, %v257
      %6271 = vst.msk [vmem:[%s197 + $0x18] sm:$0xff] %vm972, %v258
      %6272 = vst.msk [vmem:[%s197 + $0x20] sm:$0xff] %vm972, %v259
      %6273 = vst.msk [vmem:[%s197 + $0x28] sm:$0xff] %vm972, %v260
      %6274 = vst.msk [vmem:[%s197 + $0x30] sm:$0xff] %vm972, %v261
      %6275 = vst.msk [vmem:[%s197 + $0x38] sm:$0xff] %vm972, %v262
      %6276 = vst.msk [vmem:[%s197 + $0x40] sm:$0xff] %vm972, %v263
      %6277 = vst.msk [vmem:[%s197 + $0x48] sm:$0xff] %vm972, %v264
      %6278 = vst.msk [vmem:[%s197 + $0x50] sm:$0xff] %vm972, %v265
      %6279 = vst.msk [vmem:[%s197 + $0x58] sm:$0xff] %vm972, %v266
      %6280 = vst.msk [vmem:[%s197 + $0x60] sm:$0xff] %vm972, %v267
      %6281 = vst.msk [vmem:[%s197 + $0x68] sm:$0xff] %vm972, %v268
      %6282 = vst.msk [vmem:[%s197 + $0x70] sm:$0xff] %vm972, %v269
      %6283 = vst.msk [vmem:[%s197 + $0x78] sm:$0xff] %vm972, %v270
      %6284 = vst.msk [vmem:[%s197 + $0x80] sm:$0xff] %vm972, %v271
      %6285 = vst.msk [vmem:[%s197 + $0x88] sm:$0xff] %vm972, %v272
      %6286 = vst.msk [vmem:[%s197 + $0x90] sm:$0xff] %vm972, %v273
      %6287 = vst.msk [vmem:[%s197 + $0x98] sm:$0xff] %vm972, %v274
      %6288 = vst.msk [vmem:[%s197 + $0xa0] sm:$0xff] %vm972, %v275
      %6289 = vst.msk [vmem:[%s197 + $0xa8] sm:$0xff] %vm972, %v276
      %6290 = vst.msk [vmem:[%s197 + $0xb0] sm:$0xff] %vm972, %v277
      %6291 = vst.msk [vmem:[%s197 + $0xb8] sm:$0xff] %vm972, %v278
      %6292 = vst.msk [vmem:[%s197 + $0xc0] sm:$0xff] %vm972, %v279
      %6293 = vst.msk [vmem:[%s197 + $0xc8] sm:$0xff] %vm972, %v280
      %6294 = vst.msk [vmem:[%s197 + $0xd0] sm:$0xff] %vm972, %v281
      %6295 = vst.msk [vmem:[%s197 + $0xd8] sm:$0xff] %vm972, %v282
      %6296 = vst.msk [vmem:[%s197 + $0xe0] sm:$0xff] %vm972, %v283
      %6297 = vst.msk [vmem:[%s197 + $0xe8] sm:$0xff] %vm972, %v284
      %6298 = vst.msk [vmem:[%s197 + $0xf0] sm:$0xff] %vm972, %v285
      %6299 = vst.msk [vmem:[%s197 + $0xf8] sm:$0xff] %vm972, %v286
      %p6300 = scmp.lt.s32.totalorder %s15, 1
      %s6301 = scalar_select %p6300, %s15, 1
      %s6302 = smul.addr %s6301, 32
      %s6303 = smul.addr %s6302, 8
      %s6304 = scalar_lea.vmem %s4, %s6303
      // Predicated region
      $region37: #{bottle2neck_forward.4} parent=35 // pred_check
        %p6305 = pneg %p122
      $region38: #{bottle2neck_forward.4} parent=35 // pred_check_branch
        %6307 = sbr.rel (%p6305) target = $region40
      $region39: #{bottle2neck_forward.4} parent=35 // pred_region
        _
      $region40: #{bottle2neck_forward.4} parent=35 // pred_fallthru
        _
    $region36: #{bottle2neck_forward.4} parent=5 // pred_fallthru
      _
    %p6308 = scmp.le.s32.totalorder 2, %s10
    // Predicated region
    $region41: #{bottle2neck_forward.4} parent=5 // pred_check
      %p6309 = pneg %p6308
    $region42: #{bottle2neck_forward.4} parent=5 // pred_check_branch
      %6311 = sbr.rel (%p6309) target = $region44
    $region43: #{bottle2neck_forward.4} parent=5 // pred_region
      %s6312 = ssub.s32 %s10, 2
      // Predicated region
      $region45: #{bottle2neck_forward.4} parent=43 // pred_check
        %p6313 = pneg %p128
      $region46: #{bottle2neck_forward.4} parent=43 // pred_check_branch
        %6315 = sbr.rel (%p6313) target = $region48
      $region47: #{bottle2neck_forward.4} parent=43 // pred_region
        %p6316 = scmp.lt.s32.totalorder %s16, 1
        %s6317 = scalar_select %p6316, %s16, 1
        %s6318 = smul.addr %s6317, 32
        %s6319 = smul.addr %s6318, 8
        %s6320 = scalar_lea.vmem %s4, %s6319
      $region48: #{bottle2neck_forward.4} parent=43 // pred_fallthru
        _
    $region44: #{bottle2neck_forward.4} parent=5 // pred_fallthru
      _
  $region6: #{bottle2neck_forward.4} parent=0 // loop_footer
    %s14 = sadd.s32 1, %s10
  $region7: #{bottle2neck_forward.4} parent=0 // loop_footer_branch
    %9 = sbr.rel target = $region3
  $region8: #{bottle2neck_forward.4} parent=0 // loop_exit
    _

</llo_original>
